<compile_context>
chip_gen: v7x
topology: tpu7x:2x2x1
jax: 0.10.0
libtpu: 0.0.40
codegen_flags: <defaults>
</compile_context>

<pallas_src>
import functools
import math

import jax
import jax.numpy as jnp
from jax.experimental import pallas as pl
from jax.experimental.pallas import tpu as pltpu

N_CLASSES = 10
_SQRT2 = math.sqrt(2.0)
_BN_EPS = 1e-5
_K = 7            # both convs are 7x7
_PAD1 = 2         # conv1 padding
_C1P = 128        # conv1 out channels padded 50 -> 128
_C2 = 128         # conv2 out channels (exact)
_HIDP = 256       # fc1 hidden padded 200 -> 256
_NOUTP = 128      # logits padded 10 -> 128


def _gelu(x):
    # exact (erf-based) GELU, matching torch.nn.GELU() default
    return 0.5 * x * (1.0 + jax.lax.erf(x / _SQRT2))


def _round_up(x, m):
    return ((x + m - 1) // m) * m


def _geometry(h, w, c):
    hp, wp = h + 2 * _PAD1, w + 2 * _PAD1
    ho1, wo1 = hp - _K + 1, wp - _K + 1          # conv1 output
    h1, w1 = ho1 // 2, wo1 // 2                  # after pool1 (floor)
    ho2, wo2 = h1 - _K + 1, w1 - _K + 1          # conv2 output
    h2, w2 = ho2 // 2, wo2 // 2                  # after pool2 (floor)
    assert h2 >= 1 and w2 >= 1, "input too small for PoolNet geometry"
    w1p = _round_up(w1, 8)                       # padded row stride of conv2's input
    rp1 = h1 * w1p                               # rows per pool-tap block == rows of y1/S
    p2 = ho2 * w1p                               # conv2 output rows computed (flat)
    y1r = _round_up(rp1 + _K - 1, 8)             # y1 scratch rows (slack for the kw fold)
    k1 = _K * _K * c
    k1p = _round_up(k1, 128)                     # conv1 im2col contraction depth (padded)
    return dict(hp=hp, wp=wp, h1=h1, w1=w1, ho2=ho2, wo2=wo2, h2=h2, w2=w2,
                w1p=w1p, rp1=rp1, p2=p2, y1r=y1r, k1=k1, k1p=k1p)


# ------------------------------ the fused per-image kernel ------------------------------

def _poolnet_kernel(x1_ref, w1_ref, b1_ref, w2_ref, b2_ref,
                    fc1w_ref, fc1b_ref, fc2w_ref, fc2b_ref,
                    out_ref, y1_ref, s_ref, *, g):
    f32 = jnp.float32
    rp1, w1p, p2, y1r = g["rp1"], g["w1p"], g["p2"], g["y1r"]
    h2o, w2o = g["h2"], g["w2"]

    # ---- conv1 (im2col GEMM) + bias + exact GELU + 2x2 max-pool, all in registers -------
    # The four pool taps (dy, dx) are four contiguous row blocks of the im2col LHS, so the
    # max-pool is three full-width elementwise maximums; no accumulator VMEM round trips.
    b1 = b1_ref[...]
    w1 = w1_ref[...]
    pooled = None
    for blk in range(4):
        a = jnp.dot(x1_ref[0, blk * rp1:(blk + 1) * rp1, :], w1,
                    preferred_element_type=f32)
        a = _gelu(a + b1)
        pooled = a if pooled is None else jnp.maximum(pooled, a)
    y1_ref[0:rp1, :] = pooled                                        # row = y*w1p + x
    y1_ref[rp1:y1r, :] = jnp.zeros((y1r - rp1, _C1P), f32)           # slack rows

    # ---- conv2: fold the kernel WIDTH into the contraction ------------------------------
    # S[q, j*128 + c] = y1[q + j, c]  ->  conv2 = sum_i dot(S[i*w1p : i*w1p + p2], W2_i),
    # 7 dots of depth kw*128 = 896 with sublane-aligned LHS starts.
    for j in range(_K):
        s_ref[:, j * _C1P:(j + 1) * _C1P] = y1_ref[j:j + rp1, :].astype(jnp.bfloat16)
    acc2 = jnp.zeros((p2, _C2), f32)
    for i in range(_K):
        acc2 = acc2 + jnp.dot(s_ref[i * w1p:i * w1p + p2, :], w2_ref[i],
                              preferred_element_type=f32)
    act2 = _gelu(acc2 + b2_ref[...])                                 # (p2, 128), row = yo*w1p+xo

    # ---- 2x2 max-pool on the conv2 output + FC tail (fc1 as spatial partial dots) -------
    hid = fc1b_ref[...]                                              # (1, 256) f32
    for hp in range(h2o):
        for wq in range(w2o):
            r = (2 * hp) * w1p + 2 * wq
            v = jnp.maximum(
                jnp.maximum(act2[r:r + 1, :], act2[r + 1:r + 2, :]),
                jnp.maximum(act2[r + w1p:r + w1p + 1, :], act2[r + w1p + 1:r + w1p + 2, :]))
            hid = hid + jnp.dot(v, fc1w_ref[hp * w2o + wq], preferred_element_type=f32)
    hid = _gelu(hid)
    logits = jnp.dot(hid, fc2w_ref[...], preferred_element_type=f32) + fc2b_ref[...]
    out_ref[0, :, :] = jnp.broadcast_to(logits, (8, _NOUTP))


# --------------------------------- host-side wrapper ---------------------------------

def _prep_input(x_nchw, g):
    """NCHW -> conv1 im2col LHS (N, 4*rp1, k1p) bf16, rows ordered (dy, dx, y, x)."""
    n, c, h, w = x_nchw.shape
    x = jnp.transpose(x_nchw, (0, 2, 3, 1)).astype(jnp.float32)
    x = jnp.pad(x, ((0, 0), (_PAD1, _PAD1), (_PAD1, _PAD1), (0, 0)))
    h1, w1, w1p, k1, k1p = g["h1"], g["w1"], g["w1p"], g["k1"], g["k1p"]
    ho, wo = 2 * h1, 2 * w1                       # conv1 outputs actually read by the pool
    cols = jnp.stack([x[:, i:i + ho, j:j + wo, :]
                      for i in range(_K) for j in range(_K)], axis=3)
    cols = cols.reshape(n, ho, wo, k1)            # K order = (i, j, cin)
    q = cols.reshape(n, h1, 2, w1, 2, k1).transpose(0, 2, 4, 1, 3, 5)   # (n,dy,dx,y,x,K)
    q = jnp.pad(q, ((0, 0), (0, 0), (0, 0), (0, 0), (0, w1p - w1), (0, k1p - k1)))
    return q.reshape(n, 4 * h1 * w1p, k1p).astype(jnp.bfloat16)


def poolnet_forward(fp, x_nchw):
    n, c, h, w = x_nchw.shape
    g = _geometry(h, w, c)
    x1 = _prep_input(x_nchw, g)

    kernel = functools.partial(_poolnet_kernel, g=g)
    const2 = lambda i: (0, 0)
    const3 = lambda i: (0, 0, 0)
    out = pl.pallas_call(
        kernel,
        out_shape=jax.ShapeDtypeStruct((n, 8, _NOUTP), jnp.float32),
        grid=(n,),
        in_specs=[
            pl.BlockSpec((1, 4 * g["rp1"], g["k1p"]), lambda i: (i, 0, 0)),   # im2col LHS
            pl.BlockSpec((g["k1p"], _C1P), const2),                           # conv1 W
            pl.BlockSpec((1, _C1P), const2),                                  # conv1 b
            pl.BlockSpec((_K, _K * _C1P, _C2), const3),                       # conv2 W (kw-folded)
            pl.BlockSpec((1, _C2), const2),                                   # conv2 b
            pl.BlockSpec((g["h2"] * g["w2"], _C2, _HIDP), const3),            # fc1 W (per spatial)
            pl.BlockSpec((1, _HIDP), const2),                                 # fc1 b
            pl.BlockSpec((_HIDP, _NOUTP), const2),                            # fc2 W
            pl.BlockSpec((1, _NOUTP), const2),                                # fc2 b
        ],
        out_specs=pl.BlockSpec((1, 8, _NOUTP), lambda i: (i, 0, 0)),
        scratch_shapes=[
            pltpu.VMEM((g["y1r"], _C1P), jnp.float32),        # pooled conv1 output (y1)
            pltpu.VMEM((g["rp1"], _K * _C1P), jnp.bfloat16),  # kw-folded conv2 LHS staging
        ],
        compiler_params=pltpu.CompilerParams(
            dimension_semantics=("parallel",),
            vmem_limit_bytes=32 * 1024 * 1024),
    )(x1, fp["w1"], fp["b1"], fp["w2"], fp["b2"],
      fp["fc1_w"], fp["fc1_b"], fp["fc2_w"], fp["fc2_b"])
    return out[:, 0, :N_CLASSES]


# -------------------- host-side weight folding / layout preparation --------------------

def prepare_params(p, *, h, w):
    """Fold BN1/BN2/BN3 into the next layer, lay weights out for the fused kernel, and
    zero-pad narrow dims (conv1 Cout 50->128, fc1 200->256, logits 10->128) for lane density."""
    c = p["w1"].shape[1]
    g = _geometry(h, w, c)

    s1 = p["bn1_g"] * jax.lax.rsqrt(p["bn1_v"] + _BN_EPS)
    t1 = p["bn1_b"] - p["bn1_m"] * s1
    s2 = p["bn2_g"] * jax.lax.rsqrt(p["bn2_v"] + _BN_EPS)
    t2 = p["bn2_b"] - p["bn2_m"] * s2
    s3 = p["bn3_g"] * jax.lax.rsqrt(p["bn3_v"] + _BN_EPS)
    t3 = p["bn3_b"] - p["bn3_m"] * s3

    # conv1: (O=50, I, 7, 7) -> (k1p, 128) bf16, row = (i*7 + j)*I + ci.
    o1, i1, kh, kw = p["w1"].shape
    w1 = jnp.transpose(p["w1"], (2, 3, 1, 0)).reshape(kh * kw * i1, o1)
    w1 = jnp.pad(w1, ((0, g["k1p"] - kh * kw * i1), (0, _C1P - o1))).astype(jnp.bfloat16)
    b1 = jnp.pad(p["b1"], (0, _C1P - o1)).reshape(1, _C1P).astype(jnp.float32)

    # conv2 with BN1 folded into its inputs; layout (kh, kw*128, 128) bf16; Cin padded 50->128.
    o2 = p["w2"].shape[0]
    assert o2 == _C2
    w2f = p["w2"] * s1[None, :, None, None]
    b2f = p["b2"] + jnp.einsum("oihw,i->o", p["w2"], t1)
    w2 = jnp.transpose(w2f, (2, 3, 1, 0))                           # (kh, kw, cin, cout)
    w2 = jnp.pad(w2, ((0, 0), (0, 0), (0, _C1P - o1), (0, 0)))
    w2 = w2.reshape(kh, kw * _C1P, o2).astype(jnp.bfloat16)
    b2 = b2f.reshape(1, o2).astype(jnp.float32)

    # fc1 with BN2 folded; kernel feature order is (spatial = y*W2 + x, channel);
    # hidden padded 200 -> 256 (GELU(0)=0 and fc2's padded rows are zero, so exact).
    f_in, n_hidden = p["fc1_w"].shape
    spatial = g["h2"] * g["w2"]
    assert f_in == o2 * spatial
    wfc1 = p["fc1_w"].reshape(o2, spatial, n_hidden)
    bfc1 = p["fc1_b"] + jnp.einsum("csh,c->h", wfc1, t2)
    wfc1 = (wfc1 * s2[:, None, None]).transpose(1, 0, 2)            # (spatial, cin, hidden)
    wfc1 = jnp.pad(wfc1, ((0, 0), (0, 0), (0, _HIDP - n_hidden))).astype(jnp.float32)
    bfc1 = jnp.pad(bfc1, (0, _HIDP - n_hidden)).reshape(1, _HIDP).astype(jnp.float32)

    # fc2 with BN3 folded; inputs padded 200->256 and outputs 10->128 with zeros.
    wfc2 = p["fc2_w"] * s3[:, None]
    bfc2 = p["fc2_b"] + t3 @ p["fc2_w"]
    wfc2 = jnp.pad(wfc2, ((0, _HIDP - n_hidden), (0, _NOUTP - N_CLASSES))).astype(jnp.float32)
    bfc2 = jnp.pad(bfc2, (0, _NOUTP - N_CLASSES)).reshape(1, _NOUTP).astype(jnp.float32)

    return {"w1": w1, "b1": b1, "w2": w2, "b2": b2,
            "fc1_w": wfc1, "fc1_b": bfc1, "fc2_w": wfc2, "fc2_b": bfc2}


# --------------------------- init (PyTorch-layout params) ---------------------------

def init_params(key, c_in, h, w):
    def conv_out(s, k, pad):
        return s + 2 * pad - k + 1

    h1, w1 = conv_out(h, 7, 2) // 2, conv_out(w, 7, 2) // 2
    h2, w2 = conv_out(h1, 7, 0) // 2, conv_out(w1, 7, 0) // 2
    n_fc_inputs = 128 * h2 * w2
    print("Number of input features to fully connected layers:", n_fc_inputs)

    ks = jax.random.split(key, 16)

    def nrm(k, shape, scale=0.05):
        return scale * jax.random.normal(k, shape, jnp.float32)

    def bn(k, c):
        k1, k2, k3, k4 = jax.random.split(k, 4)
        return dict(g=1.0 + 0.1 * jax.random.normal(k1, (c,), jnp.float32),
                    b=0.1 * jax.random.normal(k2, (c,), jnp.float32),
                    m=0.1 * jax.random.normal(k3, (c,), jnp.float32),
                    v=1.0 + 0.1 * jnp.abs(jax.random.normal(k4, (c,), jnp.float32)))

    bn1, bn2, bn3 = bn(ks[8], 50), bn(ks[9], 128), bn(ks[10], 200)
    return {
        "w1": nrm(ks[0], (50, c_in, 7, 7)), "b1": nrm(ks[1], (50,)),
        "w2": nrm(ks[2], (128, 50, 7, 7)), "b2": nrm(ks[3], (128,)),
        "fc1_w": nrm(ks[4], (n_fc_inputs, 200)), "fc1_b": nrm(ks[5], (200,)),
        "fc2_w": nrm(ks[6], (200, N_CLASSES)), "fc2_b": nrm(ks[7], (N_CLASSES,)),
        "bn1_g": bn1["g"], "bn1_b": bn1["b"], "bn1_m": bn1["m"], "bn1_v": bn1["v"],
        "bn2_g": bn2["g"], "bn2_b": bn2["b"], "bn2_m": bn2["m"], "bn2_v": bn2["v"],
        "bn3_g": bn3["g"], "bn3_b": bn3["b"], "bn3_m": bn3["m"], "bn3_v": bn3["v"],
    }


# ---------------------- pure-JAX reference (mirrors the PyTorch module) ----------------------

def poolnet_reference(p, x):
    hi = jax.lax.Precision.HIGHEST

    def bn(v, g, b, m, var):
        s = g * jax.lax.rsqrt(var + _BN_EPS)
        return (v - m[None, :, None, None]) * s[None, :, None, None] + b[None, :, None, None]

    y = jax.lax.conv_general_dilated(x, p["w1"], (1, 1), [(2, 2), (2, 2)],
                                     dimension_numbers=("NCHW", "OIHW", "NCHW"), precision=hi)
    y = _gelu(y + p["b1"][None, :, None, None])
    y = jax.lax.reduce_window(y, -jnp.inf, jax.lax.max, (1, 1, 2, 2), (1, 1, 2, 2), "VALID")
    y = bn(y, p["bn1_g"], p["bn1_b"], p["bn1_m"], p["bn1_v"])
    y = jax.lax.conv_general_dilated(y, p["w2"], (1, 1), [(0, 0), (0, 0)],
                                     dimension_numbers=("NCHW", "OIHW", "NCHW"), precision=hi)
    y = _gelu(y + p["b2"][None, :, None, None])
    y = jax.lax.reduce_window(y, -jnp.inf, jax.lax.max, (1, 1, 2, 2), (1, 1, 2, 2), "VALID")
    y = bn(y, p["bn2_g"], p["bn2_b"], p["bn2_m"], p["bn2_v"])
    flat = y.reshape(y.shape[0], -1)                       # PyTorch NCHW flatten
    z = _gelu(jnp.dot(flat, p["fc1_w"], precision=hi) + p["fc1_b"])
    z = (z - p["bn3_m"]) * (p["bn3_g"] * jax.lax.rsqrt(p["bn3_v"] + _BN_EPS)) + p["bn3_b"]
    return jnp.dot(z, p["fc2_w"], precision=hi) + p["fc2_b"]


if __name__ == "__main__":
    # 7x7 convs + two 2x2 pools need spatial >= 18; use 24x24 like the original test.
    B, C, H, W = 2, 4, 24, 24
    key = jax.random.PRNGKey(0)
    k_x, k_p = jax.random.split(key)
    x = jax.random.normal(k_x, (B, C, H, W), jnp.float32)

    params = init_params(k_p, C, H, W)
    fparams = prepare_params(params, h=H, w=W)   # fold BNs, permute/pad weights (host, once)

    logits = jax.jit(poolnet_forward)(fparams, x)
    jax.block_until_ready(logits)

    assert logits.shape == (B, N_CLASSES) and logits.dtype == jnp.float32
    ref = poolnet_reference(params, x)
    assert jnp.allclose(logits, ref, rtol=2e-2, atol=2e-2), \
        float(jnp.max(jnp.abs(logits - ref)))
    print("KERNEL_OK")
</pallas_src>

<mosaic_0001>
module attributes {stable_mosaic.version = 11 : i64} {
  func.func @_poolnet_kernel(%arg0: i32, %arg1: memref<1x704x256xbf16, #tpu.memory_space<vmem>>, %arg2: memref<256x128xbf16, #tpu.memory_space<vmem>>, %arg3: memref<1x128xf32, #tpu.memory_space<vmem>>, %arg4: memref<7x896x128xbf16, #tpu.memory_space<vmem>>, %arg5: memref<1x128xf32, #tpu.memory_space<vmem>>, %arg6: memref<4x128x256xf32, #tpu.memory_space<vmem>>, %arg7: memref<1x256xf32, #tpu.memory_space<vmem>>, %arg8: memref<256x128xf32, #tpu.memory_space<vmem>>, %arg9: memref<1x128xf32, #tpu.memory_space<vmem>>, %arg10: memref<1x8x128xf32, #tpu.memory_space<vmem>>, %arg11: memref<184x128xf32, #tpu.memory_space<vmem>>, %arg12: memref<176x896xbf16, #tpu.memory_space<vmem>>) attributes {dimension_semantics = [#tpu.dimension_semantics<parallel>], iteration_bounds = array<i64: 2>, scalar_prefetch = 0 : i64, scratch_operands = 2 : i64, tpu.core_type = #tpu.core_type<tc>, window_params = [{transform_indices = @transform_0, window_bounds = array<i64: 1, 704, 256>}, {pipeline_mode = #tpu.pipeline_mode<synchronous>, transform_indices = @transform_1, window_bounds = array<i64: 256, 128>}, {pipeline_mode = #tpu.pipeline_mode<synchronous>, transform_indices = @transform_2, window_bounds = array<i64: 1, 128>}, {pipeline_mode = #tpu.pipeline_mode<synchronous>, transform_indices = @transform_3, window_bounds = array<i64: 7, 896, 128>}, {pipeline_mode = #tpu.pipeline_mode<synchronous>, transform_indices = @transform_4, window_bounds = array<i64: 1, 128>}, {pipeline_mode = #tpu.pipeline_mode<synchronous>, transform_indices = @transform_5, window_bounds = array<i64: 4, 128, 256>}, {pipeline_mode = #tpu.pipeline_mode<synchronous>, transform_indices = @transform_6, window_bounds = array<i64: 1, 256>}, {pipeline_mode = #tpu.pipeline_mode<synchronous>, transform_indices = @transform_7, window_bounds = array<i64: 256, 128>}, {pipeline_mode = #tpu.pipeline_mode<synchronous>, transform_indices = @transform_8, window_bounds = array<i64: 1, 128>}, {transform_indices = @transform_9, window_bounds = array<i64: 1, 8, 128>}]} {
    %c0 = arith.constant 0 : index
    %c0_0 = arith.constant 0 : index
    %0 = vector.load %arg3[%c0, %c0_0] : memref<1x128xf32, #tpu.memory_space<vmem>>, vector<1x128xf32>
    %c0_1 = arith.constant 0 : index
    %c0_2 = arith.constant 0 : index
    %1 = vector.load %arg2[%c0_1, %c0_2] : memref<256x128xbf16, #tpu.memory_space<vmem>>, vector<256x128xbf16>
    %c0_3 = arith.constant 0 : index
    %c0_4 = arith.constant 0 : index
    %c0_5 = arith.constant 0 : index
    %2 = vector.load %arg1[%c0_3, %c0_4, %c0_5] : memref<1x704x256xbf16, #tpu.memory_space<vmem>>, vector<1x176x256xbf16>
    %3 = vector.shape_cast %2 : vector<1x176x256xbf16> to vector<176x256xbf16>
    %cst = arith.constant dense<0.000000e+00> : vector<176x128xf32>
    %4 = tpu.matmul %3, %1, %cst {dimension_numbers = #tpu.dot_dimension_numbers<[1], [0], [0], [1], [0, 0, 1, 1], [], []>} : vector<176x256xbf16>, vector<256x128xbf16>, vector<176x128xf32> -> vector<176x128xf32>
    %5 = vector.broadcast %0 : vector<1x128xf32> to vector<176x128xf32>
    %6 = arith.addf %4, %5 : vector<176x128xf32>
    %cst_6 = arith.constant 5.000000e-01 : f32
    %7 = vector.broadcast %cst_6 : f32 to vector<176x128xf32>
    %8 = arith.mulf %7, %6 : vector<176x128xf32>
    %cst_7 = arith.constant 1.41421354 : f32
    %9 = vector.broadcast %cst_7 : f32 to vector<176x128xf32>
    %10 = arith.divf %6, %9 : vector<176x128xf32>
    %11 = math.erf %10 : vector<176x128xf32>
    %cst_8 = arith.constant 1.000000e+00 : f32
    %12 = vector.broadcast %cst_8 : f32 to vector<176x128xf32>
    %13 = arith.addf %12, %11 : vector<176x128xf32>
    %14 = arith.mulf %8, %13 : vector<176x128xf32>
    %c0_9 = arith.constant 0 : index
    %c176 = arith.constant 176 : index
    %c0_10 = arith.constant 0 : index
    %15 = vector.load %arg1[%c0_9, %c176, %c0_10] : memref<1x704x256xbf16, #tpu.memory_space<vmem>>, vector<1x176x256xbf16>
    %16 = vector.shape_cast %15 : vector<1x176x256xbf16> to vector<176x256xbf16>
    %cst_11 = arith.constant dense<0.000000e+00> : vector<176x128xf32>
    %17 = tpu.matmul %16, %1, %cst_11 {dimension_numbers = #tpu.dot_dimension_numbers<[1], [0], [0], [1], [0, 0, 1, 1], [], []>} : vector<176x256xbf16>, vector<256x128xbf16>, vector<176x128xf32> -> vector<176x128xf32>
    %18 = vector.broadcast %0 : vector<1x128xf32> to vector<176x128xf32>
    %19 = arith.addf %17, %18 : vector<176x128xf32>
    %cst_12 = arith.constant 5.000000e-01 : f32
    %20 = vector.broadcast %cst_12 : f32 to vector<176x128xf32>
    %21 = arith.mulf %20, %19 : vector<176x128xf32>
    %cst_13 = arith.constant 1.41421354 : f32
    %22 = vector.broadcast %cst_13 : f32 to vector<176x128xf32>
    %23 = arith.divf %19, %22 : vector<176x128xf32>
    %24 = math.erf %23 : vector<176x128xf32>
    %cst_14 = arith.constant 1.000000e+00 : f32
    %25 = vector.broadcast %cst_14 : f32 to vector<176x128xf32>
    %26 = arith.addf %25, %24 : vector<176x128xf32>
    %27 = arith.mulf %21, %26 : vector<176x128xf32>
    %28 = arith.maximumf %14, %27 : vector<176x128xf32>
    %c0_15 = arith.constant 0 : index
    %c352 = arith.constant 352 : index
    %c0_16 = arith.constant 0 : index
    %29 = vector.load %arg1[%c0_15, %c352, %c0_16] : memref<1x704x256xbf16, #tpu.memory_space<vmem>>, vector<1x176x256xbf16>
    %30 = vector.shape_cast %29 : vector<1x176x256xbf16> to vector<176x256xbf16>
    %cst_17 = arith.constant dense<0.000000e+00> : vector<176x128xf32>
    %31 = tpu.matmul %30, %1, %cst_17 {dimension_numbers = #tpu.dot_dimension_numbers<[1], [0], [0], [1], [0, 0, 1, 1], [], []>} : vector<176x256xbf16>, vector<256x128xbf16>, vector<176x128xf32> -> vector<176x128xf32>
    %32 = vector.broadcast %0 : vector<1x128xf32> to vector<176x128xf32>
    %33 = arith.addf %31, %32 : vector<176x128xf32>
    %cst_18 = arith.constant 5.000000e-01 : f32
    %34 = vector.broadcast %cst_18 : f32 to vector<176x128xf32>
    %35 = arith.mulf %34, %33 : vector<176x128xf32>
    %cst_19 = arith.constant 1.41421354 : f32
    %36 = vector.broadcast %cst_19 : f32 to vector<176x128xf32>
    %37 = arith.divf %33, %36 : vector<176x128xf32>
    %38 = math.erf %37 : vector<176x128xf32>
    %cst_20 = arith.constant 1.000000e+00 : f32
    %39 = vector.broadcast %cst_20 : f32 to vector<176x128xf32>
    %40 = arith.addf %39, %38 : vector<176x128xf32>
    %41 = arith.mulf %35, %40 : vector<176x128xf32>
    %42 = arith.maximumf %28, %41 : vector<176x128xf32>
    %c0_21 = arith.constant 0 : index
    %c528 = arith.constant 528 : index
    %c0_22 = arith.constant 0 : index
    %43 = vector.load %arg1[%c0_21, %c528, %c0_22] : memref<1x704x256xbf16, #tpu.memory_space<vmem>>, vector<1x176x256xbf16>
    %44 = vector.shape_cast %43 : vector<1x176x256xbf16> to vector<176x256xbf16>
    %cst_23 = arith.constant dense<0.000000e+00> : vector<176x128xf32>
    %45 = tpu.matmul %44, %1, %cst_23 {dimension_numbers = #tpu.dot_dimension_numbers<[1], [0], [0], [1], [0, 0, 1, 1], [], []>} : vector<176x256xbf16>, vector<256x128xbf16>, vector<176x128xf32> -> vector<176x128xf32>
    %46 = vector.broadcast %0 : vector<1x128xf32> to vector<176x128xf32>
    %47 = arith.addf %45, %46 : vector<176x128xf32>
    %cst_24 = arith.constant 5.000000e-01 : f32
    %48 = vector.broadcast %cst_24 : f32 to vector<176x128xf32>
    %49 = arith.mulf %48, %47 : vector<176x128xf32>
    %cst_25 = arith.constant 1.41421354 : f32
    %50 = vector.broadcast %cst_25 : f32 to vector<176x128xf32>
    %51 = arith.divf %47, %50 : vector<176x128xf32>
    %52 = math.erf %51 : vector<176x128xf32>
    %cst_26 = arith.constant 1.000000e+00 : f32
    %53 = vector.broadcast %cst_26 : f32 to vector<176x128xf32>
    %54 = arith.addf %53, %52 : vector<176x128xf32>
    %55 = arith.mulf %49, %54 : vector<176x128xf32>
    %56 = arith.maximumf %42, %55 : vector<176x128xf32>
    %c0_27 = arith.constant 0 : index
    %c0_28 = arith.constant 0 : index
    %57 = vector.load %arg11[%c0_27, %c0_28] : memref<184x128xf32, #tpu.memory_space<vmem>>, vector<176x128xf32>
    tpu.vector_store %arg11[%c0_27, %c0_28], %56 {strides = array<i32>} : memref<184x128xf32, #tpu.memory_space<vmem>>, vector<176x128xf32>,
    %cst_29 = arith.constant 0.000000e+00 : f32
    %58 = vector.broadcast %cst_29 : f32 to vector<8x128xf32>
    %c176_30 = arith.constant 176 : index
    %c0_31 = arith.constant 0 : index
    %59 = vector.load %arg11[%c176_30, %c0_31] : memref<184x128xf32, #tpu.memory_space<vmem>>, vector<8x128xf32>
    tpu.vector_store %arg11[%c176_30, %c0_31], %58 {strides = array<i32>} : memref<184x128xf32, #tpu.memory_space<vmem>>, vector<8x128xf32>,
    %c0_32 = arith.constant 0 : index
    %c0_33 = arith.constant 0 : index
    %60 = vector.load %arg11[%c0_32, %c0_33] : memref<184x128xf32, #tpu.memory_space<vmem>>, vector<176x128xf32>
    %61 = arith.truncf %60 : vector<176x128xf32> to vector<176x128xbf16>
    %c0_34 = arith.constant 0 : index
    %c0_35 = arith.constant 0 : index
    %62 = vector.load %arg12[%c0_34, %c0_35] : memref<176x896xbf16, #tpu.memory_space<vmem>>, vector<176x128xbf16>
    tpu.vector_store %arg12[%c0_34, %c0_35], %61 {strides = array<i32>} : memref<176x896xbf16, #tpu.memory_space<vmem>>, vector<176x128xbf16>,
    %c1 = arith.constant 1 : index
    %c0_36 = arith.constant 0 : index
    %63 = vector.load %arg11[%c1, %c0_36] : memref<184x128xf32, #tpu.memory_space<vmem>>, vector<176x128xf32>
    %64 = arith.truncf %63 : vector<176x128xf32> to vector<176x128xbf16>
    %c0_37 = arith.constant 0 : index
    %c128 = arith.constant 128 : index
    %65 = vector.load %arg12[%c0_37, %c128] : memref<176x896xbf16, #tpu.memory_space<vmem>>, vector<176x128xbf16>
    tpu.vector_store %arg12[%c0_37, %c128], %64 {strides = array<i32>} : memref<176x896xbf16, #tpu.memory_space<vmem>>, vector<176x128xbf16>,
    %c2 = arith.constant 2 : index
    %c0_38 = arith.constant 0 : index
    %66 = vector.load %arg11[%c2, %c0_38] : memref<184x128xf32, #tpu.memory_space<vmem>>, vector<176x128xf32>
    %67 = arith.truncf %66 : vector<176x128xf32> to vector<176x128xbf16>
    %c0_39 = arith.constant 0 : index
    %c256 = arith.constant 256 : index
    %68 = vector.load %arg12[%c0_39, %c256] : memref<176x896xbf16, #tpu.memory_space<vmem>>, vector<176x128xbf16>
    tpu.vector_store %arg12[%c0_39, %c256], %67 {strides = array<i32>} : memref<176x896xbf16, #tpu.memory_space<vmem>>, vector<176x128xbf16>,
    %c3 = arith.constant 3 : index
    %c0_40 = arith.constant 0 : index
    %69 = vector.load %arg11[%c3, %c0_40] : memref<184x128xf32, #tpu.memory_space<vmem>>, vector<176x128xf32>
    %70 = arith.truncf %69 : vector<176x128xf32> to vector<176x128xbf16>
    %c0_41 = arith.constant 0 : index
    %c384 = arith.constant 384 : index
    %71 = vector.load %arg12[%c0_41, %c384] : memref<176x896xbf16, #tpu.memory_space<vmem>>, vector<176x128xbf16>
    tpu.vector_store %arg12[%c0_41, %c384], %70 {strides = array<i32>} : memref<176x896xbf16, #tpu.memory_space<vmem>>, vector<176x128xbf16>,
    %c4 = arith.constant 4 : index
    %c0_42 = arith.constant 0 : index
    %72 = vector.load %arg11[%c4, %c0_42] : memref<184x128xf32, #tpu.memory_space<vmem>>, vector<176x128xf32>
    %73 = arith.truncf %72 : vector<176x128xf32> to vector<176x128xbf16>
    %c0_43 = arith.constant 0 : index
    %c512 = arith.constant 512 : index
    %74 = vector.load %arg12[%c0_43, %c512] : memref<176x896xbf16, #tpu.memory_space<vmem>>, vector<176x128xbf16>
    tpu.vector_store %arg12[%c0_43, %c512], %73 {strides = array<i32>} : memref<176x896xbf16, #tpu.memory_space<vmem>>, vector<176x128xbf16>,
    %c5 = arith.constant 5 : index
    %c0_44 = arith.constant 0 : index
    %75 = vector.load %arg11[%c5, %c0_44] : memref<184x128xf32, #tpu.memory_space<vmem>>, vector<176x128xf32>
    %76 = arith.truncf %75 : vector<176x128xf32> to vector<176x128xbf16>
    %c0_45 = arith.constant 0 : index
    %c640 = arith.constant 640 : index
    %77 = vector.load %arg12[%c0_45, %c640] : memref<176x896xbf16, #tpu.memory_space<vmem>>, vector<176x128xbf16>
    tpu.vector_store %arg12[%c0_45, %c640], %76 {strides = array<i32>} : memref<176x896xbf16, #tpu.memory_space<vmem>>, vector<176x128xbf16>,
    %c6 = arith.constant 6 : index
    %c0_46 = arith.constant 0 : index
    %78 = vector.load %arg11[%c6, %c0_46] : memref<184x128xf32, #tpu.memory_space<vmem>>, vector<176x128xf32>
    %79 = arith.truncf %78 : vector<176x128xf32> to vector<176x128xbf16>
    %c0_47 = arith.constant 0 : index
    %c768 = arith.constant 768 : index
    %80 = vector.load %arg12[%c0_47, %c768] : memref<176x896xbf16, #tpu.memory_space<vmem>>, vector<176x128xbf16>
    tpu.vector_store %arg12[%c0_47, %c768], %79 {strides = array<i32>} : memref<176x896xbf16, #tpu.memory_space<vmem>>, vector<176x128xbf16>,
    %cst_48 = arith.constant 0.000000e+00 : f32
    %81 = vector.broadcast %cst_48 : f32 to vector<80x128xf32>
    %c0_49 = arith.constant 0 : index
    %c0_50 = arith.constant 0 : index
    %82 = vector.load %arg12[%c0_49, %c0_50] : memref<176x896xbf16, #tpu.memory_space<vmem>>, vector<80x896xbf16>
    %c0_51 = arith.constant 0 : index
    %c0_52 = arith.constant 0 : index
    %c0_53 = arith.constant 0 : index
    %83 = vector.load %arg4[%c0_51, %c0_52, %c0_53] : memref<7x896x128xbf16, #tpu.memory_space<vmem>>, vector<1x896x128xbf16>
    %84 = vector.shape_cast %83 : vector<1x896x128xbf16> to vector<896x128xbf16>
    %cst_54 = arith.constant dense<0.000000e+00> : vector<80x128xf32>
    %85 = tpu.matmul %82, %84, %cst_54 {dimension_numbers = #tpu.dot_dimension_numbers<[1], [0], [0], [1], [0, 0, 1, 1], [], []>} : vector<80x896xbf16>, vector<896x128xbf16>, vector<80x128xf32> -> vector<80x128xf32>
    %86 = arith.addf %81, %85 : vector<80x128xf32>
    %c16 = arith.constant 16 : index
    %c0_55 = arith.constant 0 : index
    %87 = vector.load %arg12[%c16, %c0_55] : memref<176x896xbf16, #tpu.memory_space<vmem>>, vector<80x896xbf16>
    %c1_56 = arith.constant 1 : index
    %c0_57 = arith.constant 0 : index
    %c0_58 = arith.constant 0 : index
    %88 = vector.load %arg4[%c1_56, %c0_57, %c0_58] : memref<7x896x128xbf16, #tpu.memory_space<vmem>>, vector<1x896x128xbf16>
    %89 = vector.shape_cast %88 : vector<1x896x128xbf16> to vector<896x128xbf16>
    %cst_59 = arith.constant dense<0.000000e+00> : vector<80x128xf32>
    %90 = tpu.matmul %87, %89, %cst_59 {dimension_numbers = #tpu.dot_dimension_numbers<[1], [0], [0], [1], [0, 0, 1, 1], [], []>} : vector<80x896xbf16>, vector<896x128xbf16>, vector<80x128xf32> -> vector<80x128xf32>
    %91 = arith.addf %86, %90 : vector<80x128xf32>
    %c32 = arith.constant 32 : index
    %c0_60 = arith.constant 0 : index
    %92 = vector.load %arg12[%c32, %c0_60] : memref<176x896xbf16, #tpu.memory_space<vmem>>, vector<80x896xbf16>
    %c2_61 = arith.constant 2 : index
    %c0_62 = arith.constant 0 : index
    %c0_63 = arith.constant 0 : index
    %93 = vector.load %arg4[%c2_61, %c0_62, %c0_63] : memref<7x896x128xbf16, #tpu.memory_space<vmem>>, vector<1x896x128xbf16>
    %94 = vector.shape_cast %93 : vector<1x896x128xbf16> to vector<896x128xbf16>
    %cst_64 = arith.constant dense<0.000000e+00> : vector<80x128xf32>
    %95 = tpu.matmul %92, %94, %cst_64 {dimension_numbers = #tpu.dot_dimension_numbers<[1], [0], [0], [1], [0, 0, 1, 1], [], []>} : vector<80x896xbf16>, vector<896x128xbf16>, vector<80x128xf32> -> vector<80x128xf32>
    %96 = arith.addf %91, %95 : vector<80x128xf32>
    %c48 = arith.constant 48 : index
    %c0_65 = arith.constant 0 : index
    %97 = vector.load %arg12[%c48, %c0_65] : memref<176x896xbf16, #tpu.memory_space<vmem>>, vector<80x896xbf16>
    %c3_66 = arith.constant 3 : index
    %c0_67 = arith.constant 0 : index
    %c0_68 = arith.constant 0 : index
    %98 = vector.load %arg4[%c3_66, %c0_67, %c0_68] : memref<7x896x128xbf16, #tpu.memory_space<vmem>>, vector<1x896x128xbf16>
    %99 = vector.shape_cast %98 : vector<1x896x128xbf16> to vector<896x128xbf16>
    %cst_69 = arith.constant dense<0.000000e+00> : vector<80x128xf32>
    %100 = tpu.matmul %97, %99, %cst_69 {dimension_numbers = #tpu.dot_dimension_numbers<[1], [0], [0], [1], [0, 0, 1, 1], [], []>} : vector<80x896xbf16>, vector<896x128xbf16>, vector<80x128xf32> -> vector<80x128xf32>
    %101 = arith.addf %96, %100 : vector<80x128xf32>
    %c64 = arith.constant 64 : index
    %c0_70 = arith.constant 0 : index
    %102 = vector.load %arg12[%c64, %c0_70] : memref<176x896xbf16, #tpu.memory_space<vmem>>, vector<80x896xbf16>
    %c4_71 = arith.constant 4 : index
    %c0_72 = arith.constant 0 : index
    %c0_73 = arith.constant 0 : index
    %103 = vector.load %arg4[%c4_71, %c0_72, %c0_73] : memref<7x896x128xbf16, #tpu.memory_space<vmem>>, vector<1x896x128xbf16>
    %104 = vector.shape_cast %103 : vector<1x896x128xbf16> to vector<896x128xbf16>
    %cst_74 = arith.constant dense<0.000000e+00> : vector<80x128xf32>
    %105 = tpu.matmul %102, %104, %cst_74 {dimension_numbers = #tpu.dot_dimension_numbers<[1], [0], [0], [1], [0, 0, 1, 1], [], []>} : vector<80x896xbf16>, vector<896x128xbf16>, vector<80x128xf32> -> vector<80x128xf32>
    %106 = arith.addf %101, %105 : vector<80x128xf32>
    %c80 = arith.constant 80 : index
    %c0_75 = arith.constant 0 : index
    %107 = vector.load %arg12[%c80, %c0_75] : memref<176x896xbf16, #tpu.memory_space<vmem>>, vector<80x896xbf16>
    %c5_76 = arith.constant 5 : index
    %c0_77 = arith.constant 0 : index
    %c0_78 = arith.constant 0 : index
    %108 = vector.load %arg4[%c5_76, %c0_77, %c0_78] : memref<7x896x128xbf16, #tpu.memory_space<vmem>>, vector<1x896x128xbf16>
    %109 = vector.shape_cast %108 : vector<1x896x128xbf16> to vector<896x128xbf16>
    %cst_79 = arith.constant dense<0.000000e+00> : vector<80x128xf32>
    %110 = tpu.matmul %107, %109, %cst_79 {dimension_numbers = #tpu.dot_dimension_numbers<[1], [0], [0], [1], [0, 0, 1, 1], [], []>} : vector<80x896xbf16>, vector<896x128xbf16>, vector<80x128xf32> -> vector<80x128xf32>
    %111 = arith.addf %106, %110 : vector<80x128xf32>
    %c96 = arith.constant 96 : index
    %c0_80 = arith.constant 0 : index
    %112 = vector.load %arg12[%c96, %c0_80] : memref<176x896xbf16, #tpu.memory_space<vmem>>, vector<80x896xbf16>
    %c6_81 = arith.constant 6 : index
    %c0_82 = arith.constant 0 : index
    %c0_83 = arith.constant 0 : index
    %113 = vector.load %arg4[%c6_81, %c0_82, %c0_83] : memref<7x896x128xbf16, #tpu.memory_space<vmem>>, vector<1x896x128xbf16>
    %114 = vector.shape_cast %113 : vector<1x896x128xbf16> to vector<896x128xbf16>
    %cst_84 = arith.constant dense<0.000000e+00> : vector<80x128xf32>
    %115 = tpu.matmul %112, %114, %cst_84 {dimension_numbers = #tpu.dot_dimension_numbers<[1], [0], [0], [1], [0, 0, 1, 1], [], []>} : vector<80x896xbf16>, vector<896x128xbf16>, vector<80x128xf32> -> vector<80x128xf32>
    %116 = arith.addf %111, %115 : vector<80x128xf32>
    %c0_85 = arith.constant 0 : index
    %c0_86 = arith.constant 0 : index
    %117 = vector.load %arg5[%c0_85, %c0_86] : memref<1x128xf32, #tpu.memory_space<vmem>>, vector<1x128xf32>
    %118 = vector.broadcast %117 : vector<1x128xf32> to vector<80x128xf32>
    %119 = arith.addf %116, %118 : vector<80x128xf32>
    %cst_87 = arith.constant 5.000000e-01 : f32
    %120 = vector.broadcast %cst_87 : f32 to vector<80x128xf32>
    %121 = arith.mulf %120, %119 : vector<80x128xf32>
    %cst_88 = arith.constant 1.41421354 : f32
    %122 = vector.broadcast %cst_88 : f32 to vector<80x128xf32>
    %123 = arith.divf %119, %122 : vector<80x128xf32>
    %124 = math.erf %123 : vector<80x128xf32>
    %cst_89 = arith.constant 1.000000e+00 : f32
    %125 = vector.broadcast %cst_89 : f32 to vector<80x128xf32>
    %126 = arith.addf %125, %124 : vector<80x128xf32>
    %127 = arith.mulf %121, %126 : vector<80x128xf32>
    %c0_90 = arith.constant 0 : index
    %c0_91 = arith.constant 0 : index
    %128 = vector.load %arg7[%c0_90, %c0_91] : memref<1x256xf32, #tpu.memory_space<vmem>>, vector<1x256xf32>
    %129 = vector.extract_strided_slice %127 {offsets = [0, 0], sizes = [1, 128], strides = [1, 1]} : vector<80x128xf32> to vector<1x128xf32>
    %130 = vector.extract_strided_slice %127 {offsets = [1, 0], sizes = [1, 128], strides = [1, 1]} : vector<80x128xf32> to vector<1x128xf32>
    %131 = arith.maximumf %129, %130 : vector<1x128xf32>
    %132 = vector.extract_strided_slice %127 {offsets = [16, 0], sizes = [1, 128], strides = [1, 1]} : vector<80x128xf32> to vector<1x128xf32>
    %133 = vector.extract_strided_slice %127 {offsets = [17, 0], sizes = [1, 128], strides = [1, 1]} : vector<80x128xf32> to vector<1x128xf32>
    %134 = arith.maximumf %132, %133 : vector<1x128xf32>
    %135 = arith.maximumf %131, %134 : vector<1x128xf32>
    %c0_92 = arith.constant 0 : index
    %c0_93 = arith.constant 0 : index
    %c0_94 = arith.constant 0 : index
    %136 = vector.load %arg6[%c0_92, %c0_93, %c0_94] : memref<4x128x256xf32, #tpu.memory_space<vmem>>, vector<1x128x256xf32>
    %137 = vector.shape_cast %136 : vector<1x128x256xf32> to vector<128x256xf32>
    %cst_95 = arith.constant dense<0.000000e+00> : vector<1x256xf32>
    %138 = tpu.matmul %135, %137, %cst_95 {dimension_numbers = #tpu.dot_dimension_numbers<[1], [0], [0], [1], [0, 0, 1, 1], [], []>} : vector<1x128xf32>, vector<128x256xf32>, vector<1x256xf32> -> vector<1x256xf32>
    %139 = arith.addf %128, %138 : vector<1x256xf32>
    %140 = vector.extract_strided_slice %127 {offsets = [2, 0], sizes = [1, 128], strides = [1, 1]} : vector<80x128xf32> to vector<1x128xf32>
    %141 = vector.extract_strided_slice %127 {offsets = [3, 0], sizes = [1, 128], strides = [1, 1]} : vector<80x128xf32> to vector<1x128xf32>
    %142 = arith.maximumf %140, %141 : vector<1x128xf32>
    %143 = vector.extract_strided_slice %127 {offsets = [18, 0], sizes = [1, 128], strides = [1, 1]} : vector<80x128xf32> to vector<1x128xf32>
    %144 = vector.extract_strided_slice %127 {offsets = [19, 0], sizes = [1, 128], strides = [1, 1]} : vector<80x128xf32> to vector<1x128xf32>
    %145 = arith.maximumf %143, %144 : vector<1x128xf32>
    %146 = arith.maximumf %142, %145 : vector<1x128xf32>
    %c1_96 = arith.constant 1 : index
    %c0_97 = arith.constant 0 : index
    %c0_98 = arith.constant 0 : index
    %147 = vector.load %arg6[%c1_96, %c0_97, %c0_98] : memref<4x128x256xf32, #tpu.memory_space<vmem>>, vector<1x128x256xf32>
    %148 = vector.shape_cast %147 : vector<1x128x256xf32> to vector<128x256xf32>
    %cst_99 = arith.constant dense<0.000000e+00> : vector<1x256xf32>
    %149 = tpu.matmul %146, %148, %cst_99 {dimension_numbers = #tpu.dot_dimension_numbers<[1], [0], [0], [1], [0, 0, 1, 1], [], []>} : vector<1x128xf32>, vector<128x256xf32>, vector<1x256xf32> -> vector<1x256xf32>
    %150 = arith.addf %139, %149 : vector<1x256xf32>
    %151 = vector.extract_strided_slice %127 {offsets = [32, 0], sizes = [1, 128], strides = [1, 1]} : vector<80x128xf32> to vector<1x128xf32>
    %152 = vector.extract_strided_slice %127 {offsets = [33, 0], sizes = [1, 128], strides = [1, 1]} : vector<80x128xf32> to vector<1x128xf32>
    %153 = arith.maximumf %151, %152 : vector<1x128xf32>
    %154 = vector.extract_strided_slice %127 {offsets = [48, 0], sizes = [1, 128], strides = [1, 1]} : vector<80x128xf32> to vector<1x128xf32>
    %155 = vector.extract_strided_slice %127 {offsets = [49, 0], sizes = [1, 128], strides = [1, 1]} : vector<80x128xf32> to vector<1x128xf32>
    %156 = arith.maximumf %154, %155 : vector<1x128xf32>
    %157 = arith.maximumf %153, %156 : vector<1x128xf32>
    %c2_100 = arith.constant 2 : index
    %c0_101 = arith.constant 0 : index
    %c0_102 = arith.constant 0 : index
    %158 = vector.load %arg6[%c2_100, %c0_101, %c0_102] : memref<4x128x256xf32, #tpu.memory_space<vmem>>, vector<1x128x256xf32>
    %159 = vector.shape_cast %158 : vector<1x128x256xf32> to vector<128x256xf32>
    %cst_103 = arith.constant dense<0.000000e+00> : vector<1x256xf32>
    %160 = tpu.matmul %157, %159, %cst_103 {dimension_numbers = #tpu.dot_dimension_numbers<[1], [0], [0], [1], [0, 0, 1, 1], [], []>} : vector<1x128xf32>, vector<128x256xf32>, vector<1x256xf32> -> vector<1x256xf32>
    %161 = arith.addf %150, %160 : vector<1x256xf32>
    %162 = vector.extract_strided_slice %127 {offsets = [34, 0], sizes = [1, 128], strides = [1, 1]} : vector<80x128xf32> to vector<1x128xf32>
    %163 = vector.extract_strided_slice %127 {offsets = [35, 0], sizes = [1, 128], strides = [1, 1]} : vector<80x128xf32> to vector<1x128xf32>
    %164 = arith.maximumf %162, %163 : vector<1x128xf32>
    %165 = vector.extract_strided_slice %127 {offsets = [50, 0], sizes = [1, 128], strides = [1, 1]} : vector<80x128xf32> to vector<1x128xf32>
    %166 = vector.extract_strided_slice %127 {offsets = [51, 0], sizes = [1, 128], strides = [1, 1]} : vector<80x128xf32> to vector<1x128xf32>
    %167 = arith.maximumf %165, %166 : vector<1x128xf32>
    %168 = arith.maximumf %164, %167 : vector<1x128xf32>
    %c3_104 = arith.constant 3 : index
    %c0_105 = arith.constant 0 : index
    %c0_106 = arith.constant 0 : index
    %169 = vector.load %arg6[%c3_104, %c0_105, %c0_106] : memref<4x128x256xf32, #tpu.memory_space<vmem>>, vector<1x128x256xf32>
    %170 = vector.shape_cast %169 : vector<1x128x256xf32> to vector<128x256xf32>
    %cst_107 = arith.constant dense<0.000000e+00> : vector<1x256xf32>
    %171 = tpu.matmul %168, %170, %cst_107 {dimension_numbers = #tpu.dot_dimension_numbers<[1], [0], [0], [1], [0, 0, 1, 1], [], []>} : vector<1x128xf32>, vector<128x256xf32>, vector<1x256xf32> -> vector<1x256xf32>
    %172 = arith.addf %161, %171 : vector<1x256xf32>
    %cst_108 = arith.constant 5.000000e-01 : f32
    %173 = vector.broadcast %cst_108 : f32 to vector<1x256xf32>
    %174 = arith.mulf %173, %172 : vector<1x256xf32>
    %cst_109 = arith.constant 1.41421354 : f32
    %175 = vector.broadcast %cst_109 : f32 to vector<1x256xf32>
    %176 = arith.divf %172, %175 : vector<1x256xf32>
    %177 = math.erf %176 : vector<1x256xf32>
    %cst_110 = arith.constant 1.000000e+00 : f32
    %178 = vector.broadcast %cst_110 : f32 to vector<1x256xf32>
    %179 = arith.addf %178, %177 : vector<1x256xf32>
    %180 = arith.mulf %174, %179 : vector<1x256xf32>
    %c0_111 = arith.constant 0 : index
    %c0_112 = arith.constant 0 : index
    %181 = vector.load %arg8[%c0_111, %c0_112] : memref<256x128xf32, #tpu.memory_space<vmem>>, vector<256x128xf32>
    %cst_113 = arith.constant dense<0.000000e+00> : vector<1x128xf32>
    %182 = tpu.matmul %180, %181, %cst_113 {dimension_numbers = #tpu.dot_dimension_numbers<[1], [0], [0], [1], [0, 0, 1, 1], [], []>} : vector<1x256xf32>, vector<256x128xf32>, vector<1x128xf32> -> vector<1x128xf32>
    %c0_114 = arith.constant 0 : index
    %c0_115 = arith.constant 0 : index
    %183 = vector.load %arg9[%c0_114, %c0_115] : memref<1x128xf32, #tpu.memory_space<vmem>>, vector<1x128xf32>
    %184 = arith.addf %182, %183 : vector<1x128xf32>
    %185 = vector.shape_cast %184 : vector<1x128xf32> to vector<1x128xf32>
    %186 = vector.broadcast %185 : vector<1x128xf32> to vector<8x128xf32>
    %c0_116 = arith.constant 0 : index
    %c0_117 = arith.constant 0 : index
    %c0_118 = arith.constant 0 : index
    %187 = vector.load %arg10[%c0_116, %c0_117, %c0_118] : memref<1x8x128xf32, #tpu.memory_space<vmem>>, vector<1x8x128xf32>
    %188 = vector.shape_cast %187 : vector<1x8x128xf32> to vector<8x128xf32>
    %189 = vector.shape_cast %186 : vector<8x128xf32> to vector<1x8x128xf32>
    tpu.vector_store %arg10[%c0_116, %c0_117, %c0_118], %189 {strides = array<i32>} : memref<1x8x128xf32, #tpu.memory_space<vmem>>, vector<1x8x128xf32>,
    return
  }
  func.func @transform_0(%arg0: i32) -> (i32, i32, i32) {
    %c0_i32 = arith.constant 0 : i32
    %c0_i32_0 = arith.constant 0 : i32
    %c0_i32_1 = arith.constant 0 : i32
    return %arg0, %c0_i32, %c0_i32_0 : i32, i32, i32
  }
  func.func @transform_1(%arg0: i32) -> (i32, i32) {
    %c0_i32 = arith.constant 0 : i32
    %c0_i32_0 = arith.constant 0 : i32
    %c0_i32_1 = arith.constant 0 : i32
    return %c0_i32, %c0_i32_0 : i32, i32
  }
  func.func @transform_2(%arg0: i32) -> (i32, i32) {
    %c0_i32 = arith.constant 0 : i32
    %c0_i32_0 = arith.constant 0 : i32
    %c0_i32_1 = arith.constant 0 : i32
    return %c0_i32, %c0_i32_0 : i32, i32
  }
  func.func @transform_3(%arg0: i32) -> (i32, i32, i32) {
    %c0_i32 = arith.constant 0 : i32
    %c0_i32_0 = arith.constant 0 : i32
    %c0_i32_1 = arith.constant 0 : i32
    %c0_i32_2 = arith.constant 0 : i32
    return %c0_i32, %c0_i32_0, %c0_i32_1 : i32, i32, i32
  }
  func.func @transform_4(%arg0: i32) -> (i32, i32) {
    %c0_i32 = arith.constant 0 : i32
    %c0_i32_0 = arith.constant 0 : i32
    %c0_i32_1 = arith.constant 0 : i32
    return %c0_i32, %c0_i32_0 : i32, i32
  }
  func.func @transform_5(%arg0: i32) -> (i32, i32, i32) {
    %c0_i32 = arith.constant 0 : i32
    %c0_i32_0 = arith.constant 0 : i32
    %c0_i32_1 = arith.constant 0 : i32
    %c0_i32_2 = arith.constant 0 : i32
    return %c0_i32, %c0_i32_0, %c0_i32_1 : i32, i32, i32
  }
  func.func @transform_6(%arg0: i32) -> (i32, i32) {
    %c0_i32 = arith.constant 0 : i32
    %c0_i32_0 = arith.constant 0 : i32
    %c0_i32_1 = arith.constant 0 : i32
    return %c0_i32, %c0_i32_0 : i32, i32
  }
  func.func @transform_7(%arg0: i32) -> (i32, i32) {
    %c0_i32 = arith.constant 0 : i32
    %c0_i32_0 = arith.constant 0 : i32
    %c0_i32_1 = arith.constant 0 : i32
    return %c0_i32, %c0_i32_0 : i32, i32
  }
  func.func @transform_8(%arg0: i32) -> (i32, i32) {
    %c0_i32 = arith.constant 0 : i32
    %c0_i32_0 = arith.constant 0 : i32
    %c0_i32_1 = arith.constant 0 : i32
    return %c0_i32, %c0_i32_0 : i32, i32
  }
  func.func @transform_9(%arg0: i32) -> (i32, i32, i32) {
    %c0_i32 = arith.constant 0 : i32
    %c0_i32_0 = arith.constant 0 : i32
    %c0_i32_1 = arith.constant 0 : i32
    return %arg0, %c0_i32, %c0_i32_0 : i32, i32, i32
  }
}

</mosaic_0001>

<llo_original>
// kernel: poolnet_forward.1
$region0: #{poolnet_forward.1}
  #allocation0 [shape = 'u32[]', space=smem, size = 0x4, offset = 0x4, fixed_abs, tag = 'smem constant byte address 0x4 - core index']
  #allocation1 [shape = 'u32[144,128]{1,0:T(1,128)}', space=vmem, size = 0x12000, scoped, tag = 'internal scratch']
  #allocation2 [shape = 'f32[184,128]{1,0:T(8,128)}', space=vmem, size = 0x17000, scoped, tag = 'scratch operand']
  #allocation3 [shape = 'bf16[176,896]{1,0:T(16,128)(2,1)}', space=vmem, size = 0x4d000, scoped, tag = 'scratch operand']
  %s0 = inlined_call_operand.vmem [shape: bf16[2,704,256], index: 0, kind: input, shape index: {}]
  %s1 = inlined_call_operand.vmem [shape: bf16[256,128], index: 1, kind: input, shape index: {}]
  %s2 = inlined_call_operand.vmem [shape: f32[1,128], index: 2, kind: input, shape index: {}]
  %s3 = inlined_call_operand.vmem [shape: bf16[7,896,128], index: 3, kind: input, shape index: {}]
  %s4 = inlined_call_operand.vmem [shape: f32[1,128], index: 4, kind: input, shape index: {}]
  %s5 = inlined_call_operand.vmem [shape: f32[4,128,256], index: 5, kind: input, shape index: {}]
  %s6 = inlined_call_operand.vmem [shape: f32[1,256], index: 6, kind: input, shape index: {}]
  %s7 = inlined_call_operand.vmem [shape: f32[256,128], index: 7, kind: input, shape index: {}]
  %s8 = inlined_call_operand.vmem [shape: f32[1,128], index: 8, kind: input, shape index: {}]
  %s9 = inlined_call_operand.vmem [shape: f32[2,8,128], index: 9, kind: output, shape index: {}]
  %s10 = sld [smem:[#allocation0]]
  $region69: #{poolnet_forward.1} parent=0
    _
  %s12 = ssub.s32 1, %s10
  %s13 = scalar_select 0, %s12, %s10
  loop: start=0, step=1, limit=4
  $region2: #{poolnet_forward.1} parent=0 // loop_pre_header
    _
  $region3: #{poolnet_forward.1} parent=0 // loop_header
    %s15 = sphi 0, %s19
    %p16 = scmp.ge.s32.totalorder %s15, 4
    %s25 = sphi 0, %s27
    %s28 = sphi 0, %s25
    %s29 = sphi 0, %s28
    %s45 = sphi 0, %s29
    %s49 = sphi 0, %s49
    %s51 = sphi 0, %s49
    %s52 = sphi 0, %s51
    %s66 = sphi 0, %s52
    %s70 = sphi 0, %s70
    %s72 = sphi 0, %s70
    %s73 = sphi 0, %s72
    %s87 = sphi 0, %s73
    %s91 = sphi 0, %s91
    %s93 = sphi 0, %s91
    %s94 = sphi 0, %s93
    %s108 = sphi 0, %s94
    %s112 = sphi 0, %s112
    %s114 = sphi 0, %s112
    %s115 = sphi 0, %s114
    %s129 = sphi 0, %s115
    %s133 = sphi 0, %s133
    %s135 = sphi 0, %s133
    %s136 = sphi 0, %s135
    %s150 = sphi 0, %s136
    %s154 = sphi 0, %s154
    %s156 = sphi 0, %s154
    %s157 = sphi 0, %s156
    %s171 = sphi 0, %s157
    %s175 = sphi 0, %s175
    %s177 = sphi 0, %s175
    %s178 = sphi 0, %s177
    %s192 = sphi 0, %s178
    %s196 = sphi 0, %s196
    %s198 = sphi 0, %s196
    %s199 = sphi 0, %s198
    %s213 = sphi 0, %s199
    %s219 = sphi 0, %s221
    %s222 = sphi 0, %s219
    %s223 = sphi 0, %s222
    %s239 = sphi 0, %s223
  $region4: #{poolnet_forward.1} parent=0 // loop_header_branch
    %18 = sbr.rel (%p16) target = $region8
  $region5: #{poolnet_forward.1} parent=0 // loop_body
    %s20 = ssub.s32 %s15, 1
    %s21 = ssub.s32 %s15, 2
    %s22 = sadd.s32 %s15, 1
    %s23 = ssub.s32 %s15, %s22
    %p24 = scmp.eq.s32.totalorder %s23, 0
    %s26 = sadd.s32 %s25, 1
    %s27 = scalar_select %p24, %s25, %s26
    %p30 = pneg %p24
    %p31 = scmp.eq.s32.totalorder %s15, 1
    %p32 = por %p30, %p31
    %p33 = scmp.ne.s32.totalorder %s25, %s28
    %p34 = scmp.eq.s32.totalorder %s15, 0
    %p35 = por %p33, %p34
    %p36 = scmp.ne.s32.totalorder %s25, %s28
    %p37 = scmp.eq.s32.totalorder %s20, 1
    %p38 = por %p36, %p37
    %p39 = scmp.ne.s32.totalorder %s28, %s29
    %p40 = scmp.eq.s32.totalorder %s20, 0
    %p41 = por %p39, %p40
    %p42 = scmp.ne.s32.totalorder %s28, %s29
    %p43 = scmp.eq.s32.totalorder %s21, 1
    %p44 = por %p42, %p43
    %p46 = scmp.ne.s32.totalorder %s29, %s45
    %p47 = scmp.eq.s32.totalorder %s21, 0
    %p48 = por %p46, %p47
    %s50 = sadd.s32 %s49, 1
    %p53 = scmp.eq.s32.totalorder %s15, 1
    %p54 = scmp.ne.s32.totalorder %s49, %s51
    %p55 = scmp.eq.s32.totalorder %s15, 0
    %p56 = por %p54, %p55
    %p57 = scmp.ne.s32.totalorder %s49, %s51
    %p58 = scmp.eq.s32.totalorder %s20, 1
    %p59 = por %p57, %p58
    %p60 = scmp.ne.s32.totalorder %s51, %s52
    %p61 = scmp.eq.s32.totalorder %s20, 0
    %p62 = por %p60, %p61
    %p63 = scmp.ne.s32.totalorder %s51, %s52
    %p64 = scmp.eq.s32.totalorder %s21, 1
    %p65 = por %p63, %p64
    %p67 = scmp.ne.s32.totalorder %s52, %s66
    %p68 = scmp.eq.s32.totalorder %s21, 0
    %p69 = por %p67, %p68
    %s71 = sadd.s32 %s70, 1
    %p74 = scmp.eq.s32.totalorder %s15, 1
    %p75 = scmp.ne.s32.totalorder %s70, %s72
    %p76 = scmp.eq.s32.totalorder %s15, 0
    %p77 = por %p75, %p76
    %p78 = scmp.ne.s32.totalorder %s70, %s72
    %p79 = scmp.eq.s32.totalorder %s20, 1
    %p80 = por %p78, %p79
    %p81 = scmp.ne.s32.totalorder %s72, %s73
    %p82 = scmp.eq.s32.totalorder %s20, 0
    %p83 = por %p81, %p82
    %p84 = scmp.ne.s32.totalorder %s72, %s73
    %p85 = scmp.eq.s32.totalorder %s21, 1
    %p86 = por %p84, %p85
    %p88 = scmp.ne.s32.totalorder %s73, %s87
    %p89 = scmp.eq.s32.totalorder %s21, 0
    %p90 = por %p88, %p89
    %s92 = sadd.s32 %s91, 1
    %p95 = scmp.eq.s32.totalorder %s15, 1
    %p96 = scmp.ne.s32.totalorder %s91, %s93
    %p97 = scmp.eq.s32.totalorder %s15, 0
    %p98 = por %p96, %p97
    %p99 = scmp.ne.s32.totalorder %s91, %s93
    %p100 = scmp.eq.s32.totalorder %s20, 1
    %p101 = por %p99, %p100
    %p102 = scmp.ne.s32.totalorder %s93, %s94
    %p103 = scmp.eq.s32.totalorder %s20, 0
    %p104 = por %p102, %p103
    %p105 = scmp.ne.s32.totalorder %s93, %s94
    %p106 = scmp.eq.s32.totalorder %s21, 1
    %p107 = por %p105, %p106
    %p109 = scmp.ne.s32.totalorder %s94, %s108
    %p110 = scmp.eq.s32.totalorder %s21, 0
    %p111 = por %p109, %p110
    %s113 = sadd.s32 %s112, 1
    %p116 = scmp.eq.s32.totalorder %s15, 1
    %p117 = scmp.ne.s32.totalorder %s112, %s114
    %p118 = scmp.eq.s32.totalorder %s15, 0
    %p119 = por %p117, %p118
    %p120 = scmp.ne.s32.totalorder %s112, %s114
    %p121 = scmp.eq.s32.totalorder %s20, 1
    %p122 = por %p120, %p121
    %p123 = scmp.ne.s32.totalorder %s114, %s115
    %p124 = scmp.eq.s32.totalorder %s20, 0
    %p125 = por %p123, %p124
    %p126 = scmp.ne.s32.totalorder %s114, %s115
    %p127 = scmp.eq.s32.totalorder %s21, 1
    %p128 = por %p126, %p127
    %p130 = scmp.ne.s32.totalorder %s115, %s129
    %p131 = scmp.eq.s32.totalorder %s21, 0
    %p132 = por %p130, %p131
    %s134 = sadd.s32 %s133, 1
    %p137 = scmp.eq.s32.totalorder %s15, 1
    %p138 = scmp.ne.s32.totalorder %s133, %s135
    %p139 = scmp.eq.s32.totalorder %s15, 0
    %p140 = por %p138, %p139
    %p141 = scmp.ne.s32.totalorder %s133, %s135
    %p142 = scmp.eq.s32.totalorder %s20, 1
    %p143 = por %p141, %p142
    %p144 = scmp.ne.s32.totalorder %s135, %s136
    %p145 = scmp.eq.s32.totalorder %s20, 0
    %p146 = por %p144, %p145
    %p147 = scmp.ne.s32.totalorder %s135, %s136
    %p148 = scmp.eq.s32.totalorder %s21, 1
    %p149 = por %p147, %p148
    %p151 = scmp.ne.s32.totalorder %s136, %s150
    %p152 = scmp.eq.s32.totalorder %s21, 0
    %p153 = por %p151, %p152
    %s155 = sadd.s32 %s154, 1
    %p158 = scmp.eq.s32.totalorder %s15, 1
    %p159 = scmp.ne.s32.totalorder %s154, %s156
    %p160 = scmp.eq.s32.totalorder %s15, 0
    %p161 = por %p159, %p160
    %p162 = scmp.ne.s32.totalorder %s154, %s156
    %p163 = scmp.eq.s32.totalorder %s20, 1
    %p164 = por %p162, %p163
    %p165 = scmp.ne.s32.totalorder %s156, %s157
    %p166 = scmp.eq.s32.totalorder %s20, 0
    %p167 = por %p165, %p166
    %p168 = scmp.ne.s32.totalorder %s156, %s157
    %p169 = scmp.eq.s32.totalorder %s21, 1
    %p170 = por %p168, %p169
    %p172 = scmp.ne.s32.totalorder %s157, %s171
    %p173 = scmp.eq.s32.totalorder %s21, 0
    %p174 = por %p172, %p173
    %s176 = sadd.s32 %s175, 1
    %p179 = scmp.eq.s32.totalorder %s15, 1
    %p180 = scmp.ne.s32.totalorder %s175, %s177
    %p181 = scmp.eq.s32.totalorder %s15, 0
    %p182 = por %p180, %p181
    %p183 = scmp.ne.s32.totalorder %s175, %s177
    %p184 = scmp.eq.s32.totalorder %s20, 1
    %p185 = por %p183, %p184
    %p186 = scmp.ne.s32.totalorder %s177, %s178
    %p187 = scmp.eq.s32.totalorder %s20, 0
    %p188 = por %p186, %p187
    %p189 = scmp.ne.s32.totalorder %s177, %s178
    %p190 = scmp.eq.s32.totalorder %s21, 1
    %p191 = por %p189, %p190
    %p193 = scmp.ne.s32.totalorder %s178, %s192
    %p194 = scmp.eq.s32.totalorder %s21, 0
    %p195 = por %p193, %p194
    %s197 = sadd.s32 %s196, 1
    %p200 = scmp.eq.s32.totalorder %s15, 1
    %p201 = scmp.ne.s32.totalorder %s196, %s198
    %p202 = scmp.eq.s32.totalorder %s15, 0
    %p203 = por %p201, %p202
    %p204 = scmp.ne.s32.totalorder %s196, %s198
    %p205 = scmp.eq.s32.totalorder %s20, 1
    %p206 = por %p204, %p205
    %p207 = scmp.ne.s32.totalorder %s198, %s199
    %p208 = scmp.eq.s32.totalorder %s20, 0
    %p209 = por %p207, %p208
    %p210 = scmp.ne.s32.totalorder %s198, %s199
    %p211 = scmp.eq.s32.totalorder %s21, 1
    %p212 = por %p210, %p211
    %p214 = scmp.ne.s32.totalorder %s199, %s213
    %p215 = scmp.eq.s32.totalorder %s21, 0
    %p216 = por %p214, %p215
    %s217 = ssub.s32 %s15, %s22
    %p218 = scmp.eq.s32.totalorder %s217, 0
    %s220 = sadd.s32 %s219, 1
    %s221 = scalar_select %p218, %s219, %s220
    %p224 = pneg %p218
    %p225 = scmp.eq.s32.totalorder %s15, 1
    %p226 = por %p224, %p225
    %p227 = scmp.ne.s32.totalorder %s219, %s222
    %p228 = scmp.eq.s32.totalorder %s15, 0
    %p229 = por %p227, %p228
    %p230 = scmp.ne.s32.totalorder %s219, %s222
    %p231 = scmp.eq.s32.totalorder %s20, 1
    %p232 = por %p230, %p231
    %p233 = scmp.ne.s32.totalorder %s222, %s223
    %p234 = scmp.eq.s32.totalorder %s20, 0
    %p235 = por %p233, %p234
    %p236 = scmp.ne.s32.totalorder %s222, %s223
    %p237 = scmp.eq.s32.totalorder %s21, 1
    %p238 = por %p236, %p237
    %p240 = scmp.ne.s32.totalorder %s223, %s239
    %p241 = scmp.eq.s32.totalorder %s21, 0
    %p242 = por %p240, %p241
    %p243 = scmp.le.s32.totalorder 1, %s15
    %p244 = scmp.lt.s32.totalorder %s15, 3
    %p245 = pnand %p243, %p244
    %p246 = pneg %p245
    // Predicated region
    $region9: #{poolnet_forward.1} parent=5 // pred_check
      _
    $region10: #{poolnet_forward.1} parent=5 // pred_check_branch
      %248 = sbr.rel (%p245) target = $region12
    $region11: #{poolnet_forward.1} parent=5 // pred_region
      %s249 = ssub.s32 %s15, 1
      // Predicated region
      $region13: #{poolnet_forward.1} parent=11 // pred_check
        %p250 = pneg %p62
      $region14: #{poolnet_forward.1} parent=11 // pred_check_branch
        %252 = sbr.rel (%p250) target = $region16
      $region15: #{poolnet_forward.1} parent=11 // pred_region
        _
      $region16: #{poolnet_forward.1} parent=11 // pred_fallthru
        _
      // Predicated region
      $region17: #{poolnet_forward.1} parent=11 // pred_check
        %p253 = pneg %p83
      $region18: #{poolnet_forward.1} parent=11 // pred_check_branch
        %255 = sbr.rel (%p253) target = $region20
      $region19: #{poolnet_forward.1} parent=11 // pred_region
        _
      $region20: #{poolnet_forward.1} parent=11 // pred_fallthru
        _
      // Predicated region
      $region21: #{poolnet_forward.1} parent=11 // pred_check
        %p256 = pneg %p104
      $region22: #{poolnet_forward.1} parent=11 // pred_check_branch
        %258 = sbr.rel (%p256) target = $region24
      $region23: #{poolnet_forward.1} parent=11 // pred_region
        _
      $region24: #{poolnet_forward.1} parent=11 // pred_fallthru
        _
      // Predicated region
      $region25: #{poolnet_forward.1} parent=11 // pred_check
        %p259 = pneg %p125
      $region26: #{poolnet_forward.1} parent=11 // pred_check_branch
        %261 = sbr.rel (%p259) target = $region28
      $region27: #{poolnet_forward.1} parent=11 // pred_region
        _
      $region28: #{poolnet_forward.1} parent=11 // pred_fallthru
        _
      // Predicated region
      $region29: #{poolnet_forward.1} parent=11 // pred_check
        %p262 = pneg %p146
      $region30: #{poolnet_forward.1} parent=11 // pred_check_branch
        %264 = sbr.rel (%p262) target = $region32
      $region31: #{poolnet_forward.1} parent=11 // pred_region
        _
      $region32: #{poolnet_forward.1} parent=11 // pred_fallthru
        _
      // Predicated region
      $region33: #{poolnet_forward.1} parent=11 // pred_check
        %p265 = pneg %p167
      $region34: #{poolnet_forward.1} parent=11 // pred_check_branch
        %267 = sbr.rel (%p265) target = $region36
      $region35: #{poolnet_forward.1} parent=11 // pred_region
        _
      $region36: #{poolnet_forward.1} parent=11 // pred_fallthru
        _
      // Predicated region
      $region37: #{poolnet_forward.1} parent=11 // pred_check
        %p268 = pneg %p188
      $region38: #{poolnet_forward.1} parent=11 // pred_check_branch
        %270 = sbr.rel (%p268) target = $region40
      $region39: #{poolnet_forward.1} parent=11 // pred_region
        _
      $region40: #{poolnet_forward.1} parent=11 // pred_fallthru
        _
      // Predicated region
      $region41: #{poolnet_forward.1} parent=11 // pred_check
        %p271 = pneg %p209
      $region42: #{poolnet_forward.1} parent=11 // pred_check_branch
        %273 = sbr.rel (%p271) target = $region44
      $region43: #{poolnet_forward.1} parent=11 // pred_region
        _
      $region44: #{poolnet_forward.1} parent=11 // pred_fallthru
        _
    $region12: #{poolnet_forward.1} parent=5 // pred_fallthru
      _
    %p274 = scmp.lt.s32.totalorder %s15, 2
    // Predicated region
    $region45: #{poolnet_forward.1} parent=5 // pred_check
      %p275 = pneg %p274
    $region46: #{poolnet_forward.1} parent=5 // pred_check_branch
      %277 = sbr.rel (%p275) target = $region48
    $region47: #{poolnet_forward.1} parent=5 // pred_region
      // Predicated region
      $region49: #{poolnet_forward.1} parent=47 // pred_check
        %p278 = pneg %p35
      $region50: #{poolnet_forward.1} parent=47 // pred_check_branch
        %280 = sbr.rel (%p278) target = $region52
      $region51: #{poolnet_forward.1} parent=47 // pred_region
        %p281 = scmp.lt.s32.totalorder %s15, 1
        %s282 = scalar_select %p281, %s15, 1
        %s283 = smul.addr %s282, 176
        %s284 = smul.addr %s283, 4
        %s285 = scalar_lea.vmem %s0, %s284
      $region52: #{poolnet_forward.1} parent=47 // pred_fallthru
        _
    $region48: #{poolnet_forward.1} parent=5 // pred_fallthru
      _
    %p286 = scmp.le.s32.totalorder 1, %s15
    %p287 = scmp.lt.s32.totalorder %s15, 3
    %p288 = pnand %p286, %p287
    %p289 = pneg %p288
    // Predicated region
    $region53: #{poolnet_forward.1} parent=5 // pred_check
      _
    $region54: #{poolnet_forward.1} parent=5 // pred_check_branch
      %291 = sbr.rel (%p288) target = $region56
    $region55: #{poolnet_forward.1} parent=5 // pred_region
      %s292 = ssub.s32 %s15, 1
      %p293 = scmp.lt.s32.totalorder %s20, 1
      %s294 = scalar_select %p293, %s20, 1
      %s295 = smul.addr %s294, 176
      %s296 = smul.addr %s295, 4
      %s297 = scalar_lea.vmem %s0, %s296
      %p298 = pneg %p41
      %p299 = pneg %p38
      %p300 = pneg %p62
      %p301 = pneg %p59
      %p302 = pneg %p83
      %p303 = pneg %p80
      %p304 = pneg %p104
      %p305 = pneg %p101
      %p306 = pneg %p125
      %p307 = pneg %p122
      %p308 = pneg %p146
      %p309 = pneg %p143
      %p310 = pneg %p167
      %p311 = pneg %p164
      %p312 = pneg %p188
      %p313 = pneg %p185
      %p314 = pneg %p209
      %p315 = pneg %p206
      %p316 = pneg %p235
      %p317 = pneg %p232
      %p318 = scmp.lt.s32.totalorder %s20, 1
      %s319 = scalar_select %p318, %s20, 1
      %s320 = smul.addr %s319, 8
      %s321 = scalar_lea.vmem %s9, %s320
      %p322 = scmp.lt.s32.totalorder %s20, 1
      %s323 = scalar_select %p322, %s20, 1
      %s324 = smul.addr %s323, 176
      %s325 = smul.addr %s324, 4
      %s326 = scalar_lea.vmem %s0, %s325
      %p327 = scmp.lt.s32.totalorder %s20, 1
      %s328 = scalar_select %p327, %s20, 1
      %s329 = smul.addr %s328, 8
      %s330 = scalar_lea.vmem %s9, %s329
      %v332 = vld [vmem:[%s2] sm:$0x1]
      %v333 = vld [vmem:[%s1] sm:$0xf]
      %v334 = vld [vmem:[%s1 + $0x4] sm:$0xf]
      %v335 = vld [vmem:[%s1 + $0x8] sm:$0xf]
      %v336 = vld [vmem:[%s1 + $0xc] sm:$0xf]
      %v337 = vld [vmem:[%s1 + $0x10] sm:$0xf]
      %v338 = vld [vmem:[%s1 + $0x14] sm:$0xf]
      %v339 = vld [vmem:[%s1 + $0x18] sm:$0xf]
      %v340 = vld [vmem:[%s1 + $0x1c] sm:$0xf]
      %v341 = vld [vmem:[%s1 + $0x20] sm:$0xf]
      %v342 = vld [vmem:[%s1 + $0x24] sm:$0xf]
      %v343 = vld [vmem:[%s1 + $0x28] sm:$0xf]
      %v344 = vld [vmem:[%s1 + $0x2c] sm:$0xf]
      %v345 = vld [vmem:[%s1 + $0x30] sm:$0xf]
      %v346 = vld [vmem:[%s1 + $0x34] sm:$0xf]
      %v347 = vld [vmem:[%s1 + $0x38] sm:$0xf]
      %v348 = vld [vmem:[%s1 + $0x3c] sm:$0xf]
      %v349 = vld [vmem:[%s1 + $0x40] sm:$0xf]
      %v350 = vld [vmem:[%s1 + $0x44] sm:$0xf]
      %v351 = vld [vmem:[%s1 + $0x48] sm:$0xf]
      %v352 = vld [vmem:[%s1 + $0x4c] sm:$0xf]
      %v353 = vld [vmem:[%s1 + $0x50] sm:$0xf]
      %v354 = vld [vmem:[%s1 + $0x54] sm:$0xf]
      %v355 = vld [vmem:[%s1 + $0x58] sm:$0xf]
      %v356 = vld [vmem:[%s1 + $0x5c] sm:$0xf]
      %v357 = vld [vmem:[%s1 + $0x60] sm:$0xf]
      %v358 = vld [vmem:[%s1 + $0x64] sm:$0xf]
      %v359 = vld [vmem:[%s1 + $0x68] sm:$0xf]
      %v360 = vld [vmem:[%s1 + $0x6c] sm:$0xf]
      %v361 = vld [vmem:[%s1 + $0x70] sm:$0xf]
      %v362 = vld [vmem:[%s1 + $0x74] sm:$0xf]
      %v363 = vld [vmem:[%s1 + $0x78] sm:$0xf]
      %v364 = vld [vmem:[%s1 + $0x7c] sm:$0xf]
      %v365 = vld [vmem:[%s326] sm:$0xff]
      %v366 = vld [vmem:[%s326 + $0x8] sm:$0xff]
      %v367 = vld [vmem:[%s326 + $0x10] sm:$0xff]
      %v368 = vld [vmem:[%s326 + $0x18] sm:$0xff]
      %v369 = vld [vmem:[%s326 + $0x20] sm:$0xff]
      %v370 = vld [vmem:[%s326 + $0x28] sm:$0xff]
      %v371 = vld [vmem:[%s326 + $0x30] sm:$0xff]
      %v372 = vld [vmem:[%s326 + $0x38] sm:$0xff]
      %v373 = vld [vmem:[%s326 + $0x40] sm:$0xff]
      %v374 = vld [vmem:[%s326 + $0x48] sm:$0xff]
      %v375 = vld [vmem:[%s326 + $0x50] sm:$0xff]
      %v376 = vld [vmem:[%s326 + $0x58] sm:$0xff]
      %v377 = vld [vmem:[%s326 + $0x60] sm:$0xff]
      %v378 = vld [vmem:[%s326 + $0x68] sm:$0xff]
      %v379 = vld [vmem:[%s326 + $0x70] sm:$0xff]
      %v380 = vld [vmem:[%s326 + $0x78] sm:$0xff]
      %v381 = vld [vmem:[%s326 + $0x80] sm:$0xff]
      %v382 = vld [vmem:[%s326 + $0x88] sm:$0xff]
      %v383 = vld [vmem:[%s326 + $0x90] sm:$0xff]
      %v384 = vld [vmem:[%s326 + $0x98] sm:$0xff]
      %v385 = vld [vmem:[%s326 + $0xa0] sm:$0xff]
      %v386 = vld [vmem:[%s326 + $0xa8] sm:$0xff]
      %v388 = vlaneseq
      %v389 = vshrl.u32 %v388, 7
      %v390 = vsub.s32 0, %v389
      %v391 = vrot.slane %v332, %v390
      %v415 = vunpack.c.l.b16 %v365
      %v416 = vunpack.c.h.b16 %v365
      %v417 = vunpack.c.l.b16 %v366
      %v418 = vunpack.c.h.b16 %v366
      %v419 = vunpack.c.l.b16 %v367
      %v420 = vunpack.c.h.b16 %v367
      %v421 = vunpack.c.l.b16 %v368
      %v422 = vunpack.c.h.b16 %v368
      %v423 = vunpack.c.l.b16 %v369
      %v424 = vunpack.c.h.b16 %v369
      %v425 = vunpack.c.l.b16 %v370
      %v426 = vunpack.c.h.b16 %v370
      %v427 = vunpack.c.l.b16 %v371
      %v428 = vunpack.c.h.b16 %v371
      %v429 = vunpack.c.l.b16 %v372
      %v430 = vunpack.c.h.b16 %v372
      %v431 = vunpack.c.l.b16 %v373
      %v432 = vunpack.c.h.b16 %v373
      %v433 = vunpack.c.l.b16 %v374
      %v434 = vunpack.c.h.b16 %v374
      %v435 = vunpack.c.l.b16 %v375
      %v436 = vunpack.c.h.b16 %v375
      %v437 = vunpack.c.l.b16 %v376
      %v438 = vunpack.c.h.b16 %v376
      %v439 = vunpack.c.l.b16 %v377
      %v440 = vunpack.c.h.b16 %v377
      %v441 = vunpack.c.l.b16 %v378
      %v442 = vunpack.c.h.b16 %v378
      %v443 = vunpack.c.l.b16 %v379
      %v444 = vunpack.c.h.b16 %v379
      %v445 = vunpack.c.l.b16 %v380
      %v446 = vunpack.c.h.b16 %v380
      %v447 = vunpack.c.l.b16 %v381
      %v448 = vunpack.c.h.b16 %v381
      %v449 = vunpack.c.l.b16 %v382
      %v450 = vunpack.c.h.b16 %v382
      %v451 = vunpack.c.l.b16 %v383
      %v452 = vunpack.c.h.b16 %v383
      %v453 = vunpack.c.l.b16 %v384
      %v454 = vunpack.c.h.b16 %v384
      %v455 = vunpack.c.l.b16 %v385
      %v456 = vunpack.c.h.b16 %v385
      %v457 = vunpack.c.l.b16 %v386
      %v458 = vunpack.c.h.b16 %v386
      %v459 = vpack.c.b16 %v417, %v415
      %v460 = vpack.c.b16 %v418, %v416
      %v461 = vpack.c.b16 %v421, %v419
      %v462 = vpack.c.b16 %v422, %v420
      %v463 = vpack.c.b16 %v425, %v423
      %v464 = vpack.c.b16 %v426, %v424
      %v465 = vpack.c.b16 %v429, %v427
      %v466 = vpack.c.b16 %v430, %v428
      %v467 = vpack.c.b16 %v433, %v431
      %v468 = vpack.c.b16 %v434, %v432
      %v469 = vpack.c.b16 %v437, %v435
      %v470 = vpack.c.b16 %v438, %v436
      %v471 = vpack.c.b16 %v441, %v439
      %v472 = vpack.c.b16 %v442, %v440
      %v473 = vpack.c.b16 %v445, %v443
      %v474 = vpack.c.b16 %v446, %v444
      %v475 = vpack.c.b16 %v449, %v447
      %v476 = vpack.c.b16 %v450, %v448
      %v477 = vpack.c.b16 %v453, %v451
      %v478 = vpack.c.b16 %v454, %v452
      %v479 = vpack.c.b16 %v457, %v455
      %v480 = vpack.c.b16 %v458, %v456
      %v535 = vunpack.c.l.b16 %v333
      %v536 = vunpack.c.l.b16 %v334
      %v537 = vunpack.c.l.b16 %v335
      %v538 = vunpack.c.l.b16 %v336
      %v539 = vunpack.c.l.b16 %v337
      %v540 = vunpack.c.l.b16 %v338
      %v541 = vunpack.c.l.b16 %v339
      %v542 = vunpack.c.l.b16 %v340
      %v543 = vunpack.c.l.b16 %v341
      %v544 = vunpack.c.l.b16 %v342
      %v545 = vunpack.c.l.b16 %v343
      %v546 = vunpack.c.l.b16 %v344
      %v547 = vunpack.c.l.b16 %v345
      %v548 = vunpack.c.l.b16 %v346
      %v549 = vunpack.c.l.b16 %v347
      %v550 = vunpack.c.l.b16 %v348
      %v551 = vunpack.c.l.b16 %v349
      %v552 = vunpack.c.l.b16 %v350
      %v553 = vunpack.c.l.b16 %v351
      %v554 = vunpack.c.l.b16 %v352
      %v555 = vunpack.c.l.b16 %v353
      %v556 = vunpack.c.l.b16 %v354
      %v557 = vunpack.c.l.b16 %v355
      %v558 = vunpack.c.l.b16 %v356
      %v559 = vunpack.c.l.b16 %v357
      %v560 = vunpack.c.l.b16 %v358
      %v561 = vunpack.c.l.b16 %v359
      %v562 = vunpack.c.l.b16 %v360
      %v563 = vunpack.c.l.b16 %v361
      %v564 = vunpack.c.l.b16 %v362
      %v565 = vunpack.c.l.b16 %v363
      %v566 = vunpack.c.l.b16 %v364
      %v567 = vpack.c.b16 %v536, %v535
      %v568 = vpack.c.b16 %v538, %v537
      %v569 = vpack.c.b16 %v540, %v539
      %v570 = vpack.c.b16 %v542, %v541
      %v571 = vpack.c.b16 %v544, %v543
      %v572 = vpack.c.b16 %v546, %v545
      %v573 = vpack.c.b16 %v548, %v547
      %v574 = vpack.c.b16 %v550, %v549
      %v575 = vpack.c.b16 %v552, %v551
      %v576 = vpack.c.b16 %v554, %v553
      %v577 = vpack.c.b16 %v556, %v555
      %v578 = vpack.c.b16 %v558, %v557
      %v579 = vpack.c.b16 %v560, %v559
      %v580 = vpack.c.b16 %v562, %v561
      %v581 = vpack.c.b16 %v564, %v563
      %v582 = vpack.c.b16 %v566, %v565
      %599 = vmatprep.subr.bf16.mxu0 0
      %600 = vmatpush1.bf16.msra.mxu0 %v567
      %601 = vmatprep.subr.bf16.mxu0 0
      %602 = vmatpush1.bf16.msra.mxu0 %v568
      %603 = vmatprep.subr.bf16.mxu0 0
      %604 = vmatpush1.bf16.msra.mxu0 %v569
      %605 = vmatprep.subr.bf16.mxu0 0
      %606 = vmatpush1.bf16.msra.mxu0 %v570
      %607 = vmatprep.subr.bf16.mxu0 0
      %608 = vmatpush1.bf16.msra.mxu0 %v571
      %609 = vmatprep.subr.bf16.mxu0 0
      %610 = vmatpush1.bf16.msra.mxu0 %v572
      %611 = vmatprep.subr.bf16.mxu0 0
      %612 = vmatpush1.bf16.msra.mxu0 %v573
      %613 = vmatprep.subr.bf16.mxu0 0
      %614 = vmatpush1.bf16.msra.mxu0 %v574
      %615 = vmatprep.subr.bf16.mxu0 0
      %616 = vmatpush1.bf16.msra.mxu0 %v575
      %617 = vmatprep.subr.bf16.mxu0 0
      %618 = vmatpush1.bf16.msra.mxu0 %v576
      %619 = vmatprep.subr.bf16.mxu0 0
      %620 = vmatpush1.bf16.msra.mxu0 %v577
      %621 = vmatprep.subr.bf16.mxu0 0
      %622 = vmatpush1.bf16.msra.mxu0 %v578
      %623 = vmatprep.subr.bf16.mxu0 0
      %624 = vmatpush1.bf16.msra.mxu0 %v579
      %625 = vmatprep.subr.bf16.mxu0 0
      %626 = vmatpush1.bf16.msra.mxu0 %v580
      %627 = vmatprep.subr.bf16.mxu0 0
      %628 = vmatpush1.bf16.msra.mxu0 %v581
      %629 = vmatprep.subr.bf16.mxu0 0
      %630 = vmatpush1.bf16.msra.mxu0 %v582
      %631 = vmatprep.mubr.bf16.mxu0 %v460
      %632 = vmatmul.mubr.bf16.gmra.mrb[0].mxu0 %v459
      %v633 = vpop.f32.mrb[0].mxu0
      %v634 = vadd.f32 %v391, %v633
      %v635 = vpop.f32.mrb[0].mxu0
      %v636 = vpop.f32.mrb[0].mxu0
      %v637 = vadd.f32 %v391, %v636
      %v638 = vpop.f32.mrb[0].mxu0
      %639 = vmatprep.mubr.bf16.mxu0 %v462
      %640 = vmatmul.mubr.bf16.gmra.mrb[0].mxu0 %v461
      %v641 = vpop.f32.mrb[0].mxu0
      %v642 = vadd.f32 %v391, %v641
      %v643 = vpop.f32.mrb[0].mxu0
      %v644 = vpop.f32.mrb[0].mxu0
      %v645 = vadd.f32 %v391, %v644
      %v646 = vpop.f32.mrb[0].mxu0
      %647 = vmatprep.mubr.bf16.mxu0 %v464
      %648 = vmatmul.mubr.bf16.gmra.mrb[0].mxu0 %v463
      %v649 = vpop.f32.mrb[0].mxu0
      %v650 = vadd.f32 %v391, %v649
      %v651 = vpop.f32.mrb[0].mxu0
      %v652 = vpop.f32.mrb[0].mxu0
      %v653 = vadd.f32 %v391, %v652
      %v654 = vpop.f32.mrb[0].mxu0
      %655 = vmatprep.mubr.bf16.mxu0 %v466
      %656 = vmatmul.mubr.bf16.gmra.mrb[0].mxu0 %v465
      %v657 = vpop.f32.mrb[0].mxu0
      %v658 = vadd.f32 %v391, %v657
      %v659 = vpop.f32.mrb[0].mxu0
      %v660 = vpop.f32.mrb[0].mxu0
      %v661 = vadd.f32 %v391, %v660
      %v662 = vpop.f32.mrb[0].mxu0
      %663 = vmatprep.mubr.bf16.mxu0 %v468
      %664 = vmatmul.mubr.bf16.gmra.mrb[0].mxu0 %v467
      %v665 = vpop.f32.mrb[0].mxu0
      %v666 = vadd.f32 %v391, %v665
      %v667 = vpop.f32.mrb[0].mxu0
      %v668 = vpop.f32.mrb[0].mxu0
      %v669 = vadd.f32 %v391, %v668
      %v670 = vpop.f32.mrb[0].mxu0
      %671 = vmatprep.mubr.bf16.mxu0 %v470
      %672 = vmatmul.mubr.bf16.gmra.mrb[0].mxu0 %v469
      %v673 = vpop.f32.mrb[0].mxu0
      %v674 = vadd.f32 %v391, %v673
      %v675 = vpop.f32.mrb[0].mxu0
      %v676 = vpop.f32.mrb[0].mxu0
      %v677 = vadd.f32 %v391, %v676
      %v678 = vpop.f32.mrb[0].mxu0
      %679 = vmatprep.mubr.bf16.mxu0 %v472
      %680 = vmatmul.mubr.bf16.gmra.mrb[0].mxu0 %v471
      %v681 = vpop.f32.mrb[0].mxu0
      %v682 = vadd.f32 %v391, %v681
      %v683 = vpop.f32.mrb[0].mxu0
      %v684 = vpop.f32.mrb[0].mxu0
      %v685 = vadd.f32 %v391, %v684
      %v686 = vpop.f32.mrb[0].mxu0
      %687 = vmatprep.mubr.bf16.mxu0 %v474
      %688 = vmatmul.mubr.bf16.gmra.mrb[0].mxu0 %v473
      %v689 = vpop.f32.mrb[0].mxu0
      %v690 = vadd.f32 %v391, %v689
      %v691 = vpop.f32.mrb[0].mxu0
      %v692 = vpop.f32.mrb[0].mxu0
      %v693 = vadd.f32 %v391, %v692
      %v694 = vpop.f32.mrb[0].mxu0
      %695 = vmatprep.mubr.bf16.mxu0 %v476
      %696 = vmatmul.mubr.bf16.gmra.mrb[0].mxu0 %v475
      %v697 = vpop.f32.mrb[0].mxu0
      %v698 = vadd.f32 %v391, %v697
      %v699 = vpop.f32.mrb[0].mxu0
      %v700 = vpop.f32.mrb[0].mxu0
      %v701 = vadd.f32 %v391, %v700
      %v702 = vpop.f32.mrb[0].mxu0
      %703 = vmatprep.mubr.bf16.mxu0 %v478
      %704 = vmatmul.mubr.bf16.gmra.mrb[0].mxu0 %v477
      %v705 = vpop.f32.mrb[0].mxu0
      %v706 = vadd.f32 %v391, %v705
      %v707 = vpop.f32.mrb[0].mxu0
      %v708 = vpop.f32.mrb[0].mxu0
      %v709 = vadd.f32 %v391, %v708
      %v710 = vpop.f32.mrb[0].mxu0
      %711 = vmatprep.mubr.bf16.mxu0 %v480
      %712 = vmatmul.mubr.bf16.gmra.mrb[0].mxu0 %v479
      %v713 = vpop.f32.mrb[0].mxu0
      %v714 = vadd.f32 %v391, %v713
      %v715 = vpop.f32.mrb[0].mxu0
      %v716 = vpop.f32.mrb[0].mxu0
      %v717 = vadd.f32 %v391, %v716
      %v718 = vpop.f32.mrb[0].mxu0
      %719 = vdwg.mxu0
      %v720 = vmul.f32 %v634, 0.5
      %v721 = vmul.f32 %v637, 0.5
      %v722 = vmul.f32 %v642, 0.5
      %v723 = vmul.f32 %v645, 0.5
      %v724 = vmul.f32 %v650, 0.5
      %v725 = vmul.f32 %v653, 0.5
      %v726 = vmul.f32 %v658, 0.5
      %v727 = vmul.f32 %v661, 0.5
      %v728 = vmul.f32 %v666, 0.5
      %v729 = vmul.f32 %v669, 0.5
      %v730 = vmul.f32 %v674, 0.5
      %v731 = vmul.f32 %v677, 0.5
      %v732 = vmul.f32 %v682, 0.5
      %v733 = vmul.f32 %v685, 0.5
      %v734 = vmul.f32 %v690, 0.5
      %v735 = vmul.f32 %v693, 0.5
      %v736 = vmul.f32 %v698, 0.5
      %v737 = vmul.f32 %v701, 0.5
      %v738 = vmul.f32 %v706, 0.5
      %v739 = vmul.f32 %v709, 0.5
      %v740 = vmul.f32 %v714, 0.5
      %v741 = vmul.f32 %v717, 0.5
      %v742 = vrcp.pop 1.4142135
      %v743 = vmul.f32 %v634, %v742
      %v744 = vmul.f32 %v637, %v742
      %v745 = vmul.f32 %v642, %v742
      %v746 = vmul.f32 %v645, %v742
      %v747 = vmul.f32 %v650, %v742
      %v748 = vmul.f32 %v653, %v742
      %v749 = vmul.f32 %v658, %v742
      %v750 = vmul.f32 %v661, %v742
      %v751 = vmul.f32 %v666, %v742
      %v752 = vmul.f32 %v669, %v742
      %v753 = vmul.f32 %v674, %v742
      %v754 = vmul.f32 %v677, %v742
      %v755 = vmul.f32 %v682, %v742
      %v756 = vmul.f32 %v685, %v742
      %v757 = vmul.f32 %v690, %v742
      %v758 = vmul.f32 %v693, %v742
      %v759 = vmul.f32 %v698, %v742
      %v760 = vmul.f32 %v701, %v742
      %v761 = vmul.f32 %v706, %v742
      %v762 = vmul.f32 %v709, %v742
      %v763 = vmul.f32 %v714, %v742
      %v764 = vmul.f32 %v717, %v742
      %v765 = verf.f32.pop %v743
      %v766 = verf.f32.pop %v744
      %v767 = verf.f32.pop %v745
      %v768 = verf.f32.pop %v746
      %v769 = verf.f32.pop %v747
      %v770 = verf.f32.pop %v748
      %v771 = verf.f32.pop %v749
      %v772 = verf.f32.pop %v750
      %v773 = verf.f32.pop %v751
      %v774 = verf.f32.pop %v752
      %v775 = verf.f32.pop %v753
      %v776 = verf.f32.pop %v754
      %v777 = verf.f32.pop %v755
      %v778 = verf.f32.pop %v756
      %v779 = verf.f32.pop %v757
      %v780 = verf.f32.pop %v758
      %v781 = verf.f32.pop %v759
      %v782 = verf.f32.pop %v760
      %v783 = verf.f32.pop %v761
      %v784 = verf.f32.pop %v762
      %v785 = verf.f32.pop %v763
      %v786 = verf.f32.pop %v764
      %v787 = vadd.f32 %v765, 1.0
      %v788 = vadd.f32 %v766, 1.0
      %v789 = vadd.f32 %v767, 1.0
      %v790 = vadd.f32 %v768, 1.0
      %v791 = vadd.f32 %v769, 1.0
      %v792 = vadd.f32 %v770, 1.0
      %v793 = vadd.f32 %v771, 1.0
      %v794 = vadd.f32 %v772, 1.0
      %v795 = vadd.f32 %v773, 1.0
      %v796 = vadd.f32 %v774, 1.0
      %v797 = vadd.f32 %v775, 1.0
      %v798 = vadd.f32 %v776, 1.0
      %v799 = vadd.f32 %v777, 1.0
      %v800 = vadd.f32 %v778, 1.0
      %v801 = vadd.f32 %v779, 1.0
      %v802 = vadd.f32 %v780, 1.0
      %v803 = vadd.f32 %v781, 1.0
      %v804 = vadd.f32 %v782, 1.0
      %v805 = vadd.f32 %v783, 1.0
      %v806 = vadd.f32 %v784, 1.0
      %v807 = vadd.f32 %v785, 1.0
      %v808 = vadd.f32 %v786, 1.0
      %v809 = vmul.f32 %v720, %v787
      %v810 = vmul.f32 %v721, %v788
      %v811 = vmul.f32 %v722, %v789
      %v812 = vmul.f32 %v723, %v790
      %v813 = vmul.f32 %v724, %v791
      %v814 = vmul.f32 %v725, %v792
      %v815 = vmul.f32 %v726, %v793
      %v816 = vmul.f32 %v727, %v794
      %v817 = vmul.f32 %v728, %v795
      %v818 = vmul.f32 %v729, %v796
      %v819 = vmul.f32 %v730, %v797
      %v820 = vmul.f32 %v731, %v798
      %v821 = vmul.f32 %v732, %v799
      %v822 = vmul.f32 %v733, %v800
      %v823 = vmul.f32 %v734, %v801
      %v824 = vmul.f32 %v735, %v802
      %v825 = vmul.f32 %v736, %v803
      %v826 = vmul.f32 %v737, %v804
      %v827 = vmul.f32 %v738, %v805
      %v828 = vmul.f32 %v739, %v806
      %v829 = vmul.f32 %v740, %v807
      %v830 = vmul.f32 %v741, %v808
      %v831 = vld [vmem:[%s326 + $0xb0] sm:$0xff]
      %v832 = vld [vmem:[%s326 + $0xb8] sm:$0xff]
      %v833 = vld [vmem:[%s326 + $0xc0] sm:$0xff]
      %v834 = vld [vmem:[%s326 + $0xc8] sm:$0xff]
      %v835 = vld [vmem:[%s326 + $0xd0] sm:$0xff]
      %v836 = vld [vmem:[%s326 + $0xd8] sm:$0xff]
      %v837 = vld [vmem:[%s326 + $0xe0] sm:$0xff]
      %v838 = vld [vmem:[%s326 + $0xe8] sm:$0xff]
      %v839 = vld [vmem:[%s326 + $0xf0] sm:$0xff]
      %v840 = vld [vmem:[%s326 + $0xf8] sm:$0xff]
      %v841 = vld [vmem:[%s326 + $0x100] sm:$0xff]
      %v842 = vld [vmem:[%s326 + $0x108] sm:$0xff]
      %v843 = vld [vmem:[%s326 + $0x110] sm:$0xff]
      %v844 = vld [vmem:[%s326 + $0x118] sm:$0xff]
      %v845 = vld [vmem:[%s326 + $0x120] sm:$0xff]
      %v846 = vld [vmem:[%s326 + $0x128] sm:$0xff]
      %v847 = vld [vmem:[%s326 + $0x130] sm:$0xff]
      %v848 = vld [vmem:[%s326 + $0x138] sm:$0xff]
      %v849 = vld [vmem:[%s326 + $0x140] sm:$0xff]
      %v850 = vld [vmem:[%s326 + $0x148] sm:$0xff]
      %v851 = vld [vmem:[%s326 + $0x150] sm:$0xff]
      %v852 = vld [vmem:[%s326 + $0x158] sm:$0xff]
      %v875 = vunpack.c.l.b16 %v831
      %v876 = vunpack.c.h.b16 %v831
      %v877 = vunpack.c.l.b16 %v832
      %v878 = vunpack.c.h.b16 %v832
      %v879 = vunpack.c.l.b16 %v833
      %v880 = vunpack.c.h.b16 %v833
      %v881 = vunpack.c.l.b16 %v834
      %v882 = vunpack.c.h.b16 %v834
      %v883 = vunpack.c.l.b16 %v835
      %v884 = vunpack.c.h.b16 %v835
      %v885 = vunpack.c.l.b16 %v836
      %v886 = vunpack.c.h.b16 %v836
      %v887 = vunpack.c.l.b16 %v837
      %v888 = vunpack.c.h.b16 %v837
      %v889 = vunpack.c.l.b16 %v838
      %v890 = vunpack.c.h.b16 %v838
      %v891 = vunpack.c.l.b16 %v839
      %v892 = vunpack.c.h.b16 %v839
      %v893 = vunpack.c.l.b16 %v840
      %v894 = vunpack.c.h.b16 %v840
      %v895 = vunpack.c.l.b16 %v841
      %v896 = vunpack.c.h.b16 %v841
      %v897 = vunpack.c.l.b16 %v842
      %v898 = vunpack.c.h.b16 %v842
      %v899 = vunpack.c.l.b16 %v843
      %v900 = vunpack.c.h.b16 %v843
      %v901 = vunpack.c.l.b16 %v844
      %v902 = vunpack.c.h.b16 %v844
      %v903 = vunpack.c.l.b16 %v845
      %v904 = vunpack.c.h.b16 %v845
      %v905 = vunpack.c.l.b16 %v846
      %v906 = vunpack.c.h.b16 %v846
      %v907 = vunpack.c.l.b16 %v847
      %v908 = vunpack.c.h.b16 %v847
      %v909 = vunpack.c.l.b16 %v848
      %v910 = vunpack.c.h.b16 %v848
      %v911 = vunpack.c.l.b16 %v849
      %v912 = vunpack.c.h.b16 %v849
      %v913 = vunpack.c.l.b16 %v850
      %v914 = vunpack.c.h.b16 %v850
      %v915 = vunpack.c.l.b16 %v851
      %v916 = vunpack.c.h.b16 %v851
      %v917 = vunpack.c.l.b16 %v852
      %v918 = vunpack.c.h.b16 %v852
      %v919 = vpack.c.b16 %v877, %v875
      %v920 = vpack.c.b16 %v878, %v876
      %v921 = vpack.c.b16 %v881, %v879
      %v922 = vpack.c.b16 %v882, %v880
      %v923 = vpack.c.b16 %v885, %v883
      %v924 = vpack.c.b16 %v886, %v884
      %v925 = vpack.c.b16 %v889, %v887
      %v926 = vpack.c.b16 %v890, %v888
      %v927 = vpack.c.b16 %v893, %v891
      %v928 = vpack.c.b16 %v894, %v892
      %v929 = vpack.c.b16 %v897, %v895
      %v930 = vpack.c.b16 %v898, %v896
      %v931 = vpack.c.b16 %v901, %v899
      %v932 = vpack.c.b16 %v902, %v900
      %v933 = vpack.c.b16 %v905, %v903
      %v934 = vpack.c.b16 %v906, %v904
      %v935 = vpack.c.b16 %v909, %v907
      %v936 = vpack.c.b16 %v910, %v908
      %v937 = vpack.c.b16 %v913, %v911
      %v938 = vpack.c.b16 %v914, %v912
      %v939 = vpack.c.b16 %v917, %v915
      %v940 = vpack.c.b16 %v918, %v916
      %963 = vmatprep.subr.bf16.mxu0 0
      %964 = vmatpush1.bf16.msra.mxu0 %v567
      %965 = vmatprep.subr.bf16.mxu0 0
      %966 = vmatpush1.bf16.msra.mxu0 %v568
      %967 = vmatprep.subr.bf16.mxu0 0
      %968 = vmatpush1.bf16.msra.mxu0 %v569
      %969 = vmatprep.subr.bf16.mxu0 0
      %970 = vmatpush1.bf16.msra.mxu0 %v570
      %971 = vmatprep.subr.bf16.mxu0 0
      %972 = vmatpush1.bf16.msra.mxu0 %v571
      %973 = vmatprep.subr.bf16.mxu0 0
      %974 = vmatpush1.bf16.msra.mxu0 %v572
      %975 = vmatprep.subr.bf16.mxu0 0
      %976 = vmatpush1.bf16.msra.mxu0 %v573
      %977 = vmatprep.subr.bf16.mxu0 0
      %978 = vmatpush1.bf16.msra.mxu0 %v574
      %979 = vmatprep.subr.bf16.mxu0 0
      %980 = vmatpush1.bf16.msra.mxu0 %v575
      %981 = vmatprep.subr.bf16.mxu0 0
      %982 = vmatpush1.bf16.msra.mxu0 %v576
      %983 = vmatprep.subr.bf16.mxu0 0
      %984 = vmatpush1.bf16.msra.mxu0 %v577
      %985 = vmatprep.subr.bf16.mxu0 0
      %986 = vmatpush1.bf16.msra.mxu0 %v578
      %987 = vmatprep.subr.bf16.mxu0 0
      %988 = vmatpush1.bf16.msra.mxu0 %v579
      %989 = vmatprep.subr.bf16.mxu0 0
      %990 = vmatpush1.bf16.msra.mxu0 %v580
      %991 = vmatprep.subr.bf16.mxu0 0
      %992 = vmatpush1.bf16.msra.mxu0 %v581
      %993 = vmatprep.subr.bf16.mxu0 0
      %994 = vmatpush1.bf16.msra.mxu0 %v582
      %995 = vmatprep.mubr.bf16.mxu0 %v920
      %996 = vmatmul.mubr.bf16.gmra.mrb[0].mxu0 %v919
      %v997 = vpop.f32.mrb[0].mxu0
      %v998 = vadd.f32 %v391, %v997
      %v999 = vpop.f32.mrb[0].mxu0
      %v1000 = vpop.f32.mrb[0].mxu0
      %v1001 = vadd.f32 %v391, %v1000
      %v1002 = vpop.f32.mrb[0].mxu0
      %1003 = vmatprep.mubr.bf16.mxu0 %v922
      %1004 = vmatmul.mubr.bf16.gmra.mrb[0].mxu0 %v921
      %v1005 = vpop.f32.mrb[0].mxu0
      %v1006 = vadd.f32 %v391, %v1005
      %v1007 = vpop.f32.mrb[0].mxu0
      %v1008 = vpop.f32.mrb[0].mxu0
      %v1009 = vadd.f32 %v391, %v1008
      %v1010 = vpop.f32.mrb[0].mxu0
      %1011 = vmatprep.mubr.bf16.mxu0 %v924
      %1012 = vmatmul.mubr.bf16.gmra.mrb[0].mxu0 %v923
      %v1013 = vpop.f32.mrb[0].mxu0
      %v1014 = vadd.f32 %v391, %v1013
      %v1015 = vpop.f32.mrb[0].mxu0
      %v1016 = vpop.f32.mrb[0].mxu0
      %v1017 = vadd.f32 %v391, %v1016
      %v1018 = vpop.f32.mrb[0].mxu0
      %1019 = vmatprep.mubr.bf16.mxu0 %v926
      %1020 = vmatmul.mubr.bf16.gmra.mrb[0].mxu0 %v925
      %v1021 = vpop.f32.mrb[0].mxu0
      %v1022 = vadd.f32 %v391, %v1021
      %v1023 = vpop.f32.mrb[0].mxu0
      %v1024 = vpop.f32.mrb[0].mxu0
      %v1025 = vadd.f32 %v391, %v1024
      %v1026 = vpop.f32.mrb[0].mxu0
      %1027 = vmatprep.mubr.bf16.mxu0 %v928
      %1028 = vmatmul.mubr.bf16.gmra.mrb[0].mxu0 %v927
      %v1029 = vpop.f32.mrb[0].mxu0
      %v1030 = vadd.f32 %v391, %v1029
      %v1031 = vpop.f32.mrb[0].mxu0
      %v1032 = vpop.f32.mrb[0].mxu0
      %v1033 = vadd.f32 %v391, %v1032
      %v1034 = vpop.f32.mrb[0].mxu0
      %1035 = vmatprep.mubr.bf16.mxu0 %v930
      %1036 = vmatmul.mubr.bf16.gmra.mrb[0].mxu0 %v929
      %v1037 = vpop.f32.mrb[0].mxu0
      %v1038 = vadd.f32 %v391, %v1037
      %v1039 = vpop.f32.mrb[0].mxu0
      %v1040 = vpop.f32.mrb[0].mxu0
      %v1041 = vadd.f32 %v391, %v1040
      %v1042 = vpop.f32.mrb[0].mxu0
      %1043 = vmatprep.mubr.bf16.mxu0 %v932
      %1044 = vmatmul.mubr.bf16.gmra.mrb[0].mxu0 %v931
      %v1045 = vpop.f32.mrb[0].mxu0
      %v1046 = vadd.f32 %v391, %v1045
      %v1047 = vpop.f32.mrb[0].mxu0
      %v1048 = vpop.f32.mrb[0].mxu0
      %v1049 = vadd.f32 %v391, %v1048
      %v1050 = vpop.f32.mrb[0].mxu0
      %1051 = vmatprep.mubr.bf16.mxu0 %v934
      %1052 = vmatmul.mubr.bf16.gmra.mrb[0].mxu0 %v933
      %v1053 = vpop.f32.mrb[0].mxu0
      %v1054 = vadd.f32 %v391, %v1053
      %v1055 = vpop.f32.mrb[0].mxu0
      %v1056 = vpop.f32.mrb[0].mxu0
      %v1057 = vadd.f32 %v391, %v1056
      %v1058 = vpop.f32.mrb[0].mxu0
      %1059 = vmatprep.mubr.bf16.mxu0 %v936
      %1060 = vmatmul.mubr.bf16.gmra.mrb[0].mxu0 %v935
      %v1061 = vpop.f32.mrb[0].mxu0
      %v1062 = vadd.f32 %v391, %v1061
      %v1063 = vpop.f32.mrb[0].mxu0
      %v1064 = vpop.f32.mrb[0].mxu0
      %v1065 = vadd.f32 %v391, %v1064
      %v1066 = vpop.f32.mrb[0].mxu0
      %1067 = vmatprep.mubr.bf16.mxu0 %v938
      %1068 = vmatmul.mubr.bf16.gmra.mrb[0].mxu0 %v937
      %v1069 = vpop.f32.mrb[0].mxu0
      %v1070 = vadd.f32 %v391, %v1069
      %v1071 = vpop.f32.mrb[0].mxu0
      %v1072 = vpop.f32.mrb[0].mxu0
      %v1073 = vadd.f32 %v391, %v1072
      %v1074 = vpop.f32.mrb[0].mxu0
      %1075 = vmatprep.mubr.bf16.mxu0 %v940
      %1076 = vmatmul.mubr.bf16.gmra.mrb[0].mxu0 %v939
      %v1077 = vpop.f32.mrb[0].mxu0
      %v1078 = vadd.f32 %v391, %v1077
      %v1079 = vpop.f32.mrb[0].mxu0
      %v1080 = vpop.f32.mrb[0].mxu0
      %v1081 = vadd.f32 %v391, %v1080
      %v1082 = vpop.f32.mrb[0].mxu0
      %1083 = vdwg.mxu0
      %v1084 = vmul.f32 %v998, 0.5
      %v1085 = vmul.f32 %v1001, 0.5
      %v1086 = vmul.f32 %v1006, 0.5
      %v1087 = vmul.f32 %v1009, 0.5
      %v1088 = vmul.f32 %v1014, 0.5
      %v1089 = vmul.f32 %v1017, 0.5
      %v1090 = vmul.f32 %v1022, 0.5
      %v1091 = vmul.f32 %v1025, 0.5
      %v1092 = vmul.f32 %v1030, 0.5
      %v1093 = vmul.f32 %v1033, 0.5
      %v1094 = vmul.f32 %v1038, 0.5
      %v1095 = vmul.f32 %v1041, 0.5
      %v1096 = vmul.f32 %v1046, 0.5
      %v1097 = vmul.f32 %v1049, 0.5
      %v1098 = vmul.f32 %v1054, 0.5
      %v1099 = vmul.f32 %v1057, 0.5
      %v1100 = vmul.f32 %v1062, 0.5
      %v1101 = vmul.f32 %v1065, 0.5
      %v1102 = vmul.f32 %v1070, 0.5
      %v1103 = vmul.f32 %v1073, 0.5
      %v1104 = vmul.f32 %v1078, 0.5
      %v1105 = vmul.f32 %v1081, 0.5
      %v1106 = vmul.f32 %v998, %v742
      %v1107 = vmul.f32 %v1001, %v742
      %v1108 = vmul.f32 %v1006, %v742
      %v1109 = vmul.f32 %v1009, %v742
      %v1110 = vmul.f32 %v1014, %v742
      %v1111 = vmul.f32 %v1017, %v742
      %v1112 = vmul.f32 %v1022, %v742
      %v1113 = vmul.f32 %v1025, %v742
      %v1114 = vmul.f32 %v1030, %v742
      %v1115 = vmul.f32 %v1033, %v742
      %v1116 = vmul.f32 %v1038, %v742
      %v1117 = vmul.f32 %v1041, %v742
      %v1118 = vmul.f32 %v1046, %v742
      %v1119 = vmul.f32 %v1049, %v742
      %v1120 = vmul.f32 %v1054, %v742
      %v1121 = vmul.f32 %v1057, %v742
      %v1122 = vmul.f32 %v1062, %v742
      %v1123 = vmul.f32 %v1065, %v742
      %v1124 = vmul.f32 %v1070, %v742
      %v1125 = vmul.f32 %v1073, %v742
      %v1126 = vmul.f32 %v1078, %v742
      %v1127 = vmul.f32 %v1081, %v742
      %v1128 = verf.f32.pop %v1106
      %v1129 = verf.f32.pop %v1107
      %v1130 = verf.f32.pop %v1108
      %v1131 = verf.f32.pop %v1109
      %v1132 = verf.f32.pop %v1110
      %v1133 = verf.f32.pop %v1111
      %v1134 = verf.f32.pop %v1112
      %v1135 = verf.f32.pop %v1113
      %v1136 = verf.f32.pop %v1114
      %v1137 = verf.f32.pop %v1115
      %v1138 = verf.f32.pop %v1116
      %v1139 = verf.f32.pop %v1117
      %v1140 = verf.f32.pop %v1118
      %v1141 = verf.f32.pop %v1119
      %v1142 = verf.f32.pop %v1120
      %v1143 = verf.f32.pop %v1121
      %v1144 = verf.f32.pop %v1122
      %v1145 = verf.f32.pop %v1123
      %v1146 = verf.f32.pop %v1124
      %v1147 = verf.f32.pop %v1125
      %v1148 = verf.f32.pop %v1126
      %v1149 = verf.f32.pop %v1127
      %v1150 = vadd.f32 %v1128, 1.0
      %v1151 = vadd.f32 %v1129, 1.0
      %v1152 = vadd.f32 %v1130, 1.0
      %v1153 = vadd.f32 %v1131, 1.0
      %v1154 = vadd.f32 %v1132, 1.0
      %v1155 = vadd.f32 %v1133, 1.0
      %v1156 = vadd.f32 %v1134, 1.0
      %v1157 = vadd.f32 %v1135, 1.0
      %v1158 = vadd.f32 %v1136, 1.0
      %v1159 = vadd.f32 %v1137, 1.0
      %v1160 = vadd.f32 %v1138, 1.0
      %v1161 = vadd.f32 %v1139, 1.0
      %v1162 = vadd.f32 %v1140, 1.0
      %v1163 = vadd.f32 %v1141, 1.0
      %v1164 = vadd.f32 %v1142, 1.0
      %v1165 = vadd.f32 %v1143, 1.0
      %v1166 = vadd.f32 %v1144, 1.0
      %v1167 = vadd.f32 %v1145, 1.0
      %v1168 = vadd.f32 %v1146, 1.0
      %v1169 = vadd.f32 %v1147, 1.0
      %v1170 = vadd.f32 %v1148, 1.0
      %v1171 = vadd.f32 %v1149, 1.0
      %v1172 = vmul.f32 %v1084, %v1150
      %v1173 = vmul.f32 %v1085, %v1151
      %v1174 = vmul.f32 %v1086, %v1152
      %v1175 = vmul.f32 %v1087, %v1153
      %v1176 = vmul.f32 %v1088, %v1154
      %v1177 = vmul.f32 %v1089, %v1155
      %v1178 = vmul.f32 %v1090, %v1156
      %v1179 = vmul.f32 %v1091, %v1157
      %v1180 = vmul.f32 %v1092, %v1158
      %v1181 = vmul.f32 %v1093, %v1159
      %v1182 = vmul.f32 %v1094, %v1160
      %v1183 = vmul.f32 %v1095, %v1161
      %v1184 = vmul.f32 %v1096, %v1162
      %v1185 = vmul.f32 %v1097, %v1163
      %v1186 = vmul.f32 %v1098, %v1164
      %v1187 = vmul.f32 %v1099, %v1165
      %v1188 = vmul.f32 %v1100, %v1166
      %v1189 = vmul.f32 %v1101, %v1167
      %v1190 = vmul.f32 %v1102, %v1168
      %v1191 = vmul.f32 %v1103, %v1169
      %v1192 = vmul.f32 %v1104, %v1170
      %v1193 = vmul.f32 %v1105, %v1171
      %v1194 = vmax.f32 %v809, %v1172
      %v1195 = vmax.f32 %v810, %v1173
      %v1196 = vmax.f32 %v811, %v1174
      %v1197 = vmax.f32 %v812, %v1175
      %v1198 = vmax.f32 %v813, %v1176
      %v1199 = vmax.f32 %v814, %v1177
      %v1200 = vmax.f32 %v815, %v1178
      %v1201 = vmax.f32 %v816, %v1179
      %v1202 = vmax.f32 %v817, %v1180
      %v1203 = vmax.f32 %v818, %v1181
      %v1204 = vmax.f32 %v819, %v1182
      %v1205 = vmax.f32 %v820, %v1183
      %v1206 = vmax.f32 %v821, %v1184
      %v1207 = vmax.f32 %v822, %v1185
      %v1208 = vmax.f32 %v823, %v1186
      %v1209 = vmax.f32 %v824, %v1187
      %v1210 = vmax.f32 %v825, %v1188
      %v1211 = vmax.f32 %v826, %v1189
      %v1212 = vmax.f32 %v827, %v1190
      %v1213 = vmax.f32 %v828, %v1191
      %v1214 = vmax.f32 %v829, %v1192
      %v1215 = vmax.f32 %v830, %v1193
      %v1216 = vld [vmem:[%s326 + $0x160] sm:$0xff]
      %v1217 = vld [vmem:[%s326 + $0x168] sm:$0xff]
      %v1218 = vld [vmem:[%s326 + $0x170] sm:$0xff]
      %v1219 = vld [vmem:[%s326 + $0x178] sm:$0xff]
      %v1220 = vld [vmem:[%s326 + $0x180] sm:$0xff]
      %v1221 = vld [vmem:[%s326 + $0x188] sm:$0xff]
      %v1222 = vld [vmem:[%s326 + $0x190] sm:$0xff]
      %v1223 = vld [vmem:[%s326 + $0x198] sm:$0xff]
      %v1224 = vld [vmem:[%s326 + $0x1a0] sm:$0xff]
      %v1225 = vld [vmem:[%s326 + $0x1a8] sm:$0xff]
      %v1226 = vld [vmem:[%s326 + $0x1b0] sm:$0xff]
      %v1227 = vld [vmem:[%s326 + $0x1b8] sm:$0xff]
      %v1228 = vld [vmem:[%s326 + $0x1c0] sm:$0xff]
      %v1229 = vld [vmem:[%s326 + $0x1c8] sm:$0xff]
      %v1230 = vld [vmem:[%s326 + $0x1d0] sm:$0xff]
      %v1231 = vld [vmem:[%s326 + $0x1d8] sm:$0xff]
      %v1232 = vld [vmem:[%s326 + $0x1e0] sm:$0xff]
      %v1233 = vld [vmem:[%s326 + $0x1e8] sm:$0xff]
      %v1234 = vld [vmem:[%s326 + $0x1f0] sm:$0xff]
      %v1235 = vld [vmem:[%s326 + $0x1f8] sm:$0xff]
      %v1236 = vld [vmem:[%s326 + $0x200] sm:$0xff]
      %v1237 = vld [vmem:[%s326 + $0x208] sm:$0xff]
      %v1260 = vunpack.c.l.b16 %v1216
      %v1261 = vunpack.c.h.b16 %v1216
      %v1262 = vunpack.c.l.b16 %v1217
      %v1263 = vunpack.c.h.b16 %v1217
      %v1264 = vunpack.c.l.b16 %v1218
      %v1265 = vunpack.c.h.b16 %v1218
      %v1266 = vunpack.c.l.b16 %v1219
      %v1267 = vunpack.c.h.b16 %v1219
      %v1268 = vunpack.c.l.b16 %v1220
      %v1269 = vunpack.c.h.b16 %v1220
      %v1270 = vunpack.c.l.b16 %v1221
      %v1271 = vunpack.c.h.b16 %v1221
      %v1272 = vunpack.c.l.b16 %v1222
      %v1273 = vunpack.c.h.b16 %v1222
      %v1274 = vunpack.c.l.b16 %v1223
      %v1275 = vunpack.c.h.b16 %v1223
      %v1276 = vunpack.c.l.b16 %v1224
      %v1277 = vunpack.c.h.b16 %v1224
      %v1278 = vunpack.c.l.b16 %v1225
      %v1279 = vunpack.c.h.b16 %v1225
      %v1280 = vunpack.c.l.b16 %v1226
      %v1281 = vunpack.c.h.b16 %v1226
      %v1282 = vunpack.c.l.b16 %v1227
      %v1283 = vunpack.c.h.b16 %v1227
      %v1284 = vunpack.c.l.b16 %v1228
      %v1285 = vunpack.c.h.b16 %v1228
      %v1286 = vunpack.c.l.b16 %v1229
      %v1287 = vunpack.c.h.b16 %v1229
      %v1288 = vunpack.c.l.b16 %v1230
      %v1289 = vunpack.c.h.b16 %v1230
      %v1290 = vunpack.c.l.b16 %v1231
      %v1291 = vunpack.c.h.b16 %v1231
      %v1292 = vunpack.c.l.b16 %v1232
      %v1293 = vunpack.c.h.b16 %v1232
      %v1294 = vunpack.c.l.b16 %v1233
      %v1295 = vunpack.c.h.b16 %v1233
      %v1296 = vunpack.c.l.b16 %v1234
      %v1297 = vunpack.c.h.b16 %v1234
      %v1298 = vunpack.c.l.b16 %v1235
      %v1299 = vunpack.c.h.b16 %v1235
      %v1300 = vunpack.c.l.b16 %v1236
      %v1301 = vunpack.c.h.b16 %v1236
      %v1302 = vunpack.c.l.b16 %v1237
      %v1303 = vunpack.c.h.b16 %v1237
      %v1304 = vpack.c.b16 %v1262, %v1260
      %v1305 = vpack.c.b16 %v1263, %v1261
      %v1306 = vpack.c.b16 %v1266, %v1264
      %v1307 = vpack.c.b16 %v1267, %v1265
      %v1308 = vpack.c.b16 %v1270, %v1268
      %v1309 = vpack.c.b16 %v1271, %v1269
      %v1310 = vpack.c.b16 %v1274, %v1272
      %v1311 = vpack.c.b16 %v1275, %v1273
      %v1312 = vpack.c.b16 %v1278, %v1276
      %v1313 = vpack.c.b16 %v1279, %v1277
      %v1314 = vpack.c.b16 %v1282, %v1280
      %v1315 = vpack.c.b16 %v1283, %v1281
      %v1316 = vpack.c.b16 %v1286, %v1284
      %v1317 = vpack.c.b16 %v1287, %v1285
      %v1318 = vpack.c.b16 %v1290, %v1288
      %v1319 = vpack.c.b16 %v1291, %v1289
      %v1320 = vpack.c.b16 %v1294, %v1292
      %v1321 = vpack.c.b16 %v1295, %v1293
      %v1322 = vpack.c.b16 %v1298, %v1296
      %v1323 = vpack.c.b16 %v1299, %v1297
      %v1324 = vpack.c.b16 %v1302, %v1300
      %v1325 = vpack.c.b16 %v1303, %v1301
      %1348 = vmatprep.subr.bf16.mxu0 0
      %1349 = vmatpush1.bf16.msra.mxu0 %v567
      %1350 = vmatprep.subr.bf16.mxu0 0
      %1351 = vmatpush1.bf16.msra.mxu0 %v568
      %1352 = vmatprep.subr.bf16.mxu0 0
      %1353 = vmatpush1.bf16.msra.mxu0 %v569
      %1354 = vmatprep.subr.bf16.mxu0 0
      %1355 = vmatpush1.bf16.msra.mxu0 %v570
      %1356 = vmatprep.subr.bf16.mxu0 0
      %1357 = vmatpush1.bf16.msra.mxu0 %v571
      %1358 = vmatprep.subr.bf16.mxu0 0
      %1359 = vmatpush1.bf16.msra.mxu0 %v572
      %1360 = vmatprep.subr.bf16.mxu0 0
      %1361 = vmatpush1.bf16.msra.mxu0 %v573
      %1362 = vmatprep.subr.bf16.mxu0 0
      %1363 = vmatpush1.bf16.msra.mxu0 %v574
      %1364 = vmatprep.subr.bf16.mxu0 0
      %1365 = vmatpush1.bf16.msra.mxu0 %v575
      %1366 = vmatprep.subr.bf16.mxu0 0
      %1367 = vmatpush1.bf16.msra.mxu0 %v576
      %1368 = vmatprep.subr.bf16.mxu0 0
      %1369 = vmatpush1.bf16.msra.mxu0 %v577
      %1370 = vmatprep.subr.bf16.mxu0 0
      %1371 = vmatpush1.bf16.msra.mxu0 %v578
      %1372 = vmatprep.subr.bf16.mxu0 0
      %1373 = vmatpush1.bf16.msra.mxu0 %v579
      %1374 = vmatprep.subr.bf16.mxu0 0
      %1375 = vmatpush1.bf16.msra.mxu0 %v580
      %1376 = vmatprep.subr.bf16.mxu0 0
      %1377 = vmatpush1.bf16.msra.mxu0 %v581
      %1378 = vmatprep.subr.bf16.mxu0 0
      %1379 = vmatpush1.bf16.msra.mxu0 %v582
      %1380 = vmatprep.mubr.bf16.mxu0 %v1305
      %1381 = vmatmul.mubr.bf16.gmra.mrb[0].mxu0 %v1304
      %v1382 = vpop.f32.mrb[0].mxu0
      %v1383 = vadd.f32 %v391, %v1382
      %v1384 = vpop.f32.mrb[0].mxu0
      %v1385 = vpop.f32.mrb[0].mxu0
      %v1386 = vadd.f32 %v391, %v1385
      %v1387 = vpop.f32.mrb[0].mxu0
      %1388 = vmatprep.mubr.bf16.mxu0 %v1307
      %1389 = vmatmul.mubr.bf16.gmra.mrb[0].mxu0 %v1306
      %v1390 = vpop.f32.mrb[0].mxu0
      %v1391 = vadd.f32 %v391, %v1390
      %v1392 = vpop.f32.mrb[0].mxu0
      %v1393 = vpop.f32.mrb[0].mxu0
      %v1394 = vadd.f32 %v391, %v1393
      %v1395 = vpop.f32.mrb[0].mxu0
      %1396 = vmatprep.mubr.bf16.mxu0 %v1309
      %1397 = vmatmul.mubr.bf16.gmra.mrb[0].mxu0 %v1308
      %v1398 = vpop.f32.mrb[0].mxu0
      %v1399 = vadd.f32 %v391, %v1398
      %v1400 = vpop.f32.mrb[0].mxu0
      %v1401 = vpop.f32.mrb[0].mxu0
      %v1402 = vadd.f32 %v391, %v1401
      %v1403 = vpop.f32.mrb[0].mxu0
      %1404 = vmatprep.mubr.bf16.mxu0 %v1311
      %1405 = vmatmul.mubr.bf16.gmra.mrb[0].mxu0 %v1310
      %v1406 = vpop.f32.mrb[0].mxu0
      %v1407 = vadd.f32 %v391, %v1406
      %v1408 = vpop.f32.mrb[0].mxu0
      %v1409 = vpop.f32.mrb[0].mxu0
      %v1410 = vadd.f32 %v391, %v1409
      %v1411 = vpop.f32.mrb[0].mxu0
      %1412 = vmatprep.mubr.bf16.mxu0 %v1313
      %1413 = vmatmul.mubr.bf16.gmra.mrb[0].mxu0 %v1312
      %v1414 = vpop.f32.mrb[0].mxu0
      %v1415 = vadd.f32 %v391, %v1414
      %v1416 = vpop.f32.mrb[0].mxu0
      %v1417 = vpop.f32.mrb[0].mxu0
      %v1418 = vadd.f32 %v391, %v1417
      %v1419 = vpop.f32.mrb[0].mxu0
      %1420 = vmatprep.mubr.bf16.mxu0 %v1315
      %1421 = vmatmul.mubr.bf16.gmra.mrb[0].mxu0 %v1314
      %v1422 = vpop.f32.mrb[0].mxu0
      %v1423 = vadd.f32 %v391, %v1422
      %v1424 = vpop.f32.mrb[0].mxu0
      %v1425 = vpop.f32.mrb[0].mxu0
      %v1426 = vadd.f32 %v391, %v1425
      %v1427 = vpop.f32.mrb[0].mxu0
      %1428 = vmatprep.mubr.bf16.mxu0 %v1317
      %1429 = vmatmul.mubr.bf16.gmra.mrb[0].mxu0 %v1316
      %v1430 = vpop.f32.mrb[0].mxu0
      %v1431 = vadd.f32 %v391, %v1430
      %v1432 = vpop.f32.mrb[0].mxu0
      %v1433 = vpop.f32.mrb[0].mxu0
      %v1434 = vadd.f32 %v391, %v1433
      %v1435 = vpop.f32.mrb[0].mxu0
      %1436 = vmatprep.mubr.bf16.mxu0 %v1319
      %1437 = vmatmul.mubr.bf16.gmra.mrb[0].mxu0 %v1318
      %v1438 = vpop.f32.mrb[0].mxu0
      %v1439 = vadd.f32 %v391, %v1438
      %v1440 = vpop.f32.mrb[0].mxu0
      %v1441 = vpop.f32.mrb[0].mxu0
      %v1442 = vadd.f32 %v391, %v1441
      %v1443 = vpop.f32.mrb[0].mxu0
      %1444 = vmatprep.mubr.bf16.mxu0 %v1321
      %1445 = vmatmul.mubr.bf16.gmra.mrb[0].mxu0 %v1320
      %v1446 = vpop.f32.mrb[0].mxu0
      %v1447 = vadd.f32 %v391, %v1446
      %v1448 = vpop.f32.mrb[0].mxu0
      %v1449 = vpop.f32.mrb[0].mxu0
      %v1450 = vadd.f32 %v391, %v1449
      %v1451 = vpop.f32.mrb[0].mxu0
      %1452 = vmatprep.mubr.bf16.mxu0 %v1323
      %1453 = vmatmul.mubr.bf16.gmra.mrb[0].mxu0 %v1322
      %v1454 = vpop.f32.mrb[0].mxu0
      %v1455 = vadd.f32 %v391, %v1454
      %v1456 = vpop.f32.mrb[0].mxu0
      %v1457 = vpop.f32.mrb[0].mxu0
      %v1458 = vadd.f32 %v391, %v1457
      %v1459 = vpop.f32.mrb[0].mxu0
      %1460 = vmatprep.mubr.bf16.mxu0 %v1325
      %1461 = vmatmul.mubr.bf16.gmra.mrb[0].mxu0 %v1324
      %v1462 = vpop.f32.mrb[0].mxu0
      %v1463 = vadd.f32 %v391, %v1462
      %v1464 = vpop.f32.mrb[0].mxu0
      %v1465 = vpop.f32.mrb[0].mxu0
      %v1466 = vadd.f32 %v391, %v1465
      %v1467 = vpop.f32.mrb[0].mxu0
      %1468 = vdwg.mxu0
      %v1469 = vmul.f32 %v1383, 0.5
      %v1470 = vmul.f32 %v1386, 0.5
      %v1471 = vmul.f32 %v1391, 0.5
      %v1472 = vmul.f32 %v1394, 0.5
      %v1473 = vmul.f32 %v1399, 0.5
      %v1474 = vmul.f32 %v1402, 0.5
      %v1475 = vmul.f32 %v1407, 0.5
      %v1476 = vmul.f32 %v1410, 0.5
      %v1477 = vmul.f32 %v1415, 0.5
      %v1478 = vmul.f32 %v1418, 0.5
      %v1479 = vmul.f32 %v1423, 0.5
      %v1480 = vmul.f32 %v1426, 0.5
      %v1481 = vmul.f32 %v1431, 0.5
      %v1482 = vmul.f32 %v1434, 0.5
      %v1483 = vmul.f32 %v1439, 0.5
      %v1484 = vmul.f32 %v1442, 0.5
      %v1485 = vmul.f32 %v1447, 0.5
      %v1486 = vmul.f32 %v1450, 0.5
      %v1487 = vmul.f32 %v1455, 0.5
      %v1488 = vmul.f32 %v1458, 0.5
      %v1489 = vmul.f32 %v1463, 0.5
      %v1490 = vmul.f32 %v1466, 0.5
      %v1491 = vmul.f32 %v1383, %v742
      %v1492 = vmul.f32 %v1386, %v742
      %v1493 = vmul.f32 %v1391, %v742
      %v1494 = vmul.f32 %v1394, %v742
      %v1495 = vmul.f32 %v1399, %v742
      %v1496 = vmul.f32 %v1402, %v742
      %v1497 = vmul.f32 %v1407, %v742
      %v1498 = vmul.f32 %v1410, %v742
      %v1499 = vmul.f32 %v1415, %v742
      %v1500 = vmul.f32 %v1418, %v742
      %v1501 = vmul.f32 %v1423, %v742
      %v1502 = vmul.f32 %v1426, %v742
      %v1503 = vmul.f32 %v1431, %v742
      %v1504 = vmul.f32 %v1434, %v742
      %v1505 = vmul.f32 %v1439, %v742
      %v1506 = vmul.f32 %v1442, %v742
      %v1507 = vmul.f32 %v1447, %v742
      %v1508 = vmul.f32 %v1450, %v742
      %v1509 = vmul.f32 %v1455, %v742
      %v1510 = vmul.f32 %v1458, %v742
      %v1511 = vmul.f32 %v1463, %v742
      %v1512 = vmul.f32 %v1466, %v742
      %v1513 = verf.f32.pop %v1491
      %v1514 = verf.f32.pop %v1492
      %v1515 = verf.f32.pop %v1493
      %v1516 = verf.f32.pop %v1494
      %v1517 = verf.f32.pop %v1495
      %v1518 = verf.f32.pop %v1496
      %v1519 = verf.f32.pop %v1497
      %v1520 = verf.f32.pop %v1498
      %v1521 = verf.f32.pop %v1499
      %v1522 = verf.f32.pop %v1500
      %v1523 = verf.f32.pop %v1501
      %v1524 = verf.f32.pop %v1502
      %v1525 = verf.f32.pop %v1503
      %v1526 = verf.f32.pop %v1504
      %v1527 = verf.f32.pop %v1505
      %v1528 = verf.f32.pop %v1506
      %v1529 = verf.f32.pop %v1507
      %v1530 = verf.f32.pop %v1508
      %v1531 = verf.f32.pop %v1509
      %v1532 = verf.f32.pop %v1510
      %v1533 = verf.f32.pop %v1511
      %v1534 = verf.f32.pop %v1512
      %v1535 = vadd.f32 %v1513, 1.0
      %v1536 = vadd.f32 %v1514, 1.0
      %v1537 = vadd.f32 %v1515, 1.0
      %v1538 = vadd.f32 %v1516, 1.0
      %v1539 = vadd.f32 %v1517, 1.0
      %v1540 = vadd.f32 %v1518, 1.0
      %v1541 = vadd.f32 %v1519, 1.0
      %v1542 = vadd.f32 %v1520, 1.0
      %v1543 = vadd.f32 %v1521, 1.0
      %v1544 = vadd.f32 %v1522, 1.0
      %v1545 = vadd.f32 %v1523, 1.0
      %v1546 = vadd.f32 %v1524, 1.0
      %v1547 = vadd.f32 %v1525, 1.0
      %v1548 = vadd.f32 %v1526, 1.0
      %v1549 = vadd.f32 %v1527, 1.0
      %v1550 = vadd.f32 %v1528, 1.0
      %v1551 = vadd.f32 %v1529, 1.0
      %v1552 = vadd.f32 %v1530, 1.0
      %v1553 = vadd.f32 %v1531, 1.0
      %v1554 = vadd.f32 %v1532, 1.0
      %v1555 = vadd.f32 %v1533, 1.0
      %v1556 = vadd.f32 %v1534, 1.0
      %v1557 = vmul.f32 %v1469, %v1535
      %v1558 = vmul.f32 %v1470, %v1536
      %v1559 = vmul.f32 %v1471, %v1537
      %v1560 = vmul.f32 %v1472, %v1538
      %v1561 = vmul.f32 %v1473, %v1539
      %v1562 = vmul.f32 %v1474, %v1540
      %v1563 = vmul.f32 %v1475, %v1541
      %v1564 = vmul.f32 %v1476, %v1542
      %v1565 = vmul.f32 %v1477, %v1543
      %v1566 = vmul.f32 %v1478, %v1544
      %v1567 = vmul.f32 %v1479, %v1545
      %v1568 = vmul.f32 %v1480, %v1546
      %v1569 = vmul.f32 %v1481, %v1547
      %v1570 = vmul.f32 %v1482, %v1548
      %v1571 = vmul.f32 %v1483, %v1549
      %v1572 = vmul.f32 %v1484, %v1550
      %v1573 = vmul.f32 %v1485, %v1551
      %v1574 = vmul.f32 %v1486, %v1552
      %v1575 = vmul.f32 %v1487, %v1553
      %v1576 = vmul.f32 %v1488, %v1554
      %v1577 = vmul.f32 %v1489, %v1555
      %v1578 = vmul.f32 %v1490, %v1556
      %v1579 = vmax.f32 %v1194, %v1557
      %v1580 = vmax.f32 %v1195, %v1558
      %v1581 = vmax.f32 %v1196, %v1559
      %v1582 = vmax.f32 %v1197, %v1560
      %v1583 = vmax.f32 %v1198, %v1561
      %v1584 = vmax.f32 %v1199, %v1562
      %v1585 = vmax.f32 %v1200, %v1563
      %v1586 = vmax.f32 %v1201, %v1564
      %v1587 = vmax.f32 %v1202, %v1565
      %v1588 = vmax.f32 %v1203, %v1566
      %v1589 = vmax.f32 %v1204, %v1567
      %v1590 = vmax.f32 %v1205, %v1568
      %v1591 = vmax.f32 %v1206, %v1569
      %v1592 = vmax.f32 %v1207, %v1570
      %v1593 = vmax.f32 %v1208, %v1571
      %v1594 = vmax.f32 %v1209, %v1572
      %v1595 = vmax.f32 %v1210, %v1573
      %v1596 = vmax.f32 %v1211, %v1574
      %v1597 = vmax.f32 %v1212, %v1575
      %v1598 = vmax.f32 %v1213, %v1576
      %v1599 = vmax.f32 %v1214, %v1577
      %v1600 = vmax.f32 %v1215, %v1578
      %v1601 = vld [vmem:[%s326 + $0x210] sm:$0xff]
      %v1602 = vld [vmem:[%s326 + $0x218] sm:$0xff]
      %v1603 = vld [vmem:[%s326 + $0x220] sm:$0xff]
      %v1604 = vld [vmem:[%s326 + $0x228] sm:$0xff]
      %v1605 = vld [vmem:[%s326 + $0x230] sm:$0xff]
      %v1606 = vld [vmem:[%s326 + $0x238] sm:$0xff]
      %v1607 = vld [vmem:[%s326 + $0x240] sm:$0xff]
      %v1608 = vld [vmem:[%s326 + $0x248] sm:$0xff]
      %v1609 = vld [vmem:[%s326 + $0x250] sm:$0xff]
      %v1610 = vld [vmem:[%s326 + $0x258] sm:$0xff]
      %v1611 = vld [vmem:[%s326 + $0x260] sm:$0xff]
      %v1612 = vld [vmem:[%s326 + $0x268] sm:$0xff]
      %v1613 = vld [vmem:[%s326 + $0x270] sm:$0xff]
      %v1614 = vld [vmem:[%s326 + $0x278] sm:$0xff]
      %v1615 = vld [vmem:[%s326 + $0x280] sm:$0xff]
      %v1616 = vld [vmem:[%s326 + $0x288] sm:$0xff]
      %v1617 = vld [vmem:[%s326 + $0x290] sm:$0xff]
      %v1618 = vld [vmem:[%s326 + $0x298] sm:$0xff]
      %v1619 = vld [vmem:[%s326 + $0x2a0] sm:$0xff]
      %v1620 = vld [vmem:[%s326 + $0x2a8] sm:$0xff]
      %v1621 = vld [vmem:[%s326 + $0x2b0] sm:$0xff]
      %v1622 = vld [vmem:[%s326 + $0x2b8] sm:$0xff]
      %v1645 = vunpack.c.l.b16 %v1601
      %v1646 = vunpack.c.h.b16 %v1601
      %v1647 = vunpack.c.l.b16 %v1602
      %v1648 = vunpack.c.h.b16 %v1602
      %v1649 = vunpack.c.l.b16 %v1603
      %v1650 = vunpack.c.h.b16 %v1603
      %v1651 = vunpack.c.l.b16 %v1604
      %v1652 = vunpack.c.h.b16 %v1604
      %v1653 = vunpack.c.l.b16 %v1605
      %v1654 = vunpack.c.h.b16 %v1605
      %v1655 = vunpack.c.l.b16 %v1606
      %v1656 = vunpack.c.h.b16 %v1606
      %v1657 = vunpack.c.l.b16 %v1607
      %v1658 = vunpack.c.h.b16 %v1607
      %v1659 = vunpack.c.l.b16 %v1608
      %v1660 = vunpack.c.h.b16 %v1608
      %v1661 = vunpack.c.l.b16 %v1609
      %v1662 = vunpack.c.h.b16 %v1609
      %v1663 = vunpack.c.l.b16 %v1610
      %v1664 = vunpack.c.h.b16 %v1610
      %v1665 = vunpack.c.l.b16 %v1611
      %v1666 = vunpack.c.h.b16 %v1611
      %v1667 = vunpack.c.l.b16 %v1612
      %v1668 = vunpack.c.h.b16 %v1612
      %v1669 = vunpack.c.l.b16 %v1613
      %v1670 = vunpack.c.h.b16 %v1613
      %v1671 = vunpack.c.l.b16 %v1614
      %v1672 = vunpack.c.h.b16 %v1614
      %v1673 = vunpack.c.l.b16 %v1615
      %v1674 = vunpack.c.h.b16 %v1615
      %v1675 = vunpack.c.l.b16 %v1616
      %v1676 = vunpack.c.h.b16 %v1616
      %v1677 = vunpack.c.l.b16 %v1617
      %v1678 = vunpack.c.h.b16 %v1617
      %v1679 = vunpack.c.l.b16 %v1618
      %v1680 = vunpack.c.h.b16 %v1618
      %v1681 = vunpack.c.l.b16 %v1619
      %v1682 = vunpack.c.h.b16 %v1619
      %v1683 = vunpack.c.l.b16 %v1620
      %v1684 = vunpack.c.h.b16 %v1620
      %v1685 = vunpack.c.l.b16 %v1621
      %v1686 = vunpack.c.h.b16 %v1621
      %v1687 = vunpack.c.l.b16 %v1622
      %v1688 = vunpack.c.h.b16 %v1622
      %v1689 = vpack.c.b16 %v1647, %v1645
      %v1690 = vpack.c.b16 %v1648, %v1646
      %v1691 = vpack.c.b16 %v1651, %v1649
      %v1692 = vpack.c.b16 %v1652, %v1650
      %v1693 = vpack.c.b16 %v1655, %v1653
      %v1694 = vpack.c.b16 %v1656, %v1654
      %v1695 = vpack.c.b16 %v1659, %v1657
      %v1696 = vpack.c.b16 %v1660, %v1658
      %v1697 = vpack.c.b16 %v1663, %v1661
      %v1698 = vpack.c.b16 %v1664, %v1662
      %v1699 = vpack.c.b16 %v1667, %v1665
      %v1700 = vpack.c.b16 %v1668, %v1666
      %v1701 = vpack.c.b16 %v1671, %v1669
      %v1702 = vpack.c.b16 %v1672, %v1670
      %v1703 = vpack.c.b16 %v1675, %v1673
      %v1704 = vpack.c.b16 %v1676, %v1674
      %v1705 = vpack.c.b16 %v1679, %v1677
      %v1706 = vpack.c.b16 %v1680, %v1678
      %v1707 = vpack.c.b16 %v1683, %v1681
      %v1708 = vpack.c.b16 %v1684, %v1682
      %v1709 = vpack.c.b16 %v1687, %v1685
      %v1710 = vpack.c.b16 %v1688, %v1686
      %1733 = vmatprep.subr.bf16.mxu0 0
      %1734 = vmatpush1.bf16.msra.mxu0 %v567
      %1735 = vmatprep.subr.bf16.mxu0 0
      %1736 = vmatpush1.bf16.msra.mxu0 %v568
      %1737 = vmatprep.subr.bf16.mxu0 0
      %1738 = vmatpush1.bf16.msra.mxu0 %v569
      %1739 = vmatprep.subr.bf16.mxu0 0
      %1740 = vmatpush1.bf16.msra.mxu0 %v570
      %1741 = vmatprep.subr.bf16.mxu0 0
      %1742 = vmatpush1.bf16.msra.mxu0 %v571
      %1743 = vmatprep.subr.bf16.mxu0 0
      %1744 = vmatpush1.bf16.msra.mxu0 %v572
      %1745 = vmatprep.subr.bf16.mxu0 0
      %1746 = vmatpush1.bf16.msra.mxu0 %v573
      %1747 = vmatprep.subr.bf16.mxu0 0
      %1748 = vmatpush1.bf16.msra.mxu0 %v574
      %1749 = vmatprep.subr.bf16.mxu0 0
      %1750 = vmatpush1.bf16.msra.mxu0 %v575
      %1751 = vmatprep.subr.bf16.mxu0 0
      %1752 = vmatpush1.bf16.msra.mxu0 %v576
      %1753 = vmatprep.subr.bf16.mxu0 0
      %1754 = vmatpush1.bf16.msra.mxu0 %v577
      %1755 = vmatprep.subr.bf16.mxu0 0
      %1756 = vmatpush1.bf16.msra.mxu0 %v578
      %1757 = vmatprep.subr.bf16.mxu0 0
      %1758 = vmatpush1.bf16.msra.mxu0 %v579
      %1759 = vmatprep.subr.bf16.mxu0 0
      %1760 = vmatpush1.bf16.msra.mxu0 %v580
      %1761 = vmatprep.subr.bf16.mxu0 0
      %1762 = vmatpush1.bf16.msra.mxu0 %v581
      %1763 = vmatprep.subr.bf16.mxu0 0
      %1764 = vmatpush1.bf16.msra.mxu0 %v582
      %1765 = vmatprep.mubr.bf16.mxu0 %v1690
      %1766 = vmatmul.mubr.bf16.gmra.mrb[0].mxu0 %v1689
      %v1767 = vpop.f32.mrb[0].mxu0
      %v1768 = vadd.f32 %v391, %v1767
      %v1769 = vpop.f32.mrb[0].mxu0
      %v1770 = vpop.f32.mrb[0].mxu0
      %v1771 = vadd.f32 %v391, %v1770
      %v1772 = vpop.f32.mrb[0].mxu0
      %1773 = vmatprep.mubr.bf16.mxu0 %v1692
      %1774 = vmatmul.mubr.bf16.gmra.mrb[0].mxu0 %v1691
      %v1775 = vpop.f32.mrb[0].mxu0
      %v1776 = vadd.f32 %v391, %v1775
      %v1777 = vpop.f32.mrb[0].mxu0
      %v1778 = vpop.f32.mrb[0].mxu0
      %v1779 = vadd.f32 %v391, %v1778
      %v1780 = vpop.f32.mrb[0].mxu0
      %1781 = vmatprep.mubr.bf16.mxu0 %v1694
      %1782 = vmatmul.mubr.bf16.gmra.mrb[0].mxu0 %v1693
      %v1783 = vpop.f32.mrb[0].mxu0
      %v1784 = vadd.f32 %v391, %v1783
      %v1785 = vpop.f32.mrb[0].mxu0
      %v1786 = vpop.f32.mrb[0].mxu0
      %v1787 = vadd.f32 %v391, %v1786
      %v1788 = vpop.f32.mrb[0].mxu0
      %1789 = vmatprep.mubr.bf16.mxu0 %v1696
      %1790 = vmatmul.mubr.bf16.gmra.mrb[0].mxu0 %v1695
      %v1791 = vpop.f32.mrb[0].mxu0
      %v1792 = vadd.f32 %v391, %v1791
      %v1793 = vpop.f32.mrb[0].mxu0
      %v1794 = vpop.f32.mrb[0].mxu0
      %v1795 = vadd.f32 %v391, %v1794
      %v1796 = vpop.f32.mrb[0].mxu0
      %1797 = vmatprep.mubr.bf16.mxu0 %v1698
      %1798 = vmatmul.mubr.bf16.gmra.mrb[0].mxu0 %v1697
      %v1799 = vpop.f32.mrb[0].mxu0
      %v1800 = vadd.f32 %v391, %v1799
      %v1801 = vpop.f32.mrb[0].mxu0
      %v1802 = vpop.f32.mrb[0].mxu0
      %v1803 = vadd.f32 %v391, %v1802
      %v1804 = vpop.f32.mrb[0].mxu0
      %1805 = vmatprep.mubr.bf16.mxu0 %v1700
      %1806 = vmatmul.mubr.bf16.gmra.mrb[0].mxu0 %v1699
      %v1807 = vpop.f32.mrb[0].mxu0
      %v1808 = vadd.f32 %v391, %v1807
      %v1809 = vpop.f32.mrb[0].mxu0
      %v1810 = vpop.f32.mrb[0].mxu0
      %v1811 = vadd.f32 %v391, %v1810
      %v1812 = vpop.f32.mrb[0].mxu0
      %1813 = vmatprep.mubr.bf16.mxu0 %v1702
      %1814 = vmatmul.mubr.bf16.gmra.mrb[0].mxu0 %v1701
      %v1815 = vpop.f32.mrb[0].mxu0
      %v1816 = vadd.f32 %v391, %v1815
      %v1817 = vpop.f32.mrb[0].mxu0
      %v1818 = vpop.f32.mrb[0].mxu0
      %v1819 = vadd.f32 %v391, %v1818
      %v1820 = vpop.f32.mrb[0].mxu0
      %1821 = vmatprep.mubr.bf16.mxu0 %v1704
      %1822 = vmatmul.mubr.bf16.gmra.mrb[0].mxu0 %v1703
      %v1823 = vpop.f32.mrb[0].mxu0
      %v1824 = vadd.f32 %v391, %v1823
      %v1825 = vpop.f32.mrb[0].mxu0
      %v1826 = vpop.f32.mrb[0].mxu0
      %v1827 = vadd.f32 %v391, %v1826
      %v1828 = vpop.f32.mrb[0].mxu0
      %1829 = vmatprep.mubr.bf16.mxu0 %v1706
      %1830 = vmatmul.mubr.bf16.gmra.mrb[0].mxu0 %v1705
      %v1831 = vpop.f32.mrb[0].mxu0
      %v1832 = vadd.f32 %v391, %v1831
      %v1833 = vpop.f32.mrb[0].mxu0
      %v1834 = vpop.f32.mrb[0].mxu0
      %v1835 = vadd.f32 %v391, %v1834
      %v1836 = vpop.f32.mrb[0].mxu0
      %1837 = vmatprep.mubr.bf16.mxu0 %v1708
      %1838 = vmatmul.mubr.bf16.gmra.mrb[0].mxu0 %v1707
      %v1839 = vpop.f32.mrb[0].mxu0
      %v1840 = vadd.f32 %v391, %v1839
      %v1841 = vpop.f32.mrb[0].mxu0
      %v1842 = vpop.f32.mrb[0].mxu0
      %v1843 = vadd.f32 %v391, %v1842
      %v1844 = vpop.f32.mrb[0].mxu0
      %1845 = vmatprep.mubr.bf16.mxu0 %v1710
      %1846 = vmatmul.mubr.bf16.gmra.mrb[0].mxu0 %v1709
      %v1847 = vpop.f32.mrb[0].mxu0
      %v1848 = vadd.f32 %v391, %v1847
      %v1849 = vpop.f32.mrb[0].mxu0
      %v1850 = vpop.f32.mrb[0].mxu0
      %v1851 = vadd.f32 %v391, %v1850
      %v1852 = vpop.f32.mrb[0].mxu0
      %1853 = vdwg.mxu0
      %v1854 = vmul.f32 %v1768, 0.5
      %v1855 = vmul.f32 %v1771, 0.5
      %v1856 = vmul.f32 %v1776, 0.5
      %v1857 = vmul.f32 %v1779, 0.5
      %v1858 = vmul.f32 %v1784, 0.5
      %v1859 = vmul.f32 %v1787, 0.5
      %v1860 = vmul.f32 %v1792, 0.5
      %v1861 = vmul.f32 %v1795, 0.5
      %v1862 = vmul.f32 %v1800, 0.5
      %v1863 = vmul.f32 %v1803, 0.5
      %v1864 = vmul.f32 %v1808, 0.5
      %v1865 = vmul.f32 %v1811, 0.5
      %v1866 = vmul.f32 %v1816, 0.5
      %v1867 = vmul.f32 %v1819, 0.5
      %v1868 = vmul.f32 %v1824, 0.5
      %v1869 = vmul.f32 %v1827, 0.5
      %v1870 = vmul.f32 %v1832, 0.5
      %v1871 = vmul.f32 %v1835, 0.5
      %v1872 = vmul.f32 %v1840, 0.5
      %v1873 = vmul.f32 %v1843, 0.5
      %v1874 = vmul.f32 %v1848, 0.5
      %v1875 = vmul.f32 %v1851, 0.5
      %v1876 = vmul.f32 %v1768, %v742
      %v1877 = vmul.f32 %v1771, %v742
      %v1878 = vmul.f32 %v1776, %v742
      %v1879 = vmul.f32 %v1779, %v742
      %v1880 = vmul.f32 %v1784, %v742
      %v1881 = vmul.f32 %v1787, %v742
      %v1882 = vmul.f32 %v1792, %v742
      %v1883 = vmul.f32 %v1795, %v742
      %v1884 = vmul.f32 %v1800, %v742
      %v1885 = vmul.f32 %v1803, %v742
      %v1886 = vmul.f32 %v1808, %v742
      %v1887 = vmul.f32 %v1811, %v742
      %v1888 = vmul.f32 %v1816, %v742
      %v1889 = vmul.f32 %v1819, %v742
      %v1890 = vmul.f32 %v1824, %v742
      %v1891 = vmul.f32 %v1827, %v742
      %v1892 = vmul.f32 %v1832, %v742
      %v1893 = vmul.f32 %v1835, %v742
      %v1894 = vmul.f32 %v1840, %v742
      %v1895 = vmul.f32 %v1843, %v742
      %v1896 = vmul.f32 %v1848, %v742
      %v1897 = vmul.f32 %v1851, %v742
      %v1898 = verf.f32.pop %v1876
      %v1899 = verf.f32.pop %v1877
      %v1900 = verf.f32.pop %v1878
      %v1901 = verf.f32.pop %v1879
      %v1902 = verf.f32.pop %v1880
      %v1903 = verf.f32.pop %v1881
      %v1904 = verf.f32.pop %v1882
      %v1905 = verf.f32.pop %v1883
      %v1906 = verf.f32.pop %v1884
      %v1907 = verf.f32.pop %v1885
      %v1908 = verf.f32.pop %v1886
      %v1909 = verf.f32.pop %v1887
      %v1910 = verf.f32.pop %v1888
      %v1911 = verf.f32.pop %v1889
      %v1912 = verf.f32.pop %v1890
      %v1913 = verf.f32.pop %v1891
      %v1914 = verf.f32.pop %v1892
      %v1915 = verf.f32.pop %v1893
      %v1916 = verf.f32.pop %v1894
      %v1917 = verf.f32.pop %v1895
      %v1918 = verf.f32.pop %v1896
      %v1919 = verf.f32.pop %v1897
      %v1920 = vadd.f32 %v1898, 1.0
      %v1921 = vadd.f32 %v1899, 1.0
      %v1922 = vadd.f32 %v1900, 1.0
      %v1923 = vadd.f32 %v1901, 1.0
      %v1924 = vadd.f32 %v1902, 1.0
      %v1925 = vadd.f32 %v1903, 1.0
      %v1926 = vadd.f32 %v1904, 1.0
      %v1927 = vadd.f32 %v1905, 1.0
      %v1928 = vadd.f32 %v1906, 1.0
      %v1929 = vadd.f32 %v1907, 1.0
      %v1930 = vadd.f32 %v1908, 1.0
      %v1931 = vadd.f32 %v1909, 1.0
      %v1932 = vadd.f32 %v1910, 1.0
      %v1933 = vadd.f32 %v1911, 1.0
      %v1934 = vadd.f32 %v1912, 1.0
      %v1935 = vadd.f32 %v1913, 1.0
      %v1936 = vadd.f32 %v1914, 1.0
      %v1937 = vadd.f32 %v1915, 1.0
      %v1938 = vadd.f32 %v1916, 1.0
      %v1939 = vadd.f32 %v1917, 1.0
      %v1940 = vadd.f32 %v1918, 1.0
      %v1941 = vadd.f32 %v1919, 1.0
      %v1942 = vmul.f32 %v1854, %v1920
      %v1943 = vmul.f32 %v1855, %v1921
      %v1944 = vmul.f32 %v1856, %v1922
      %v1945 = vmul.f32 %v1857, %v1923
      %v1946 = vmul.f32 %v1858, %v1924
      %v1947 = vmul.f32 %v1859, %v1925
      %v1948 = vmul.f32 %v1860, %v1926
      %v1949 = vmul.f32 %v1861, %v1927
      %v1950 = vmul.f32 %v1862, %v1928
      %v1951 = vmul.f32 %v1863, %v1929
      %v1952 = vmul.f32 %v1864, %v1930
      %v1953 = vmul.f32 %v1865, %v1931
      %v1954 = vmul.f32 %v1866, %v1932
      %v1955 = vmul.f32 %v1867, %v1933
      %v1956 = vmul.f32 %v1868, %v1934
      %v1957 = vmul.f32 %v1869, %v1935
      %v1958 = vmul.f32 %v1870, %v1936
      %v1959 = vmul.f32 %v1871, %v1937
      %v1960 = vmul.f32 %v1872, %v1938
      %v1961 = vmul.f32 %v1873, %v1939
      %v1962 = vmul.f32 %v1874, %v1940
      %v1963 = vmul.f32 %v1875, %v1941
      %v1964 = vmax.f32 %v1579, %v1942
      %v1965 = vmax.f32 %v1580, %v1943
      %v1966 = vmax.f32 %v1581, %v1944
      %v1967 = vmax.f32 %v1582, %v1945
      %v1968 = vmax.f32 %v1583, %v1946
      %v1969 = vmax.f32 %v1584, %v1947
      %v1970 = vmax.f32 %v1585, %v1948
      %v1971 = vmax.f32 %v1586, %v1949
      %v1972 = vmax.f32 %v1587, %v1950
      %v1973 = vmax.f32 %v1588, %v1951
      %v1974 = vmax.f32 %v1589, %v1952
      %v1975 = vmax.f32 %v1590, %v1953
      %v1976 = vmax.f32 %v1591, %v1954
      %v1977 = vmax.f32 %v1592, %v1955
      %v1978 = vmax.f32 %v1593, %v1956
      %v1979 = vmax.f32 %v1594, %v1957
      %v1980 = vmax.f32 %v1595, %v1958
      %v1981 = vmax.f32 %v1596, %v1959
      %v1982 = vmax.f32 %v1597, %v1960
      %v1983 = vmax.f32 %v1598, %v1961
      %v1984 = vmax.f32 %v1599, %v1962
      %v1985 = vmax.f32 %v1600, %v1963
      %1986 = vst [vmem:[#allocation2] sm:$0xff] %v1964
      %1987 = vst [vmem:[#allocation2 + $0x8] sm:$0xff] %v1965
      %1988 = vst [vmem:[#allocation2 + $0x10] sm:$0xff] %v1966
      %1989 = vst [vmem:[#allocation2 + $0x18] sm:$0xff] %v1967
      %1990 = vst [vmem:[#allocation2 + $0x20] sm:$0xff] %v1968
      %1991 = vst [vmem:[#allocation2 + $0x28] sm:$0xff] %v1969
      %1992 = vst [vmem:[#allocation2 + $0x30] sm:$0xff] %v1970
      %1993 = vst [vmem:[#allocation2 + $0x38] sm:$0xff] %v1971
      %1994 = vst [vmem:[#allocation2 + $0x40] sm:$0xff] %v1972
      %1995 = vst [vmem:[#allocation2 + $0x48] sm:$0xff] %v1973
      %1996 = vst [vmem:[#allocation2 + $0x50] sm:$0xff] %v1974
      %1997 = vst [vmem:[#allocation2 + $0x58] sm:$0xff] %v1975
      %1998 = vst [vmem:[#allocation2 + $0x60] sm:$0xff] %v1976
      %1999 = vst [vmem:[#allocation2 + $0x68] sm:$0xff] %v1977
      %2000 = vst [vmem:[#allocation2 + $0x70] sm:$0xff] %v1978
      %2001 = vst [vmem:[#allocation2 + $0x78] sm:$0xff] %v1979
      %2002 = vst [vmem:[#allocation2 + $0x80] sm:$0xff] %v1980
      %2003 = vst [vmem:[#allocation2 + $0x88] sm:$0xff] %v1981
      %2004 = vst [vmem:[#allocation2 + $0x90] sm:$0xff] %v1982
      %2005 = vst [vmem:[#allocation2 + $0x98] sm:$0xff] %v1983
      %2006 = vst [vmem:[#allocation2 + $0xa0] sm:$0xff] %v1984
      %2007 = vst [vmem:[#allocation2 + $0xa8] sm:$0xff] %v1985
      %2008 = vst [vmem:[#allocation2 + $0xb0] sm:$0xff] 0.0
      %v2009 = vld [vmem:[#allocation2] sm:$0xff]
      %v2010 = vld [vmem:[#allocation2 + $0x8] sm:$0xff]
      %v2011 = vld [vmem:[#allocation2 + $0x10] sm:$0xff]
      %v2012 = vld [vmem:[#allocation2 + $0x18] sm:$0xff]
      %v2013 = vld [vmem:[#allocation2 + $0x20] sm:$0xff]
      %v2014 = vld [vmem:[#allocation2 + $0x28] sm:$0xff]
      %v2015 = vld [vmem:[#allocation2 + $0x30] sm:$0xff]
      %v2016 = vld [vmem:[#allocation2 + $0x38] sm:$0xff]
      %v2017 = vld [vmem:[#allocation2 + $0x40] sm:$0xff]
      %v2018 = vld [vmem:[#allocation2 + $0x48] sm:$0xff]
      %v2019 = vld [vmem:[#allocation2 + $0x50] sm:$0xff]
      %v2020 = vld [vmem:[#allocation2 + $0x58] sm:$0xff]
      %v2021 = vld [vmem:[#allocation2 + $0x60] sm:$0xff]
      %v2022 = vld [vmem:[#allocation2 + $0x68] sm:$0xff]
      %v2023 = vld [vmem:[#allocation2 + $0x70] sm:$0xff]
      %v2024 = vld [vmem:[#allocation2 + $0x78] sm:$0xff]
      %v2025 = vld [vmem:[#allocation2 + $0x80] sm:$0xff]
      %v2026 = vld [vmem:[#allocation2 + $0x88] sm:$0xff]
      %v2027 = vld [vmem:[#allocation2 + $0x90] sm:$0xff]
      %v2028 = vld [vmem:[#allocation2 + $0x98] sm:$0xff]
      %v2029 = vld [vmem:[#allocation2 + $0xa0] sm:$0xff]
      %v2030 = vld [vmem:[#allocation2 + $0xa8] sm:$0xff]
      %v2031 = vpack.c.bf16 %v2010, %v2009
      %v2032 = vpack.c.bf16 %v2012, %v2011
      %v2033 = vpack.c.bf16 %v2014, %v2013
      %v2034 = vpack.c.bf16 %v2016, %v2015
      %v2035 = vpack.c.bf16 %v2018, %v2017
      %v2036 = vpack.c.bf16 %v2020, %v2019
      %v2037 = vpack.c.bf16 %v2022, %v2021
      %v2038 = vpack.c.bf16 %v2024, %v2023
      %v2039 = vpack.c.bf16 %v2026, %v2025
      %v2040 = vpack.c.bf16 %v2028, %v2027
      %v2041 = vpack.c.bf16 %v2030, %v2029
      %2042 = vst [vmem:[#allocation3] sm:$0xff] %v2031
      %2043 = vst [vmem:[#allocation3 + $0x38] sm:$0xff] %v2032
      %2044 = vst [vmem:[#allocation3 + $0x70] sm:$0xff] %v2033
      %2045 = vst [vmem:[#allocation3 + $0xa8] sm:$0xff] %v2034
      %2046 = vst [vmem:[#allocation3 + $0xe0] sm:$0xff] %v2035
      %2047 = vst [vmem:[#allocation3 + $0x118] sm:$0xff] %v2036
      %2048 = vst [vmem:[#allocation3 + $0x150] sm:$0xff] %v2037
      %2049 = vst [vmem:[#allocation3 + $0x188] sm:$0xff] %v2038
      %2050 = vst [vmem:[#allocation3 + $0x1c0] sm:$0xff] %v2039
      %2051 = vst [vmem:[#allocation3 + $0x1f8] sm:$0xff] %v2040
      %2052 = vst [vmem:[#allocation3 + $0x230] sm:$0xff] %v2041
      %v2053 = vld [vmem:[#allocation2 + $0x1] sm:$0xff]
      %v2054 = vld [vmem:[#allocation2 + $0x9] sm:$0xff]
      %v2055 = vld [vmem:[#allocation2 + $0x11] sm:$0xff]
      %v2056 = vld [vmem:[#allocation2 + $0x19] sm:$0xff]
      %v2057 = vld [vmem:[#allocation2 + $0x21] sm:$0xff]
      %v2058 = vld [vmem:[#allocation2 + $0x29] sm:$0xff]
      %v2059 = vld [vmem:[#allocation2 + $0x31] sm:$0xff]
      %v2060 = vld [vmem:[#allocation2 + $0x39] sm:$0xff]
      %v2061 = vld [vmem:[#allocation2 + $0x41] sm:$0xff]
      %v2062 = vld [vmem:[#allocation2 + $0x49] sm:$0xff]
      %v2063 = vld [vmem:[#allocation2 + $0x51] sm:$0xff]
      %v2064 = vld [vmem:[#allocation2 + $0x59] sm:$0xff]
      %v2065 = vld [vmem:[#allocation2 + $0x61] sm:$0xff]
      %v2066 = vld [vmem:[#allocation2 + $0x69] sm:$0xff]
      %v2067 = vld [vmem:[#allocation2 + $0x71] sm:$0xff]
      %v2068 = vld [vmem:[#allocation2 + $0x79] sm:$0xff]
      %v2069 = vld [vmem:[#allocation2 + $0x81] sm:$0xff]
      %v2070 = vld [vmem:[#allocation2 + $0x89] sm:$0xff]
      %v2071 = vld [vmem:[#allocation2 + $0x91] sm:$0xff]
      %v2072 = vld [vmem:[#allocation2 + $0x99] sm:$0xff]
      %v2073 = vld [vmem:[#allocation2 + $0xa1] sm:$0xff]
      %v2074 = vld [vmem:[#allocation2 + $0xa9] sm:$0xff]
      %v2075 = vpack.c.bf16 %v2054, %v2053
      %v2076 = vpack.c.bf16 %v2056, %v2055
      %v2077 = vpack.c.bf16 %v2058, %v2057
      %v2078 = vpack.c.bf16 %v2060, %v2059
      %v2079 = vpack.c.bf16 %v2062, %v2061
      %v2080 = vpack.c.bf16 %v2064, %v2063
      %v2081 = vpack.c.bf16 %v2066, %v2065
      %v2082 = vpack.c.bf16 %v2068, %v2067
      %v2083 = vpack.c.bf16 %v2070, %v2069
      %v2084 = vpack.c.bf16 %v2072, %v2071
      %v2085 = vpack.c.bf16 %v2074, %v2073
      %2086 = vst [vmem:[#allocation3 + $0x8] sm:$0xff] %v2075
      %2087 = vst [vmem:[#allocation3 + $0x40] sm:$0xff] %v2076
      %2088 = vst [vmem:[#allocation3 + $0x78] sm:$0xff] %v2077
      %2089 = vst [vmem:[#allocation3 + $0xb0] sm:$0xff] %v2078
      %2090 = vst [vmem:[#allocation3 + $0xe8] sm:$0xff] %v2079
      %2091 = vst [vmem:[#allocation3 + $0x120] sm:$0xff] %v2080
      %2092 = vst [vmem:[#allocation3 + $0x158] sm:$0xff] %v2081
      %2093 = vst [vmem:[#allocation3 + $0x190] sm:$0xff] %v2082
      %2094 = vst [vmem:[#allocation3 + $0x1c8] sm:$0xff] %v2083
      %2095 = vst [vmem:[#allocation3 + $0x200] sm:$0xff] %v2084
      %2096 = vst [vmem:[#allocation3 + $0x238] sm:$0xff] %v2085
      %v2097 = vld [vmem:[#allocation2 + $0x2] sm:$0xff]
      %v2098 = vld [vmem:[#allocation2 + $0xa] sm:$0xff]
      %v2099 = vld [vmem:[#allocation2 + $0x12] sm:$0xff]
      %v2100 = vld [vmem:[#allocation2 + $0x1a] sm:$0xff]
      %v2101 = vld [vmem:[#allocation2 + $0x22] sm:$0xff]
      %v2102 = vld [vmem:[#allocation2 + $0x2a] sm:$0xff]
      %v2103 = vld [vmem:[#allocation2 + $0x32] sm:$0xff]
      %v2104 = vld [vmem:[#allocation2 + $0x3a] sm:$0xff]
      %v2105 = vld [vmem:[#allocation2 + $0x42] sm:$0xff]
      %v2106 = vld [vmem:[#allocation2 + $0x4a] sm:$0xff]
      %v2107 = vld [vmem:[#allocation2 + $0x52] sm:$0xff]
      %v2108 = vld [vmem:[#allocation2 + $0x5a] sm:$0xff]
      %v2109 = vld [vmem:[#allocation2 + $0x62] sm:$0xff]
      %v2110 = vld [vmem:[#allocation2 + $0x6a] sm:$0xff]
      %v2111 = vld [vmem:[#allocation2 + $0x72] sm:$0xff]
      %v2112 = vld [vmem:[#allocation2 + $0x7a] sm:$0xff]
      %v2113 = vld [vmem:[#allocation2 + $0x82] sm:$0xff]
      %v2114 = vld [vmem:[#allocation2 + $0x8a] sm:$0xff]
      %v2115 = vld [vmem:[#allocation2 + $0x92] sm:$0xff]
      %v2116 = vld [vmem:[#allocation2 + $0x9a] sm:$0xff]
      %v2117 = vld [vmem:[#allocation2 + $0xa2] sm:$0xff]
      %v2118 = vld [vmem:[#allocation2 + $0xaa] sm:$0xff]
      %v2119 = vpack.c.bf16 %v2098, %v2097
      %v2120 = vpack.c.bf16 %v2100, %v2099
      %v2121 = vpack.c.bf16 %v2102, %v2101
      %v2122 = vpack.c.bf16 %v2104, %v2103
      %v2123 = vpack.c.bf16 %v2106, %v2105
      %v2124 = vpack.c.bf16 %v2108, %v2107
      %v2125 = vpack.c.bf16 %v2110, %v2109
      %v2126 = vpack.c.bf16 %v2112, %v2111
      %v2127 = vpack.c.bf16 %v2114, %v2113
      %v2128 = vpack.c.bf16 %v2116, %v2115
      %v2129 = vpack.c.bf16 %v2118, %v2117
      %2130 = vst [vmem:[#allocation3 + $0x10] sm:$0xff] %v2119
      %2131 = vst [vmem:[#allocation3 + $0x48] sm:$0xff] %v2120
      %2132 = vst [vmem:[#allocation3 + $0x80] sm:$0xff] %v2121
      %2133 = vst [vmem:[#allocation3 + $0xb8] sm:$0xff] %v2122
      %2134 = vst [vmem:[#allocation3 + $0xf0] sm:$0xff] %v2123
      %2135 = vst [vmem:[#allocation3 + $0x128] sm:$0xff] %v2124
      %2136 = vst [vmem:[#allocation3 + $0x160] sm:$0xff] %v2125
      %2137 = vst [vmem:[#allocation3 + $0x198] sm:$0xff] %v2126
      %2138 = vst [vmem:[#allocation3 + $0x1d0] sm:$0xff] %v2127
      %2139 = vst [vmem:[#allocation3 + $0x208] sm:$0xff] %v2128
      %2140 = vst [vmem:[#allocation3 + $0x240] sm:$0xff] %v2129
      %v2141 = vld [vmem:[#allocation2 + $0x3] sm:$0xff]
      %v2142 = vld [vmem:[#allocation2 + $0xb] sm:$0xff]
      %v2143 = vld [vmem:[#allocation2 + $0x13] sm:$0xff]
      %v2144 = vld [vmem:[#allocation2 + $0x1b] sm:$0xff]
      %v2145 = vld [vmem:[#allocation2 + $0x23] sm:$0xff]
      %v2146 = vld [vmem:[#allocation2 + $0x2b] sm:$0xff]
      %v2147 = vld [vmem:[#allocation2 + $0x33] sm:$0xff]
      %v2148 = vld [vmem:[#allocation2 + $0x3b] sm:$0xff]
      %v2149 = vld [vmem:[#allocation2 + $0x43] sm:$0xff]
      %v2150 = vld [vmem:[#allocation2 + $0x4b] sm:$0xff]
      %v2151 = vld [vmem:[#allocation2 + $0x53] sm:$0xff]
      %v2152 = vld [vmem:[#allocation2 + $0x5b] sm:$0xff]
      %v2153 = vld [vmem:[#allocation2 + $0x63] sm:$0xff]
      %v2154 = vld [vmem:[#allocation2 + $0x6b] sm:$0xff]
      %v2155 = vld [vmem:[#allocation2 + $0x73] sm:$0xff]
      %v2156 = vld [vmem:[#allocation2 + $0x7b] sm:$0xff]
      %v2157 = vld [vmem:[#allocation2 + $0x83] sm:$0xff]
      %v2158 = vld [vmem:[#allocation2 + $0x8b] sm:$0xff]
      %v2159 = vld [vmem:[#allocation2 + $0x93] sm:$0xff]
      %v2160 = vld [vmem:[#allocation2 + $0x9b] sm:$0xff]
      %v2161 = vld [vmem:[#allocation2 + $0xa3] sm:$0xff]
      %v2162 = vld [vmem:[#allocation2 + $0xab] sm:$0xff]
      %v2163 = vpack.c.bf16 %v2142, %v2141
      %v2164 = vpack.c.bf16 %v2144, %v2143
      %v2165 = vpack.c.bf16 %v2146, %v2145
      %v2166 = vpack.c.bf16 %v2148, %v2147
      %v2167 = vpack.c.bf16 %v2150, %v2149
      %v2168 = vpack.c.bf16 %v2152, %v2151
      %v2169 = vpack.c.bf16 %v2154, %v2153
      %v2170 = vpack.c.bf16 %v2156, %v2155
      %v2171 = vpack.c.bf16 %v2158, %v2157
      %v2172 = vpack.c.bf16 %v2160, %v2159
      %v2173 = vpack.c.bf16 %v2162, %v2161
      %2174 = vst [vmem:[#allocation3 + $0x18] sm:$0xff] %v2163
      %2175 = vst [vmem:[#allocation3 + $0x50] sm:$0xff] %v2164
      %2176 = vst [vmem:[#allocation3 + $0x88] sm:$0xff] %v2165
      %2177 = vst [vmem:[#allocation3 + $0xc0] sm:$0xff] %v2166
      %2178 = vst [vmem:[#allocation3 + $0xf8] sm:$0xff] %v2167
      %2179 = vst [vmem:[#allocation3 + $0x130] sm:$0xff] %v2168
      %2180 = vst [vmem:[#allocation3 + $0x168] sm:$0xff] %v2169
      %2181 = vst [vmem:[#allocation3 + $0x1a0] sm:$0xff] %v2170
      %2182 = vst [vmem:[#allocation3 + $0x1d8] sm:$0xff] %v2171
      %2183 = vst [vmem:[#allocation3 + $0x210] sm:$0xff] %v2172
      %2184 = vst [vmem:[#allocation3 + $0x248] sm:$0xff] %v2173
      %v2185 = vld [vmem:[#allocation2 + $0x4] sm:$0xff]
      %v2186 = vld [vmem:[#allocation2 + $0xc] sm:$0xff]
      %v2187 = vld [vmem:[#allocation2 + $0x14] sm:$0xff]
      %v2188 = vld [vmem:[#allocation2 + $0x1c] sm:$0xff]
      %v2189 = vld [vmem:[#allocation2 + $0x24] sm:$0xff]
      %v2190 = vld [vmem:[#allocation2 + $0x2c] sm:$0xff]
      %v2191 = vld [vmem:[#allocation2 + $0x34] sm:$0xff]
      %v2192 = vld [vmem:[#allocation2 + $0x3c] sm:$0xff]
      %v2193 = vld [vmem:[#allocation2 + $0x44] sm:$0xff]
      %v2194 = vld [vmem:[#allocation2 + $0x4c] sm:$0xff]
      %v2195 = vld [vmem:[#allocation2 + $0x54] sm:$0xff]
      %v2196 = vld [vmem:[#allocation2 + $0x5c] sm:$0xff]
      %v2197 = vld [vmem:[#allocation2 + $0x64] sm:$0xff]
      %v2198 = vld [vmem:[#allocation2 + $0x6c] sm:$0xff]
      %v2199 = vld [vmem:[#allocation2 + $0x74] sm:$0xff]
      %v2200 = vld [vmem:[#allocation2 + $0x7c] sm:$0xff]
      %v2201 = vld [vmem:[#allocation2 + $0x84] sm:$0xff]
      %v2202 = vld [vmem:[#allocation2 + $0x8c] sm:$0xff]
      %v2203 = vld [vmem:[#allocation2 + $0x94] sm:$0xff]
      %v2204 = vld [vmem:[#allocation2 + $0x9c] sm:$0xff]
      %v2205 = vld [vmem:[#allocation2 + $0xa4] sm:$0xff]
      %v2206 = vld [vmem:[#allocation2 + $0xac] sm:$0xff]
      %v2207 = vpack.c.bf16 %v2186, %v2185
      %v2208 = vpack.c.bf16 %v2188, %v2187
      %v2209 = vpack.c.bf16 %v2190, %v2189
      %v2210 = vpack.c.bf16 %v2192, %v2191
      %v2211 = vpack.c.bf16 %v2194, %v2193
      %v2212 = vpack.c.bf16 %v2196, %v2195
      %v2213 = vpack.c.bf16 %v2198, %v2197
      %v2214 = vpack.c.bf16 %v2200, %v2199
      %v2215 = vpack.c.bf16 %v2202, %v2201
      %v2216 = vpack.c.bf16 %v2204, %v2203
      %v2217 = vpack.c.bf16 %v2206, %v2205
      %2218 = vst [vmem:[#allocation3 + $0x20] sm:$0xff] %v2207
      %2219 = vst [vmem:[#allocation3 + $0x58] sm:$0xff] %v2208
      %2220 = vst [vmem:[#allocation3 + $0x90] sm:$0xff] %v2209
      %2221 = vst [vmem:[#allocation3 + $0xc8] sm:$0xff] %v2210
      %2222 = vst [vmem:[#allocation3 + $0x100] sm:$0xff] %v2211
      %2223 = vst [vmem:[#allocation3 + $0x138] sm:$0xff] %v2212
      %2224 = vst [vmem:[#allocation3 + $0x170] sm:$0xff] %v2213
      %2225 = vst [vmem:[#allocation3 + $0x1a8] sm:$0xff] %v2214
      %2226 = vst [vmem:[#allocation3 + $0x1e0] sm:$0xff] %v2215
      %2227 = vst [vmem:[#allocation3 + $0x218] sm:$0xff] %v2216
      %2228 = vst [vmem:[#allocation3 + $0x250] sm:$0xff] %v2217
      %v2229 = vld [vmem:[#allocation2 + $0x5] sm:$0xff]
      %v2230 = vld [vmem:[#allocation2 + $0xd] sm:$0xff]
      %v2231 = vld [vmem:[#allocation2 + $0x15] sm:$0xff]
      %v2232 = vld [vmem:[#allocation2 + $0x1d] sm:$0xff]
      %v2233 = vld [vmem:[#allocation2 + $0x25] sm:$0xff]
      %v2234 = vld [vmem:[#allocation2 + $0x2d] sm:$0xff]
      %v2235 = vld [vmem:[#allocation2 + $0x35] sm:$0xff]
      %v2236 = vld [vmem:[#allocation2 + $0x3d] sm:$0xff]
      %v2237 = vld [vmem:[#allocation2 + $0x45] sm:$0xff]
      %v2238 = vld [vmem:[#allocation2 + $0x4d] sm:$0xff]
      %v2239 = vld [vmem:[#allocation2 + $0x55] sm:$0xff]
      %v2240 = vld [vmem:[#allocation2 + $0x5d] sm:$0xff]
      %v2241 = vld [vmem:[#allocation2 + $0x65] sm:$0xff]
      %v2242 = vld [vmem:[#allocation2 + $0x6d] sm:$0xff]
      %v2243 = vld [vmem:[#allocation2 + $0x75] sm:$0xff]
      %v2244 = vld [vmem:[#allocation2 + $0x7d] sm:$0xff]
      %v2245 = vld [vmem:[#allocation2 + $0x85] sm:$0xff]
      %v2246 = vld [vmem:[#allocation2 + $0x8d] sm:$0xff]
      %v2247 = vld [vmem:[#allocation2 + $0x95] sm:$0xff]
      %v2248 = vld [vmem:[#allocation2 + $0x9d] sm:$0xff]
      %v2249 = vld [vmem:[#allocation2 + $0xa5] sm:$0xff]
      %v2250 = vld [vmem:[#allocation2 + $0xad] sm:$0xff]
      %v2251 = vpack.c.bf16 %v2230, %v2229
      %v2252 = vpack.c.bf16 %v2232, %v2231
      %v2253 = vpack.c.bf16 %v2234, %v2233
      %v2254 = vpack.c.bf16 %v2236, %v2235
      %v2255 = vpack.c.bf16 %v2238, %v2237
      %v2256 = vpack.c.bf16 %v2240, %v2239
      %v2257 = vpack.c.bf16 %v2242, %v2241
      %v2258 = vpack.c.bf16 %v2244, %v2243
      %v2259 = vpack.c.bf16 %v2246, %v2245
      %v2260 = vpack.c.bf16 %v2248, %v2247
      %v2261 = vpack.c.bf16 %v2250, %v2249
      %2262 = vst [vmem:[#allocation3 + $0x28] sm:$0xff] %v2251
      %2263 = vst [vmem:[#allocation3 + $0x60] sm:$0xff] %v2252
      %2264 = vst [vmem:[#allocation3 + $0x98] sm:$0xff] %v2253
      %2265 = vst [vmem:[#allocation3 + $0xd0] sm:$0xff] %v2254
      %2266 = vst [vmem:[#allocation3 + $0x108] sm:$0xff] %v2255
      %2267 = vst [vmem:[#allocation3 + $0x140] sm:$0xff] %v2256
      %2268 = vst [vmem:[#allocation3 + $0x178] sm:$0xff] %v2257
      %2269 = vst [vmem:[#allocation3 + $0x1b0] sm:$0xff] %v2258
      %2270 = vst [vmem:[#allocation3 + $0x1e8] sm:$0xff] %v2259
      %2271 = vst [vmem:[#allocation3 + $0x220] sm:$0xff] %v2260
      %2272 = vst [vmem:[#allocation3 + $0x258] sm:$0xff] %v2261
      %v2273 = vld [vmem:[#allocation2 + $0x6] sm:$0xff]
      %v2274 = vld [vmem:[#allocation2 + $0xe] sm:$0xff]
      %v2275 = vld [vmem:[#allocation2 + $0x16] sm:$0xff]
      %v2276 = vld [vmem:[#allocation2 + $0x1e] sm:$0xff]
      %v2277 = vld [vmem:[#allocation2 + $0x26] sm:$0xff]
      %v2278 = vld [vmem:[#allocation2 + $0x2e] sm:$0xff]
      %v2279 = vld [vmem:[#allocation2 + $0x36] sm:$0xff]
      %v2280 = vld [vmem:[#allocation2 + $0x3e] sm:$0xff]
      %v2281 = vld [vmem:[#allocation2 + $0x46] sm:$0xff]
      %v2282 = vld [vmem:[#allocation2 + $0x4e] sm:$0xff]
      %v2283 = vld [vmem:[#allocation2 + $0x56] sm:$0xff]
      %v2284 = vld [vmem:[#allocation2 + $0x5e] sm:$0xff]
      %v2285 = vld [vmem:[#allocation2 + $0x66] sm:$0xff]
      %v2286 = vld [vmem:[#allocation2 + $0x6e] sm:$0xff]
      %v2287 = vld [vmem:[#allocation2 + $0x76] sm:$0xff]
      %v2288 = vld [vmem:[#allocation2 + $0x7e] sm:$0xff]
      %v2289 = vld [vmem:[#allocation2 + $0x86] sm:$0xff]
      %v2290 = vld [vmem:[#allocation2 + $0x8e] sm:$0xff]
      %v2291 = vld [vmem:[#allocation2 + $0x96] sm:$0xff]
      %v2292 = vld [vmem:[#allocation2 + $0x9e] sm:$0xff]
      %v2293 = vld [vmem:[#allocation2 + $0xa6] sm:$0xff]
      %v2294 = vld [vmem:[#allocation2 + $0xae] sm:$0xff]
      %v2295 = vpack.c.bf16 %v2274, %v2273
      %v2296 = vpack.c.bf16 %v2276, %v2275
      %v2297 = vpack.c.bf16 %v2278, %v2277
      %v2298 = vpack.c.bf16 %v2280, %v2279
      %v2299 = vpack.c.bf16 %v2282, %v2281
      %v2300 = vpack.c.bf16 %v2284, %v2283
      %v2301 = vpack.c.bf16 %v2286, %v2285
      %v2302 = vpack.c.bf16 %v2288, %v2287
      %v2303 = vpack.c.bf16 %v2290, %v2289
      %v2304 = vpack.c.bf16 %v2292, %v2291
      %v2305 = vpack.c.bf16 %v2294, %v2293
      %2306 = vst [vmem:[#allocation3 + $0x30] sm:$0xff] %v2295
      %2307 = vst [vmem:[#allocation3 + $0x68] sm:$0xff] %v2296
      %2308 = vst [vmem:[#allocation3 + $0xa0] sm:$0xff] %v2297
      %2309 = vst [vmem:[#allocation3 + $0xd8] sm:$0xff] %v2298
      %2310 = vst [vmem:[#allocation3 + $0x110] sm:$0xff] %v2299
      %2311 = vst [vmem:[#allocation3 + $0x148] sm:$0xff] %v2300
      %2312 = vst [vmem:[#allocation3 + $0x180] sm:$0xff] %v2301
      %2313 = vst [vmem:[#allocation3 + $0x1b8] sm:$0xff] %v2302
      %2314 = vst [vmem:[#allocation3 + $0x1f0] sm:$0xff] %v2303
      %2315 = vst [vmem:[#allocation3 + $0x228] sm:$0xff] %v2304
      %2316 = vst [vmem:[#allocation3 + $0x260] sm:$0xff] %v2305
      %v2317 = vld [vmem:[#allocation3] sm:$0xff]
      %v2318 = vld [vmem:[#allocation3 + $0x8] sm:$0xff]
      %v2319 = vld [vmem:[#allocation3 + $0x10] sm:$0xff]
      %v2320 = vld [vmem:[#allocation3 + $0x18] sm:$0xff]
      %v2321 = vld [vmem:[#allocation3 + $0x20] sm:$0xff]
      %v2322 = vld [vmem:[#allocation3 + $0x28] sm:$0xff]
      %v2323 = vld [vmem:[#allocation3 + $0x30] sm:$0xff]
      %v2324 = vld [vmem:[#allocation3 + $0x38] sm:$0xff]
      %v2325 = vld [vmem:[#allocation3 + $0x40] sm:$0xff]
      %v2326 = vld [vmem:[#allocation3 + $0x48] sm:$0xff]
      %v2327 = vld [vmem:[#allocation3 + $0x50] sm:$0xff]
      %v2328 = vld [vmem:[#allocation3 + $0x58] sm:$0xff]
      %v2329 = vld [vmem:[#allocation3 + $0x60] sm:$0xff]
      %v2330 = vld [vmem:[#allocation3 + $0x68] sm:$0xff]
      %v2331 = vld [vmem:[#allocation3 + $0x70] sm:$0xff]
      %v2332 = vld [vmem:[#allocation3 + $0x78] sm:$0xff]
      %v2333 = vld [vmem:[#allocation3 + $0x80] sm:$0xff]
      %v2334 = vld [vmem:[#allocation3 + $0x88] sm:$0xff]
      %v2335 = vld [vmem:[#allocation3 + $0x90] sm:$0xff]
      %v2336 = vld [vmem:[#allocation3 + $0x98] sm:$0xff]
      %v2337 = vld [vmem:[#allocation3 + $0xa0] sm:$0xff]
      %v2338 = vld [vmem:[#allocation3 + $0xa8] sm:$0xff]
      %v2339 = vld [vmem:[#allocation3 + $0xb0] sm:$0xff]
      %v2340 = vld [vmem:[#allocation3 + $0xb8] sm:$0xff]
      %v2341 = vld [vmem:[#allocation3 + $0xc0] sm:$0xff]
      %v2342 = vld [vmem:[#allocation3 + $0xc8] sm:$0xff]
      %v2343 = vld [vmem:[#allocation3 + $0xd0] sm:$0xff]
      %v2344 = vld [vmem:[#allocation3 + $0xd8] sm:$0xff]
      %v2345 = vld [vmem:[#allocation3 + $0xe0] sm:$0xff]
      %v2346 = vld [vmem:[#allocation3 + $0xe8] sm:$0xff]
      %v2347 = vld [vmem:[#allocation3 + $0xf0] sm:$0xff]
      %v2348 = vld [vmem:[#allocation3 + $0xf8] sm:$0xff]
      %v2349 = vld [vmem:[#allocation3 + $0x100] sm:$0xff]
      %v2350 = vld [vmem:[#allocation3 + $0x108] sm:$0xff]
      %v2351 = vld [vmem:[#allocation3 + $0x110] sm:$0xff]
      %v2352 = vld [vmem:[%s3] sm:$0xf]
      %v2353 = vld [vmem:[%s3 + $0x4] sm:$0xf]
      %v2354 = vld [vmem:[%s3 + $0x8] sm:$0xf]
      %v2355 = vld [vmem:[%s3 + $0xc] sm:$0xf]
      %v2356 = vld [vmem:[%s3 + $0x10] sm:$0xf]
      %v2357 = vld [vmem:[%s3 + $0x14] sm:$0xf]
      %v2358 = vld [vmem:[%s3 + $0x18] sm:$0xf]
      %v2359 = vld [vmem:[%s3 + $0x1c] sm:$0xf]
      %v2360 = vld [vmem:[%s3 + $0x20] sm:$0xf]
      %v2361 = vld [vmem:[%s3 + $0x24] sm:$0xf]
      %v2362 = vld [vmem:[%s3 + $0x28] sm:$0xf]
      %v2363 = vld [vmem:[%s3 + $0x2c] sm:$0xf]
      %v2364 = vld [vmem:[%s3 + $0x30] sm:$0xf]
      %v2365 = vld [vmem:[%s3 + $0x34] sm:$0xf]
      %v2366 = vld [vmem:[%s3 + $0x38] sm:$0xf]
      %v2367 = vld [vmem:[%s3 + $0x3c] sm:$0xf]
      %v2368 = vld [vmem:[%s3 + $0x40] sm:$0xf]
      %v2369 = vld [vmem:[%s3 + $0x44] sm:$0xf]
      %v2370 = vld [vmem:[%s3 + $0x48] sm:$0xf]
      %v2371 = vld [vmem:[%s3 + $0x4c] sm:$0xf]
      %v2372 = vld [vmem:[%s3 + $0x50] sm:$0xf]
      %v2373 = vld [vmem:[%s3 + $0x54] sm:$0xf]
      %v2374 = vld [vmem:[%s3 + $0x58] sm:$0xf]
      %v2375 = vld [vmem:[%s3 + $0x5c] sm:$0xf]
      %v2376 = vld [vmem:[%s3 + $0x60] sm:$0xf]
      %v2377 = vld [vmem:[%s3 + $0x64] sm:$0xf]
      %v2378 = vld [vmem:[%s3 + $0x68] sm:$0xf]
      %v2379 = vld [vmem:[%s3 + $0x6c] sm:$0xf]
      %v2380 = vld [vmem:[%s3 + $0x70] sm:$0xf]
      %v2381 = vld [vmem:[%s3 + $0x74] sm:$0xf]
      %v2382 = vld [vmem:[%s3 + $0x78] sm:$0xf]
      %v2383 = vld [vmem:[%s3 + $0x7c] sm:$0xf]
      %v2384 = vld [vmem:[%s3 + $0x80] sm:$0xf]
      %v2385 = vld [vmem:[%s3 + $0x84] sm:$0xf]
      %v2386 = vld [vmem:[%s3 + $0x88] sm:$0xf]
      %v2387 = vld [vmem:[%s3 + $0x8c] sm:$0xf]
      %v2388 = vld [vmem:[%s3 + $0x90] sm:$0xf]
      %v2389 = vld [vmem:[%s3 + $0x94] sm:$0xf]
      %v2390 = vld [vmem:[%s3 + $0x98] sm:$0xf]
      %v2391 = vld [vmem:[%s3 + $0x9c] sm:$0xf]
      %v2392 = vld [vmem:[%s3 + $0xa0] sm:$0xf]
      %v2393 = vld [vmem:[%s3 + $0xa4] sm:$0xf]
      %v2394 = vld [vmem:[%s3 + $0xa8] sm:$0xf]
      %v2395 = vld [vmem:[%s3 + $0xac] sm:$0xf]
      %v2396 = vld [vmem:[%s3 + $0xb0] sm:$0xf]
      %v2397 = vld [vmem:[%s3 + $0xb4] sm:$0xf]
      %v2398 = vld [vmem:[%s3 + $0xb8] sm:$0xf]
      %v2399 = vld [vmem:[%s3 + $0xbc] sm:$0xf]
      %v2400 = vld [vmem:[%s3 + $0xc0] sm:$0xf]
      %v2401 = vld [vmem:[%s3 + $0xc4] sm:$0xf]
      %v2402 = vld [vmem:[%s3 + $0xc8] sm:$0xf]
      %v2403 = vld [vmem:[%s3 + $0xcc] sm:$0xf]
      %v2404 = vld [vmem:[%s3 + $0xd0] sm:$0xf]
      %v2405 = vld [vmem:[%s3 + $0xd4] sm:$0xf]
      %v2406 = vld [vmem:[%s3 + $0xd8] sm:$0xf]
      %v2407 = vld [vmem:[%s3 + $0xdc] sm:$0xf]
      %v2408 = vld [vmem:[%s3 + $0xe0] sm:$0xf]
      %v2409 = vld [vmem:[%s3 + $0xe4] sm:$0xf]
      %v2410 = vld [vmem:[%s3 + $0xe8] sm:$0xf]
      %v2411 = vld [vmem:[%s3 + $0xec] sm:$0xf]
      %v2412 = vld [vmem:[%s3 + $0xf0] sm:$0xf]
      %v2413 = vld [vmem:[%s3 + $0xf4] sm:$0xf]
      %v2414 = vld [vmem:[%s3 + $0xf8] sm:$0xf]
      %v2415 = vld [vmem:[%s3 + $0xfc] sm:$0xf]
      %v2416 = vld [vmem:[%s3 + $0x100] sm:$0xf]
      %v2417 = vld [vmem:[%s3 + $0x104] sm:$0xf]
      %v2418 = vld [vmem:[%s3 + $0x108] sm:$0xf]
      %v2419 = vld [vmem:[%s3 + $0x10c] sm:$0xf]
      %v2420 = vld [vmem:[%s3 + $0x110] sm:$0xf]
      %v2421 = vld [vmem:[%s3 + $0x114] sm:$0xf]
      %v2422 = vld [vmem:[%s3 + $0x118] sm:$0xf]
      %v2423 = vld [vmem:[%s3 + $0x11c] sm:$0xf]
      %v2424 = vld [vmem:[%s3 + $0x120] sm:$0xf]
      %v2425 = vld [vmem:[%s3 + $0x124] sm:$0xf]
      %v2426 = vld [vmem:[%s3 + $0x128] sm:$0xf]
      %v2427 = vld [vmem:[%s3 + $0x12c] sm:$0xf]
      %v2428 = vld [vmem:[%s3 + $0x130] sm:$0xf]
      %v2429 = vld [vmem:[%s3 + $0x134] sm:$0xf]
      %v2430 = vld [vmem:[%s3 + $0x138] sm:$0xf]
      %v2431 = vld [vmem:[%s3 + $0x13c] sm:$0xf]
      %v2432 = vld [vmem:[%s3 + $0x140] sm:$0xf]
      %v2433 = vld [vmem:[%s3 + $0x144] sm:$0xf]
      %v2434 = vld [vmem:[%s3 + $0x148] sm:$0xf]
      %v2435 = vld [vmem:[%s3 + $0x14c] sm:$0xf]
      %v2436 = vld [vmem:[%s3 + $0x150] sm:$0xf]
      %v2437 = vld [vmem:[%s3 + $0x154] sm:$0xf]
      %v2438 = vld [vmem:[%s3 + $0x158] sm:$0xf]
      %v2439 = vld [vmem:[%s3 + $0x15c] sm:$0xf]
      %v2440 = vld [vmem:[%s3 + $0x160] sm:$0xf]
      %v2441 = vld [vmem:[%s3 + $0x164] sm:$0xf]
      %v2442 = vld [vmem:[%s3 + $0x168] sm:$0xf]
      %v2443 = vld [vmem:[%s3 + $0x16c] sm:$0xf]
      %v2444 = vld [vmem:[%s3 + $0x170] sm:$0xf]
      %v2445 = vld [vmem:[%s3 + $0x174] sm:$0xf]
      %v2446 = vld [vmem:[%s3 + $0x178] sm:$0xf]
      %v2447 = vld [vmem:[%s3 + $0x17c] sm:$0xf]
      %v2448 = vld [vmem:[%s3 + $0x180] sm:$0xf]
      %v2449 = vld [vmem:[%s3 + $0x184] sm:$0xf]
      %v2450 = vld [vmem:[%s3 + $0x188] sm:$0xf]
      %v2451 = vld [vmem:[%s3 + $0x18c] sm:$0xf]
      %v2452 = vld [vmem:[%s3 + $0x190] sm:$0xf]
      %v2453 = vld [vmem:[%s3 + $0x194] sm:$0xf]
      %v2454 = vld [vmem:[%s3 + $0x198] sm:$0xf]
      %v2455 = vld [vmem:[%s3 + $0x19c] sm:$0xf]
      %v2456 = vld [vmem:[%s3 + $0x1a0] sm:$0xf]
      %v2457 = vld [vmem:[%s3 + $0x1a4] sm:$0xf]
      %v2458 = vld [vmem:[%s3 + $0x1a8] sm:$0xf]
      %v2459 = vld [vmem:[%s3 + $0x1ac] sm:$0xf]
      %v2460 = vld [vmem:[%s3 + $0x1b0] sm:$0xf]
      %v2461 = vld [vmem:[%s3 + $0x1b4] sm:$0xf]
      %v2462 = vld [vmem:[%s3 + $0x1b8] sm:$0xf]
      %v2463 = vld [vmem:[%s3 + $0x1bc] sm:$0xf]
      %v2464 = vld [vmem:[#allocation3 + $0x118] sm:$0xff]
      %v2465 = vld [vmem:[#allocation3 + $0x120] sm:$0xff]
      %v2466 = vld [vmem:[#allocation3 + $0x128] sm:$0xff]
      %v2467 = vld [vmem:[#allocation3 + $0x130] sm:$0xff]
      %v2468 = vld [vmem:[#allocation3 + $0x138] sm:$0xff]
      %v2469 = vld [vmem:[#allocation3 + $0x140] sm:$0xff]
      %v2470 = vld [vmem:[#allocation3 + $0x148] sm:$0xff]
      %s2471 = scalar_lea.vmem %s3, 448
      %v2472 = vld [vmem:[%s2471] sm:$0xf]
      %v2473 = vld [vmem:[%s2471 + $0x4] sm:$0xf]
      %v2474 = vld [vmem:[%s2471 + $0x8] sm:$0xf]
      %v2475 = vld [vmem:[%s2471 + $0xc] sm:$0xf]
      %v2476 = vld [vmem:[%s2471 + $0x10] sm:$0xf]
      %v2477 = vld [vmem:[%s2471 + $0x14] sm:$0xf]
      %v2478 = vld [vmem:[%s2471 + $0x18] sm:$0xf]
      %v2479 = vld [vmem:[%s2471 + $0x1c] sm:$0xf]
      %v2480 = vld [vmem:[%s2471 + $0x20] sm:$0xf]
      %v2481 = vld [vmem:[%s2471 + $0x24] sm:$0xf]
      %v2482 = vld [vmem:[%s2471 + $0x28] sm:$0xf]
      %v2483 = vld [vmem:[%s2471 + $0x2c] sm:$0xf]
      %v2484 = vld [vmem:[%s2471 + $0x30] sm:$0xf]
      %v2485 = vld [vmem:[%s2471 + $0x34] sm:$0xf]
      %v2486 = vld [vmem:[%s2471 + $0x38] sm:$0xf]
      %v2487 = vld [vmem:[%s2471 + $0x3c] sm:$0xf]
      %v2488 = vld [vmem:[%s2471 + $0x40] sm:$0xf]
      %v2489 = vld [vmem:[%s2471 + $0x44] sm:$0xf]
      %v2490 = vld [vmem:[%s2471 + $0x48] sm:$0xf]
      %v2491 = vld [vmem:[%s2471 + $0x4c] sm:$0xf]
      %v2492 = vld [vmem:[%s2471 + $0x50] sm:$0xf]
      %v2493 = vld [vmem:[%s2471 + $0x54] sm:$0xf]
      %v2494 = vld [vmem:[%s2471 + $0x58] sm:$0xf]
      %v2495 = vld [vmem:[%s2471 + $0x5c] sm:$0xf]
      %v2496 = vld [vmem:[%s2471 + $0x60] sm:$0xf]
      %v2497 = vld [vmem:[%s2471 + $0x64] sm:$0xf]
      %v2498 = vld [vmem:[%s2471 + $0x68] sm:$0xf]
      %v2499 = vld [vmem:[%s2471 + $0x6c] sm:$0xf]
      %v2500 = vld [vmem:[%s2471 + $0x70] sm:$0xf]
      %v2501 = vld [vmem:[%s2471 + $0x74] sm:$0xf]
      %v2502 = vld [vmem:[%s2471 + $0x78] sm:$0xf]
      %v2503 = vld [vmem:[%s2471 + $0x7c] sm:$0xf]
      %v2504 = vld [vmem:[%s2471 + $0x80] sm:$0xf]
      %v2505 = vld [vmem:[%s2471 + $0x84] sm:$0xf]
      %v2506 = vld [vmem:[%s2471 + $0x88] sm:$0xf]
      %v2507 = vld [vmem:[%s2471 + $0x8c] sm:$0xf]
      %v2508 = vld [vmem:[%s2471 + $0x90] sm:$0xf]
      %v2509 = vld [vmem:[%s2471 + $0x94] sm:$0xf]
      %v2510 = vld [vmem:[%s2471 + $0x98] sm:$0xf]
      %v2511 = vld [vmem:[%s2471 + $0x9c] sm:$0xf]
      %v2512 = vld [vmem:[%s2471 + $0xa0] sm:$0xf]
      %v2513 = vld [vmem:[%s2471 + $0xa4] sm:$0xf]
      %v2514 = vld [vmem:[%s2471 + $0xa8] sm:$0xf]
      %v2515 = vld [vmem:[%s2471 + $0xac] sm:$0xf]
      %v2516 = vld [vmem:[%s2471 + $0xb0] sm:$0xf]
      %v2517 = vld [vmem:[%s2471 + $0xb4] sm:$0xf]
      %v2518 = vld [vmem:[%s2471 + $0xb8] sm:$0xf]
      %v2519 = vld [vmem:[%s2471 + $0xbc] sm:$0xf]
      %v2520 = vld [vmem:[%s2471 + $0xc0] sm:$0xf]
      %v2521 = vld [vmem:[%s2471 + $0xc4] sm:$0xf]
      %v2522 = vld [vmem:[%s2471 + $0xc8] sm:$0xf]
      %v2523 = vld [vmem:[%s2471 + $0xcc] sm:$0xf]
      %v2524 = vld [vmem:[%s2471 + $0xd0] sm:$0xf]
      %v2525 = vld [vmem:[%s2471 + $0xd4] sm:$0xf]
      %v2526 = vld [vmem:[%s2471 + $0xd8] sm:$0xf]
      %v2527 = vld [vmem:[%s2471 + $0xdc] sm:$0xf]
      %v2528 = vld [vmem:[%s2471 + $0xe0] sm:$0xf]
      %v2529 = vld [vmem:[%s2471 + $0xe4] sm:$0xf]
      %v2530 = vld [vmem:[%s2471 + $0xe8] sm:$0xf]
      %v2531 = vld [vmem:[%s2471 + $0xec] sm:$0xf]
      %v2532 = vld [vmem:[%s2471 + $0xf0] sm:$0xf]
      %v2533 = vld [vmem:[%s2471 + $0xf4] sm:$0xf]
      %v2534 = vld [vmem:[%s2471 + $0xf8] sm:$0xf]
      %v2535 = vld [vmem:[%s2471 + $0xfc] sm:$0xf]
      %v2536 = vld [vmem:[%s2471 + $0x100] sm:$0xf]
      %v2537 = vld [vmem:[%s2471 + $0x104] sm:$0xf]
      %v2538 = vld [vmem:[%s2471 + $0x108] sm:$0xf]
      %v2539 = vld [vmem:[%s2471 + $0x10c] sm:$0xf]
      %v2540 = vld [vmem:[%s2471 + $0x110] sm:$0xf]
      %v2541 = vld [vmem:[%s2471 + $0x114] sm:$0xf]
      %v2542 = vld [vmem:[%s2471 + $0x118] sm:$0xf]
      %v2543 = vld [vmem:[%s2471 + $0x11c] sm:$0xf]
      %v2544 = vld [vmem:[%s2471 + $0x120] sm:$0xf]
      %v2545 = vld [vmem:[%s2471 + $0x124] sm:$0xf]
      %v2546 = vld [vmem:[%s2471 + $0x128] sm:$0xf]
      %v2547 = vld [vmem:[%s2471 + $0x12c] sm:$0xf]
      %v2548 = vld [vmem:[%s2471 + $0x130] sm:$0xf]
      %v2549 = vld [vmem:[%s2471 + $0x134] sm:$0xf]
      %v2550 = vld [vmem:[%s2471 + $0x138] sm:$0xf]
      %v2551 = vld [vmem:[%s2471 + $0x13c] sm:$0xf]
      %v2552 = vld [vmem:[%s2471 + $0x140] sm:$0xf]
      %v2553 = vld [vmem:[%s2471 + $0x144] sm:$0xf]
      %v2554 = vld [vmem:[%s2471 + $0x148] sm:$0xf]
      %v2555 = vld [vmem:[%s2471 + $0x14c] sm:$0xf]
      %v2556 = vld [vmem:[%s2471 + $0x150] sm:$0xf]
      %v2557 = vld [vmem:[%s2471 + $0x154] sm:$0xf]
      %v2558 = vld [vmem:[%s2471 + $0x158] sm:$0xf]
      %v2559 = vld [vmem:[%s2471 + $0x15c] sm:$0xf]
      %v2560 = vld [vmem:[%s2471 + $0x160] sm:$0xf]
      %v2561 = vld [vmem:[%s2471 + $0x164] sm:$0xf]
      %v2562 = vld [vmem:[%s2471 + $0x168] sm:$0xf]
      %v2563 = vld [vmem:[%s2471 + $0x16c] sm:$0xf]
      %v2564 = vld [vmem:[%s2471 + $0x170] sm:$0xf]
      %v2565 = vld [vmem:[%s2471 + $0x174] sm:$0xf]
      %v2566 = vld [vmem:[%s2471 + $0x178] sm:$0xf]
      %v2567 = vld [vmem:[%s2471 + $0x17c] sm:$0xf]
      %v2568 = vld [vmem:[%s2471 + $0x180] sm:$0xf]
      %v2569 = vld [vmem:[%s2471 + $0x184] sm:$0xf]
      %v2570 = vld [vmem:[%s2471 + $0x188] sm:$0xf]
      %v2571 = vld [vmem:[%s2471 + $0x18c] sm:$0xf]
      %v2572 = vld [vmem:[%s2471 + $0x190] sm:$0xf]
      %v2573 = vld [vmem:[%s2471 + $0x194] sm:$0xf]
      %v2574 = vld [vmem:[%s2471 + $0x198] sm:$0xf]
      %v2575 = vld [vmem:[%s2471 + $0x19c] sm:$0xf]
      %v2576 = vld [vmem:[%s2471 + $0x1a0] sm:$0xf]
      %v2577 = vld [vmem:[%s2471 + $0x1a4] sm:$0xf]
      %v2578 = vld [vmem:[%s2471 + $0x1a8] sm:$0xf]
      %v2579 = vld [vmem:[%s2471 + $0x1ac] sm:$0xf]
      %v2580 = vld [vmem:[%s2471 + $0x1b0] sm:$0xf]
      %v2581 = vld [vmem:[%s2471 + $0x1b4] sm:$0xf]
      %v2582 = vld [vmem:[%s2471 + $0x1b8] sm:$0xf]
      %v2583 = vld [vmem:[%s2471 + $0x1bc] sm:$0xf]
      %v2696 = vunpack.c.l.b16 %v2472
      %v2697 = vunpack.c.l.b16 %v2473
      %v2698 = vunpack.c.l.b16 %v2474
      %v2699 = vunpack.c.l.b16 %v2475
      %v2700 = vunpack.c.l.b16 %v2476
      %v2701 = vunpack.c.l.b16 %v2477
      %v2702 = vunpack.c.l.b16 %v2478
      %v2703 = vunpack.c.l.b16 %v2479
      %v2704 = vunpack.c.l.b16 %v2480
      %v2705 = vunpack.c.l.b16 %v2481
      %v2706 = vunpack.c.l.b16 %v2482
      %v2707 = vunpack.c.l.b16 %v2483
      %v2708 = vunpack.c.l.b16 %v2484
      %v2709 = vunpack.c.l.b16 %v2485
      %v2710 = vunpack.c.l.b16 %v2486
      %v2711 = vunpack.c.l.b16 %v2487
      %v2712 = vunpack.c.l.b16 %v2488
      %v2713 = vunpack.c.l.b16 %v2489
      %v2714 = vunpack.c.l.b16 %v2490
      %v2715 = vunpack.c.l.b16 %v2491
      %v2716 = vunpack.c.l.b16 %v2492
      %v2717 = vunpack.c.l.b16 %v2493
      %v2718 = vunpack.c.l.b16 %v2494
      %v2719 = vunpack.c.l.b16 %v2495
      %v2720 = vunpack.c.l.b16 %v2496
      %v2721 = vunpack.c.l.b16 %v2497
      %v2722 = vunpack.c.l.b16 %v2498
      %v2723 = vunpack.c.l.b16 %v2499
      %v2724 = vunpack.c.l.b16 %v2500
      %v2725 = vunpack.c.l.b16 %v2501
      %v2726 = vunpack.c.l.b16 %v2502
      %v2727 = vunpack.c.l.b16 %v2503
      %v2728 = vunpack.c.l.b16 %v2504
      %v2729 = vunpack.c.l.b16 %v2505
      %v2730 = vunpack.c.l.b16 %v2506
      %v2731 = vunpack.c.l.b16 %v2507
      %v2732 = vunpack.c.l.b16 %v2508
      %v2733 = vunpack.c.l.b16 %v2509
      %v2734 = vunpack.c.l.b16 %v2510
      %v2735 = vunpack.c.l.b16 %v2511
      %v2736 = vunpack.c.l.b16 %v2512
      %v2737 = vunpack.c.l.b16 %v2513
      %v2738 = vunpack.c.l.b16 %v2514
      %v2739 = vunpack.c.l.b16 %v2515
      %v2740 = vunpack.c.l.b16 %v2516
      %v2741 = vunpack.c.l.b16 %v2517
      %v2742 = vunpack.c.l.b16 %v2518
      %v2743 = vunpack.c.l.b16 %v2519
      %v2744 = vunpack.c.l.b16 %v2520
      %v2745 = vunpack.c.l.b16 %v2521
      %v2746 = vunpack.c.l.b16 %v2522
      %v2747 = vunpack.c.l.b16 %v2523
      %v2748 = vunpack.c.l.b16 %v2524
      %v2749 = vunpack.c.l.b16 %v2525
      %v2750 = vunpack.c.l.b16 %v2526
      %v2751 = vunpack.c.l.b16 %v2527
      %v2752 = vunpack.c.l.b16 %v2528
      %v2753 = vunpack.c.l.b16 %v2529
      %v2754 = vunpack.c.l.b16 %v2530
      %v2755 = vunpack.c.l.b16 %v2531
      %v2756 = vunpack.c.l.b16 %v2532
      %v2757 = vunpack.c.l.b16 %v2533
      %v2758 = vunpack.c.l.b16 %v2534
      %v2759 = vunpack.c.l.b16 %v2535
      %v2760 = vunpack.c.l.b16 %v2536
      %v2761 = vunpack.c.l.b16 %v2537
      %v2762 = vunpack.c.l.b16 %v2538
      %v2763 = vunpack.c.l.b16 %v2539
      %v2764 = vunpack.c.l.b16 %v2540
      %v2765 = vunpack.c.l.b16 %v2541
      %v2766 = vunpack.c.l.b16 %v2542
      %v2767 = vunpack.c.l.b16 %v2543
      %v2768 = vunpack.c.l.b16 %v2544
      %v2769 = vunpack.c.l.b16 %v2545
      %v2770 = vunpack.c.l.b16 %v2546
      %v2771 = vunpack.c.l.b16 %v2547
      %v2772 = vunpack.c.l.b16 %v2548
      %v2773 = vunpack.c.l.b16 %v2549
      %v2774 = vunpack.c.l.b16 %v2550
      %v2775 = vunpack.c.l.b16 %v2551
      %v2776 = vunpack.c.l.b16 %v2552
      %v2777 = vunpack.c.l.b16 %v2553
      %v2778 = vunpack.c.l.b16 %v2554
      %v2779 = vunpack.c.l.b16 %v2555
      %v2780 = vunpack.c.l.b16 %v2556
      %v2781 = vunpack.c.l.b16 %v2557
      %v2782 = vunpack.c.l.b16 %v2558
      %v2783 = vunpack.c.l.b16 %v2559
      %v2784 = vunpack.c.l.b16 %v2560
      %v2785 = vunpack.c.l.b16 %v2561
      %v2786 = vunpack.c.l.b16 %v2562
      %v2787 = vunpack.c.l.b16 %v2563
      %v2788 = vunpack.c.l.b16 %v2564
      %v2789 = vunpack.c.l.b16 %v2565
      %v2790 = vunpack.c.l.b16 %v2566
      %v2791 = vunpack.c.l.b16 %v2567
      %v2792 = vunpack.c.l.b16 %v2568
      %v2793 = vunpack.c.l.b16 %v2569
      %v2794 = vunpack.c.l.b16 %v2570
      %v2795 = vunpack.c.l.b16 %v2571
      %v2796 = vunpack.c.l.b16 %v2572
      %v2797 = vunpack.c.l.b16 %v2573
      %v2798 = vunpack.c.l.b16 %v2574
      %v2799 = vunpack.c.l.b16 %v2575
      %v2800 = vunpack.c.l.b16 %v2576
      %v2801 = vunpack.c.l.b16 %v2577
      %v2802 = vunpack.c.l.b16 %v2578
      %v2803 = vunpack.c.l.b16 %v2579
      %v2804 = vunpack.c.l.b16 %v2580
      %v2805 = vunpack.c.l.b16 %v2581
      %v2806 = vunpack.c.l.b16 %v2582
      %v2807 = vunpack.c.l.b16 %v2583
      %v2808 = vpack.c.b16 %v2697, %v2696
      %v2809 = vpack.c.b16 %v2699, %v2698
      %v2810 = vpack.c.b16 %v2701, %v2700
      %v2811 = vpack.c.b16 %v2703, %v2702
      %v2812 = vpack.c.b16 %v2705, %v2704
      %v2813 = vpack.c.b16 %v2707, %v2706
      %v2814 = vpack.c.b16 %v2709, %v2708
      %v2815 = vpack.c.b16 %v2711, %v2710
      %v2816 = vpack.c.b16 %v2713, %v2712
      %v2817 = vpack.c.b16 %v2715, %v2714
      %v2818 = vpack.c.b16 %v2717, %v2716
      %v2819 = vpack.c.b16 %v2719, %v2718
      %v2820 = vpack.c.b16 %v2721, %v2720
      %v2821 = vpack.c.b16 %v2723, %v2722
      %v2822 = vpack.c.b16 %v2725, %v2724
      %v2823 = vpack.c.b16 %v2727, %v2726
      %v2824 = vpack.c.b16 %v2729, %v2728
      %v2825 = vpack.c.b16 %v2731, %v2730
      %v2826 = vpack.c.b16 %v2733, %v2732
      %v2827 = vpack.c.b16 %v2735, %v2734
      %v2828 = vpack.c.b16 %v2737, %v2736
      %v2829 = vpack.c.b16 %v2739, %v2738
      %v2830 = vpack.c.b16 %v2741, %v2740
      %v2831 = vpack.c.b16 %v2743, %v2742
      %v2832 = vpack.c.b16 %v2745, %v2744
      %v2833 = vpack.c.b16 %v2747, %v2746
      %v2834 = vpack.c.b16 %v2749, %v2748
      %v2835 = vpack.c.b16 %v2751, %v2750
      %v2836 = vpack.c.b16 %v2753, %v2752
      %v2837 = vpack.c.b16 %v2755, %v2754
      %v2838 = vpack.c.b16 %v2757, %v2756
      %v2839 = vpack.c.b16 %v2759, %v2758
      %v2840 = vpack.c.b16 %v2761, %v2760
      %v2841 = vpack.c.b16 %v2763, %v2762
      %v2842 = vpack.c.b16 %v2765, %v2764
      %v2843 = vpack.c.b16 %v2767, %v2766
      %v2844 = vpack.c.b16 %v2769, %v2768
      %v2845 = vpack.c.b16 %v2771, %v2770
      %v2846 = vpack.c.b16 %v2773, %v2772
      %v2847 = vpack.c.b16 %v2775, %v2774
      %v2848 = vpack.c.b16 %v2777, %v2776
      %v2849 = vpack.c.b16 %v2779, %v2778
      %v2850 = vpack.c.b16 %v2781, %v2780
      %v2851 = vpack.c.b16 %v2783, %v2782
      %v2852 = vpack.c.b16 %v2785, %v2784
      %v2853 = vpack.c.b16 %v2787, %v2786
      %v2854 = vpack.c.b16 %v2789, %v2788
      %v2855 = vpack.c.b16 %v2791, %v2790
      %v2856 = vpack.c.b16 %v2793, %v2792
      %v2857 = vpack.c.b16 %v2795, %v2794
      %v2858 = vpack.c.b16 %v2797, %v2796
      %v2859 = vpack.c.b16 %v2799, %v2798
      %v2860 = vpack.c.b16 %v2801, %v2800
      %v2861 = vpack.c.b16 %v2803, %v2802
      %v2862 = vpack.c.b16 %v2805, %v2804
      %v2863 = vpack.c.b16 %v2807, %v2806
      %2920 = vmatprep.subr.bf16.mxu0 0
      %2921 = vmatpush1.bf16.msra.mxu0 %v2808
      %2922 = vmatprep.subr.bf16.mxu0 0
      %2923 = vmatpush1.bf16.msra.mxu0 %v2809
      %2924 = vmatprep.subr.bf16.mxu0 0
      %2925 = vmatpush1.bf16.msra.mxu0 %v2810
      %2926 = vmatprep.subr.bf16.mxu0 0
      %2927 = vmatpush1.bf16.msra.mxu0 %v2811
      %2928 = vmatprep.subr.bf16.mxu0 0
      %2929 = vmatpush1.bf16.msra.mxu0 %v2812
      %2930 = vmatprep.subr.bf16.mxu0 0
      %2931 = vmatpush1.bf16.msra.mxu0 %v2813
      %2932 = vmatprep.subr.bf16.mxu0 0
      %2933 = vmatpush1.bf16.msra.mxu0 %v2814
      %2934 = vmatprep.subr.bf16.mxu0 0
      %2935 = vmatpush1.bf16.msra.mxu0 %v2815
      %2936 = vmatprep.subr.bf16.mxu0 0
      %2937 = vmatpush1.bf16.msra.mxu0 %v2816
      %2938 = vmatprep.subr.bf16.mxu0 0
      %2939 = vmatpush1.bf16.msra.mxu0 %v2817
      %2940 = vmatprep.subr.bf16.mxu0 0
      %2941 = vmatpush1.bf16.msra.mxu0 %v2818
      %2942 = vmatprep.subr.bf16.mxu0 0
      %2943 = vmatpush1.bf16.msra.mxu0 %v2819
      %2944 = vmatprep.subr.bf16.mxu0 0
      %2945 = vmatpush1.bf16.msra.mxu0 %v2820
      %2946 = vmatprep.subr.bf16.mxu0 0
      %2947 = vmatpush1.bf16.msra.mxu0 %v2821
      %2948 = vmatprep.subr.bf16.mxu0 0
      %2949 = vmatpush1.bf16.msra.mxu0 %v2822
      %2950 = vmatprep.subr.bf16.mxu0 0
      %2951 = vmatpush1.bf16.msra.mxu0 %v2823
      %2952 = vmatprep.mubr.bf16.mxu0 %v2325
      %2953 = vmatmul.mubr.bf16.gmra.mrb[0].mxu0 %v2324
      %v2954 = vpop.f32.mrb[0].mxu0
      %v2955 = vadd.f32 0.0, %v2954
      %v2956 = vpop.f32.mrb[0].mxu0
      %v2957 = vpop.f32.mrb[0].mxu0
      %v2958 = vpop.f32.mrb[0].mxu0
      %2959 = vmatprep.mubr.bf16.mxu0 %v2332
      %2960 = vmatmul.mubr.bf16.gmra.mrb[0].mxu0 %v2331
      %v2961 = vpop.f32.mrb[0].mxu0
      %v2962 = vadd.f32 0.0, %v2961
      %v2963 = vpop.f32.mrb[0].mxu0
      %v2964 = vpop.f32.mrb[0].mxu0
      %v2965 = vpop.f32.mrb[0].mxu0
      %2966 = vmatprep.mubr.bf16.mxu0 %v2339
      %2967 = vmatmul.mubr.bf16.gmra.mrb[0].mxu0 %v2338
      %v2968 = vpop.f32.mrb[0].mxu0
      %v2969 = vadd.f32 0.0, %v2968
      %v2970 = vpop.f32.mrb[0].mxu0
      %v2971 = vpop.f32.mrb[0].mxu0
      %v2972 = vpop.f32.mrb[0].mxu0
      %2973 = vmatprep.mubr.bf16.mxu0 %v2346
      %2974 = vmatmul.mubr.bf16.gmra.mrb[0].mxu0 %v2345
      %v2975 = vpop.f32.mrb[0].mxu0
      %v2976 = vadd.f32 0.0, %v2975
      %v2977 = vpop.f32.mrb[0].mxu0
      %v2978 = vpop.f32.mrb[0].mxu0
      %v2979 = vpop.f32.mrb[0].mxu0
      %2980 = vmatprep.mubr.bf16.mxu0 %v2465
      %2981 = vmatmul.mubr.bf16.gmra.mrb[0].mxu0 %v2464
      %v2982 = vpop.f32.mrb[0].mxu0
      %v2983 = vpop.f32.mrb[0].mxu0
      %v2984 = vpop.f32.mrb[0].mxu0
      %v2985 = vpop.f32.mrb[0].mxu0
      %2986 = vdwg.mxu0
      %2987 = vmatprep.subr.bf16.mxu0 0
      %2988 = vmatpush1.bf16.msra.mxu0 %v2824
      %2989 = vmatprep.subr.bf16.mxu0 0
      %2990 = vmatpush1.bf16.msra.mxu0 %v2825
      %2991 = vmatprep.subr.bf16.mxu0 0
      %2992 = vmatpush1.bf16.msra.mxu0 %v2826
      %2993 = vmatprep.subr.bf16.mxu0 0
      %2994 = vmatpush1.bf16.msra.mxu0 %v2827
      %2995 = vmatprep.subr.bf16.mxu0 0
      %2996 = vmatpush1.bf16.msra.mxu0 %v2828
      %2997 = vmatprep.subr.bf16.mxu0 0
      %2998 = vmatpush1.bf16.msra.mxu0 %v2829
      %2999 = vmatprep.subr.bf16.mxu0 0
      %3000 = vmatpush1.bf16.msra.mxu0 %v2830
      %3001 = vmatprep.subr.bf16.mxu0 0
      %3002 = vmatpush1.bf16.msra.mxu0 %v2831
      %3003 = vmatprep.subr.bf16.mxu0 0
      %3004 = vmatpush1.bf16.msra.mxu0 %v2832
      %3005 = vmatprep.subr.bf16.mxu0 0
      %3006 = vmatpush1.bf16.msra.mxu0 %v2833
      %3007 = vmatprep.subr.bf16.mxu0 0
      %3008 = vmatpush1.bf16.msra.mxu0 %v2834
      %3009 = vmatprep.subr.bf16.mxu0 0
      %3010 = vmatpush1.bf16.msra.mxu0 %v2835
      %3011 = vmatprep.subr.bf16.mxu0 0
      %3012 = vmatpush1.bf16.msra.mxu0 %v2836
      %3013 = vmatprep.subr.bf16.mxu0 0
      %3014 = vmatpush1.bf16.msra.mxu0 %v2837
      %3015 = vmatprep.subr.bf16.mxu0 0
      %3016 = vmatpush1.bf16.msra.mxu0 %v2838
      %3017 = vmatprep.subr.bf16.mxu0 0
      %3018 = vmatpush1.bf16.msra.mxu0 %v2839
      %3019 = vmatprep.mubr.bf16.mxu0 %v2327
      %3020 = vmatmul.mubr.bf16.gmra.mrb[0].mxu0 %v2326
      %v3021 = vpop.f32.mrb[0].mxu0
      %v3022 = vadd.f32 %v2955, %v3021
      %v3023 = vpop.f32.mrb[0].mxu0
      %v3024 = vpop.f32.mrb[0].mxu0
      %v3025 = vpop.f32.mrb[0].mxu0
      %3026 = vmatprep.mubr.bf16.mxu0 %v2334
      %3027 = vmatmul.mubr.bf16.gmra.mrb[0].mxu0 %v2333
      %v3028 = vpop.f32.mrb[0].mxu0
      %v3029 = vadd.f32 %v2962, %v3028
      %v3030 = vpop.f32.mrb[0].mxu0
      %v3031 = vpop.f32.mrb[0].mxu0
      %v3032 = vpop.f32.mrb[0].mxu0
      %3033 = vmatprep.mubr.bf16.mxu0 %v2341
      %3034 = vmatmul.mubr.bf16.gmra.mrb[0].mxu0 %v2340
      %v3035 = vpop.f32.mrb[0].mxu0
      %v3036 = vadd.f32 %v2969, %v3035
      %v3037 = vpop.f32.mrb[0].mxu0
      %v3038 = vpop.f32.mrb[0].mxu0
      %v3039 = vpop.f32.mrb[0].mxu0
      %3040 = vmatprep.mubr.bf16.mxu0 %v2348
      %3041 = vmatmul.mubr.bf16.gmra.mrb[0].mxu0 %v2347
      %v3042 = vpop.f32.mrb[0].mxu0
      %v3043 = vadd.f32 %v2976, %v3042
      %v3044 = vpop.f32.mrb[0].mxu0
      %v3045 = vpop.f32.mrb[0].mxu0
      %v3046 = vpop.f32.mrb[0].mxu0
      %3047 = vmatprep.mubr.bf16.mxu0 %v2467
      %3048 = vmatmul.mubr.bf16.gmra.mrb[0].mxu0 %v2466
      %v3049 = vpop.f32.mrb[0].mxu0
      %v3050 = vpop.f32.mrb[0].mxu0
      %v3051 = vpop.f32.mrb[0].mxu0
      %v3052 = vpop.f32.mrb[0].mxu0
      %3053 = vdwg.mxu0
      %3054 = vmatprep.subr.bf16.mxu0 0
      %3055 = vmatpush1.bf16.msra.mxu0 %v2840
      %3056 = vmatprep.subr.bf16.mxu0 0
      %3057 = vmatpush1.bf16.msra.mxu0 %v2841
      %3058 = vmatprep.subr.bf16.mxu0 0
      %3059 = vmatpush1.bf16.msra.mxu0 %v2842
      %3060 = vmatprep.subr.bf16.mxu0 0
      %3061 = vmatpush1.bf16.msra.mxu0 %v2843
      %3062 = vmatprep.subr.bf16.mxu0 0
      %3063 = vmatpush1.bf16.msra.mxu0 %v2844
      %3064 = vmatprep.subr.bf16.mxu0 0
      %3065 = vmatpush1.bf16.msra.mxu0 %v2845
      %3066 = vmatprep.subr.bf16.mxu0 0
      %3067 = vmatpush1.bf16.msra.mxu0 %v2846
      %3068 = vmatprep.subr.bf16.mxu0 0
      %3069 = vmatpush1.bf16.msra.mxu0 %v2847
      %3070 = vmatprep.subr.bf16.mxu0 0
      %3071 = vmatpush1.bf16.msra.mxu0 %v2848
      %3072 = vmatprep.subr.bf16.mxu0 0
      %3073 = vmatpush1.bf16.msra.mxu0 %v2849
      %3074 = vmatprep.subr.bf16.mxu0 0
      %3075 = vmatpush1.bf16.msra.mxu0 %v2850
      %3076 = vmatprep.subr.bf16.mxu0 0
      %3077 = vmatpush1.bf16.msra.mxu0 %v2851
      %3078 = vmatprep.subr.bf16.mxu0 0
      %3079 = vmatpush1.bf16.msra.mxu0 %v2852
      %3080 = vmatprep.subr.bf16.mxu0 0
      %3081 = vmatpush1.bf16.msra.mxu0 %v2853
      %3082 = vmatprep.subr.bf16.mxu0 0
      %3083 = vmatpush1.bf16.msra.mxu0 %v2854
      %3084 = vmatprep.subr.bf16.mxu0 0
      %3085 = vmatpush1.bf16.msra.mxu0 %v2855
      %3086 = vmatprep.mubr.bf16.mxu0 %v2329
      %3087 = vmatmul.mubr.bf16.gmra.mrb[0].mxu0 %v2328
      %v3088 = vpop.f32.mrb[0].mxu0
      %v3089 = vadd.f32 %v3022, %v3088
      %v3090 = vpop.f32.mrb[0].mxu0
      %v3091 = vpop.f32.mrb[0].mxu0
      %v3092 = vpop.f32.mrb[0].mxu0
      %3093 = vmatprep.mubr.bf16.mxu0 %v2336
      %3094 = vmatmul.mubr.bf16.gmra.mrb[0].mxu0 %v2335
      %v3095 = vpop.f32.mrb[0].mxu0
      %v3096 = vadd.f32 %v3029, %v3095
      %v3097 = vpop.f32.mrb[0].mxu0
      %v3098 = vpop.f32.mrb[0].mxu0
      %v3099 = vpop.f32.mrb[0].mxu0
      %3100 = vmatprep.mubr.bf16.mxu0 %v2343
      %3101 = vmatmul.mubr.bf16.gmra.mrb[0].mxu0 %v2342
      %v3102 = vpop.f32.mrb[0].mxu0
      %v3103 = vadd.f32 %v3036, %v3102
      %v3104 = vpop.f32.mrb[0].mxu0
      %v3105 = vpop.f32.mrb[0].mxu0
      %v3106 = vpop.f32.mrb[0].mxu0
      %3107 = vmatprep.mubr.bf16.mxu0 %v2350
      %3108 = vmatmul.mubr.bf16.gmra.mrb[0].mxu0 %v2349
      %v3109 = vpop.f32.mrb[0].mxu0
      %v3110 = vadd.f32 %v3043, %v3109
      %v3111 = vpop.f32.mrb[0].mxu0
      %v3112 = vpop.f32.mrb[0].mxu0
      %v3113 = vpop.f32.mrb[0].mxu0
      %3114 = vmatprep.mubr.bf16.mxu0 %v2469
      %3115 = vmatmul.mubr.bf16.gmra.mrb[0].mxu0 %v2468
      %v3116 = vpop.f32.mrb[0].mxu0
      %v3117 = vpop.f32.mrb[0].mxu0
      %v3118 = vpop.f32.mrb[0].mxu0
      %v3119 = vpop.f32.mrb[0].mxu0
      %3120 = vdwg.mxu0
      %3121 = vmatprep.subr.bf16.mxu0 0
      %3122 = vmatpush1.bf16.msra.mxu0 %v2856
      %3123 = vmatprep.subr.bf16.mxu0 0
      %3124 = vmatpush1.bf16.msra.mxu0 %v2857
      %3125 = vmatprep.subr.bf16.mxu0 0
      %3126 = vmatpush1.bf16.msra.mxu0 %v2858
      %3127 = vmatprep.subr.bf16.mxu0 0
      %3128 = vmatpush1.bf16.msra.mxu0 %v2859
      %3129 = vmatprep.subr.bf16.mxu0 0
      %3130 = vmatpush1.bf16.msra.mxu0 %v2860
      %3131 = vmatprep.subr.bf16.mxu0 0
      %3132 = vmatpush1.bf16.msra.mxu0 %v2861
      %3133 = vmatprep.subr.bf16.mxu0 0
      %3134 = vmatpush1.bf16.msra.mxu0 %v2862
      %3135 = vmatprep.subr.bf16.mxu0 0
      %3136 = vmatpush1.bf16.msra.mxu0 %v2863
      %3137 = vmatprep.subr.bf16.mxu0 0
      %3138 = vmatpush1.bf16.msra.mxu0 0
      %3139 = vmatprep.subr.bf16.mxu0 0
      %3140 = vmatpush1.bf16.msra.mxu0 0
      %3141 = vmatprep.subr.bf16.mxu0 0
      %3142 = vmatpush1.bf16.msra.mxu0 0
      %3143 = vmatprep.subr.bf16.mxu0 0
      %3144 = vmatpush1.bf16.msra.mxu0 0
      %3145 = vmatprep.subr.bf16.mxu0 0
      %3146 = vmatpush1.bf16.msra.mxu0 0
      %3147 = vmatprep.subr.bf16.mxu0 0
      %3148 = vmatpush1.bf16.msra.mxu0 0
      %3149 = vmatprep.subr.bf16.mxu0 0
      %3150 = vmatpush1.bf16.msra.mxu0 0
      %3151 = vmatprep.subr.bf16.mxu0 0
      %3152 = vmatpush1.bf16.msra.mxu0 0
      %3153 = vmatprep.mubr.bf16.mxu0 0
      %3154 = vmatmul.mubr.bf16.gmra.mrb[0].mxu0 %v2330
      %v3155 = vpop.f32.mrb[0].mxu0
      %v3156 = vadd.f32 %v3089, %v3155
      %v3157 = vpop.f32.mrb[0].mxu0
      %v3158 = vpop.f32.mrb[0].mxu0
      %v3159 = vpop.f32.mrb[0].mxu0
      %3160 = vmatprep.mubr.bf16.mxu0 0
      %3161 = vmatmul.mubr.bf16.gmra.mrb[0].mxu0 %v2337
      %v3162 = vpop.f32.mrb[0].mxu0
      %v3163 = vadd.f32 %v3096, %v3162
      %v3164 = vpop.f32.mrb[0].mxu0
      %v3165 = vpop.f32.mrb[0].mxu0
      %v3166 = vpop.f32.mrb[0].mxu0
      %3167 = vmatprep.mubr.bf16.mxu0 0
      %3168 = vmatmul.mubr.bf16.gmra.mrb[0].mxu0 %v2344
      %v3169 = vpop.f32.mrb[0].mxu0
      %v3170 = vadd.f32 %v3103, %v3169
      %v3171 = vpop.f32.mrb[0].mxu0
      %v3172 = vpop.f32.mrb[0].mxu0
      %v3173 = vpop.f32.mrb[0].mxu0
      %3174 = vmatprep.mubr.bf16.mxu0 0
      %3175 = vmatmul.mubr.bf16.gmra.mrb[0].mxu0 %v2351
      %v3176 = vpop.f32.mrb[0].mxu0
      %v3177 = vadd.f32 %v3110, %v3176
      %v3178 = vpop.f32.mrb[0].mxu0
      %v3179 = vpop.f32.mrb[0].mxu0
      %v3180 = vpop.f32.mrb[0].mxu0
      %3181 = vmatprep.mubr.bf16.mxu0 0
      %3182 = vmatmul.mubr.bf16.gmra.mrb[0].mxu0 %v2470
      %v3183 = vpop.f32.mrb[0].mxu0
      %v3184 = vpop.f32.mrb[0].mxu0
      %v3185 = vpop.f32.mrb[0].mxu0
      %v3186 = vpop.f32.mrb[0].mxu0
      %3187 = vdwg.mxu0
      %v3300 = vunpack.c.l.b16 %v2352
      %v3301 = vunpack.c.l.b16 %v2353
      %v3302 = vunpack.c.l.b16 %v2354
      %v3303 = vunpack.c.l.b16 %v2355
      %v3304 = vunpack.c.l.b16 %v2356
      %v3305 = vunpack.c.l.b16 %v2357
      %v3306 = vunpack.c.l.b16 %v2358
      %v3307 = vunpack.c.l.b16 %v2359
      %v3308 = vunpack.c.l.b16 %v2360
      %v3309 = vunpack.c.l.b16 %v2361
      %v3310 = vunpack.c.l.b16 %v2362
      %v3311 = vunpack.c.l.b16 %v2363
      %v3312 = vunpack.c.l.b16 %v2364
      %v3313 = vunpack.c.l.b16 %v2365
      %v3314 = vunpack.c.l.b16 %v2366
      %v3315 = vunpack.c.l.b16 %v2367
      %v3316 = vunpack.c.l.b16 %v2368
      %v3317 = vunpack.c.l.b16 %v2369
      %v3318 = vunpack.c.l.b16 %v2370
      %v3319 = vunpack.c.l.b16 %v2371
      %v3320 = vunpack.c.l.b16 %v2372
      %v3321 = vunpack.c.l.b16 %v2373
      %v3322 = vunpack.c.l.b16 %v2374
      %v3323 = vunpack.c.l.b16 %v2375
      %v3324 = vunpack.c.l.b16 %v2376
      %v3325 = vunpack.c.l.b16 %v2377
      %v3326 = vunpack.c.l.b16 %v2378
      %v3327 = vunpack.c.l.b16 %v2379
      %v3328 = vunpack.c.l.b16 %v2380
      %v3329 = vunpack.c.l.b16 %v2381
      %v3330 = vunpack.c.l.b16 %v2382
      %v3331 = vunpack.c.l.b16 %v2383
      %v3332 = vunpack.c.l.b16 %v2384
      %v3333 = vunpack.c.l.b16 %v2385
      %v3334 = vunpack.c.l.b16 %v2386
      %v3335 = vunpack.c.l.b16 %v2387
      %v3336 = vunpack.c.l.b16 %v2388
      %v3337 = vunpack.c.l.b16 %v2389
      %v3338 = vunpack.c.l.b16 %v2390
      %v3339 = vunpack.c.l.b16 %v2391
      %v3340 = vunpack.c.l.b16 %v2392
      %v3341 = vunpack.c.l.b16 %v2393
      %v3342 = vunpack.c.l.b16 %v2394
      %v3343 = vunpack.c.l.b16 %v2395
      %v3344 = vunpack.c.l.b16 %v2396
      %v3345 = vunpack.c.l.b16 %v2397
      %v3346 = vunpack.c.l.b16 %v2398
      %v3347 = vunpack.c.l.b16 %v2399
      %v3348 = vunpack.c.l.b16 %v2400
      %v3349 = vunpack.c.l.b16 %v2401
      %v3350 = vunpack.c.l.b16 %v2402
      %v3351 = vunpack.c.l.b16 %v2403
      %v3352 = vunpack.c.l.b16 %v2404
      %v3353 = vunpack.c.l.b16 %v2405
      %v3354 = vunpack.c.l.b16 %v2406
      %v3355 = vunpack.c.l.b16 %v2407
      %v3356 = vunpack.c.l.b16 %v2408
      %v3357 = vunpack.c.l.b16 %v2409
      %v3358 = vunpack.c.l.b16 %v2410
      %v3359 = vunpack.c.l.b16 %v2411
      %v3360 = vunpack.c.l.b16 %v2412
      %v3361 = vunpack.c.l.b16 %v2413
      %v3362 = vunpack.c.l.b16 %v2414
      %v3363 = vunpack.c.l.b16 %v2415
      %v3364 = vunpack.c.l.b16 %v2416
      %v3365 = vunpack.c.l.b16 %v2417
      %v3366 = vunpack.c.l.b16 %v2418
      %v3367 = vunpack.c.l.b16 %v2419
      %v3368 = vunpack.c.l.b16 %v2420
      %v3369 = vunpack.c.l.b16 %v2421
      %v3370 = vunpack.c.l.b16 %v2422
      %v3371 = vunpack.c.l.b16 %v2423
      %v3372 = vunpack.c.l.b16 %v2424
      %v3373 = vunpack.c.l.b16 %v2425
      %v3374 = vunpack.c.l.b16 %v2426
      %v3375 = vunpack.c.l.b16 %v2427
      %v3376 = vunpack.c.l.b16 %v2428
      %v3377 = vunpack.c.l.b16 %v2429
      %v3378 = vunpack.c.l.b16 %v2430
      %v3379 = vunpack.c.l.b16 %v2431
      %v3380 = vunpack.c.l.b16 %v2432
      %v3381 = vunpack.c.l.b16 %v2433
      %v3382 = vunpack.c.l.b16 %v2434
      %v3383 = vunpack.c.l.b16 %v2435
      %v3384 = vunpack.c.l.b16 %v2436
      %v3385 = vunpack.c.l.b16 %v2437
      %v3386 = vunpack.c.l.b16 %v2438
      %v3387 = vunpack.c.l.b16 %v2439
      %v3388 = vunpack.c.l.b16 %v2440
      %v3389 = vunpack.c.l.b16 %v2441
      %v3390 = vunpack.c.l.b16 %v2442
      %v3391 = vunpack.c.l.b16 %v2443
      %v3392 = vunpack.c.l.b16 %v2444
      %v3393 = vunpack.c.l.b16 %v2445
      %v3394 = vunpack.c.l.b16 %v2446
      %v3395 = vunpack.c.l.b16 %v2447
      %v3396 = vunpack.c.l.b16 %v2448
      %v3397 = vunpack.c.l.b16 %v2449
      %v3398 = vunpack.c.l.b16 %v2450
      %v3399 = vunpack.c.l.b16 %v2451
      %v3400 = vunpack.c.l.b16 %v2452
      %v3401 = vunpack.c.l.b16 %v2453
      %v3402 = vunpack.c.l.b16 %v2454
      %v3403 = vunpack.c.l.b16 %v2455
      %v3404 = vunpack.c.l.b16 %v2456
      %v3405 = vunpack.c.l.b16 %v2457
      %v3406 = vunpack.c.l.b16 %v2458
      %v3407 = vunpack.c.l.b16 %v2459
      %v3408 = vunpack.c.l.b16 %v2460
      %v3409 = vunpack.c.l.b16 %v2461
      %v3410 = vunpack.c.l.b16 %v2462
      %v3411 = vunpack.c.l.b16 %v2463
      %v3412 = vpack.c.b16 %v3301, %v3300
      %v3413 = vpack.c.b16 %v3303, %v3302
      %v3414 = vpack.c.b16 %v3305, %v3304
      %v3415 = vpack.c.b16 %v3307, %v3306
      %v3416 = vpack.c.b16 %v3309, %v3308
      %v3417 = vpack.c.b16 %v3311, %v3310
      %v3418 = vpack.c.b16 %v3313, %v3312
      %v3419 = vpack.c.b16 %v3315, %v3314
      %v3420 = vpack.c.b16 %v3317, %v3316
      %v3421 = vpack.c.b16 %v3319, %v3318
      %v3422 = vpack.c.b16 %v3321, %v3320
      %v3423 = vpack.c.b16 %v3323, %v3322
      %v3424 = vpack.c.b16 %v3325, %v3324
      %v3425 = vpack.c.b16 %v3327, %v3326
      %v3426 = vpack.c.b16 %v3329, %v3328
      %v3427 = vpack.c.b16 %v3331, %v3330
      %v3428 = vpack.c.b16 %v3333, %v3332
      %v3429 = vpack.c.b16 %v3335, %v3334
      %v3430 = vpack.c.b16 %v3337, %v3336
      %v3431 = vpack.c.b16 %v3339, %v3338
      %v3432 = vpack.c.b16 %v3341, %v3340
      %v3433 = vpack.c.b16 %v3343, %v3342
      %v3434 = vpack.c.b16 %v3345, %v3344
      %v3435 = vpack.c.b16 %v3347, %v3346
      %v3436 = vpack.c.b16 %v3349, %v3348
      %v3437 = vpack.c.b16 %v3351, %v3350
      %v3438 = vpack.c.b16 %v3353, %v3352
      %v3439 = vpack.c.b16 %v3355, %v3354
      %v3440 = vpack.c.b16 %v3357, %v3356
      %v3441 = vpack.c.b16 %v3359, %v3358
      %v3442 = vpack.c.b16 %v3361, %v3360
      %v3443 = vpack.c.b16 %v3363, %v3362
      %v3444 = vpack.c.b16 %v3365, %v3364
      %v3445 = vpack.c.b16 %v3367, %v3366
      %v3446 = vpack.c.b16 %v3369, %v3368
      %v3447 = vpack.c.b16 %v3371, %v3370
      %v3448 = vpack.c.b16 %v3373, %v3372
      %v3449 = vpack.c.b16 %v3375, %v3374
      %v3450 = vpack.c.b16 %v3377, %v3376
      %v3451 = vpack.c.b16 %v3379, %v3378
      %v3452 = vpack.c.b16 %v3381, %v3380
      %v3453 = vpack.c.b16 %v3383, %v3382
      %v3454 = vpack.c.b16 %v3385, %v3384
      %v3455 = vpack.c.b16 %v3387, %v3386
      %v3456 = vpack.c.b16 %v3389, %v3388
      %v3457 = vpack.c.b16 %v3391, %v3390
      %v3458 = vpack.c.b16 %v3393, %v3392
      %v3459 = vpack.c.b16 %v3395, %v3394
      %v3460 = vpack.c.b16 %v3397, %v3396
      %v3461 = vpack.c.b16 %v3399, %v3398
      %v3462 = vpack.c.b16 %v3401, %v3400
      %v3463 = vpack.c.b16 %v3403, %v3402
      %v3464 = vpack.c.b16 %v3405, %v3404
      %v3465 = vpack.c.b16 %v3407, %v3406
      %v3466 = vpack.c.b16 %v3409, %v3408
      %v3467 = vpack.c.b16 %v3411, %v3410
      %3524 = vmatprep.subr.bf16.mxu0 0
      %3525 = vmatpush1.bf16.msra.mxu0 %v3412
      %3526 = vmatprep.subr.bf16.mxu0 0
      %3527 = vmatpush1.bf16.msra.mxu0 %v3413
      %3528 = vmatprep.subr.bf16.mxu0 0
      %3529 = vmatpush1.bf16.msra.mxu0 %v3414
      %3530 = vmatprep.subr.bf16.mxu0 0
      %3531 = vmatpush1.bf16.msra.mxu0 %v3415
      %3532 = vmatprep.subr.bf16.mxu0 0
      %3533 = vmatpush1.bf16.msra.mxu0 %v3416
      %3534 = vmatprep.subr.bf16.mxu0 0
      %3535 = vmatpush1.bf16.msra.mxu0 %v3417
      %3536 = vmatprep.subr.bf16.mxu0 0
      %3537 = vmatpush1.bf16.msra.mxu0 %v3418
      %3538 = vmatprep.subr.bf16.mxu0 0
      %3539 = vmatpush1.bf16.msra.mxu0 %v3419
      %3540 = vmatprep.subr.bf16.mxu0 0
      %3541 = vmatpush1.bf16.msra.mxu0 %v3420
      %3542 = vmatprep.subr.bf16.mxu0 0
      %3543 = vmatpush1.bf16.msra.mxu0 %v3421
      %3544 = vmatprep.subr.bf16.mxu0 0
      %3545 = vmatpush1.bf16.msra.mxu0 %v3422
      %3546 = vmatprep.subr.bf16.mxu0 0
      %3547 = vmatpush1.bf16.msra.mxu0 %v3423
      %3548 = vmatprep.subr.bf16.mxu0 0
      %3549 = vmatpush1.bf16.msra.mxu0 %v3424
      %3550 = vmatprep.subr.bf16.mxu0 0
      %3551 = vmatpush1.bf16.msra.mxu0 %v3425
      %3552 = vmatprep.subr.bf16.mxu0 0
      %3553 = vmatpush1.bf16.msra.mxu0 %v3426
      %3554 = vmatprep.subr.bf16.mxu0 0
      %3555 = vmatpush1.bf16.msra.mxu0 %v3427
      %3556 = vmatprep.mubr.bf16.mxu0 %v2318
      %3557 = vmatmul.mubr.bf16.gmra.mrb[0].mxu0 %v2317
      %v3558 = vpop.f32.mrb[0].mxu0
      %v3559 = vadd.f32 %v3156, %v3558
      %v3560 = vpop.f32.mrb[0].mxu0
      %v3561 = vpop.f32.mrb[0].mxu0
      %v3562 = vpop.f32.mrb[0].mxu0
      %3563 = vmatprep.mubr.bf16.mxu0 %v2325
      %3564 = vmatmul.mubr.bf16.gmra.mrb[0].mxu0 %v2324
      %v3565 = vpop.f32.mrb[0].mxu0
      %v3566 = vadd.f32 %v3163, %v3565
      %v3567 = vpop.f32.mrb[0].mxu0
      %v3568 = vpop.f32.mrb[0].mxu0
      %v3569 = vpop.f32.mrb[0].mxu0
      %3570 = vmatprep.mubr.bf16.mxu0 %v2332
      %3571 = vmatmul.mubr.bf16.gmra.mrb[0].mxu0 %v2331
      %v3572 = vpop.f32.mrb[0].mxu0
      %v3573 = vadd.f32 %v3170, %v3572
      %v3574 = vpop.f32.mrb[0].mxu0
      %v3575 = vpop.f32.mrb[0].mxu0
      %v3576 = vpop.f32.mrb[0].mxu0
      %3577 = vmatprep.mubr.bf16.mxu0 %v2339
      %3578 = vmatmul.mubr.bf16.gmra.mrb[0].mxu0 %v2338
      %v3579 = vpop.f32.mrb[0].mxu0
      %v3580 = vadd.f32 %v3177, %v3579
      %v3581 = vpop.f32.mrb[0].mxu0
      %v3582 = vpop.f32.mrb[0].mxu0
      %v3583 = vpop.f32.mrb[0].mxu0
      %3584 = vmatprep.mubr.bf16.mxu0 %v2346
      %3585 = vmatmul.mubr.bf16.gmra.mrb[0].mxu0 %v2345
      %v3586 = vpop.f32.mrb[0].mxu0
      %v3587 = vpop.f32.mrb[0].mxu0
      %v3588 = vpop.f32.mrb[0].mxu0
      %v3589 = vpop.f32.mrb[0].mxu0
      %3590 = vdwg.mxu0
      %3591 = vmatprep.subr.bf16.mxu0 0
      %3592 = vmatpush1.bf16.msra.mxu0 %v3428
      %3593 = vmatprep.subr.bf16.mxu0 0
      %3594 = vmatpush1.bf16.msra.mxu0 %v3429
      %3595 = vmatprep.subr.bf16.mxu0 0
      %3596 = vmatpush1.bf16.msra.mxu0 %v3430
      %3597 = vmatprep.subr.bf16.mxu0 0
      %3598 = vmatpush1.bf16.msra.mxu0 %v3431
      %3599 = vmatprep.subr.bf16.mxu0 0
      %3600 = vmatpush1.bf16.msra.mxu0 %v3432
      %3601 = vmatprep.subr.bf16.mxu0 0
      %3602 = vmatpush1.bf16.msra.mxu0 %v3433
      %3603 = vmatprep.subr.bf16.mxu0 0
      %3604 = vmatpush1.bf16.msra.mxu0 %v3434
      %3605 = vmatprep.subr.bf16.mxu0 0
      %3606 = vmatpush1.bf16.msra.mxu0 %v3435
      %3607 = vmatprep.subr.bf16.mxu0 0
      %3608 = vmatpush1.bf16.msra.mxu0 %v3436
      %3609 = vmatprep.subr.bf16.mxu0 0
      %3610 = vmatpush1.bf16.msra.mxu0 %v3437
      %3611 = vmatprep.subr.bf16.mxu0 0
      %3612 = vmatpush1.bf16.msra.mxu0 %v3438
      %3613 = vmatprep.subr.bf16.mxu0 0
      %3614 = vmatpush1.bf16.msra.mxu0 %v3439
      %3615 = vmatprep.subr.bf16.mxu0 0
      %3616 = vmatpush1.bf16.msra.mxu0 %v3440
      %3617 = vmatprep.subr.bf16.mxu0 0
      %3618 = vmatpush1.bf16.msra.mxu0 %v3441
      %3619 = vmatprep.subr.bf16.mxu0 0
      %3620 = vmatpush1.bf16.msra.mxu0 %v3442
      %3621 = vmatprep.subr.bf16.mxu0 0
      %3622 = vmatpush1.bf16.msra.mxu0 %v3443
      %3623 = vmatprep.mubr.bf16.mxu0 %v2320
      %3624 = vmatmul.mubr.bf16.gmra.mrb[0].mxu0 %v2319
      %v3625 = vpop.f32.mrb[0].mxu0
      %v3626 = vadd.f32 %v3559, %v3625
      %v3627 = vpop.f32.mrb[0].mxu0
      %v3628 = vpop.f32.mrb[0].mxu0
      %v3629 = vpop.f32.mrb[0].mxu0
      %3630 = vmatprep.mubr.bf16.mxu0 %v2327
      %3631 = vmatmul.mubr.bf16.gmra.mrb[0].mxu0 %v2326
      %v3632 = vpop.f32.mrb[0].mxu0
      %v3633 = vadd.f32 %v3566, %v3632
      %v3634 = vpop.f32.mrb[0].mxu0
      %v3635 = vpop.f32.mrb[0].mxu0
      %v3636 = vpop.f32.mrb[0].mxu0
      %3637 = vmatprep.mubr.bf16.mxu0 %v2334
      %3638 = vmatmul.mubr.bf16.gmra.mrb[0].mxu0 %v2333
      %v3639 = vpop.f32.mrb[0].mxu0
      %v3640 = vadd.f32 %v3573, %v3639
      %v3641 = vpop.f32.mrb[0].mxu0
      %v3642 = vpop.f32.mrb[0].mxu0
      %v3643 = vpop.f32.mrb[0].mxu0
      %3644 = vmatprep.mubr.bf16.mxu0 %v2341
      %3645 = vmatmul.mubr.bf16.gmra.mrb[0].mxu0 %v2340
      %v3646 = vpop.f32.mrb[0].mxu0
      %v3647 = vadd.f32 %v3580, %v3646
      %v3648 = vpop.f32.mrb[0].mxu0
      %v3649 = vpop.f32.mrb[0].mxu0
      %v3650 = vpop.f32.mrb[0].mxu0
      %3651 = vmatprep.mubr.bf16.mxu0 %v2348
      %3652 = vmatmul.mubr.bf16.gmra.mrb[0].mxu0 %v2347
      %v3653 = vpop.f32.mrb[0].mxu0
      %v3654 = vpop.f32.mrb[0].mxu0
      %v3655 = vpop.f32.mrb[0].mxu0
      %v3656 = vpop.f32.mrb[0].mxu0
      %3657 = vdwg.mxu0
      %3658 = vmatprep.subr.bf16.mxu0 0
      %3659 = vmatpush1.bf16.msra.mxu0 %v3444
      %3660 = vmatprep.subr.bf16.mxu0 0
      %3661 = vmatpush1.bf16.msra.mxu0 %v3445
      %3662 = vmatprep.subr.bf16.mxu0 0
      %3663 = vmatpush1.bf16.msra.mxu0 %v3446
      %3664 = vmatprep.subr.bf16.mxu0 0
      %3665 = vmatpush1.bf16.msra.mxu0 %v3447
      %3666 = vmatprep.subr.bf16.mxu0 0
      %3667 = vmatpush1.bf16.msra.mxu0 %v3448
      %3668 = vmatprep.subr.bf16.mxu0 0
      %3669 = vmatpush1.bf16.msra.mxu0 %v3449
      %3670 = vmatprep.subr.bf16.mxu0 0
      %3671 = vmatpush1.bf16.msra.mxu0 %v3450
      %3672 = vmatprep.subr.bf16.mxu0 0
      %3673 = vmatpush1.bf16.msra.mxu0 %v3451
      %3674 = vmatprep.subr.bf16.mxu0 0
      %3675 = vmatpush1.bf16.msra.mxu0 %v3452
      %3676 = vmatprep.subr.bf16.mxu0 0
      %3677 = vmatpush1.bf16.msra.mxu0 %v3453
      %3678 = vmatprep.subr.bf16.mxu0 0
      %3679 = vmatpush1.bf16.msra.mxu0 %v3454
      %3680 = vmatprep.subr.bf16.mxu0 0
      %3681 = vmatpush1.bf16.msra.mxu0 %v3455
      %3682 = vmatprep.subr.bf16.mxu0 0
      %3683 = vmatpush1.bf16.msra.mxu0 %v3456
      %3684 = vmatprep.subr.bf16.mxu0 0
      %3685 = vmatpush1.bf16.msra.mxu0 %v3457
      %3686 = vmatprep.subr.bf16.mxu0 0
      %3687 = vmatpush1.bf16.msra.mxu0 %v3458
      %3688 = vmatprep.subr.bf16.mxu0 0
      %3689 = vmatpush1.bf16.msra.mxu0 %v3459
      %3690 = vmatprep.mubr.bf16.mxu0 %v2322
      %3691 = vmatmul.mubr.bf16.gmra.mrb[0].mxu0 %v2321
      %v3692 = vpop.f32.mrb[0].mxu0
      %v3693 = vadd.f32 %v3626, %v3692
      %v3694 = vpop.f32.mrb[0].mxu0
      %v3695 = vpop.f32.mrb[0].mxu0
      %v3696 = vpop.f32.mrb[0].mxu0
      %3697 = vmatprep.mubr.bf16.mxu0 %v2329
      %3698 = vmatmul.mubr.bf16.gmra.mrb[0].mxu0 %v2328
      %v3699 = vpop.f32.mrb[0].mxu0
      %v3700 = vadd.f32 %v3633, %v3699
      %v3701 = vpop.f32.mrb[0].mxu0
      %v3702 = vpop.f32.mrb[0].mxu0
      %v3703 = vpop.f32.mrb[0].mxu0
      %3704 = vmatprep.mubr.bf16.mxu0 %v2336
      %3705 = vmatmul.mubr.bf16.gmra.mrb[0].mxu0 %v2335
      %v3706 = vpop.f32.mrb[0].mxu0
      %v3707 = vadd.f32 %v3640, %v3706
      %v3708 = vpop.f32.mrb[0].mxu0
      %v3709 = vpop.f32.mrb[0].mxu0
      %v3710 = vpop.f32.mrb[0].mxu0
      %3711 = vmatprep.mubr.bf16.mxu0 %v2343
      %3712 = vmatmul.mubr.bf16.gmra.mrb[0].mxu0 %v2342
      %v3713 = vpop.f32.mrb[0].mxu0
      %v3714 = vadd.f32 %v3647, %v3713
      %v3715 = vpop.f32.mrb[0].mxu0
      %v3716 = vpop.f32.mrb[0].mxu0
      %v3717 = vpop.f32.mrb[0].mxu0
      %3718 = vmatprep.mubr.bf16.mxu0 %v2350
      %3719 = vmatmul.mubr.bf16.gmra.mrb[0].mxu0 %v2349
      %v3720 = vpop.f32.mrb[0].mxu0
      %v3721 = vpop.f32.mrb[0].mxu0
      %v3722 = vpop.f32.mrb[0].mxu0
      %v3723 = vpop.f32.mrb[0].mxu0
      %3724 = vdwg.mxu0
      %3725 = vmatprep.subr.bf16.mxu0 0
      %3726 = vmatpush1.bf16.msra.mxu0 %v3460
      %3727 = vmatprep.subr.bf16.mxu0 0
      %3728 = vmatpush1.bf16.msra.mxu0 %v3461
      %3729 = vmatprep.subr.bf16.mxu0 0
      %3730 = vmatpush1.bf16.msra.mxu0 %v3462
      %3731 = vmatprep.subr.bf16.mxu0 0
      %3732 = vmatpush1.bf16.msra.mxu0 %v3463
      %3733 = vmatprep.subr.bf16.mxu0 0
      %3734 = vmatpush1.bf16.msra.mxu0 %v3464
      %3735 = vmatprep.subr.bf16.mxu0 0
      %3736 = vmatpush1.bf16.msra.mxu0 %v3465
      %3737 = vmatprep.subr.bf16.mxu0 0
      %3738 = vmatpush1.bf16.msra.mxu0 %v3466
      %3739 = vmatprep.subr.bf16.mxu0 0
      %3740 = vmatpush1.bf16.msra.mxu0 %v3467
      %3741 = vmatprep.subr.bf16.mxu0 0
      %3742 = vmatpush1.bf16.msra.mxu0 0
      %3743 = vmatprep.subr.bf16.mxu0 0
      %3744 = vmatpush1.bf16.msra.mxu0 0
      %3745 = vmatprep.subr.bf16.mxu0 0
      %3746 = vmatpush1.bf16.msra.mxu0 0
      %3747 = vmatprep.subr.bf16.mxu0 0
      %3748 = vmatpush1.bf16.msra.mxu0 0
      %3749 = vmatprep.subr.bf16.mxu0 0
      %3750 = vmatpush1.bf16.msra.mxu0 0
      %3751 = vmatprep.subr.bf16.mxu0 0
      %3752 = vmatpush1.bf16.msra.mxu0 0
      %3753 = vmatprep.subr.bf16.mxu0 0
      %3754 = vmatpush1.bf16.msra.mxu0 0
      %3755 = vmatprep.subr.bf16.mxu0 0
      %3756 = vmatpush1.bf16.msra.mxu0 0
      %3757 = vmatprep.mubr.bf16.mxu0 0
      %3758 = vmatmul.mubr.bf16.gmra.mrb[0].mxu0 %v2323
      %v3759 = vpop.f32.mrb[0].mxu0
      %v3760 = vadd.f32 %v3693, %v3759
      %v3761 = vpop.f32.mrb[0].mxu0
      %v3762 = vpop.f32.mrb[0].mxu0
      %v3763 = vpop.f32.mrb[0].mxu0
      %3764 = vmatprep.mubr.bf16.mxu0 0
      %3765 = vmatmul.mubr.bf16.gmra.mrb[0].mxu0 %v2330
      %v3766 = vpop.f32.mrb[0].mxu0
      %v3767 = vadd.f32 %v3700, %v3766
      %v3768 = vpop.f32.mrb[0].mxu0
      %v3769 = vpop.f32.mrb[0].mxu0
      %v3770 = vpop.f32.mrb[0].mxu0
      %3771 = vmatprep.mubr.bf16.mxu0 0
      %3772 = vmatmul.mubr.bf16.gmra.mrb[0].mxu0 %v2337
      %v3773 = vpop.f32.mrb[0].mxu0
      %v3774 = vadd.f32 %v3707, %v3773
      %v3775 = vpop.f32.mrb[0].mxu0
      %v3776 = vpop.f32.mrb[0].mxu0
      %v3777 = vpop.f32.mrb[0].mxu0
      %3778 = vmatprep.mubr.bf16.mxu0 0
      %3779 = vmatmul.mubr.bf16.gmra.mrb[0].mxu0 %v2344
      %v3780 = vpop.f32.mrb[0].mxu0
      %v3781 = vadd.f32 %v3714, %v3780
      %v3782 = vpop.f32.mrb[0].mxu0
      %v3783 = vpop.f32.mrb[0].mxu0
      %v3784 = vpop.f32.mrb[0].mxu0
      %3785 = vmatprep.mubr.bf16.mxu0 0
      %3786 = vmatmul.mubr.bf16.gmra.mrb[0].mxu0 %v2351
      %v3787 = vpop.f32.mrb[0].mxu0
      %v3788 = vpop.f32.mrb[0].mxu0
      %v3789 = vpop.f32.mrb[0].mxu0
      %v3790 = vpop.f32.mrb[0].mxu0
      %3791 = vdwg.mxu0
      %v3792 = vld [vmem:[#allocation3 + $0x70] sm:$0xff]
      %v3793 = vld [vmem:[#allocation3 + $0x78] sm:$0xff]
      %v3794 = vld [vmem:[#allocation3 + $0x80] sm:$0xff]
      %v3795 = vld [vmem:[#allocation3 + $0x88] sm:$0xff]
      %v3796 = vld [vmem:[#allocation3 + $0x90] sm:$0xff]
      %v3797 = vld [vmem:[#allocation3 + $0x98] sm:$0xff]
      %v3798 = vld [vmem:[#allocation3 + $0xa0] sm:$0xff]
      %v3799 = vld [vmem:[#allocation3 + $0xa8] sm:$0xff]
      %v3800 = vld [vmem:[#allocation3 + $0xb0] sm:$0xff]
      %v3801 = vld [vmem:[#allocation3 + $0xb8] sm:$0xff]
      %v3802 = vld [vmem:[#allocation3 + $0xc0] sm:$0xff]
      %v3803 = vld [vmem:[#allocation3 + $0xc8] sm:$0xff]
      %v3804 = vld [vmem:[#allocation3 + $0xd0] sm:$0xff]
      %v3805 = vld [vmem:[#allocation3 + $0xd8] sm:$0xff]
      %v3806 = vld [vmem:[#allocation3 + $0xe0] sm:$0xff]
      %v3807 = vld [vmem:[#allocation3 + $0xe8] sm:$0xff]
      %v3808 = vld [vmem:[#allocation3 + $0xf0] sm:$0xff]
      %v3809 = vld [vmem:[#allocation3 + $0xf8] sm:$0xff]
      %v3810 = vld [vmem:[#allocation3 + $0x100] sm:$0xff]
      %v3811 = vld [vmem:[#allocation3 + $0x108] sm:$0xff]
      %v3812 = vld [vmem:[#allocation3 + $0x110] sm:$0xff]
      %v3813 = vld [vmem:[#allocation3 + $0x118] sm:$0xff]
      %v3814 = vld [vmem:[#allocation3 + $0x120] sm:$0xff]
      %v3815 = vld [vmem:[#allocation3 + $0x128] sm:$0xff]
      %v3816 = vld [vmem:[#allocation3 + $0x130] sm:$0xff]
      %v3817 = vld [vmem:[#allocation3 + $0x138] sm:$0xff]
      %v3818 = vld [vmem:[#allocation3 + $0x140] sm:$0xff]
      %v3819 = vld [vmem:[#allocation3 + $0x148] sm:$0xff]
      %v3820 = vld [vmem:[#allocation3 + $0x150] sm:$0xff]
      %v3821 = vld [vmem:[#allocation3 + $0x158] sm:$0xff]
      %v3822 = vld [vmem:[#allocation3 + $0x160] sm:$0xff]
      %v3823 = vld [vmem:[#allocation3 + $0x168] sm:$0xff]
      %v3824 = vld [vmem:[#allocation3 + $0x170] sm:$0xff]
      %v3825 = vld [vmem:[#allocation3 + $0x178] sm:$0xff]
      %v3826 = vld [vmem:[#allocation3 + $0x180] sm:$0xff]
      %s3827 = scalar_lea.vmem %s3, 896
      %v3828 = vld [vmem:[%s3827] sm:$0xf]
      %v3829 = vld [vmem:[%s3827 + $0x4] sm:$0xf]
      %v3830 = vld [vmem:[%s3827 + $0x8] sm:$0xf]
      %v3831 = vld [vmem:[%s3827 + $0xc] sm:$0xf]
      %v3832 = vld [vmem:[%s3827 + $0x10] sm:$0xf]
      %v3833 = vld [vmem:[%s3827 + $0x14] sm:$0xf]
      %v3834 = vld [vmem:[%s3827 + $0x18] sm:$0xf]
      %v3835 = vld [vmem:[%s3827 + $0x1c] sm:$0xf]
      %v3836 = vld [vmem:[%s3827 + $0x20] sm:$0xf]
      %v3837 = vld [vmem:[%s3827 + $0x24] sm:$0xf]
      %v3838 = vld [vmem:[%s3827 + $0x28] sm:$0xf]
      %v3839 = vld [vmem:[%s3827 + $0x2c] sm:$0xf]
      %v3840 = vld [vmem:[%s3827 + $0x30] sm:$0xf]
      %v3841 = vld [vmem:[%s3827 + $0x34] sm:$0xf]
      %v3842 = vld [vmem:[%s3827 + $0x38] sm:$0xf]
      %v3843 = vld [vmem:[%s3827 + $0x3c] sm:$0xf]
      %v3844 = vld [vmem:[%s3827 + $0x40] sm:$0xf]
      %v3845 = vld [vmem:[%s3827 + $0x44] sm:$0xf]
      %v3846 = vld [vmem:[%s3827 + $0x48] sm:$0xf]
      %v3847 = vld [vmem:[%s3827 + $0x4c] sm:$0xf]
      %v3848 = vld [vmem:[%s3827 + $0x50] sm:$0xf]
      %v3849 = vld [vmem:[%s3827 + $0x54] sm:$0xf]
      %v3850 = vld [vmem:[%s3827 + $0x58] sm:$0xf]
      %v3851 = vld [vmem:[%s3827 + $0x5c] sm:$0xf]
      %v3852 = vld [vmem:[%s3827 + $0x60] sm:$0xf]
      %v3853 = vld [vmem:[%s3827 + $0x64] sm:$0xf]
      %v3854 = vld [vmem:[%s3827 + $0x68] sm:$0xf]
      %v3855 = vld [vmem:[%s3827 + $0x6c] sm:$0xf]
      %v3856 = vld [vmem:[%s3827 + $0x70] sm:$0xf]
      %v3857 = vld [vmem:[%s3827 + $0x74] sm:$0xf]
      %v3858 = vld [vmem:[%s3827 + $0x78] sm:$0xf]
      %v3859 = vld [vmem:[%s3827 + $0x7c] sm:$0xf]
      %v3860 = vld [vmem:[%s3827 + $0x80] sm:$0xf]
      %v3861 = vld [vmem:[%s3827 + $0x84] sm:$0xf]
      %v3862 = vld [vmem:[%s3827 + $0x88] sm:$0xf]
      %v3863 = vld [vmem:[%s3827 + $0x8c] sm:$0xf]
      %v3864 = vld [vmem:[%s3827 + $0x90] sm:$0xf]
      %v3865 = vld [vmem:[%s3827 + $0x94] sm:$0xf]
      %v3866 = vld [vmem:[%s3827 + $0x98] sm:$0xf]
      %v3867 = vld [vmem:[%s3827 + $0x9c] sm:$0xf]
      %v3868 = vld [vmem:[%s3827 + $0xa0] sm:$0xf]
      %v3869 = vld [vmem:[%s3827 + $0xa4] sm:$0xf]
      %v3870 = vld [vmem:[%s3827 + $0xa8] sm:$0xf]
      %v3871 = vld [vmem:[%s3827 + $0xac] sm:$0xf]
      %v3872 = vld [vmem:[%s3827 + $0xb0] sm:$0xf]
      %v3873 = vld [vmem:[%s3827 + $0xb4] sm:$0xf]
      %v3874 = vld [vmem:[%s3827 + $0xb8] sm:$0xf]
      %v3875 = vld [vmem:[%s3827 + $0xbc] sm:$0xf]
      %v3876 = vld [vmem:[%s3827 + $0xc0] sm:$0xf]
      %v3877 = vld [vmem:[%s3827 + $0xc4] sm:$0xf]
      %v3878 = vld [vmem:[%s3827 + $0xc8] sm:$0xf]
      %v3879 = vld [vmem:[%s3827 + $0xcc] sm:$0xf]
      %v3880 = vld [vmem:[%s3827 + $0xd0] sm:$0xf]
      %v3881 = vld [vmem:[%s3827 + $0xd4] sm:$0xf]
      %v3882 = vld [vmem:[%s3827 + $0xd8] sm:$0xf]
      %v3883 = vld [vmem:[%s3827 + $0xdc] sm:$0xf]
      %v3884 = vld [vmem:[%s3827 + $0xe0] sm:$0xf]
      %v3885 = vld [vmem:[%s3827 + $0xe4] sm:$0xf]
      %v3886 = vld [vmem:[%s3827 + $0xe8] sm:$0xf]
      %v3887 = vld [vmem:[%s3827 + $0xec] sm:$0xf]
      %v3888 = vld [vmem:[%s3827 + $0xf0] sm:$0xf]
      %v3889 = vld [vmem:[%s3827 + $0xf4] sm:$0xf]
      %v3890 = vld [vmem:[%s3827 + $0xf8] sm:$0xf]
      %v3891 = vld [vmem:[%s3827 + $0xfc] sm:$0xf]
      %v3892 = vld [vmem:[%s3827 + $0x100] sm:$0xf]
      %v3893 = vld [vmem:[%s3827 + $0x104] sm:$0xf]
      %v3894 = vld [vmem:[%s3827 + $0x108] sm:$0xf]
      %v3895 = vld [vmem:[%s3827 + $0x10c] sm:$0xf]
      %v3896 = vld [vmem:[%s3827 + $0x110] sm:$0xf]
      %v3897 = vld [vmem:[%s3827 + $0x114] sm:$0xf]
      %v3898 = vld [vmem:[%s3827 + $0x118] sm:$0xf]
      %v3899 = vld [vmem:[%s3827 + $0x11c] sm:$0xf]
      %v3900 = vld [vmem:[%s3827 + $0x120] sm:$0xf]
      %v3901 = vld [vmem:[%s3827 + $0x124] sm:$0xf]
      %v3902 = vld [vmem:[%s3827 + $0x128] sm:$0xf]
      %v3903 = vld [vmem:[%s3827 + $0x12c] sm:$0xf]
      %v3904 = vld [vmem:[%s3827 + $0x130] sm:$0xf]
      %v3905 = vld [vmem:[%s3827 + $0x134] sm:$0xf]
      %v3906 = vld [vmem:[%s3827 + $0x138] sm:$0xf]
      %v3907 = vld [vmem:[%s3827 + $0x13c] sm:$0xf]
      %v3908 = vld [vmem:[%s3827 + $0x140] sm:$0xf]
      %v3909 = vld [vmem:[%s3827 + $0x144] sm:$0xf]
      %v3910 = vld [vmem:[%s3827 + $0x148] sm:$0xf]
      %v3911 = vld [vmem:[%s3827 + $0x14c] sm:$0xf]
      %v3912 = vld [vmem:[%s3827 + $0x150] sm:$0xf]
      %v3913 = vld [vmem:[%s3827 + $0x154] sm:$0xf]
      %v3914 = vld [vmem:[%s3827 + $0x158] sm:$0xf]
      %v3915 = vld [vmem:[%s3827 + $0x15c] sm:$0xf]
      %v3916 = vld [vmem:[%s3827 + $0x160] sm:$0xf]
      %v3917 = vld [vmem:[%s3827 + $0x164] sm:$0xf]
      %v3918 = vld [vmem:[%s3827 + $0x168] sm:$0xf]
      %v3919 = vld [vmem:[%s3827 + $0x16c] sm:$0xf]
      %v3920 = vld [vmem:[%s3827 + $0x170] sm:$0xf]
      %v3921 = vld [vmem:[%s3827 + $0x174] sm:$0xf]
      %v3922 = vld [vmem:[%s3827 + $0x178] sm:$0xf]
      %v3923 = vld [vmem:[%s3827 + $0x17c] sm:$0xf]
      %v3924 = vld [vmem:[%s3827 + $0x180] sm:$0xf]
      %v3925 = vld [vmem:[%s3827 + $0x184] sm:$0xf]
      %v3926 = vld [vmem:[%s3827 + $0x188] sm:$0xf]
      %v3927 = vld [vmem:[%s3827 + $0x18c] sm:$0xf]
      %v3928 = vld [vmem:[%s3827 + $0x190] sm:$0xf]
      %v3929 = vld [vmem:[%s3827 + $0x194] sm:$0xf]
      %v3930 = vld [vmem:[%s3827 + $0x198] sm:$0xf]
      %v3931 = vld [vmem:[%s3827 + $0x19c] sm:$0xf]
      %v3932 = vld [vmem:[%s3827 + $0x1a0] sm:$0xf]
      %v3933 = vld [vmem:[%s3827 + $0x1a4] sm:$0xf]
      %v3934 = vld [vmem:[%s3827 + $0x1a8] sm:$0xf]
      %v3935 = vld [vmem:[%s3827 + $0x1ac] sm:$0xf]
      %v3936 = vld [vmem:[%s3827 + $0x1b0] sm:$0xf]
      %v3937 = vld [vmem:[%s3827 + $0x1b4] sm:$0xf]
      %v3938 = vld [vmem:[%s3827 + $0x1b8] sm:$0xf]
      %v3939 = vld [vmem:[%s3827 + $0x1bc] sm:$0xf]
      %v4052 = vunpack.c.l.b16 %v3828
      %v4053 = vunpack.c.l.b16 %v3829
      %v4054 = vunpack.c.l.b16 %v3830
      %v4055 = vunpack.c.l.b16 %v3831
      %v4056 = vunpack.c.l.b16 %v3832
      %v4057 = vunpack.c.l.b16 %v3833
      %v4058 = vunpack.c.l.b16 %v3834
      %v4059 = vunpack.c.l.b16 %v3835
      %v4060 = vunpack.c.l.b16 %v3836
      %v4061 = vunpack.c.l.b16 %v3837
      %v4062 = vunpack.c.l.b16 %v3838
      %v4063 = vunpack.c.l.b16 %v3839
      %v4064 = vunpack.c.l.b16 %v3840
      %v4065 = vunpack.c.l.b16 %v3841
      %v4066 = vunpack.c.l.b16 %v3842
      %v4067 = vunpack.c.l.b16 %v3843
      %v4068 = vunpack.c.l.b16 %v3844
      %v4069 = vunpack.c.l.b16 %v3845
      %v4070 = vunpack.c.l.b16 %v3846
      %v4071 = vunpack.c.l.b16 %v3847
      %v4072 = vunpack.c.l.b16 %v3848
      %v4073 = vunpack.c.l.b16 %v3849
      %v4074 = vunpack.c.l.b16 %v3850
      %v4075 = vunpack.c.l.b16 %v3851
      %v4076 = vunpack.c.l.b16 %v3852
      %v4077 = vunpack.c.l.b16 %v3853
      %v4078 = vunpack.c.l.b16 %v3854
      %v4079 = vunpack.c.l.b16 %v3855
      %v4080 = vunpack.c.l.b16 %v3856
      %v4081 = vunpack.c.l.b16 %v3857
      %v4082 = vunpack.c.l.b16 %v3858
      %v4083 = vunpack.c.l.b16 %v3859
      %v4084 = vunpack.c.l.b16 %v3860
      %v4085 = vunpack.c.l.b16 %v3861
      %v4086 = vunpack.c.l.b16 %v3862
      %v4087 = vunpack.c.l.b16 %v3863
      %v4088 = vunpack.c.l.b16 %v3864
      %v4089 = vunpack.c.l.b16 %v3865
      %v4090 = vunpack.c.l.b16 %v3866
      %v4091 = vunpack.c.l.b16 %v3867
      %v4092 = vunpack.c.l.b16 %v3868
      %v4093 = vunpack.c.l.b16 %v3869
      %v4094 = vunpack.c.l.b16 %v3870
      %v4095 = vunpack.c.l.b16 %v3871
      %v4096 = vunpack.c.l.b16 %v3872
      %v4097 = vunpack.c.l.b16 %v3873
      %v4098 = vunpack.c.l.b16 %v3874
      %v4099 = vunpack.c.l.b16 %v3875
      %v4100 = vunpack.c.l.b16 %v3876
      %v4101 = vunpack.c.l.b16 %v3877
      %v4102 = vunpack.c.l.b16 %v3878
      %v4103 = vunpack.c.l.b16 %v3879
      %v4104 = vunpack.c.l.b16 %v3880
      %v4105 = vunpack.c.l.b16 %v3881
      %v4106 = vunpack.c.l.b16 %v3882
      %v4107 = vunpack.c.l.b16 %v3883
      %v4108 = vunpack.c.l.b16 %v3884
      %v4109 = vunpack.c.l.b16 %v3885
      %v4110 = vunpack.c.l.b16 %v3886
      %v4111 = vunpack.c.l.b16 %v3887
      %v4112 = vunpack.c.l.b16 %v3888
      %v4113 = vunpack.c.l.b16 %v3889
      %v4114 = vunpack.c.l.b16 %v3890
      %v4115 = vunpack.c.l.b16 %v3891
      %v4116 = vunpack.c.l.b16 %v3892
      %v4117 = vunpack.c.l.b16 %v3893
      %v4118 = vunpack.c.l.b16 %v3894
      %v4119 = vunpack.c.l.b16 %v3895
      %v4120 = vunpack.c.l.b16 %v3896
      %v4121 = vunpack.c.l.b16 %v3897
      %v4122 = vunpack.c.l.b16 %v3898
      %v4123 = vunpack.c.l.b16 %v3899
      %v4124 = vunpack.c.l.b16 %v3900
      %v4125 = vunpack.c.l.b16 %v3901
      %v4126 = vunpack.c.l.b16 %v3902
      %v4127 = vunpack.c.l.b16 %v3903
      %v4128 = vunpack.c.l.b16 %v3904
      %v4129 = vunpack.c.l.b16 %v3905
      %v4130 = vunpack.c.l.b16 %v3906
      %v4131 = vunpack.c.l.b16 %v3907
      %v4132 = vunpack.c.l.b16 %v3908
      %v4133 = vunpack.c.l.b16 %v3909
      %v4134 = vunpack.c.l.b16 %v3910
      %v4135 = vunpack.c.l.b16 %v3911
      %v4136 = vunpack.c.l.b16 %v3912
      %v4137 = vunpack.c.l.b16 %v3913
      %v4138 = vunpack.c.l.b16 %v3914
      %v4139 = vunpack.c.l.b16 %v3915
      %v4140 = vunpack.c.l.b16 %v3916
      %v4141 = vunpack.c.l.b16 %v3917
      %v4142 = vunpack.c.l.b16 %v3918
      %v4143 = vunpack.c.l.b16 %v3919
      %v4144 = vunpack.c.l.b16 %v3920
      %v4145 = vunpack.c.l.b16 %v3921
      %v4146 = vunpack.c.l.b16 %v3922
      %v4147 = vunpack.c.l.b16 %v3923
      %v4148 = vunpack.c.l.b16 %v3924
      %v4149 = vunpack.c.l.b16 %v3925
      %v4150 = vunpack.c.l.b16 %v3926
      %v4151 = vunpack.c.l.b16 %v3927
      %v4152 = vunpack.c.l.b16 %v3928
      %v4153 = vunpack.c.l.b16 %v3929
      %v4154 = vunpack.c.l.b16 %v3930
      %v4155 = vunpack.c.l.b16 %v3931
      %v4156 = vunpack.c.l.b16 %v3932
      %v4157 = vunpack.c.l.b16 %v3933
      %v4158 = vunpack.c.l.b16 %v3934
      %v4159 = vunpack.c.l.b16 %v3935
      %v4160 = vunpack.c.l.b16 %v3936
      %v4161 = vunpack.c.l.b16 %v3937
      %v4162 = vunpack.c.l.b16 %v3938
      %v4163 = vunpack.c.l.b16 %v3939
      %v4164 = vpack.c.b16 %v4053, %v4052
      %v4165 = vpack.c.b16 %v4055, %v4054
      %v4166 = vpack.c.b16 %v4057, %v4056
      %v4167 = vpack.c.b16 %v4059, %v4058
      %v4168 = vpack.c.b16 %v4061, %v4060
      %v4169 = vpack.c.b16 %v4063, %v4062
      %v4170 = vpack.c.b16 %v4065, %v4064
      %v4171 = vpack.c.b16 %v4067, %v4066
      %v4172 = vpack.c.b16 %v4069, %v4068
      %v4173 = vpack.c.b16 %v4071, %v4070
      %v4174 = vpack.c.b16 %v4073, %v4072
      %v4175 = vpack.c.b16 %v4075, %v4074
      %v4176 = vpack.c.b16 %v4077, %v4076
      %v4177 = vpack.c.b16 %v4079, %v4078
      %v4178 = vpack.c.b16 %v4081, %v4080
      %v4179 = vpack.c.b16 %v4083, %v4082
      %v4180 = vpack.c.b16 %v4085, %v4084
      %v4181 = vpack.c.b16 %v4087, %v4086
      %v4182 = vpack.c.b16 %v4089, %v4088
      %v4183 = vpack.c.b16 %v4091, %v4090
      %v4184 = vpack.c.b16 %v4093, %v4092
      %v4185 = vpack.c.b16 %v4095, %v4094
      %v4186 = vpack.c.b16 %v4097, %v4096
      %v4187 = vpack.c.b16 %v4099, %v4098
      %v4188 = vpack.c.b16 %v4101, %v4100
      %v4189 = vpack.c.b16 %v4103, %v4102
      %v4190 = vpack.c.b16 %v4105, %v4104
      %v4191 = vpack.c.b16 %v4107, %v4106
      %v4192 = vpack.c.b16 %v4109, %v4108
      %v4193 = vpack.c.b16 %v4111, %v4110
      %v4194 = vpack.c.b16 %v4113, %v4112
      %v4195 = vpack.c.b16 %v4115, %v4114
      %v4196 = vpack.c.b16 %v4117, %v4116
      %v4197 = vpack.c.b16 %v4119, %v4118
      %v4198 = vpack.c.b16 %v4121, %v4120
      %v4199 = vpack.c.b16 %v4123, %v4122
      %v4200 = vpack.c.b16 %v4125, %v4124
      %v4201 = vpack.c.b16 %v4127, %v4126
      %v4202 = vpack.c.b16 %v4129, %v4128
      %v4203 = vpack.c.b16 %v4131, %v4130
      %v4204 = vpack.c.b16 %v4133, %v4132
      %v4205 = vpack.c.b16 %v4135, %v4134
      %v4206 = vpack.c.b16 %v4137, %v4136
      %v4207 = vpack.c.b16 %v4139, %v4138
      %v4208 = vpack.c.b16 %v4141, %v4140
      %v4209 = vpack.c.b16 %v4143, %v4142
      %v4210 = vpack.c.b16 %v4145, %v4144
      %v4211 = vpack.c.b16 %v4147, %v4146
      %v4212 = vpack.c.b16 %v4149, %v4148
      %v4213 = vpack.c.b16 %v4151, %v4150
      %v4214 = vpack.c.b16 %v4153, %v4152
      %v4215 = vpack.c.b16 %v4155, %v4154
      %v4216 = vpack.c.b16 %v4157, %v4156
      %v4217 = vpack.c.b16 %v4159, %v4158
      %v4218 = vpack.c.b16 %v4161, %v4160
      %v4219 = vpack.c.b16 %v4163, %v4162
      %4276 = vmatprep.subr.bf16.mxu0 0
      %4277 = vmatpush1.bf16.msra.mxu0 %v4164
      %4278 = vmatprep.subr.bf16.mxu0 0
      %4279 = vmatpush1.bf16.msra.mxu0 %v4165
      %4280 = vmatprep.subr.bf16.mxu0 0
      %4281 = vmatpush1.bf16.msra.mxu0 %v4166
      %4282 = vmatprep.subr.bf16.mxu0 0
      %4283 = vmatpush1.bf16.msra.mxu0 %v4167
      %4284 = vmatprep.subr.bf16.mxu0 0
      %4285 = vmatpush1.bf16.msra.mxu0 %v4168
      %4286 = vmatprep.subr.bf16.mxu0 0
      %4287 = vmatpush1.bf16.msra.mxu0 %v4169
      %4288 = vmatprep.subr.bf16.mxu0 0
      %4289 = vmatpush1.bf16.msra.mxu0 %v4170
      %4290 = vmatprep.subr.bf16.mxu0 0
      %4291 = vmatpush1.bf16.msra.mxu0 %v4171
      %4292 = vmatprep.subr.bf16.mxu0 0
      %4293 = vmatpush1.bf16.msra.mxu0 %v4172
      %4294 = vmatprep.subr.bf16.mxu0 0
      %4295 = vmatpush1.bf16.msra.mxu0 %v4173
      %4296 = vmatprep.subr.bf16.mxu0 0
      %4297 = vmatpush1.bf16.msra.mxu0 %v4174
      %4298 = vmatprep.subr.bf16.mxu0 0
      %4299 = vmatpush1.bf16.msra.mxu0 %v4175
      %4300 = vmatprep.subr.bf16.mxu0 0
      %4301 = vmatpush1.bf16.msra.mxu0 %v4176
      %4302 = vmatprep.subr.bf16.mxu0 0
      %4303 = vmatpush1.bf16.msra.mxu0 %v4177
      %4304 = vmatprep.subr.bf16.mxu0 0
      %4305 = vmatpush1.bf16.msra.mxu0 %v4178
      %4306 = vmatprep.subr.bf16.mxu0 0
      %4307 = vmatpush1.bf16.msra.mxu0 %v4179
      %4308 = vmatprep.mubr.bf16.mxu0 %v3793
      %4309 = vmatmul.mubr.bf16.gmra.mrb[0].mxu0 %v3792
      %v4310 = vpop.f32.mrb[0].mxu0
      %v4311 = vadd.f32 0.0, %v4310
      %v4312 = vpop.f32.mrb[0].mxu0
      %v4313 = vpop.f32.mrb[0].mxu0
      %v4314 = vpop.f32.mrb[0].mxu0
      %4315 = vmatprep.mubr.bf16.mxu0 %v3800
      %4316 = vmatmul.mubr.bf16.gmra.mrb[0].mxu0 %v3799
      %v4317 = vpop.f32.mrb[0].mxu0
      %v4318 = vadd.f32 0.0, %v4317
      %v4319 = vpop.f32.mrb[0].mxu0
      %v4320 = vpop.f32.mrb[0].mxu0
      %v4321 = vpop.f32.mrb[0].mxu0
      %4322 = vmatprep.mubr.bf16.mxu0 %v3807
      %4323 = vmatmul.mubr.bf16.gmra.mrb[0].mxu0 %v3806
      %v4324 = vpop.f32.mrb[0].mxu0
      %v4325 = vadd.f32 0.0, %v4324
      %v4326 = vpop.f32.mrb[0].mxu0
      %v4327 = vpop.f32.mrb[0].mxu0
      %v4328 = vpop.f32.mrb[0].mxu0
      %4329 = vmatprep.mubr.bf16.mxu0 %v3814
      %4330 = vmatmul.mubr.bf16.gmra.mrb[0].mxu0 %v3813
      %v4331 = vpop.f32.mrb[0].mxu0
      %v4332 = vadd.f32 0.0, %v4331
      %v4333 = vpop.f32.mrb[0].mxu0
      %v4334 = vpop.f32.mrb[0].mxu0
      %v4335 = vpop.f32.mrb[0].mxu0
      %4336 = vmatprep.mubr.bf16.mxu0 %v3821
      %4337 = vmatmul.mubr.bf16.gmra.mrb[0].mxu0 %v3820
      %v4338 = vpop.f32.mrb[0].mxu0
      %v4339 = vpop.f32.mrb[0].mxu0
      %v4340 = vpop.f32.mrb[0].mxu0
      %v4341 = vpop.f32.mrb[0].mxu0
      %4342 = vdwg.mxu0
      %4343 = vmatprep.subr.bf16.mxu0 0
      %4344 = vmatpush1.bf16.msra.mxu0 %v4180
      %4345 = vmatprep.subr.bf16.mxu0 0
      %4346 = vmatpush1.bf16.msra.mxu0 %v4181
      %4347 = vmatprep.subr.bf16.mxu0 0
      %4348 = vmatpush1.bf16.msra.mxu0 %v4182
      %4349 = vmatprep.subr.bf16.mxu0 0
      %4350 = vmatpush1.bf16.msra.mxu0 %v4183
      %4351 = vmatprep.subr.bf16.mxu0 0
      %4352 = vmatpush1.bf16.msra.mxu0 %v4184
      %4353 = vmatprep.subr.bf16.mxu0 0
      %4354 = vmatpush1.bf16.msra.mxu0 %v4185
      %4355 = vmatprep.subr.bf16.mxu0 0
      %4356 = vmatpush1.bf16.msra.mxu0 %v4186
      %4357 = vmatprep.subr.bf16.mxu0 0
      %4358 = vmatpush1.bf16.msra.mxu0 %v4187
      %4359 = vmatprep.subr.bf16.mxu0 0
      %4360 = vmatpush1.bf16.msra.mxu0 %v4188
      %4361 = vmatprep.subr.bf16.mxu0 0
      %4362 = vmatpush1.bf16.msra.mxu0 %v4189
      %4363 = vmatprep.subr.bf16.mxu0 0
      %4364 = vmatpush1.bf16.msra.mxu0 %v4190
      %4365 = vmatprep.subr.bf16.mxu0 0
      %4366 = vmatpush1.bf16.msra.mxu0 %v4191
      %4367 = vmatprep.subr.bf16.mxu0 0
      %4368 = vmatpush1.bf16.msra.mxu0 %v4192
      %4369 = vmatprep.subr.bf16.mxu0 0
      %4370 = vmatpush1.bf16.msra.mxu0 %v4193
      %4371 = vmatprep.subr.bf16.mxu0 0
      %4372 = vmatpush1.bf16.msra.mxu0 %v4194
      %4373 = vmatprep.subr.bf16.mxu0 0
      %4374 = vmatpush1.bf16.msra.mxu0 %v4195
      %4375 = vmatprep.mubr.bf16.mxu0 %v3795
      %4376 = vmatmul.mubr.bf16.gmra.mrb[0].mxu0 %v3794
      %v4377 = vpop.f32.mrb[0].mxu0
      %v4378 = vadd.f32 %v4311, %v4377
      %v4379 = vpop.f32.mrb[0].mxu0
      %v4380 = vpop.f32.mrb[0].mxu0
      %v4381 = vpop.f32.mrb[0].mxu0
      %4382 = vmatprep.mubr.bf16.mxu0 %v3802
      %4383 = vmatmul.mubr.bf16.gmra.mrb[0].mxu0 %v3801
      %v4384 = vpop.f32.mrb[0].mxu0
      %v4385 = vadd.f32 %v4318, %v4384
      %v4386 = vpop.f32.mrb[0].mxu0
      %v4387 = vpop.f32.mrb[0].mxu0
      %v4388 = vpop.f32.mrb[0].mxu0
      %4389 = vmatprep.mubr.bf16.mxu0 %v3809
      %4390 = vmatmul.mubr.bf16.gmra.mrb[0].mxu0 %v3808
      %v4391 = vpop.f32.mrb[0].mxu0
      %v4392 = vadd.f32 %v4325, %v4391
      %v4393 = vpop.f32.mrb[0].mxu0
      %v4394 = vpop.f32.mrb[0].mxu0
      %v4395 = vpop.f32.mrb[0].mxu0
      %4396 = vmatprep.mubr.bf16.mxu0 %v3816
      %4397 = vmatmul.mubr.bf16.gmra.mrb[0].mxu0 %v3815
      %v4398 = vpop.f32.mrb[0].mxu0
      %v4399 = vadd.f32 %v4332, %v4398
      %v4400 = vpop.f32.mrb[0].mxu0
      %v4401 = vpop.f32.mrb[0].mxu0
      %v4402 = vpop.f32.mrb[0].mxu0
      %4403 = vmatprep.mubr.bf16.mxu0 %v3823
      %4404 = vmatmul.mubr.bf16.gmra.mrb[0].mxu0 %v3822
      %v4405 = vpop.f32.mrb[0].mxu0
      %v4406 = vpop.f32.mrb[0].mxu0
      %v4407 = vpop.f32.mrb[0].mxu0
      %v4408 = vpop.f32.mrb[0].mxu0
      %4409 = vdwg.mxu0
      %4410 = vmatprep.subr.bf16.mxu0 0
      %4411 = vmatpush1.bf16.msra.mxu0 %v4196
      %4412 = vmatprep.subr.bf16.mxu0 0
      %4413 = vmatpush1.bf16.msra.mxu0 %v4197
      %4414 = vmatprep.subr.bf16.mxu0 0
      %4415 = vmatpush1.bf16.msra.mxu0 %v4198
      %4416 = vmatprep.subr.bf16.mxu0 0
      %4417 = vmatpush1.bf16.msra.mxu0 %v4199
      %4418 = vmatprep.subr.bf16.mxu0 0
      %4419 = vmatpush1.bf16.msra.mxu0 %v4200
      %4420 = vmatprep.subr.bf16.mxu0 0
      %4421 = vmatpush1.bf16.msra.mxu0 %v4201
      %4422 = vmatprep.subr.bf16.mxu0 0
      %4423 = vmatpush1.bf16.msra.mxu0 %v4202
      %4424 = vmatprep.subr.bf16.mxu0 0
      %4425 = vmatpush1.bf16.msra.mxu0 %v4203
      %4426 = vmatprep.subr.bf16.mxu0 0
      %4427 = vmatpush1.bf16.msra.mxu0 %v4204
      %4428 = vmatprep.subr.bf16.mxu0 0
      %4429 = vmatpush1.bf16.msra.mxu0 %v4205
      %4430 = vmatprep.subr.bf16.mxu0 0
      %4431 = vmatpush1.bf16.msra.mxu0 %v4206
      %4432 = vmatprep.subr.bf16.mxu0 0
      %4433 = vmatpush1.bf16.msra.mxu0 %v4207
      %4434 = vmatprep.subr.bf16.mxu0 0
      %4435 = vmatpush1.bf16.msra.mxu0 %v4208
      %4436 = vmatprep.subr.bf16.mxu0 0
      %4437 = vmatpush1.bf16.msra.mxu0 %v4209
      %4438 = vmatprep.subr.bf16.mxu0 0
      %4439 = vmatpush1.bf16.msra.mxu0 %v4210
      %4440 = vmatprep.subr.bf16.mxu0 0
      %4441 = vmatpush1.bf16.msra.mxu0 %v4211
      %4442 = vmatprep.mubr.bf16.mxu0 %v3797
      %4443 = vmatmul.mubr.bf16.gmra.mrb[0].mxu0 %v3796
      %v4444 = vpop.f32.mrb[0].mxu0
      %v4445 = vadd.f32 %v4378, %v4444
      %v4446 = vpop.f32.mrb[0].mxu0
      %v4447 = vpop.f32.mrb[0].mxu0
      %v4448 = vpop.f32.mrb[0].mxu0
      %4449 = vmatprep.mubr.bf16.mxu0 %v3804
      %4450 = vmatmul.mubr.bf16.gmra.mrb[0].mxu0 %v3803
      %v4451 = vpop.f32.mrb[0].mxu0
      %v4452 = vadd.f32 %v4385, %v4451
      %v4453 = vpop.f32.mrb[0].mxu0
      %v4454 = vpop.f32.mrb[0].mxu0
      %v4455 = vpop.f32.mrb[0].mxu0
      %4456 = vmatprep.mubr.bf16.mxu0 %v3811
      %4457 = vmatmul.mubr.bf16.gmra.mrb[0].mxu0 %v3810
      %v4458 = vpop.f32.mrb[0].mxu0
      %v4459 = vadd.f32 %v4392, %v4458
      %v4460 = vpop.f32.mrb[0].mxu0
      %v4461 = vpop.f32.mrb[0].mxu0
      %v4462 = vpop.f32.mrb[0].mxu0
      %4463 = vmatprep.mubr.bf16.mxu0 %v3818
      %4464 = vmatmul.mubr.bf16.gmra.mrb[0].mxu0 %v3817
      %v4465 = vpop.f32.mrb[0].mxu0
      %v4466 = vadd.f32 %v4399, %v4465
      %v4467 = vpop.f32.mrb[0].mxu0
      %v4468 = vpop.f32.mrb[0].mxu0
      %v4469 = vpop.f32.mrb[0].mxu0
      %4470 = vmatprep.mubr.bf16.mxu0 %v3825
      %4471 = vmatmul.mubr.bf16.gmra.mrb[0].mxu0 %v3824
      %v4472 = vpop.f32.mrb[0].mxu0
      %v4473 = vpop.f32.mrb[0].mxu0
      %v4474 = vpop.f32.mrb[0].mxu0
      %v4475 = vpop.f32.mrb[0].mxu0
      %4476 = vdwg.mxu0
      %4477 = vmatprep.subr.bf16.mxu0 0
      %4478 = vmatpush1.bf16.msra.mxu0 %v4212
      %4479 = vmatprep.subr.bf16.mxu0 0
      %4480 = vmatpush1.bf16.msra.mxu0 %v4213
      %4481 = vmatprep.subr.bf16.mxu0 0
      %4482 = vmatpush1.bf16.msra.mxu0 %v4214
      %4483 = vmatprep.subr.bf16.mxu0 0
      %4484 = vmatpush1.bf16.msra.mxu0 %v4215
      %4485 = vmatprep.subr.bf16.mxu0 0
      %4486 = vmatpush1.bf16.msra.mxu0 %v4216
      %4487 = vmatprep.subr.bf16.mxu0 0
      %4488 = vmatpush1.bf16.msra.mxu0 %v4217
      %4489 = vmatprep.subr.bf16.mxu0 0
      %4490 = vmatpush1.bf16.msra.mxu0 %v4218
      %4491 = vmatprep.subr.bf16.mxu0 0
      %4492 = vmatpush1.bf16.msra.mxu0 %v4219
      %4493 = vmatprep.subr.bf16.mxu0 0
      %4494 = vmatpush1.bf16.msra.mxu0 0
      %4495 = vmatprep.subr.bf16.mxu0 0
      %4496 = vmatpush1.bf16.msra.mxu0 0
      %4497 = vmatprep.subr.bf16.mxu0 0
      %4498 = vmatpush1.bf16.msra.mxu0 0
      %4499 = vmatprep.subr.bf16.mxu0 0
      %4500 = vmatpush1.bf16.msra.mxu0 0
      %4501 = vmatprep.subr.bf16.mxu0 0
      %4502 = vmatpush1.bf16.msra.mxu0 0
      %4503 = vmatprep.subr.bf16.mxu0 0
      %4504 = vmatpush1.bf16.msra.mxu0 0
      %4505 = vmatprep.subr.bf16.mxu0 0
      %4506 = vmatpush1.bf16.msra.mxu0 0
      %4507 = vmatprep.subr.bf16.mxu0 0
      %4508 = vmatpush1.bf16.msra.mxu0 0
      %4509 = vmatprep.mubr.bf16.mxu0 0
      %4510 = vmatmul.mubr.bf16.gmra.mrb[0].mxu0 %v3798
      %v4511 = vpop.f32.mrb[0].mxu0
      %v4512 = vadd.f32 %v4445, %v4511
      %v4513 = vpop.f32.mrb[0].mxu0
      %v4514 = vpop.f32.mrb[0].mxu0
      %v4515 = vpop.f32.mrb[0].mxu0
      %4516 = vmatprep.mubr.bf16.mxu0 0
      %4517 = vmatmul.mubr.bf16.gmra.mrb[0].mxu0 %v3805
      %v4518 = vpop.f32.mrb[0].mxu0
      %v4519 = vadd.f32 %v4452, %v4518
      %v4520 = vpop.f32.mrb[0].mxu0
      %v4521 = vpop.f32.mrb[0].mxu0
      %v4522 = vpop.f32.mrb[0].mxu0
      %4523 = vmatprep.mubr.bf16.mxu0 0
      %4524 = vmatmul.mubr.bf16.gmra.mrb[0].mxu0 %v3812
      %v4525 = vpop.f32.mrb[0].mxu0
      %v4526 = vadd.f32 %v4459, %v4525
      %v4527 = vpop.f32.mrb[0].mxu0
      %v4528 = vpop.f32.mrb[0].mxu0
      %v4529 = vpop.f32.mrb[0].mxu0
      %4530 = vmatprep.mubr.bf16.mxu0 0
      %4531 = vmatmul.mubr.bf16.gmra.mrb[0].mxu0 %v3819
      %v4532 = vpop.f32.mrb[0].mxu0
      %v4533 = vadd.f32 %v4466, %v4532
      %v4534 = vpop.f32.mrb[0].mxu0
      %v4535 = vpop.f32.mrb[0].mxu0
      %v4536 = vpop.f32.mrb[0].mxu0
      %4537 = vmatprep.mubr.bf16.mxu0 0
      %4538 = vmatmul.mubr.bf16.gmra.mrb[0].mxu0 %v3826
      %v4539 = vpop.f32.mrb[0].mxu0
      %v4540 = vpop.f32.mrb[0].mxu0
      %v4541 = vpop.f32.mrb[0].mxu0
      %v4542 = vpop.f32.mrb[0].mxu0
      %4543 = vdwg.mxu0
      %v4544 = vadd.f32 %v3760, %v4512
      %v4545 = vadd.f32 %v3767, %v4519
      %v4546 = vadd.f32 %v3774, %v4526
      %v4547 = vadd.f32 %v3781, %v4533
      %v4548 = vld [vmem:[#allocation3 + $0xa8] sm:$0xff]
      %v4549 = vld [vmem:[#allocation3 + $0xb0] sm:$0xff]
      %v4550 = vld [vmem:[#allocation3 + $0xb8] sm:$0xff]
      %v4551 = vld [vmem:[#allocation3 + $0xc0] sm:$0xff]
      %v4552 = vld [vmem:[#allocation3 + $0xc8] sm:$0xff]
      %v4553 = vld [vmem:[#allocation3 + $0xd0] sm:$0xff]
      %v4554 = vld [vmem:[#allocation3 + $0xd8] sm:$0xff]
      %v4555 = vld [vmem:[#allocation3 + $0xe0] sm:$0xff]
      %v4556 = vld [vmem:[#allocation3 + $0xe8] sm:$0xff]
      %v4557 = vld [vmem:[#allocation3 + $0xf0] sm:$0xff]
      %v4558 = vld [vmem:[#allocation3 + $0xf8] sm:$0xff]
      %v4559 = vld [vmem:[#allocation3 + $0x100] sm:$0xff]
      %v4560 = vld [vmem:[#allocation3 + $0x108] sm:$0xff]
      %v4561 = vld [vmem:[#allocation3 + $0x110] sm:$0xff]
      %v4562 = vld [vmem:[#allocation3 + $0x118] sm:$0xff]
      %v4563 = vld [vmem:[#allocation3 + $0x120] sm:$0xff]
      %v4564 = vld [vmem:[#allocation3 + $0x128] sm:$0xff]
      %v4565 = vld [vmem:[#allocation3 + $0x130] sm:$0xff]
      %v4566 = vld [vmem:[#allocation3 + $0x138] sm:$0xff]
      %v4567 = vld [vmem:[#allocation3 + $0x140] sm:$0xff]
      %v4568 = vld [vmem:[#allocation3 + $0x148] sm:$0xff]
      %v4569 = vld [vmem:[#allocation3 + $0x150] sm:$0xff]
      %v4570 = vld [vmem:[#allocation3 + $0x158] sm:$0xff]
      %v4571 = vld [vmem:[#allocation3 + $0x160] sm:$0xff]
      %v4572 = vld [vmem:[#allocation3 + $0x168] sm:$0xff]
      %v4573 = vld [vmem:[#allocation3 + $0x170] sm:$0xff]
      %v4574 = vld [vmem:[#allocation3 + $0x178] sm:$0xff]
      %v4575 = vld [vmem:[#allocation3 + $0x180] sm:$0xff]
      %v4576 = vld [vmem:[#allocation3 + $0x188] sm:$0xff]
      %v4577 = vld [vmem:[#allocation3 + $0x190] sm:$0xff]
      %v4578 = vld [vmem:[#allocation3 + $0x198] sm:$0xff]
      %v4579 = vld [vmem:[#allocation3 + $0x1a0] sm:$0xff]
      %v4580 = vld [vmem:[#allocation3 + $0x1a8] sm:$0xff]
      %v4581 = vld [vmem:[#allocation3 + $0x1b0] sm:$0xff]
      %v4582 = vld [vmem:[#allocation3 + $0x1b8] sm:$0xff]
      %s4583 = scalar_lea.vmem %s3, 1344
      %v4584 = vld [vmem:[%s4583] sm:$0xf]
      %v4585 = vld [vmem:[%s4583 + $0x4] sm:$0xf]
      %v4586 = vld [vmem:[%s4583 + $0x8] sm:$0xf]
      %v4587 = vld [vmem:[%s4583 + $0xc] sm:$0xf]
      %v4588 = vld [vmem:[%s4583 + $0x10] sm:$0xf]
      %v4589 = vld [vmem:[%s4583 + $0x14] sm:$0xf]
      %v4590 = vld [vmem:[%s4583 + $0x18] sm:$0xf]
      %v4591 = vld [vmem:[%s4583 + $0x1c] sm:$0xf]
      %v4592 = vld [vmem:[%s4583 + $0x20] sm:$0xf]
      %v4593 = vld [vmem:[%s4583 + $0x24] sm:$0xf]
      %v4594 = vld [vmem:[%s4583 + $0x28] sm:$0xf]
      %v4595 = vld [vmem:[%s4583 + $0x2c] sm:$0xf]
      %v4596 = vld [vmem:[%s4583 + $0x30] sm:$0xf]
      %v4597 = vld [vmem:[%s4583 + $0x34] sm:$0xf]
      %v4598 = vld [vmem:[%s4583 + $0x38] sm:$0xf]
      %v4599 = vld [vmem:[%s4583 + $0x3c] sm:$0xf]
      %v4600 = vld [vmem:[%s4583 + $0x40] sm:$0xf]
      %v4601 = vld [vmem:[%s4583 + $0x44] sm:$0xf]
      %v4602 = vld [vmem:[%s4583 + $0x48] sm:$0xf]
      %v4603 = vld [vmem:[%s4583 + $0x4c] sm:$0xf]
      %v4604 = vld [vmem:[%s4583 + $0x50] sm:$0xf]
      %v4605 = vld [vmem:[%s4583 + $0x54] sm:$0xf]
      %v4606 = vld [vmem:[%s4583 + $0x58] sm:$0xf]
      %v4607 = vld [vmem:[%s4583 + $0x5c] sm:$0xf]
      %v4608 = vld [vmem:[%s4583 + $0x60] sm:$0xf]
      %v4609 = vld [vmem:[%s4583 + $0x64] sm:$0xf]
      %v4610 = vld [vmem:[%s4583 + $0x68] sm:$0xf]
      %v4611 = vld [vmem:[%s4583 + $0x6c] sm:$0xf]
      %v4612 = vld [vmem:[%s4583 + $0x70] sm:$0xf]
      %v4613 = vld [vmem:[%s4583 + $0x74] sm:$0xf]
      %v4614 = vld [vmem:[%s4583 + $0x78] sm:$0xf]
      %v4615 = vld [vmem:[%s4583 + $0x7c] sm:$0xf]
      %v4616 = vld [vmem:[%s4583 + $0x80] sm:$0xf]
      %v4617 = vld [vmem:[%s4583 + $0x84] sm:$0xf]
      %v4618 = vld [vmem:[%s4583 + $0x88] sm:$0xf]
      %v4619 = vld [vmem:[%s4583 + $0x8c] sm:$0xf]
      %v4620 = vld [vmem:[%s4583 + $0x90] sm:$0xf]
      %v4621 = vld [vmem:[%s4583 + $0x94] sm:$0xf]
      %v4622 = vld [vmem:[%s4583 + $0x98] sm:$0xf]
      %v4623 = vld [vmem:[%s4583 + $0x9c] sm:$0xf]
      %v4624 = vld [vmem:[%s4583 + $0xa0] sm:$0xf]
      %v4625 = vld [vmem:[%s4583 + $0xa4] sm:$0xf]
      %v4626 = vld [vmem:[%s4583 + $0xa8] sm:$0xf]
      %v4627 = vld [vmem:[%s4583 + $0xac] sm:$0xf]
      %v4628 = vld [vmem:[%s4583 + $0xb0] sm:$0xf]
      %v4629 = vld [vmem:[%s4583 + $0xb4] sm:$0xf]
      %v4630 = vld [vmem:[%s4583 + $0xb8] sm:$0xf]
      %v4631 = vld [vmem:[%s4583 + $0xbc] sm:$0xf]
      %v4632 = vld [vmem:[%s4583 + $0xc0] sm:$0xf]
      %v4633 = vld [vmem:[%s4583 + $0xc4] sm:$0xf]
      %v4634 = vld [vmem:[%s4583 + $0xc8] sm:$0xf]
      %v4635 = vld [vmem:[%s4583 + $0xcc] sm:$0xf]
      %v4636 = vld [vmem:[%s4583 + $0xd0] sm:$0xf]
      %v4637 = vld [vmem:[%s4583 + $0xd4] sm:$0xf]
      %v4638 = vld [vmem:[%s4583 + $0xd8] sm:$0xf]
      %v4639 = vld [vmem:[%s4583 + $0xdc] sm:$0xf]
      %v4640 = vld [vmem:[%s4583 + $0xe0] sm:$0xf]
      %v4641 = vld [vmem:[%s4583 + $0xe4] sm:$0xf]
      %v4642 = vld [vmem:[%s4583 + $0xe8] sm:$0xf]
      %v4643 = vld [vmem:[%s4583 + $0xec] sm:$0xf]
      %v4644 = vld [vmem:[%s4583 + $0xf0] sm:$0xf]
      %v4645 = vld [vmem:[%s4583 + $0xf4] sm:$0xf]
      %v4646 = vld [vmem:[%s4583 + $0xf8] sm:$0xf]
      %v4647 = vld [vmem:[%s4583 + $0xfc] sm:$0xf]
      %v4648 = vld [vmem:[%s4583 + $0x100] sm:$0xf]
      %v4649 = vld [vmem:[%s4583 + $0x104] sm:$0xf]
      %v4650 = vld [vmem:[%s4583 + $0x108] sm:$0xf]
      %v4651 = vld [vmem:[%s4583 + $0x10c] sm:$0xf]
      %v4652 = vld [vmem:[%s4583 + $0x110] sm:$0xf]
      %v4653 = vld [vmem:[%s4583 + $0x114] sm:$0xf]
      %v4654 = vld [vmem:[%s4583 + $0x118] sm:$0xf]
      %v4655 = vld [vmem:[%s4583 + $0x11c] sm:$0xf]
      %v4656 = vld [vmem:[%s4583 + $0x120] sm:$0xf]
      %v4657 = vld [vmem:[%s4583 + $0x124] sm:$0xf]
      %v4658 = vld [vmem:[%s4583 + $0x128] sm:$0xf]
      %v4659 = vld [vmem:[%s4583 + $0x12c] sm:$0xf]
      %v4660 = vld [vmem:[%s4583 + $0x130] sm:$0xf]
      %v4661 = vld [vmem:[%s4583 + $0x134] sm:$0xf]
      %v4662 = vld [vmem:[%s4583 + $0x138] sm:$0xf]
      %v4663 = vld [vmem:[%s4583 + $0x13c] sm:$0xf]
      %v4664 = vld [vmem:[%s4583 + $0x140] sm:$0xf]
      %v4665 = vld [vmem:[%s4583 + $0x144] sm:$0xf]
      %v4666 = vld [vmem:[%s4583 + $0x148] sm:$0xf]
      %v4667 = vld [vmem:[%s4583 + $0x14c] sm:$0xf]
      %v4668 = vld [vmem:[%s4583 + $0x150] sm:$0xf]
      %v4669 = vld [vmem:[%s4583 + $0x154] sm:$0xf]
      %v4670 = vld [vmem:[%s4583 + $0x158] sm:$0xf]
      %v4671 = vld [vmem:[%s4583 + $0x15c] sm:$0xf]
      %v4672 = vld [vmem:[%s4583 + $0x160] sm:$0xf]
      %v4673 = vld [vmem:[%s4583 + $0x164] sm:$0xf]
      %v4674 = vld [vmem:[%s4583 + $0x168] sm:$0xf]
      %v4675 = vld [vmem:[%s4583 + $0x16c] sm:$0xf]
      %v4676 = vld [vmem:[%s4583 + $0x170] sm:$0xf]
      %v4677 = vld [vmem:[%s4583 + $0x174] sm:$0xf]
      %v4678 = vld [vmem:[%s4583 + $0x178] sm:$0xf]
      %v4679 = vld [vmem:[%s4583 + $0x17c] sm:$0xf]
      %v4680 = vld [vmem:[%s4583 + $0x180] sm:$0xf]
      %v4681 = vld [vmem:[%s4583 + $0x184] sm:$0xf]
      %v4682 = vld [vmem:[%s4583 + $0x188] sm:$0xf]
      %v4683 = vld [vmem:[%s4583 + $0x18c] sm:$0xf]
      %v4684 = vld [vmem:[%s4583 + $0x190] sm:$0xf]
      %v4685 = vld [vmem:[%s4583 + $0x194] sm:$0xf]
      %v4686 = vld [vmem:[%s4583 + $0x198] sm:$0xf]
      %v4687 = vld [vmem:[%s4583 + $0x19c] sm:$0xf]
      %v4688 = vld [vmem:[%s4583 + $0x1a0] sm:$0xf]
      %v4689 = vld [vmem:[%s4583 + $0x1a4] sm:$0xf]
      %v4690 = vld [vmem:[%s4583 + $0x1a8] sm:$0xf]
      %v4691 = vld [vmem:[%s4583 + $0x1ac] sm:$0xf]
      %v4692 = vld [vmem:[%s4583 + $0x1b0] sm:$0xf]
      %v4693 = vld [vmem:[%s4583 + $0x1b4] sm:$0xf]
      %v4694 = vld [vmem:[%s4583 + $0x1b8] sm:$0xf]
      %v4695 = vld [vmem:[%s4583 + $0x1bc] sm:$0xf]
      %v4808 = vunpack.c.l.b16 %v4584
      %v4809 = vunpack.c.l.b16 %v4585
      %v4810 = vunpack.c.l.b16 %v4586
      %v4811 = vunpack.c.l.b16 %v4587
      %v4812 = vunpack.c.l.b16 %v4588
      %v4813 = vunpack.c.l.b16 %v4589
      %v4814 = vunpack.c.l.b16 %v4590
      %v4815 = vunpack.c.l.b16 %v4591
      %v4816 = vunpack.c.l.b16 %v4592
      %v4817 = vunpack.c.l.b16 %v4593
      %v4818 = vunpack.c.l.b16 %v4594
      %v4819 = vunpack.c.l.b16 %v4595
      %v4820 = vunpack.c.l.b16 %v4596
      %v4821 = vunpack.c.l.b16 %v4597
      %v4822 = vunpack.c.l.b16 %v4598
      %v4823 = vunpack.c.l.b16 %v4599
      %v4824 = vunpack.c.l.b16 %v4600
      %v4825 = vunpack.c.l.b16 %v4601
      %v4826 = vunpack.c.l.b16 %v4602
      %v4827 = vunpack.c.l.b16 %v4603
      %v4828 = vunpack.c.l.b16 %v4604
      %v4829 = vunpack.c.l.b16 %v4605
      %v4830 = vunpack.c.l.b16 %v4606
      %v4831 = vunpack.c.l.b16 %v4607
      %v4832 = vunpack.c.l.b16 %v4608
      %v4833 = vunpack.c.l.b16 %v4609
      %v4834 = vunpack.c.l.b16 %v4610
      %v4835 = vunpack.c.l.b16 %v4611
      %v4836 = vunpack.c.l.b16 %v4612
      %v4837 = vunpack.c.l.b16 %v4613
      %v4838 = vunpack.c.l.b16 %v4614
      %v4839 = vunpack.c.l.b16 %v4615
      %v4840 = vunpack.c.l.b16 %v4616
      %v4841 = vunpack.c.l.b16 %v4617
      %v4842 = vunpack.c.l.b16 %v4618
      %v4843 = vunpack.c.l.b16 %v4619
      %v4844 = vunpack.c.l.b16 %v4620
      %v4845 = vunpack.c.l.b16 %v4621
      %v4846 = vunpack.c.l.b16 %v4622
      %v4847 = vunpack.c.l.b16 %v4623
      %v4848 = vunpack.c.l.b16 %v4624
      %v4849 = vunpack.c.l.b16 %v4625
      %v4850 = vunpack.c.l.b16 %v4626
      %v4851 = vunpack.c.l.b16 %v4627
      %v4852 = vunpack.c.l.b16 %v4628
      %v4853 = vunpack.c.l.b16 %v4629
      %v4854 = vunpack.c.l.b16 %v4630
      %v4855 = vunpack.c.l.b16 %v4631
      %v4856 = vunpack.c.l.b16 %v4632
      %v4857 = vunpack.c.l.b16 %v4633
      %v4858 = vunpack.c.l.b16 %v4634
      %v4859 = vunpack.c.l.b16 %v4635
      %v4860 = vunpack.c.l.b16 %v4636
      %v4861 = vunpack.c.l.b16 %v4637
      %v4862 = vunpack.c.l.b16 %v4638
      %v4863 = vunpack.c.l.b16 %v4639
      %v4864 = vunpack.c.l.b16 %v4640
      %v4865 = vunpack.c.l.b16 %v4641
      %v4866 = vunpack.c.l.b16 %v4642
      %v4867 = vunpack.c.l.b16 %v4643
      %v4868 = vunpack.c.l.b16 %v4644
      %v4869 = vunpack.c.l.b16 %v4645
      %v4870 = vunpack.c.l.b16 %v4646
      %v4871 = vunpack.c.l.b16 %v4647
      %v4872 = vunpack.c.l.b16 %v4648
      %v4873 = vunpack.c.l.b16 %v4649
      %v4874 = vunpack.c.l.b16 %v4650
      %v4875 = vunpack.c.l.b16 %v4651
      %v4876 = vunpack.c.l.b16 %v4652
      %v4877 = vunpack.c.l.b16 %v4653
      %v4878 = vunpack.c.l.b16 %v4654
      %v4879 = vunpack.c.l.b16 %v4655
      %v4880 = vunpack.c.l.b16 %v4656
      %v4881 = vunpack.c.l.b16 %v4657
      %v4882 = vunpack.c.l.b16 %v4658
      %v4883 = vunpack.c.l.b16 %v4659
      %v4884 = vunpack.c.l.b16 %v4660
      %v4885 = vunpack.c.l.b16 %v4661
      %v4886 = vunpack.c.l.b16 %v4662
      %v4887 = vunpack.c.l.b16 %v4663
      %v4888 = vunpack.c.l.b16 %v4664
      %v4889 = vunpack.c.l.b16 %v4665
      %v4890 = vunpack.c.l.b16 %v4666
      %v4891 = vunpack.c.l.b16 %v4667
      %v4892 = vunpack.c.l.b16 %v4668
      %v4893 = vunpack.c.l.b16 %v4669
      %v4894 = vunpack.c.l.b16 %v4670
      %v4895 = vunpack.c.l.b16 %v4671
      %v4896 = vunpack.c.l.b16 %v4672
      %v4897 = vunpack.c.l.b16 %v4673
      %v4898 = vunpack.c.l.b16 %v4674
      %v4899 = vunpack.c.l.b16 %v4675
      %v4900 = vunpack.c.l.b16 %v4676
      %v4901 = vunpack.c.l.b16 %v4677
      %v4902 = vunpack.c.l.b16 %v4678
      %v4903 = vunpack.c.l.b16 %v4679
      %v4904 = vunpack.c.l.b16 %v4680
      %v4905 = vunpack.c.l.b16 %v4681
      %v4906 = vunpack.c.l.b16 %v4682
      %v4907 = vunpack.c.l.b16 %v4683
      %v4908 = vunpack.c.l.b16 %v4684
      %v4909 = vunpack.c.l.b16 %v4685
      %v4910 = vunpack.c.l.b16 %v4686
      %v4911 = vunpack.c.l.b16 %v4687
      %v4912 = vunpack.c.l.b16 %v4688
      %v4913 = vunpack.c.l.b16 %v4689
      %v4914 = vunpack.c.l.b16 %v4690
      %v4915 = vunpack.c.l.b16 %v4691
      %v4916 = vunpack.c.l.b16 %v4692
      %v4917 = vunpack.c.l.b16 %v4693
      %v4918 = vunpack.c.l.b16 %v4694
      %v4919 = vunpack.c.l.b16 %v4695
      %v4920 = vpack.c.b16 %v4809, %v4808
      %v4921 = vpack.c.b16 %v4811, %v4810
      %v4922 = vpack.c.b16 %v4813, %v4812
      %v4923 = vpack.c.b16 %v4815, %v4814
      %v4924 = vpack.c.b16 %v4817, %v4816
      %v4925 = vpack.c.b16 %v4819, %v4818
      %v4926 = vpack.c.b16 %v4821, %v4820
      %v4927 = vpack.c.b16 %v4823, %v4822
      %v4928 = vpack.c.b16 %v4825, %v4824
      %v4929 = vpack.c.b16 %v4827, %v4826
      %v4930 = vpack.c.b16 %v4829, %v4828
      %v4931 = vpack.c.b16 %v4831, %v4830
      %v4932 = vpack.c.b16 %v4833, %v4832
      %v4933 = vpack.c.b16 %v4835, %v4834
      %v4934 = vpack.c.b16 %v4837, %v4836
      %v4935 = vpack.c.b16 %v4839, %v4838
      %v4936 = vpack.c.b16 %v4841, %v4840
      %v4937 = vpack.c.b16 %v4843, %v4842
      %v4938 = vpack.c.b16 %v4845, %v4844
      %v4939 = vpack.c.b16 %v4847, %v4846
      %v4940 = vpack.c.b16 %v4849, %v4848
      %v4941 = vpack.c.b16 %v4851, %v4850
      %v4942 = vpack.c.b16 %v4853, %v4852
      %v4943 = vpack.c.b16 %v4855, %v4854
      %v4944 = vpack.c.b16 %v4857, %v4856
      %v4945 = vpack.c.b16 %v4859, %v4858
      %v4946 = vpack.c.b16 %v4861, %v4860
      %v4947 = vpack.c.b16 %v4863, %v4862
      %v4948 = vpack.c.b16 %v4865, %v4864
      %v4949 = vpack.c.b16 %v4867, %v4866
      %v4950 = vpack.c.b16 %v4869, %v4868
      %v4951 = vpack.c.b16 %v4871, %v4870
      %v4952 = vpack.c.b16 %v4873, %v4872
      %v4953 = vpack.c.b16 %v4875, %v4874
      %v4954 = vpack.c.b16 %v4877, %v4876
      %v4955 = vpack.c.b16 %v4879, %v4878
      %v4956 = vpack.c.b16 %v4881, %v4880
      %v4957 = vpack.c.b16 %v4883, %v4882
      %v4958 = vpack.c.b16 %v4885, %v4884
      %v4959 = vpack.c.b16 %v4887, %v4886
      %v4960 = vpack.c.b16 %v4889, %v4888
      %v4961 = vpack.c.b16 %v4891, %v4890
      %v4962 = vpack.c.b16 %v4893, %v4892
      %v4963 = vpack.c.b16 %v4895, %v4894
      %v4964 = vpack.c.b16 %v4897, %v4896
      %v4965 = vpack.c.b16 %v4899, %v4898
      %v4966 = vpack.c.b16 %v4901, %v4900
      %v4967 = vpack.c.b16 %v4903, %v4902
      %v4968 = vpack.c.b16 %v4905, %v4904
      %v4969 = vpack.c.b16 %v4907, %v4906
      %v4970 = vpack.c.b16 %v4909, %v4908
      %v4971 = vpack.c.b16 %v4911, %v4910
      %v4972 = vpack.c.b16 %v4913, %v4912
      %v4973 = vpack.c.b16 %v4915, %v4914
      %v4974 = vpack.c.b16 %v4917, %v4916
      %v4975 = vpack.c.b16 %v4919, %v4918
      %5032 = vmatprep.subr.bf16.mxu0 0
      %5033 = vmatpush1.bf16.msra.mxu0 %v4920
      %5034 = vmatprep.subr.bf16.mxu0 0
      %5035 = vmatpush1.bf16.msra.mxu0 %v4921
      %5036 = vmatprep.subr.bf16.mxu0 0
      %5037 = vmatpush1.bf16.msra.mxu0 %v4922
      %5038 = vmatprep.subr.bf16.mxu0 0
      %5039 = vmatpush1.bf16.msra.mxu0 %v4923
      %5040 = vmatprep.subr.bf16.mxu0 0
      %5041 = vmatpush1.bf16.msra.mxu0 %v4924
      %5042 = vmatprep.subr.bf16.mxu0 0
      %5043 = vmatpush1.bf16.msra.mxu0 %v4925
      %5044 = vmatprep.subr.bf16.mxu0 0
      %5045 = vmatpush1.bf16.msra.mxu0 %v4926
      %5046 = vmatprep.subr.bf16.mxu0 0
      %5047 = vmatpush1.bf16.msra.mxu0 %v4927
      %5048 = vmatprep.subr.bf16.mxu0 0
      %5049 = vmatpush1.bf16.msra.mxu0 %v4928
      %5050 = vmatprep.subr.bf16.mxu0 0
      %5051 = vmatpush1.bf16.msra.mxu0 %v4929
      %5052 = vmatprep.subr.bf16.mxu0 0
      %5053 = vmatpush1.bf16.msra.mxu0 %v4930
      %5054 = vmatprep.subr.bf16.mxu0 0
      %5055 = vmatpush1.bf16.msra.mxu0 %v4931
      %5056 = vmatprep.subr.bf16.mxu0 0
      %5057 = vmatpush1.bf16.msra.mxu0 %v4932
      %5058 = vmatprep.subr.bf16.mxu0 0
      %5059 = vmatpush1.bf16.msra.mxu0 %v4933
      %5060 = vmatprep.subr.bf16.mxu0 0
      %5061 = vmatpush1.bf16.msra.mxu0 %v4934
      %5062 = vmatprep.subr.bf16.mxu0 0
      %5063 = vmatpush1.bf16.msra.mxu0 %v4935
      %5064 = vmatprep.mubr.bf16.mxu0 %v4549
      %5065 = vmatmul.mubr.bf16.gmra.mrb[0].mxu0 %v4548
      %v5066 = vpop.f32.mrb[0].mxu0
      %v5067 = vadd.f32 0.0, %v5066
      %v5068 = vpop.f32.mrb[0].mxu0
      %v5069 = vpop.f32.mrb[0].mxu0
      %v5070 = vpop.f32.mrb[0].mxu0
      %5071 = vmatprep.mubr.bf16.mxu0 %v4556
      %5072 = vmatmul.mubr.bf16.gmra.mrb[0].mxu0 %v4555
      %v5073 = vpop.f32.mrb[0].mxu0
      %v5074 = vadd.f32 0.0, %v5073
      %v5075 = vpop.f32.mrb[0].mxu0
      %v5076 = vpop.f32.mrb[0].mxu0
      %v5077 = vpop.f32.mrb[0].mxu0
      %5078 = vmatprep.mubr.bf16.mxu0 %v4563
      %5079 = vmatmul.mubr.bf16.gmra.mrb[0].mxu0 %v4562
      %v5080 = vpop.f32.mrb[0].mxu0
      %v5081 = vadd.f32 0.0, %v5080
      %v5082 = vpop.f32.mrb[0].mxu0
      %v5083 = vpop.f32.mrb[0].mxu0
      %v5084 = vpop.f32.mrb[0].mxu0
      %5085 = vmatprep.mubr.bf16.mxu0 %v4570
      %5086 = vmatmul.mubr.bf16.gmra.mrb[0].mxu0 %v4569
      %v5087 = vpop.f32.mrb[0].mxu0
      %v5088 = vadd.f32 0.0, %v5087
      %v5089 = vpop.f32.mrb[0].mxu0
      %v5090 = vpop.f32.mrb[0].mxu0
      %v5091 = vpop.f32.mrb[0].mxu0
      %5092 = vmatprep.mubr.bf16.mxu0 %v4577
      %5093 = vmatmul.mubr.bf16.gmra.mrb[0].mxu0 %v4576
      %v5094 = vpop.f32.mrb[0].mxu0
      %v5095 = vpop.f32.mrb[0].mxu0
      %v5096 = vpop.f32.mrb[0].mxu0
      %v5097 = vpop.f32.mrb[0].mxu0
      %5098 = vdwg.mxu0
      %5099 = vmatprep.subr.bf16.mxu0 0
      %5100 = vmatpush1.bf16.msra.mxu0 %v4936
      %5101 = vmatprep.subr.bf16.mxu0 0
      %5102 = vmatpush1.bf16.msra.mxu0 %v4937
      %5103 = vmatprep.subr.bf16.mxu0 0
      %5104 = vmatpush1.bf16.msra.mxu0 %v4938
      %5105 = vmatprep.subr.bf16.mxu0 0
      %5106 = vmatpush1.bf16.msra.mxu0 %v4939
      %5107 = vmatprep.subr.bf16.mxu0 0
      %5108 = vmatpush1.bf16.msra.mxu0 %v4940
      %5109 = vmatprep.subr.bf16.mxu0 0
      %5110 = vmatpush1.bf16.msra.mxu0 %v4941
      %5111 = vmatprep.subr.bf16.mxu0 0
      %5112 = vmatpush1.bf16.msra.mxu0 %v4942
      %5113 = vmatprep.subr.bf16.mxu0 0
      %5114 = vmatpush1.bf16.msra.mxu0 %v4943
      %5115 = vmatprep.subr.bf16.mxu0 0
      %5116 = vmatpush1.bf16.msra.mxu0 %v4944
      %5117 = vmatprep.subr.bf16.mxu0 0
      %5118 = vmatpush1.bf16.msra.mxu0 %v4945
      %5119 = vmatprep.subr.bf16.mxu0 0
      %5120 = vmatpush1.bf16.msra.mxu0 %v4946
      %5121 = vmatprep.subr.bf16.mxu0 0
      %5122 = vmatpush1.bf16.msra.mxu0 %v4947
      %5123 = vmatprep.subr.bf16.mxu0 0
      %5124 = vmatpush1.bf16.msra.mxu0 %v4948
      %5125 = vmatprep.subr.bf16.mxu0 0
      %5126 = vmatpush1.bf16.msra.mxu0 %v4949
      %5127 = vmatprep.subr.bf16.mxu0 0
      %5128 = vmatpush1.bf16.msra.mxu0 %v4950
      %5129 = vmatprep.subr.bf16.mxu0 0
      %5130 = vmatpush1.bf16.msra.mxu0 %v4951
      %5131 = vmatprep.mubr.bf16.mxu0 %v4551
      %5132 = vmatmul.mubr.bf16.gmra.mrb[0].mxu0 %v4550
      %v5133 = vpop.f32.mrb[0].mxu0
      %v5134 = vadd.f32 %v5067, %v5133
      %v5135 = vpop.f32.mrb[0].mxu0
      %v5136 = vpop.f32.mrb[0].mxu0
      %v5137 = vpop.f32.mrb[0].mxu0
      %5138 = vmatprep.mubr.bf16.mxu0 %v4558
      %5139 = vmatmul.mubr.bf16.gmra.mrb[0].mxu0 %v4557
      %v5140 = vpop.f32.mrb[0].mxu0
      %v5141 = vadd.f32 %v5074, %v5140
      %v5142 = vpop.f32.mrb[0].mxu0
      %v5143 = vpop.f32.mrb[0].mxu0
      %v5144 = vpop.f32.mrb[0].mxu0
      %5145 = vmatprep.mubr.bf16.mxu0 %v4565
      %5146 = vmatmul.mubr.bf16.gmra.mrb[0].mxu0 %v4564
      %v5147 = vpop.f32.mrb[0].mxu0
      %v5148 = vadd.f32 %v5081, %v5147
      %v5149 = vpop.f32.mrb[0].mxu0
      %v5150 = vpop.f32.mrb[0].mxu0
      %v5151 = vpop.f32.mrb[0].mxu0
      %5152 = vmatprep.mubr.bf16.mxu0 %v4572
      %5153 = vmatmul.mubr.bf16.gmra.mrb[0].mxu0 %v4571
      %v5154 = vpop.f32.mrb[0].mxu0
      %v5155 = vadd.f32 %v5088, %v5154
      %v5156 = vpop.f32.mrb[0].mxu0
      %v5157 = vpop.f32.mrb[0].mxu0
      %v5158 = vpop.f32.mrb[0].mxu0
      %5159 = vmatprep.mubr.bf16.mxu0 %v4579
      %5160 = vmatmul.mubr.bf16.gmra.mrb[0].mxu0 %v4578
      %v5161 = vpop.f32.mrb[0].mxu0
      %v5162 = vpop.f32.mrb[0].mxu0
      %v5163 = vpop.f32.mrb[0].mxu0
      %v5164 = vpop.f32.mrb[0].mxu0
      %5165 = vdwg.mxu0
      %5166 = vmatprep.subr.bf16.mxu0 0
      %5167 = vmatpush1.bf16.msra.mxu0 %v4952
      %5168 = vmatprep.subr.bf16.mxu0 0
      %5169 = vmatpush1.bf16.msra.mxu0 %v4953
      %5170 = vmatprep.subr.bf16.mxu0 0
      %5171 = vmatpush1.bf16.msra.mxu0 %v4954
      %5172 = vmatprep.subr.bf16.mxu0 0
      %5173 = vmatpush1.bf16.msra.mxu0 %v4955
      %5174 = vmatprep.subr.bf16.mxu0 0
      %5175 = vmatpush1.bf16.msra.mxu0 %v4956
      %5176 = vmatprep.subr.bf16.mxu0 0
      %5177 = vmatpush1.bf16.msra.mxu0 %v4957
      %5178 = vmatprep.subr.bf16.mxu0 0
      %5179 = vmatpush1.bf16.msra.mxu0 %v4958
      %5180 = vmatprep.subr.bf16.mxu0 0
      %5181 = vmatpush1.bf16.msra.mxu0 %v4959
      %5182 = vmatprep.subr.bf16.mxu0 0
      %5183 = vmatpush1.bf16.msra.mxu0 %v4960
      %5184 = vmatprep.subr.bf16.mxu0 0
      %5185 = vmatpush1.bf16.msra.mxu0 %v4961
      %5186 = vmatprep.subr.bf16.mxu0 0
      %5187 = vmatpush1.bf16.msra.mxu0 %v4962
      %5188 = vmatprep.subr.bf16.mxu0 0
      %5189 = vmatpush1.bf16.msra.mxu0 %v4963
      %5190 = vmatprep.subr.bf16.mxu0 0
      %5191 = vmatpush1.bf16.msra.mxu0 %v4964
      %5192 = vmatprep.subr.bf16.mxu0 0
      %5193 = vmatpush1.bf16.msra.mxu0 %v4965
      %5194 = vmatprep.subr.bf16.mxu0 0
      %5195 = vmatpush1.bf16.msra.mxu0 %v4966
      %5196 = vmatprep.subr.bf16.mxu0 0
      %5197 = vmatpush1.bf16.msra.mxu0 %v4967
      %5198 = vmatprep.mubr.bf16.mxu0 %v4553
      %5199 = vmatmul.mubr.bf16.gmra.mrb[0].mxu0 %v4552
      %v5200 = vpop.f32.mrb[0].mxu0
      %v5201 = vadd.f32 %v5134, %v5200
      %v5202 = vpop.f32.mrb[0].mxu0
      %v5203 = vpop.f32.mrb[0].mxu0
      %v5204 = vpop.f32.mrb[0].mxu0
      %5205 = vmatprep.mubr.bf16.mxu0 %v4560
      %5206 = vmatmul.mubr.bf16.gmra.mrb[0].mxu0 %v4559
      %v5207 = vpop.f32.mrb[0].mxu0
      %v5208 = vadd.f32 %v5141, %v5207
      %v5209 = vpop.f32.mrb[0].mxu0
      %v5210 = vpop.f32.mrb[0].mxu0
      %v5211 = vpop.f32.mrb[0].mxu0
      %5212 = vmatprep.mubr.bf16.mxu0 %v4567
      %5213 = vmatmul.mubr.bf16.gmra.mrb[0].mxu0 %v4566
      %v5214 = vpop.f32.mrb[0].mxu0
      %v5215 = vadd.f32 %v5148, %v5214
      %v5216 = vpop.f32.mrb[0].mxu0
      %v5217 = vpop.f32.mrb[0].mxu0
      %v5218 = vpop.f32.mrb[0].mxu0
      %5219 = vmatprep.mubr.bf16.mxu0 %v4574
      %5220 = vmatmul.mubr.bf16.gmra.mrb[0].mxu0 %v4573
      %v5221 = vpop.f32.mrb[0].mxu0
      %v5222 = vadd.f32 %v5155, %v5221
      %v5223 = vpop.f32.mrb[0].mxu0
      %v5224 = vpop.f32.mrb[0].mxu0
      %v5225 = vpop.f32.mrb[0].mxu0
      %5226 = vmatprep.mubr.bf16.mxu0 %v4581
      %5227 = vmatmul.mubr.bf16.gmra.mrb[0].mxu0 %v4580
      %v5228 = vpop.f32.mrb[0].mxu0
      %v5229 = vpop.f32.mrb[0].mxu0
      %v5230 = vpop.f32.mrb[0].mxu0
      %v5231 = vpop.f32.mrb[0].mxu0
      %5232 = vdwg.mxu0
      %5233 = vmatprep.subr.bf16.mxu0 0
      %5234 = vmatpush1.bf16.msra.mxu0 %v4968
      %5235 = vmatprep.subr.bf16.mxu0 0
      %5236 = vmatpush1.bf16.msra.mxu0 %v4969
      %5237 = vmatprep.subr.bf16.mxu0 0
      %5238 = vmatpush1.bf16.msra.mxu0 %v4970
      %5239 = vmatprep.subr.bf16.mxu0 0
      %5240 = vmatpush1.bf16.msra.mxu0 %v4971
      %5241 = vmatprep.subr.bf16.mxu0 0
      %5242 = vmatpush1.bf16.msra.mxu0 %v4972
      %5243 = vmatprep.subr.bf16.mxu0 0
      %5244 = vmatpush1.bf16.msra.mxu0 %v4973
      %5245 = vmatprep.subr.bf16.mxu0 0
      %5246 = vmatpush1.bf16.msra.mxu0 %v4974
      %5247 = vmatprep.subr.bf16.mxu0 0
      %5248 = vmatpush1.bf16.msra.mxu0 %v4975
      %5249 = vmatprep.subr.bf16.mxu0 0
      %5250 = vmatpush1.bf16.msra.mxu0 0
      %5251 = vmatprep.subr.bf16.mxu0 0
      %5252 = vmatpush1.bf16.msra.mxu0 0
      %5253 = vmatprep.subr.bf16.mxu0 0
      %5254 = vmatpush1.bf16.msra.mxu0 0
      %5255 = vmatprep.subr.bf16.mxu0 0
      %5256 = vmatpush1.bf16.msra.mxu0 0
      %5257 = vmatprep.subr.bf16.mxu0 0
      %5258 = vmatpush1.bf16.msra.mxu0 0
      %5259 = vmatprep.subr.bf16.mxu0 0
      %5260 = vmatpush1.bf16.msra.mxu0 0
      %5261 = vmatprep.subr.bf16.mxu0 0
      %5262 = vmatpush1.bf16.msra.mxu0 0
      %5263 = vmatprep.subr.bf16.mxu0 0
      %5264 = vmatpush1.bf16.msra.mxu0 0
      %5265 = vmatprep.mubr.bf16.mxu0 0
      %5266 = vmatmul.mubr.bf16.gmra.mrb[0].mxu0 %v4554
      %v5267 = vpop.f32.mrb[0].mxu0
      %v5268 = vadd.f32 %v5201, %v5267
      %v5269 = vpop.f32.mrb[0].mxu0
      %v5270 = vpop.f32.mrb[0].mxu0
      %v5271 = vpop.f32.mrb[0].mxu0
      %5272 = vmatprep.mubr.bf16.mxu0 0
      %5273 = vmatmul.mubr.bf16.gmra.mrb[0].mxu0 %v4561
      %v5274 = vpop.f32.mrb[0].mxu0
      %v5275 = vadd.f32 %v5208, %v5274
      %v5276 = vpop.f32.mrb[0].mxu0
      %v5277 = vpop.f32.mrb[0].mxu0
      %v5278 = vpop.f32.mrb[0].mxu0
      %5279 = vmatprep.mubr.bf16.mxu0 0
      %5280 = vmatmul.mubr.bf16.gmra.mrb[0].mxu0 %v4568
      %v5281 = vpop.f32.mrb[0].mxu0
      %v5282 = vadd.f32 %v5215, %v5281
      %v5283 = vpop.f32.mrb[0].mxu0
      %v5284 = vpop.f32.mrb[0].mxu0
      %v5285 = vpop.f32.mrb[0].mxu0
      %5286 = vmatprep.mubr.bf16.mxu0 0
      %5287 = vmatmul.mubr.bf16.gmra.mrb[0].mxu0 %v4575
      %v5288 = vpop.f32.mrb[0].mxu0
      %v5289 = vadd.f32 %v5222, %v5288
      %v5290 = vpop.f32.mrb[0].mxu0
      %v5291 = vpop.f32.mrb[0].mxu0
      %v5292 = vpop.f32.mrb[0].mxu0
      %5293 = vmatprep.mubr.bf16.mxu0 0
      %5294 = vmatmul.mubr.bf16.gmra.mrb[0].mxu0 %v4582
      %v5295 = vpop.f32.mrb[0].mxu0
      %v5296 = vpop.f32.mrb[0].mxu0
      %v5297 = vpop.f32.mrb[0].mxu0
      %v5298 = vpop.f32.mrb[0].mxu0
      %5299 = vdwg.mxu0
      %v5300 = vadd.f32 %v4544, %v5268
      %v5301 = vadd.f32 %v4545, %v5275
      %v5302 = vadd.f32 %v4546, %v5282
      %v5303 = vadd.f32 %v4547, %v5289
      %v5304 = vld [vmem:[#allocation3 + $0xe0] sm:$0xff]
      %v5305 = vld [vmem:[#allocation3 + $0xe8] sm:$0xff]
      %v5306 = vld [vmem:[#allocation3 + $0xf0] sm:$0xff]
      %v5307 = vld [vmem:[#allocation3 + $0xf8] sm:$0xff]
      %v5308 = vld [vmem:[#allocation3 + $0x100] sm:$0xff]
      %v5309 = vld [vmem:[#allocation3 + $0x108] sm:$0xff]
      %v5310 = vld [vmem:[#allocation3 + $0x110] sm:$0xff]
      %v5311 = vld [vmem:[#allocation3 + $0x118] sm:$0xff]
      %v5312 = vld [vmem:[#allocation3 + $0x120] sm:$0xff]
      %v5313 = vld [vmem:[#allocation3 + $0x128] sm:$0xff]
      %v5314 = vld [vmem:[#allocation3 + $0x130] sm:$0xff]
      %v5315 = vld [vmem:[#allocation3 + $0x138] sm:$0xff]
      %v5316 = vld [vmem:[#allocation3 + $0x140] sm:$0xff]
      %v5317 = vld [vmem:[#allocation3 + $0x148] sm:$0xff]
      %v5318 = vld [vmem:[#allocation3 + $0x150] sm:$0xff]
      %v5319 = vld [vmem:[#allocation3 + $0x158] sm:$0xff]
      %v5320 = vld [vmem:[#allocation3 + $0x160] sm:$0xff]
      %v5321 = vld [vmem:[#allocation3 + $0x168] sm:$0xff]
      %v5322 = vld [vmem:[#allocation3 + $0x170] sm:$0xff]
      %v5323 = vld [vmem:[#allocation3 + $0x178] sm:$0xff]
      %v5324 = vld [vmem:[#allocation3 + $0x180] sm:$0xff]
      %v5325 = vld [vmem:[#allocation3 + $0x188] sm:$0xff]
      %v5326 = vld [vmem:[#allocation3 + $0x190] sm:$0xff]
      %v5327 = vld [vmem:[#allocation3 + $0x198] sm:$0xff]
      %v5328 = vld [vmem:[#allocation3 + $0x1a0] sm:$0xff]
      %v5329 = vld [vmem:[#allocation3 + $0x1a8] sm:$0xff]
      %v5330 = vld [vmem:[#allocation3 + $0x1b0] sm:$0xff]
      %v5331 = vld [vmem:[#allocation3 + $0x1b8] sm:$0xff]
      %v5332 = vld [vmem:[#allocation3 + $0x1c0] sm:$0xff]
      %v5333 = vld [vmem:[#allocation3 + $0x1c8] sm:$0xff]
      %v5334 = vld [vmem:[#allocation3 + $0x1d0] sm:$0xff]
      %v5335 = vld [vmem:[#allocation3 + $0x1d8] sm:$0xff]
      %v5336 = vld [vmem:[#allocation3 + $0x1e0] sm:$0xff]
      %v5337 = vld [vmem:[#allocation3 + $0x1e8] sm:$0xff]
      %v5338 = vld [vmem:[#allocation3 + $0x1f0] sm:$0xff]
      %s5339 = scalar_lea.vmem %s3, 1792
      %v5340 = vld [vmem:[%s5339] sm:$0xf]
      %v5341 = vld [vmem:[%s5339 + $0x4] sm:$0xf]
      %v5342 = vld [vmem:[%s5339 + $0x8] sm:$0xf]
      %v5343 = vld [vmem:[%s5339 + $0xc] sm:$0xf]
      %v5344 = vld [vmem:[%s5339 + $0x10] sm:$0xf]
      %v5345 = vld [vmem:[%s5339 + $0x14] sm:$0xf]
      %v5346 = vld [vmem:[%s5339 + $0x18] sm:$0xf]
      %v5347 = vld [vmem:[%s5339 + $0x1c] sm:$0xf]
      %v5348 = vld [vmem:[%s5339 + $0x20] sm:$0xf]
      %v5349 = vld [vmem:[%s5339 + $0x24] sm:$0xf]
      %v5350 = vld [vmem:[%s5339 + $0x28] sm:$0xf]
      %v5351 = vld [vmem:[%s5339 + $0x2c] sm:$0xf]
      %v5352 = vld [vmem:[%s5339 + $0x30] sm:$0xf]
      %v5353 = vld [vmem:[%s5339 + $0x34] sm:$0xf]
      %v5354 = vld [vmem:[%s5339 + $0x38] sm:$0xf]
      %v5355 = vld [vmem:[%s5339 + $0x3c] sm:$0xf]
      %v5356 = vld [vmem:[%s5339 + $0x40] sm:$0xf]
      %v5357 = vld [vmem:[%s5339 + $0x44] sm:$0xf]
      %v5358 = vld [vmem:[%s5339 + $0x48] sm:$0xf]
      %v5359 = vld [vmem:[%s5339 + $0x4c] sm:$0xf]
      %v5360 = vld [vmem:[%s5339 + $0x50] sm:$0xf]
      %v5361 = vld [vmem:[%s5339 + $0x54] sm:$0xf]
      %v5362 = vld [vmem:[%s5339 + $0x58] sm:$0xf]
      %v5363 = vld [vmem:[%s5339 + $0x5c] sm:$0xf]
      %v5364 = vld [vmem:[%s5339 + $0x60] sm:$0xf]
      %v5365 = vld [vmem:[%s5339 + $0x64] sm:$0xf]
      %v5366 = vld [vmem:[%s5339 + $0x68] sm:$0xf]
      %v5367 = vld [vmem:[%s5339 + $0x6c] sm:$0xf]
      %v5368 = vld [vmem:[%s5339 + $0x70] sm:$0xf]
      %v5369 = vld [vmem:[%s5339 + $0x74] sm:$0xf]
      %v5370 = vld [vmem:[%s5339 + $0x78] sm:$0xf]
      %v5371 = vld [vmem:[%s5339 + $0x7c] sm:$0xf]
      %v5372 = vld [vmem:[%s5339 + $0x80] sm:$0xf]
      %v5373 = vld [vmem:[%s5339 + $0x84] sm:$0xf]
      %v5374 = vld [vmem:[%s5339 + $0x88] sm:$0xf]
      %v5375 = vld [vmem:[%s5339 + $0x8c] sm:$0xf]
      %v5376 = vld [vmem:[%s5339 + $0x90] sm:$0xf]
      %v5377 = vld [vmem:[%s5339 + $0x94] sm:$0xf]
      %v5378 = vld [vmem:[%s5339 + $0x98] sm:$0xf]
      %v5379 = vld [vmem:[%s5339 + $0x9c] sm:$0xf]
      %v5380 = vld [vmem:[%s5339 + $0xa0] sm:$0xf]
      %v5381 = vld [vmem:[%s5339 + $0xa4] sm:$0xf]
      %v5382 = vld [vmem:[%s5339 + $0xa8] sm:$0xf]
      %v5383 = vld [vmem:[%s5339 + $0xac] sm:$0xf]
      %v5384 = vld [vmem:[%s5339 + $0xb0] sm:$0xf]
      %v5385 = vld [vmem:[%s5339 + $0xb4] sm:$0xf]
      %v5386 = vld [vmem:[%s5339 + $0xb8] sm:$0xf]
      %v5387 = vld [vmem:[%s5339 + $0xbc] sm:$0xf]
      %v5388 = vld [vmem:[%s5339 + $0xc0] sm:$0xf]
      %v5389 = vld [vmem:[%s5339 + $0xc4] sm:$0xf]
      %v5390 = vld [vmem:[%s5339 + $0xc8] sm:$0xf]
      %v5391 = vld [vmem:[%s5339 + $0xcc] sm:$0xf]
      %v5392 = vld [vmem:[%s5339 + $0xd0] sm:$0xf]
      %v5393 = vld [vmem:[%s5339 + $0xd4] sm:$0xf]
      %v5394 = vld [vmem:[%s5339 + $0xd8] sm:$0xf]
      %v5395 = vld [vmem:[%s5339 + $0xdc] sm:$0xf]
      %v5396 = vld [vmem:[%s5339 + $0xe0] sm:$0xf]
      %v5397 = vld [vmem:[%s5339 + $0xe4] sm:$0xf]
      %v5398 = vld [vmem:[%s5339 + $0xe8] sm:$0xf]
      %v5399 = vld [vmem:[%s5339 + $0xec] sm:$0xf]
      %v5400 = vld [vmem:[%s5339 + $0xf0] sm:$0xf]
      %v5401 = vld [vmem:[%s5339 + $0xf4] sm:$0xf]
      %v5402 = vld [vmem:[%s5339 + $0xf8] sm:$0xf]
      %v5403 = vld [vmem:[%s5339 + $0xfc] sm:$0xf]
      %v5404 = vld [vmem:[%s5339 + $0x100] sm:$0xf]
      %v5405 = vld [vmem:[%s5339 + $0x104] sm:$0xf]
      %v5406 = vld [vmem:[%s5339 + $0x108] sm:$0xf]
      %v5407 = vld [vmem:[%s5339 + $0x10c] sm:$0xf]
      %v5408 = vld [vmem:[%s5339 + $0x110] sm:$0xf]
      %v5409 = vld [vmem:[%s5339 + $0x114] sm:$0xf]
      %v5410 = vld [vmem:[%s5339 + $0x118] sm:$0xf]
      %v5411 = vld [vmem:[%s5339 + $0x11c] sm:$0xf]
      %v5412 = vld [vmem:[%s5339 + $0x120] sm:$0xf]
      %v5413 = vld [vmem:[%s5339 + $0x124] sm:$0xf]
      %v5414 = vld [vmem:[%s5339 + $0x128] sm:$0xf]
      %v5415 = vld [vmem:[%s5339 + $0x12c] sm:$0xf]
      %v5416 = vld [vmem:[%s5339 + $0x130] sm:$0xf]
      %v5417 = vld [vmem:[%s5339 + $0x134] sm:$0xf]
      %v5418 = vld [vmem:[%s5339 + $0x138] sm:$0xf]
      %v5419 = vld [vmem:[%s5339 + $0x13c] sm:$0xf]
      %v5420 = vld [vmem:[%s5339 + $0x140] sm:$0xf]
      %v5421 = vld [vmem:[%s5339 + $0x144] sm:$0xf]
      %v5422 = vld [vmem:[%s5339 + $0x148] sm:$0xf]
      %v5423 = vld [vmem:[%s5339 + $0x14c] sm:$0xf]
      %v5424 = vld [vmem:[%s5339 + $0x150] sm:$0xf]
      %v5425 = vld [vmem:[%s5339 + $0x154] sm:$0xf]
      %v5426 = vld [vmem:[%s5339 + $0x158] sm:$0xf]
      %v5427 = vld [vmem:[%s5339 + $0x15c] sm:$0xf]
      %v5428 = vld [vmem:[%s5339 + $0x160] sm:$0xf]
      %v5429 = vld [vmem:[%s5339 + $0x164] sm:$0xf]
      %v5430 = vld [vmem:[%s5339 + $0x168] sm:$0xf]
      %v5431 = vld [vmem:[%s5339 + $0x16c] sm:$0xf]
      %v5432 = vld [vmem:[%s5339 + $0x170] sm:$0xf]
      %v5433 = vld [vmem:[%s5339 + $0x174] sm:$0xf]
      %v5434 = vld [vmem:[%s5339 + $0x178] sm:$0xf]
      %v5435 = vld [vmem:[%s5339 + $0x17c] sm:$0xf]
      %v5436 = vld [vmem:[%s5339 + $0x180] sm:$0xf]
      %v5437 = vld [vmem:[%s5339 + $0x184] sm:$0xf]
      %v5438 = vld [vmem:[%s5339 + $0x188] sm:$0xf]
      %v5439 = vld [vmem:[%s5339 + $0x18c] sm:$0xf]
      %v5440 = vld [vmem:[%s5339 + $0x190] sm:$0xf]
      %v5441 = vld [vmem:[%s5339 + $0x194] sm:$0xf]
      %v5442 = vld [vmem:[%s5339 + $0x198] sm:$0xf]
      %v5443 = vld [vmem:[%s5339 + $0x19c] sm:$0xf]
      %v5444 = vld [vmem:[%s5339 + $0x1a0] sm:$0xf]
      %v5445 = vld [vmem:[%s5339 + $0x1a4] sm:$0xf]
      %v5446 = vld [vmem:[%s5339 + $0x1a8] sm:$0xf]
      %v5447 = vld [vmem:[%s5339 + $0x1ac] sm:$0xf]
      %v5448 = vld [vmem:[%s5339 + $0x1b0] sm:$0xf]
      %v5449 = vld [vmem:[%s5339 + $0x1b4] sm:$0xf]
      %v5450 = vld [vmem:[%s5339 + $0x1b8] sm:$0xf]
      %v5451 = vld [vmem:[%s5339 + $0x1bc] sm:$0xf]
      %v5564 = vunpack.c.l.b16 %v5340
      %v5565 = vunpack.c.l.b16 %v5341
      %v5566 = vunpack.c.l.b16 %v5342
      %v5567 = vunpack.c.l.b16 %v5343
      %v5568 = vunpack.c.l.b16 %v5344
      %v5569 = vunpack.c.l.b16 %v5345
      %v5570 = vunpack.c.l.b16 %v5346
      %v5571 = vunpack.c.l.b16 %v5347
      %v5572 = vunpack.c.l.b16 %v5348
      %v5573 = vunpack.c.l.b16 %v5349
      %v5574 = vunpack.c.l.b16 %v5350
      %v5575 = vunpack.c.l.b16 %v5351
      %v5576 = vunpack.c.l.b16 %v5352
      %v5577 = vunpack.c.l.b16 %v5353
      %v5578 = vunpack.c.l.b16 %v5354
      %v5579 = vunpack.c.l.b16 %v5355
      %v5580 = vunpack.c.l.b16 %v5356
      %v5581 = vunpack.c.l.b16 %v5357
      %v5582 = vunpack.c.l.b16 %v5358
      %v5583 = vunpack.c.l.b16 %v5359
      %v5584 = vunpack.c.l.b16 %v5360
      %v5585 = vunpack.c.l.b16 %v5361
      %v5586 = vunpack.c.l.b16 %v5362
      %v5587 = vunpack.c.l.b16 %v5363
      %v5588 = vunpack.c.l.b16 %v5364
      %v5589 = vunpack.c.l.b16 %v5365
      %v5590 = vunpack.c.l.b16 %v5366
      %v5591 = vunpack.c.l.b16 %v5367
      %v5592 = vunpack.c.l.b16 %v5368
      %v5593 = vunpack.c.l.b16 %v5369
      %v5594 = vunpack.c.l.b16 %v5370
      %v5595 = vunpack.c.l.b16 %v5371
      %v5596 = vunpack.c.l.b16 %v5372
      %v5597 = vunpack.c.l.b16 %v5373
      %v5598 = vunpack.c.l.b16 %v5374
      %v5599 = vunpack.c.l.b16 %v5375
      %v5600 = vunpack.c.l.b16 %v5376
      %v5601 = vunpack.c.l.b16 %v5377
      %v5602 = vunpack.c.l.b16 %v5378
      %v5603 = vunpack.c.l.b16 %v5379
      %v5604 = vunpack.c.l.b16 %v5380
      %v5605 = vunpack.c.l.b16 %v5381
      %v5606 = vunpack.c.l.b16 %v5382
      %v5607 = vunpack.c.l.b16 %v5383
      %v5608 = vunpack.c.l.b16 %v5384
      %v5609 = vunpack.c.l.b16 %v5385
      %v5610 = vunpack.c.l.b16 %v5386
      %v5611 = vunpack.c.l.b16 %v5387
      %v5612 = vunpack.c.l.b16 %v5388
      %v5613 = vunpack.c.l.b16 %v5389
      %v5614 = vunpack.c.l.b16 %v5390
      %v5615 = vunpack.c.l.b16 %v5391
      %v5616 = vunpack.c.l.b16 %v5392
      %v5617 = vunpack.c.l.b16 %v5393
      %v5618 = vunpack.c.l.b16 %v5394
      %v5619 = vunpack.c.l.b16 %v5395
      %v5620 = vunpack.c.l.b16 %v5396
      %v5621 = vunpack.c.l.b16 %v5397
      %v5622 = vunpack.c.l.b16 %v5398
      %v5623 = vunpack.c.l.b16 %v5399
      %v5624 = vunpack.c.l.b16 %v5400
      %v5625 = vunpack.c.l.b16 %v5401
      %v5626 = vunpack.c.l.b16 %v5402
      %v5627 = vunpack.c.l.b16 %v5403
      %v5628 = vunpack.c.l.b16 %v5404
      %v5629 = vunpack.c.l.b16 %v5405
      %v5630 = vunpack.c.l.b16 %v5406
      %v5631 = vunpack.c.l.b16 %v5407
      %v5632 = vunpack.c.l.b16 %v5408
      %v5633 = vunpack.c.l.b16 %v5409
      %v5634 = vunpack.c.l.b16 %v5410
      %v5635 = vunpack.c.l.b16 %v5411
      %v5636 = vunpack.c.l.b16 %v5412
      %v5637 = vunpack.c.l.b16 %v5413
      %v5638 = vunpack.c.l.b16 %v5414
      %v5639 = vunpack.c.l.b16 %v5415
      %v5640 = vunpack.c.l.b16 %v5416
      %v5641 = vunpack.c.l.b16 %v5417
      %v5642 = vunpack.c.l.b16 %v5418
      %v5643 = vunpack.c.l.b16 %v5419
      %v5644 = vunpack.c.l.b16 %v5420
      %v5645 = vunpack.c.l.b16 %v5421
      %v5646 = vunpack.c.l.b16 %v5422
      %v5647 = vunpack.c.l.b16 %v5423
      %v5648 = vunpack.c.l.b16 %v5424
      %v5649 = vunpack.c.l.b16 %v5425
      %v5650 = vunpack.c.l.b16 %v5426
      %v5651 = vunpack.c.l.b16 %v5427
      %v5652 = vunpack.c.l.b16 %v5428
      %v5653 = vunpack.c.l.b16 %v5429
      %v5654 = vunpack.c.l.b16 %v5430
      %v5655 = vunpack.c.l.b16 %v5431
      %v5656 = vunpack.c.l.b16 %v5432
      %v5657 = vunpack.c.l.b16 %v5433
      %v5658 = vunpack.c.l.b16 %v5434
      %v5659 = vunpack.c.l.b16 %v5435
      %v5660 = vunpack.c.l.b16 %v5436
      %v5661 = vunpack.c.l.b16 %v5437
      %v5662 = vunpack.c.l.b16 %v5438
      %v5663 = vunpack.c.l.b16 %v5439
      %v5664 = vunpack.c.l.b16 %v5440
      %v5665 = vunpack.c.l.b16 %v5441
      %v5666 = vunpack.c.l.b16 %v5442
      %v5667 = vunpack.c.l.b16 %v5443
      %v5668 = vunpack.c.l.b16 %v5444
      %v5669 = vunpack.c.l.b16 %v5445
      %v5670 = vunpack.c.l.b16 %v5446
      %v5671 = vunpack.c.l.b16 %v5447
      %v5672 = vunpack.c.l.b16 %v5448
      %v5673 = vunpack.c.l.b16 %v5449
      %v5674 = vunpack.c.l.b16 %v5450
      %v5675 = vunpack.c.l.b16 %v5451
      %v5676 = vpack.c.b16 %v5565, %v5564
      %v5677 = vpack.c.b16 %v5567, %v5566
      %v5678 = vpack.c.b16 %v5569, %v5568
      %v5679 = vpack.c.b16 %v5571, %v5570
      %v5680 = vpack.c.b16 %v5573, %v5572
      %v5681 = vpack.c.b16 %v5575, %v5574
      %v5682 = vpack.c.b16 %v5577, %v5576
      %v5683 = vpack.c.b16 %v5579, %v5578
      %v5684 = vpack.c.b16 %v5581, %v5580
      %v5685 = vpack.c.b16 %v5583, %v5582
      %v5686 = vpack.c.b16 %v5585, %v5584
      %v5687 = vpack.c.b16 %v5587, %v5586
      %v5688 = vpack.c.b16 %v5589, %v5588
      %v5689 = vpack.c.b16 %v5591, %v5590
      %v5690 = vpack.c.b16 %v5593, %v5592
      %v5691 = vpack.c.b16 %v5595, %v5594
      %v5692 = vpack.c.b16 %v5597, %v5596
      %v5693 = vpack.c.b16 %v5599, %v5598
      %v5694 = vpack.c.b16 %v5601, %v5600
      %v5695 = vpack.c.b16 %v5603, %v5602
      %v5696 = vpack.c.b16 %v5605, %v5604
      %v5697 = vpack.c.b16 %v5607, %v5606
      %v5698 = vpack.c.b16 %v5609, %v5608
      %v5699 = vpack.c.b16 %v5611, %v5610
      %v5700 = vpack.c.b16 %v5613, %v5612
      %v5701 = vpack.c.b16 %v5615, %v5614
      %v5702 = vpack.c.b16 %v5617, %v5616
      %v5703 = vpack.c.b16 %v5619, %v5618
      %v5704 = vpack.c.b16 %v5621, %v5620
      %v5705 = vpack.c.b16 %v5623, %v5622
      %v5706 = vpack.c.b16 %v5625, %v5624
      %v5707 = vpack.c.b16 %v5627, %v5626
      %v5708 = vpack.c.b16 %v5629, %v5628
      %v5709 = vpack.c.b16 %v5631, %v5630
      %v5710 = vpack.c.b16 %v5633, %v5632
      %v5711 = vpack.c.b16 %v5635, %v5634
      %v5712 = vpack.c.b16 %v5637, %v5636
      %v5713 = vpack.c.b16 %v5639, %v5638
      %v5714 = vpack.c.b16 %v5641, %v5640
      %v5715 = vpack.c.b16 %v5643, %v5642
      %v5716 = vpack.c.b16 %v5645, %v5644
      %v5717 = vpack.c.b16 %v5647, %v5646
      %v5718 = vpack.c.b16 %v5649, %v5648
      %v5719 = vpack.c.b16 %v5651, %v5650
      %v5720 = vpack.c.b16 %v5653, %v5652
      %v5721 = vpack.c.b16 %v5655, %v5654
      %v5722 = vpack.c.b16 %v5657, %v5656
      %v5723 = vpack.c.b16 %v5659, %v5658
      %v5724 = vpack.c.b16 %v5661, %v5660
      %v5725 = vpack.c.b16 %v5663, %v5662
      %v5726 = vpack.c.b16 %v5665, %v5664
      %v5727 = vpack.c.b16 %v5667, %v5666
      %v5728 = vpack.c.b16 %v5669, %v5668
      %v5729 = vpack.c.b16 %v5671, %v5670
      %v5730 = vpack.c.b16 %v5673, %v5672
      %v5731 = vpack.c.b16 %v5675, %v5674
      %5788 = vmatprep.subr.bf16.mxu0 0
      %5789 = vmatpush1.bf16.msra.mxu0 %v5676
      %5790 = vmatprep.subr.bf16.mxu0 0
      %5791 = vmatpush1.bf16.msra.mxu0 %v5677
      %5792 = vmatprep.subr.bf16.mxu0 0
      %5793 = vmatpush1.bf16.msra.mxu0 %v5678
      %5794 = vmatprep.subr.bf16.mxu0 0
      %5795 = vmatpush1.bf16.msra.mxu0 %v5679
      %5796 = vmatprep.subr.bf16.mxu0 0
      %5797 = vmatpush1.bf16.msra.mxu0 %v5680
      %5798 = vmatprep.subr.bf16.mxu0 0
      %5799 = vmatpush1.bf16.msra.mxu0 %v5681
      %5800 = vmatprep.subr.bf16.mxu0 0
      %5801 = vmatpush1.bf16.msra.mxu0 %v5682
      %5802 = vmatprep.subr.bf16.mxu0 0
      %5803 = vmatpush1.bf16.msra.mxu0 %v5683
      %5804 = vmatprep.subr.bf16.mxu0 0
      %5805 = vmatpush1.bf16.msra.mxu0 %v5684
      %5806 = vmatprep.subr.bf16.mxu0 0
      %5807 = vmatpush1.bf16.msra.mxu0 %v5685
      %5808 = vmatprep.subr.bf16.mxu0 0
      %5809 = vmatpush1.bf16.msra.mxu0 %v5686
      %5810 = vmatprep.subr.bf16.mxu0 0
      %5811 = vmatpush1.bf16.msra.mxu0 %v5687
      %5812 = vmatprep.subr.bf16.mxu0 0
      %5813 = vmatpush1.bf16.msra.mxu0 %v5688
      %5814 = vmatprep.subr.bf16.mxu0 0
      %5815 = vmatpush1.bf16.msra.mxu0 %v5689
      %5816 = vmatprep.subr.bf16.mxu0 0
      %5817 = vmatpush1.bf16.msra.mxu0 %v5690
      %5818 = vmatprep.subr.bf16.mxu0 0
      %5819 = vmatpush1.bf16.msra.mxu0 %v5691
      %5820 = vmatprep.mubr.bf16.mxu0 %v5305
      %5821 = vmatmul.mubr.bf16.gmra.mrb[0].mxu0 %v5304
      %v5822 = vpop.f32.mrb[0].mxu0
      %v5823 = vadd.f32 0.0, %v5822
      %v5824 = vpop.f32.mrb[0].mxu0
      %v5825 = vpop.f32.mrb[0].mxu0
      %v5826 = vpop.f32.mrb[0].mxu0
      %5827 = vmatprep.mubr.bf16.mxu0 %v5312
      %5828 = vmatmul.mubr.bf16.gmra.mrb[0].mxu0 %v5311
      %v5829 = vpop.f32.mrb[0].mxu0
      %v5830 = vadd.f32 0.0, %v5829
      %v5831 = vpop.f32.mrb[0].mxu0
      %v5832 = vpop.f32.mrb[0].mxu0
      %v5833 = vpop.f32.mrb[0].mxu0
      %5834 = vmatprep.mubr.bf16.mxu0 %v5319
      %5835 = vmatmul.mubr.bf16.gmra.mrb[0].mxu0 %v5318
      %v5836 = vpop.f32.mrb[0].mxu0
      %v5837 = vadd.f32 0.0, %v5836
      %v5838 = vpop.f32.mrb[0].mxu0
      %v5839 = vpop.f32.mrb[0].mxu0
      %v5840 = vpop.f32.mrb[0].mxu0
      %5841 = vmatprep.mubr.bf16.mxu0 %v5326
      %5842 = vmatmul.mubr.bf16.gmra.mrb[0].mxu0 %v5325
      %v5843 = vpop.f32.mrb[0].mxu0
      %v5844 = vadd.f32 0.0, %v5843
      %v5845 = vpop.f32.mrb[0].mxu0
      %v5846 = vpop.f32.mrb[0].mxu0
      %v5847 = vpop.f32.mrb[0].mxu0
      %5848 = vmatprep.mubr.bf16.mxu0 %v5333
      %5849 = vmatmul.mubr.bf16.gmra.mrb[0].mxu0 %v5332
      %v5850 = vpop.f32.mrb[0].mxu0
      %v5851 = vpop.f32.mrb[0].mxu0
      %v5852 = vpop.f32.mrb[0].mxu0
      %v5853 = vpop.f32.mrb[0].mxu0
      %5854 = vdwg.mxu0
      %5855 = vmatprep.subr.bf16.mxu0 0
      %5856 = vmatpush1.bf16.msra.mxu0 %v5692
      %5857 = vmatprep.subr.bf16.mxu0 0
      %5858 = vmatpush1.bf16.msra.mxu0 %v5693
      %5859 = vmatprep.subr.bf16.mxu0 0
      %5860 = vmatpush1.bf16.msra.mxu0 %v5694
      %5861 = vmatprep.subr.bf16.mxu0 0
      %5862 = vmatpush1.bf16.msra.mxu0 %v5695
      %5863 = vmatprep.subr.bf16.mxu0 0
      %5864 = vmatpush1.bf16.msra.mxu0 %v5696
      %5865 = vmatprep.subr.bf16.mxu0 0
      %5866 = vmatpush1.bf16.msra.mxu0 %v5697
      %5867 = vmatprep.subr.bf16.mxu0 0
      %5868 = vmatpush1.bf16.msra.mxu0 %v5698
      %5869 = vmatprep.subr.bf16.mxu0 0
      %5870 = vmatpush1.bf16.msra.mxu0 %v5699
      %5871 = vmatprep.subr.bf16.mxu0 0
      %5872 = vmatpush1.bf16.msra.mxu0 %v5700
      %5873 = vmatprep.subr.bf16.mxu0 0
      %5874 = vmatpush1.bf16.msra.mxu0 %v5701
      %5875 = vmatprep.subr.bf16.mxu0 0
      %5876 = vmatpush1.bf16.msra.mxu0 %v5702
      %5877 = vmatprep.subr.bf16.mxu0 0
      %5878 = vmatpush1.bf16.msra.mxu0 %v5703
      %5879 = vmatprep.subr.bf16.mxu0 0
      %5880 = vmatpush1.bf16.msra.mxu0 %v5704
      %5881 = vmatprep.subr.bf16.mxu0 0
      %5882 = vmatpush1.bf16.msra.mxu0 %v5705
      %5883 = vmatprep.subr.bf16.mxu0 0
      %5884 = vmatpush1.bf16.msra.mxu0 %v5706
      %5885 = vmatprep.subr.bf16.mxu0 0
      %5886 = vmatpush1.bf16.msra.mxu0 %v5707
      %5887 = vmatprep.mubr.bf16.mxu0 %v5307
      %5888 = vmatmul.mubr.bf16.gmra.mrb[0].mxu0 %v5306
      %v5889 = vpop.f32.mrb[0].mxu0
      %v5890 = vadd.f32 %v5823, %v5889
      %v5891 = vpop.f32.mrb[0].mxu0
      %v5892 = vpop.f32.mrb[0].mxu0
      %v5893 = vpop.f32.mrb[0].mxu0
      %5894 = vmatprep.mubr.bf16.mxu0 %v5314
      %5895 = vmatmul.mubr.bf16.gmra.mrb[0].mxu0 %v5313
      %v5896 = vpop.f32.mrb[0].mxu0
      %v5897 = vadd.f32 %v5830, %v5896
      %v5898 = vpop.f32.mrb[0].mxu0
      %v5899 = vpop.f32.mrb[0].mxu0
      %v5900 = vpop.f32.mrb[0].mxu0
      %5901 = vmatprep.mubr.bf16.mxu0 %v5321
      %5902 = vmatmul.mubr.bf16.gmra.mrb[0].mxu0 %v5320
      %v5903 = vpop.f32.mrb[0].mxu0
      %v5904 = vadd.f32 %v5837, %v5903
      %v5905 = vpop.f32.mrb[0].mxu0
      %v5906 = vpop.f32.mrb[0].mxu0
      %v5907 = vpop.f32.mrb[0].mxu0
      %5908 = vmatprep.mubr.bf16.mxu0 %v5328
      %5909 = vmatmul.mubr.bf16.gmra.mrb[0].mxu0 %v5327
      %v5910 = vpop.f32.mrb[0].mxu0
      %v5911 = vadd.f32 %v5844, %v5910
      %v5912 = vpop.f32.mrb[0].mxu0
      %v5913 = vpop.f32.mrb[0].mxu0
      %v5914 = vpop.f32.mrb[0].mxu0
      %5915 = vmatprep.mubr.bf16.mxu0 %v5335
      %5916 = vmatmul.mubr.bf16.gmra.mrb[0].mxu0 %v5334
      %v5917 = vpop.f32.mrb[0].mxu0
      %v5918 = vpop.f32.mrb[0].mxu0
      %v5919 = vpop.f32.mrb[0].mxu0
      %v5920 = vpop.f32.mrb[0].mxu0
      %5921 = vdwg.mxu0
      %5922 = vmatprep.subr.bf16.mxu0 0
      %5923 = vmatpush1.bf16.msra.mxu0 %v5708
      %5924 = vmatprep.subr.bf16.mxu0 0
      %5925 = vmatpush1.bf16.msra.mxu0 %v5709
      %5926 = vmatprep.subr.bf16.mxu0 0
      %5927 = vmatpush1.bf16.msra.mxu0 %v5710
      %5928 = vmatprep.subr.bf16.mxu0 0
      %5929 = vmatpush1.bf16.msra.mxu0 %v5711
      %5930 = vmatprep.subr.bf16.mxu0 0
      %5931 = vmatpush1.bf16.msra.mxu0 %v5712
      %5932 = vmatprep.subr.bf16.mxu0 0
      %5933 = vmatpush1.bf16.msra.mxu0 %v5713
      %5934 = vmatprep.subr.bf16.mxu0 0
      %5935 = vmatpush1.bf16.msra.mxu0 %v5714
      %5936 = vmatprep.subr.bf16.mxu0 0
      %5937 = vmatpush1.bf16.msra.mxu0 %v5715
      %5938 = vmatprep.subr.bf16.mxu0 0
      %5939 = vmatpush1.bf16.msra.mxu0 %v5716
      %5940 = vmatprep.subr.bf16.mxu0 0
      %5941 = vmatpush1.bf16.msra.mxu0 %v5717
      %5942 = vmatprep.subr.bf16.mxu0 0
      %5943 = vmatpush1.bf16.msra.mxu0 %v5718
      %5944 = vmatprep.subr.bf16.mxu0 0
      %5945 = vmatpush1.bf16.msra.mxu0 %v5719
      %5946 = vmatprep.subr.bf16.mxu0 0
      %5947 = vmatpush1.bf16.msra.mxu0 %v5720
      %5948 = vmatprep.subr.bf16.mxu0 0
      %5949 = vmatpush1.bf16.msra.mxu0 %v5721
      %5950 = vmatprep.subr.bf16.mxu0 0
      %5951 = vmatpush1.bf16.msra.mxu0 %v5722
      %5952 = vmatprep.subr.bf16.mxu0 0
      %5953 = vmatpush1.bf16.msra.mxu0 %v5723
      %5954 = vmatprep.mubr.bf16.mxu0 %v5309
      %5955 = vmatmul.mubr.bf16.gmra.mrb[0].mxu0 %v5308
      %v5956 = vpop.f32.mrb[0].mxu0
      %v5957 = vadd.f32 %v5890, %v5956
      %v5958 = vpop.f32.mrb[0].mxu0
      %v5959 = vpop.f32.mrb[0].mxu0
      %v5960 = vpop.f32.mrb[0].mxu0
      %5961 = vmatprep.mubr.bf16.mxu0 %v5316
      %5962 = vmatmul.mubr.bf16.gmra.mrb[0].mxu0 %v5315
      %v5963 = vpop.f32.mrb[0].mxu0
      %v5964 = vadd.f32 %v5897, %v5963
      %v5965 = vpop.f32.mrb[0].mxu0
      %v5966 = vpop.f32.mrb[0].mxu0
      %v5967 = vpop.f32.mrb[0].mxu0
      %5968 = vmatprep.mubr.bf16.mxu0 %v5323
      %5969 = vmatmul.mubr.bf16.gmra.mrb[0].mxu0 %v5322
      %v5970 = vpop.f32.mrb[0].mxu0
      %v5971 = vadd.f32 %v5904, %v5970
      %v5972 = vpop.f32.mrb[0].mxu0
      %v5973 = vpop.f32.mrb[0].mxu0
      %v5974 = vpop.f32.mrb[0].mxu0
      %5975 = vmatprep.mubr.bf16.mxu0 %v5330
      %5976 = vmatmul.mubr.bf16.gmra.mrb[0].mxu0 %v5329
      %v5977 = vpop.f32.mrb[0].mxu0
      %v5978 = vadd.f32 %v5911, %v5977
      %v5979 = vpop.f32.mrb[0].mxu0
      %v5980 = vpop.f32.mrb[0].mxu0
      %v5981 = vpop.f32.mrb[0].mxu0
      %5982 = vmatprep.mubr.bf16.mxu0 %v5337
      %5983 = vmatmul.mubr.bf16.gmra.mrb[0].mxu0 %v5336
      %v5984 = vpop.f32.mrb[0].mxu0
      %v5985 = vpop.f32.mrb[0].mxu0
      %v5986 = vpop.f32.mrb[0].mxu0
      %v5987 = vpop.f32.mrb[0].mxu0
      %5988 = vdwg.mxu0
      %5989 = vmatprep.subr.bf16.mxu0 0
      %5990 = vmatpush1.bf16.msra.mxu0 %v5724
      %5991 = vmatprep.subr.bf16.mxu0 0
      %5992 = vmatpush1.bf16.msra.mxu0 %v5725
      %5993 = vmatprep.subr.bf16.mxu0 0
      %5994 = vmatpush1.bf16.msra.mxu0 %v5726
      %5995 = vmatprep.subr.bf16.mxu0 0
      %5996 = vmatpush1.bf16.msra.mxu0 %v5727
      %5997 = vmatprep.subr.bf16.mxu0 0
      %5998 = vmatpush1.bf16.msra.mxu0 %v5728
      %5999 = vmatprep.subr.bf16.mxu0 0
      %6000 = vmatpush1.bf16.msra.mxu0 %v5729
      %6001 = vmatprep.subr.bf16.mxu0 0
      %6002 = vmatpush1.bf16.msra.mxu0 %v5730
      %6003 = vmatprep.subr.bf16.mxu0 0
      %6004 = vmatpush1.bf16.msra.mxu0 %v5731
      %6005 = vmatprep.subr.bf16.mxu0 0
      %6006 = vmatpush1.bf16.msra.mxu0 0
      %6007 = vmatprep.subr.bf16.mxu0 0
      %6008 = vmatpush1.bf16.msra.mxu0 0
      %6009 = vmatprep.subr.bf16.mxu0 0
      %6010 = vmatpush1.bf16.msra.mxu0 0
      %6011 = vmatprep.subr.bf16.mxu0 0
      %6012 = vmatpush1.bf16.msra.mxu0 0
      %6013 = vmatprep.subr.bf16.mxu0 0
      %6014 = vmatpush1.bf16.msra.mxu0 0
      %6015 = vmatprep.subr.bf16.mxu0 0
      %6016 = vmatpush1.bf16.msra.mxu0 0
      %6017 = vmatprep.subr.bf16.mxu0 0
      %6018 = vmatpush1.bf16.msra.mxu0 0
      %6019 = vmatprep.subr.bf16.mxu0 0
      %6020 = vmatpush1.bf16.msra.mxu0 0
      %6021 = vmatprep.mubr.bf16.mxu0 0
      %6022 = vmatmul.mubr.bf16.gmra.mrb[0].mxu0 %v5310
      %v6023 = vpop.f32.mrb[0].mxu0
      %v6024 = vadd.f32 %v5957, %v6023
      %v6025 = vpop.f32.mrb[0].mxu0
      %v6026 = vpop.f32.mrb[0].mxu0
      %v6027 = vpop.f32.mrb[0].mxu0
      %6028 = vmatprep.mubr.bf16.mxu0 0
      %6029 = vmatmul.mubr.bf16.gmra.mrb[0].mxu0 %v5317
      %v6030 = vpop.f32.mrb[0].mxu0
      %v6031 = vadd.f32 %v5964, %v6030
      %v6032 = vpop.f32.mrb[0].mxu0
      %v6033 = vpop.f32.mrb[0].mxu0
      %v6034 = vpop.f32.mrb[0].mxu0
      %6035 = vmatprep.mubr.bf16.mxu0 0
      %6036 = vmatmul.mubr.bf16.gmra.mrb[0].mxu0 %v5324
      %v6037 = vpop.f32.mrb[0].mxu0
      %v6038 = vadd.f32 %v5971, %v6037
      %v6039 = vpop.f32.mrb[0].mxu0
      %v6040 = vpop.f32.mrb[0].mxu0
      %v6041 = vpop.f32.mrb[0].mxu0
      %6042 = vmatprep.mubr.bf16.mxu0 0
      %6043 = vmatmul.mubr.bf16.gmra.mrb[0].mxu0 %v5331
      %v6044 = vpop.f32.mrb[0].mxu0
      %v6045 = vadd.f32 %v5978, %v6044
      %v6046 = vpop.f32.mrb[0].mxu0
      %v6047 = vpop.f32.mrb[0].mxu0
      %v6048 = vpop.f32.mrb[0].mxu0
      %6049 = vmatprep.mubr.bf16.mxu0 0
      %6050 = vmatmul.mubr.bf16.gmra.mrb[0].mxu0 %v5338
      %v6051 = vpop.f32.mrb[0].mxu0
      %v6052 = vpop.f32.mrb[0].mxu0
      %v6053 = vpop.f32.mrb[0].mxu0
      %v6054 = vpop.f32.mrb[0].mxu0
      %6055 = vdwg.mxu0
      %v6056 = vadd.f32 %v5300, %v6024
      %v6057 = vadd.f32 %v5301, %v6031
      %v6058 = vadd.f32 %v5302, %v6038
      %v6059 = vadd.f32 %v5303, %v6045
      %v6060 = vld [vmem:[#allocation3 + $0x118] sm:$0xff]
      %v6061 = vld [vmem:[#allocation3 + $0x120] sm:$0xff]
      %v6062 = vld [vmem:[#allocation3 + $0x128] sm:$0xff]
      %v6063 = vld [vmem:[#allocation3 + $0x130] sm:$0xff]
      %v6064 = vld [vmem:[#allocation3 + $0x138] sm:$0xff]
      %v6065 = vld [vmem:[#allocation3 + $0x140] sm:$0xff]
      %v6066 = vld [vmem:[#allocation3 + $0x148] sm:$0xff]
      %v6067 = vld [vmem:[#allocation3 + $0x150] sm:$0xff]
      %v6068 = vld [vmem:[#allocation3 + $0x158] sm:$0xff]
      %v6069 = vld [vmem:[#allocation3 + $0x160] sm:$0xff]
      %v6070 = vld [vmem:[#allocation3 + $0x168] sm:$0xff]
      %v6071 = vld [vmem:[#allocation3 + $0x170] sm:$0xff]
      %v6072 = vld [vmem:[#allocation3 + $0x178] sm:$0xff]
      %v6073 = vld [vmem:[#allocation3 + $0x180] sm:$0xff]
      %v6074 = vld [vmem:[#allocation3 + $0x188] sm:$0xff]
      %v6075 = vld [vmem:[#allocation3 + $0x190] sm:$0xff]
      %v6076 = vld [vmem:[#allocation3 + $0x198] sm:$0xff]
      %v6077 = vld [vmem:[#allocation3 + $0x1a0] sm:$0xff]
      %v6078 = vld [vmem:[#allocation3 + $0x1a8] sm:$0xff]
      %v6079 = vld [vmem:[#allocation3 + $0x1b0] sm:$0xff]
      %v6080 = vld [vmem:[#allocation3 + $0x1b8] sm:$0xff]
      %v6081 = vld [vmem:[#allocation3 + $0x1c0] sm:$0xff]
      %v6082 = vld [vmem:[#allocation3 + $0x1c8] sm:$0xff]
      %v6083 = vld [vmem:[#allocation3 + $0x1d0] sm:$0xff]
      %v6084 = vld [vmem:[#allocation3 + $0x1d8] sm:$0xff]
      %v6085 = vld [vmem:[#allocation3 + $0x1e0] sm:$0xff]
      %v6086 = vld [vmem:[#allocation3 + $0x1e8] sm:$0xff]
      %v6087 = vld [vmem:[#allocation3 + $0x1f0] sm:$0xff]
      %v6088 = vld [vmem:[#allocation3 + $0x1f8] sm:$0xff]
      %v6089 = vld [vmem:[#allocation3 + $0x200] sm:$0xff]
      %v6090 = vld [vmem:[#allocation3 + $0x208] sm:$0xff]
      %v6091 = vld [vmem:[#allocation3 + $0x210] sm:$0xff]
      %v6092 = vld [vmem:[#allocation3 + $0x218] sm:$0xff]
      %v6093 = vld [vmem:[#allocation3 + $0x220] sm:$0xff]
      %v6094 = vld [vmem:[#allocation3 + $0x228] sm:$0xff]
      %s6095 = scalar_lea.vmem %s3, 2240
      %v6096 = vld [vmem:[%s6095] sm:$0xf]
      %v6097 = vld [vmem:[%s6095 + $0x4] sm:$0xf]
      %v6098 = vld [vmem:[%s6095 + $0x8] sm:$0xf]
      %v6099 = vld [vmem:[%s6095 + $0xc] sm:$0xf]
      %v6100 = vld [vmem:[%s6095 + $0x10] sm:$0xf]
      %v6101 = vld [vmem:[%s6095 + $0x14] sm:$0xf]
      %v6102 = vld [vmem:[%s6095 + $0x18] sm:$0xf]
      %v6103 = vld [vmem:[%s6095 + $0x1c] sm:$0xf]
      %v6104 = vld [vmem:[%s6095 + $0x20] sm:$0xf]
      %v6105 = vld [vmem:[%s6095 + $0x24] sm:$0xf]
      %v6106 = vld [vmem:[%s6095 + $0x28] sm:$0xf]
      %v6107 = vld [vmem:[%s6095 + $0x2c] sm:$0xf]
      %v6108 = vld [vmem:[%s6095 + $0x30] sm:$0xf]
      %v6109 = vld [vmem:[%s6095 + $0x34] sm:$0xf]
      %v6110 = vld [vmem:[%s6095 + $0x38] sm:$0xf]
      %v6111 = vld [vmem:[%s6095 + $0x3c] sm:$0xf]
      %v6112 = vld [vmem:[%s6095 + $0x40] sm:$0xf]
      %v6113 = vld [vmem:[%s6095 + $0x44] sm:$0xf]
      %v6114 = vld [vmem:[%s6095 + $0x48] sm:$0xf]
      %v6115 = vld [vmem:[%s6095 + $0x4c] sm:$0xf]
      %v6116 = vld [vmem:[%s6095 + $0x50] sm:$0xf]
      %v6117 = vld [vmem:[%s6095 + $0x54] sm:$0xf]
      %v6118 = vld [vmem:[%s6095 + $0x58] sm:$0xf]
      %v6119 = vld [vmem:[%s6095 + $0x5c] sm:$0xf]
      %v6120 = vld [vmem:[%s6095 + $0x60] sm:$0xf]
      %v6121 = vld [vmem:[%s6095 + $0x64] sm:$0xf]
      %v6122 = vld [vmem:[%s6095 + $0x68] sm:$0xf]
      %v6123 = vld [vmem:[%s6095 + $0x6c] sm:$0xf]
      %v6124 = vld [vmem:[%s6095 + $0x70] sm:$0xf]
      %v6125 = vld [vmem:[%s6095 + $0x74] sm:$0xf]
      %v6126 = vld [vmem:[%s6095 + $0x78] sm:$0xf]
      %v6127 = vld [vmem:[%s6095 + $0x7c] sm:$0xf]
      %v6128 = vld [vmem:[%s6095 + $0x80] sm:$0xf]
      %v6129 = vld [vmem:[%s6095 + $0x84] sm:$0xf]
      %v6130 = vld [vmem:[%s6095 + $0x88] sm:$0xf]
      %v6131 = vld [vmem:[%s6095 + $0x8c] sm:$0xf]
      %v6132 = vld [vmem:[%s6095 + $0x90] sm:$0xf]
      %v6133 = vld [vmem:[%s6095 + $0x94] sm:$0xf]
      %v6134 = vld [vmem:[%s6095 + $0x98] sm:$0xf]
      %v6135 = vld [vmem:[%s6095 + $0x9c] sm:$0xf]
      %v6136 = vld [vmem:[%s6095 + $0xa0] sm:$0xf]
      %v6137 = vld [vmem:[%s6095 + $0xa4] sm:$0xf]
      %v6138 = vld [vmem:[%s6095 + $0xa8] sm:$0xf]
      %v6139 = vld [vmem:[%s6095 + $0xac] sm:$0xf]
      %v6140 = vld [vmem:[%s6095 + $0xb0] sm:$0xf]
      %v6141 = vld [vmem:[%s6095 + $0xb4] sm:$0xf]
      %v6142 = vld [vmem:[%s6095 + $0xb8] sm:$0xf]
      %v6143 = vld [vmem:[%s6095 + $0xbc] sm:$0xf]
      %v6144 = vld [vmem:[%s6095 + $0xc0] sm:$0xf]
      %v6145 = vld [vmem:[%s6095 + $0xc4] sm:$0xf]
      %v6146 = vld [vmem:[%s6095 + $0xc8] sm:$0xf]
      %v6147 = vld [vmem:[%s6095 + $0xcc] sm:$0xf]
      %v6148 = vld [vmem:[%s6095 + $0xd0] sm:$0xf]
      %v6149 = vld [vmem:[%s6095 + $0xd4] sm:$0xf]
      %v6150 = vld [vmem:[%s6095 + $0xd8] sm:$0xf]
      %v6151 = vld [vmem:[%s6095 + $0xdc] sm:$0xf]
      %v6152 = vld [vmem:[%s6095 + $0xe0] sm:$0xf]
      %v6153 = vld [vmem:[%s6095 + $0xe4] sm:$0xf]
      %v6154 = vld [vmem:[%s6095 + $0xe8] sm:$0xf]
      %v6155 = vld [vmem:[%s6095 + $0xec] sm:$0xf]
      %v6156 = vld [vmem:[%s6095 + $0xf0] sm:$0xf]
      %v6157 = vld [vmem:[%s6095 + $0xf4] sm:$0xf]
      %v6158 = vld [vmem:[%s6095 + $0xf8] sm:$0xf]
      %v6159 = vld [vmem:[%s6095 + $0xfc] sm:$0xf]
      %v6160 = vld [vmem:[%s6095 + $0x100] sm:$0xf]
      %v6161 = vld [vmem:[%s6095 + $0x104] sm:$0xf]
      %v6162 = vld [vmem:[%s6095 + $0x108] sm:$0xf]
      %v6163 = vld [vmem:[%s6095 + $0x10c] sm:$0xf]
      %v6164 = vld [vmem:[%s6095 + $0x110] sm:$0xf]
      %v6165 = vld [vmem:[%s6095 + $0x114] sm:$0xf]
      %v6166 = vld [vmem:[%s6095 + $0x118] sm:$0xf]
      %v6167 = vld [vmem:[%s6095 + $0x11c] sm:$0xf]
      %v6168 = vld [vmem:[%s6095 + $0x120] sm:$0xf]
      %v6169 = vld [vmem:[%s6095 + $0x124] sm:$0xf]
      %v6170 = vld [vmem:[%s6095 + $0x128] sm:$0xf]
      %v6171 = vld [vmem:[%s6095 + $0x12c] sm:$0xf]
      %v6172 = vld [vmem:[%s6095 + $0x130] sm:$0xf]
      %v6173 = vld [vmem:[%s6095 + $0x134] sm:$0xf]
      %v6174 = vld [vmem:[%s6095 + $0x138] sm:$0xf]
      %v6175 = vld [vmem:[%s6095 + $0x13c] sm:$0xf]
      %v6176 = vld [vmem:[%s6095 + $0x140] sm:$0xf]
      %v6177 = vld [vmem:[%s6095 + $0x144] sm:$0xf]
      %v6178 = vld [vmem:[%s6095 + $0x148] sm:$0xf]
      %v6179 = vld [vmem:[%s6095 + $0x14c] sm:$0xf]
      %v6180 = vld [vmem:[%s6095 + $0x150] sm:$0xf]
      %v6181 = vld [vmem:[%s6095 + $0x154] sm:$0xf]
      %v6182 = vld [vmem:[%s6095 + $0x158] sm:$0xf]
      %v6183 = vld [vmem:[%s6095 + $0x15c] sm:$0xf]
      %v6184 = vld [vmem:[%s6095 + $0x160] sm:$0xf]
      %v6185 = vld [vmem:[%s6095 + $0x164] sm:$0xf]
      %v6186 = vld [vmem:[%s6095 + $0x168] sm:$0xf]
      %v6187 = vld [vmem:[%s6095 + $0x16c] sm:$0xf]
      %v6188 = vld [vmem:[%s6095 + $0x170] sm:$0xf]
      %v6189 = vld [vmem:[%s6095 + $0x174] sm:$0xf]
      %v6190 = vld [vmem:[%s6095 + $0x178] sm:$0xf]
      %v6191 = vld [vmem:[%s6095 + $0x17c] sm:$0xf]
      %v6192 = vld [vmem:[%s6095 + $0x180] sm:$0xf]
      %v6193 = vld [vmem:[%s6095 + $0x184] sm:$0xf]
      %v6194 = vld [vmem:[%s6095 + $0x188] sm:$0xf]
      %v6195 = vld [vmem:[%s6095 + $0x18c] sm:$0xf]
      %v6196 = vld [vmem:[%s6095 + $0x190] sm:$0xf]
      %v6197 = vld [vmem:[%s6095 + $0x194] sm:$0xf]
      %v6198 = vld [vmem:[%s6095 + $0x198] sm:$0xf]
      %v6199 = vld [vmem:[%s6095 + $0x19c] sm:$0xf]
      %v6200 = vld [vmem:[%s6095 + $0x1a0] sm:$0xf]
      %v6201 = vld [vmem:[%s6095 + $0x1a4] sm:$0xf]
      %v6202 = vld [vmem:[%s6095 + $0x1a8] sm:$0xf]
      %v6203 = vld [vmem:[%s6095 + $0x1ac] sm:$0xf]
      %v6204 = vld [vmem:[%s6095 + $0x1b0] sm:$0xf]
      %v6205 = vld [vmem:[%s6095 + $0x1b4] sm:$0xf]
      %v6206 = vld [vmem:[%s6095 + $0x1b8] sm:$0xf]
      %v6207 = vld [vmem:[%s6095 + $0x1bc] sm:$0xf]
      %v6320 = vunpack.c.l.b16 %v6096
      %v6321 = vunpack.c.l.b16 %v6097
      %v6322 = vunpack.c.l.b16 %v6098
      %v6323 = vunpack.c.l.b16 %v6099
      %v6324 = vunpack.c.l.b16 %v6100
      %v6325 = vunpack.c.l.b16 %v6101
      %v6326 = vunpack.c.l.b16 %v6102
      %v6327 = vunpack.c.l.b16 %v6103
      %v6328 = vunpack.c.l.b16 %v6104
      %v6329 = vunpack.c.l.b16 %v6105
      %v6330 = vunpack.c.l.b16 %v6106
      %v6331 = vunpack.c.l.b16 %v6107
      %v6332 = vunpack.c.l.b16 %v6108
      %v6333 = vunpack.c.l.b16 %v6109
      %v6334 = vunpack.c.l.b16 %v6110
      %v6335 = vunpack.c.l.b16 %v6111
      %v6336 = vunpack.c.l.b16 %v6112
      %v6337 = vunpack.c.l.b16 %v6113
      %v6338 = vunpack.c.l.b16 %v6114
      %v6339 = vunpack.c.l.b16 %v6115
      %v6340 = vunpack.c.l.b16 %v6116
      %v6341 = vunpack.c.l.b16 %v6117
      %v6342 = vunpack.c.l.b16 %v6118
      %v6343 = vunpack.c.l.b16 %v6119
      %v6344 = vunpack.c.l.b16 %v6120
      %v6345 = vunpack.c.l.b16 %v6121
      %v6346 = vunpack.c.l.b16 %v6122
      %v6347 = vunpack.c.l.b16 %v6123
      %v6348 = vunpack.c.l.b16 %v6124
      %v6349 = vunpack.c.l.b16 %v6125
      %v6350 = vunpack.c.l.b16 %v6126
      %v6351 = vunpack.c.l.b16 %v6127
      %v6352 = vunpack.c.l.b16 %v6128
      %v6353 = vunpack.c.l.b16 %v6129
      %v6354 = vunpack.c.l.b16 %v6130
      %v6355 = vunpack.c.l.b16 %v6131
      %v6356 = vunpack.c.l.b16 %v6132
      %v6357 = vunpack.c.l.b16 %v6133
      %v6358 = vunpack.c.l.b16 %v6134
      %v6359 = vunpack.c.l.b16 %v6135
      %v6360 = vunpack.c.l.b16 %v6136
      %v6361 = vunpack.c.l.b16 %v6137
      %v6362 = vunpack.c.l.b16 %v6138
      %v6363 = vunpack.c.l.b16 %v6139
      %v6364 = vunpack.c.l.b16 %v6140
      %v6365 = vunpack.c.l.b16 %v6141
      %v6366 = vunpack.c.l.b16 %v6142
      %v6367 = vunpack.c.l.b16 %v6143
      %v6368 = vunpack.c.l.b16 %v6144
      %v6369 = vunpack.c.l.b16 %v6145
      %v6370 = vunpack.c.l.b16 %v6146
      %v6371 = vunpack.c.l.b16 %v6147
      %v6372 = vunpack.c.l.b16 %v6148
      %v6373 = vunpack.c.l.b16 %v6149
      %v6374 = vunpack.c.l.b16 %v6150
      %v6375 = vunpack.c.l.b16 %v6151
      %v6376 = vunpack.c.l.b16 %v6152
      %v6377 = vunpack.c.l.b16 %v6153
      %v6378 = vunpack.c.l.b16 %v6154
      %v6379 = vunpack.c.l.b16 %v6155
      %v6380 = vunpack.c.l.b16 %v6156
      %v6381 = vunpack.c.l.b16 %v6157
      %v6382 = vunpack.c.l.b16 %v6158
      %v6383 = vunpack.c.l.b16 %v6159
      %v6384 = vunpack.c.l.b16 %v6160
      %v6385 = vunpack.c.l.b16 %v6161
      %v6386 = vunpack.c.l.b16 %v6162
      %v6387 = vunpack.c.l.b16 %v6163
      %v6388 = vunpack.c.l.b16 %v6164
      %v6389 = vunpack.c.l.b16 %v6165
      %v6390 = vunpack.c.l.b16 %v6166
      %v6391 = vunpack.c.l.b16 %v6167
      %v6392 = vunpack.c.l.b16 %v6168
      %v6393 = vunpack.c.l.b16 %v6169
      %v6394 = vunpack.c.l.b16 %v6170
      %v6395 = vunpack.c.l.b16 %v6171
      %v6396 = vunpack.c.l.b16 %v6172
      %v6397 = vunpack.c.l.b16 %v6173
      %v6398 = vunpack.c.l.b16 %v6174
      %v6399 = vunpack.c.l.b16 %v6175
      %v6400 = vunpack.c.l.b16 %v6176
      %v6401 = vunpack.c.l.b16 %v6177
      %v6402 = vunpack.c.l.b16 %v6178
      %v6403 = vunpack.c.l.b16 %v6179
      %v6404 = vunpack.c.l.b16 %v6180
      %v6405 = vunpack.c.l.b16 %v6181
      %v6406 = vunpack.c.l.b16 %v6182
      %v6407 = vunpack.c.l.b16 %v6183
      %v6408 = vunpack.c.l.b16 %v6184
      %v6409 = vunpack.c.l.b16 %v6185
      %v6410 = vunpack.c.l.b16 %v6186
      %v6411 = vunpack.c.l.b16 %v6187
      %v6412 = vunpack.c.l.b16 %v6188
      %v6413 = vunpack.c.l.b16 %v6189
      %v6414 = vunpack.c.l.b16 %v6190
      %v6415 = vunpack.c.l.b16 %v6191
      %v6416 = vunpack.c.l.b16 %v6192
      %v6417 = vunpack.c.l.b16 %v6193
      %v6418 = vunpack.c.l.b16 %v6194
      %v6419 = vunpack.c.l.b16 %v6195
      %v6420 = vunpack.c.l.b16 %v6196
      %v6421 = vunpack.c.l.b16 %v6197
      %v6422 = vunpack.c.l.b16 %v6198
      %v6423 = vunpack.c.l.b16 %v6199
      %v6424 = vunpack.c.l.b16 %v6200
      %v6425 = vunpack.c.l.b16 %v6201
      %v6426 = vunpack.c.l.b16 %v6202
      %v6427 = vunpack.c.l.b16 %v6203
      %v6428 = vunpack.c.l.b16 %v6204
      %v6429 = vunpack.c.l.b16 %v6205
      %v6430 = vunpack.c.l.b16 %v6206
      %v6431 = vunpack.c.l.b16 %v6207
      %v6432 = vpack.c.b16 %v6321, %v6320
      %v6433 = vpack.c.b16 %v6323, %v6322
      %v6434 = vpack.c.b16 %v6325, %v6324
      %v6435 = vpack.c.b16 %v6327, %v6326
      %v6436 = vpack.c.b16 %v6329, %v6328
      %v6437 = vpack.c.b16 %v6331, %v6330
      %v6438 = vpack.c.b16 %v6333, %v6332
      %v6439 = vpack.c.b16 %v6335, %v6334
      %v6440 = vpack.c.b16 %v6337, %v6336
      %v6441 = vpack.c.b16 %v6339, %v6338
      %v6442 = vpack.c.b16 %v6341, %v6340
      %v6443 = vpack.c.b16 %v6343, %v6342
      %v6444 = vpack.c.b16 %v6345, %v6344
      %v6445 = vpack.c.b16 %v6347, %v6346
      %v6446 = vpack.c.b16 %v6349, %v6348
      %v6447 = vpack.c.b16 %v6351, %v6350
      %v6448 = vpack.c.b16 %v6353, %v6352
      %v6449 = vpack.c.b16 %v6355, %v6354
      %v6450 = vpack.c.b16 %v6357, %v6356
      %v6451 = vpack.c.b16 %v6359, %v6358
      %v6452 = vpack.c.b16 %v6361, %v6360
      %v6453 = vpack.c.b16 %v6363, %v6362
      %v6454 = vpack.c.b16 %v6365, %v6364
      %v6455 = vpack.c.b16 %v6367, %v6366
      %v6456 = vpack.c.b16 %v6369, %v6368
      %v6457 = vpack.c.b16 %v6371, %v6370
      %v6458 = vpack.c.b16 %v6373, %v6372
      %v6459 = vpack.c.b16 %v6375, %v6374
      %v6460 = vpack.c.b16 %v6377, %v6376
      %v6461 = vpack.c.b16 %v6379, %v6378
      %v6462 = vpack.c.b16 %v6381, %v6380
      %v6463 = vpack.c.b16 %v6383, %v6382
      %v6464 = vpack.c.b16 %v6385, %v6384
      %v6465 = vpack.c.b16 %v6387, %v6386
      %v6466 = vpack.c.b16 %v6389, %v6388
      %v6467 = vpack.c.b16 %v6391, %v6390
      %v6468 = vpack.c.b16 %v6393, %v6392
      %v6469 = vpack.c.b16 %v6395, %v6394
      %v6470 = vpack.c.b16 %v6397, %v6396
      %v6471 = vpack.c.b16 %v6399, %v6398
      %v6472 = vpack.c.b16 %v6401, %v6400
      %v6473 = vpack.c.b16 %v6403, %v6402
      %v6474 = vpack.c.b16 %v6405, %v6404
      %v6475 = vpack.c.b16 %v6407, %v6406
      %v6476 = vpack.c.b16 %v6409, %v6408
      %v6477 = vpack.c.b16 %v6411, %v6410
      %v6478 = vpack.c.b16 %v6413, %v6412
      %v6479 = vpack.c.b16 %v6415, %v6414
      %v6480 = vpack.c.b16 %v6417, %v6416
      %v6481 = vpack.c.b16 %v6419, %v6418
      %v6482 = vpack.c.b16 %v6421, %v6420
      %v6483 = vpack.c.b16 %v6423, %v6422
      %v6484 = vpack.c.b16 %v6425, %v6424
      %v6485 = vpack.c.b16 %v6427, %v6426
      %v6486 = vpack.c.b16 %v6429, %v6428
      %v6487 = vpack.c.b16 %v6431, %v6430
      %6544 = vmatprep.subr.bf16.mxu0 0
      %6545 = vmatpush1.bf16.msra.mxu0 %v6432
      %6546 = vmatprep.subr.bf16.mxu0 0
      %6547 = vmatpush1.bf16.msra.mxu0 %v6433
      %6548 = vmatprep.subr.bf16.mxu0 0
      %6549 = vmatpush1.bf16.msra.mxu0 %v6434
      %6550 = vmatprep.subr.bf16.mxu0 0
      %6551 = vmatpush1.bf16.msra.mxu0 %v6435
      %6552 = vmatprep.subr.bf16.mxu0 0
      %6553 = vmatpush1.bf16.msra.mxu0 %v6436
      %6554 = vmatprep.subr.bf16.mxu0 0
      %6555 = vmatpush1.bf16.msra.mxu0 %v6437
      %6556 = vmatprep.subr.bf16.mxu0 0
      %6557 = vmatpush1.bf16.msra.mxu0 %v6438
      %6558 = vmatprep.subr.bf16.mxu0 0
      %6559 = vmatpush1.bf16.msra.mxu0 %v6439
      %6560 = vmatprep.subr.bf16.mxu0 0
      %6561 = vmatpush1.bf16.msra.mxu0 %v6440
      %6562 = vmatprep.subr.bf16.mxu0 0
      %6563 = vmatpush1.bf16.msra.mxu0 %v6441
      %6564 = vmatprep.subr.bf16.mxu0 0
      %6565 = vmatpush1.bf16.msra.mxu0 %v6442
      %6566 = vmatprep.subr.bf16.mxu0 0
      %6567 = vmatpush1.bf16.msra.mxu0 %v6443
      %6568 = vmatprep.subr.bf16.mxu0 0
      %6569 = vmatpush1.bf16.msra.mxu0 %v6444
      %6570 = vmatprep.subr.bf16.mxu0 0
      %6571 = vmatpush1.bf16.msra.mxu0 %v6445
      %6572 = vmatprep.subr.bf16.mxu0 0
      %6573 = vmatpush1.bf16.msra.mxu0 %v6446
      %6574 = vmatprep.subr.bf16.mxu0 0
      %6575 = vmatpush1.bf16.msra.mxu0 %v6447
      %6576 = vmatprep.mubr.bf16.mxu0 %v6061
      %6577 = vmatmul.mubr.bf16.gmra.mrb[0].mxu0 %v6060
      %v6578 = vpop.f32.mrb[0].mxu0
      %v6579 = vadd.f32 0.0, %v6578
      %v6580 = vpop.f32.mrb[0].mxu0
      %v6581 = vpop.f32.mrb[0].mxu0
      %v6582 = vpop.f32.mrb[0].mxu0
      %6583 = vmatprep.mubr.bf16.mxu0 %v6068
      %6584 = vmatmul.mubr.bf16.gmra.mrb[0].mxu0 %v6067
      %v6585 = vpop.f32.mrb[0].mxu0
      %v6586 = vadd.f32 0.0, %v6585
      %v6587 = vpop.f32.mrb[0].mxu0
      %v6588 = vpop.f32.mrb[0].mxu0
      %v6589 = vpop.f32.mrb[0].mxu0
      %6590 = vmatprep.mubr.bf16.mxu0 %v6075
      %6591 = vmatmul.mubr.bf16.gmra.mrb[0].mxu0 %v6074
      %v6592 = vpop.f32.mrb[0].mxu0
      %v6593 = vadd.f32 0.0, %v6592
      %v6594 = vpop.f32.mrb[0].mxu0
      %v6595 = vpop.f32.mrb[0].mxu0
      %v6596 = vpop.f32.mrb[0].mxu0
      %6597 = vmatprep.mubr.bf16.mxu0 %v6082
      %6598 = vmatmul.mubr.bf16.gmra.mrb[0].mxu0 %v6081
      %v6599 = vpop.f32.mrb[0].mxu0
      %v6600 = vadd.f32 0.0, %v6599
      %v6601 = vpop.f32.mrb[0].mxu0
      %v6602 = vpop.f32.mrb[0].mxu0
      %v6603 = vpop.f32.mrb[0].mxu0
      %6604 = vmatprep.mubr.bf16.mxu0 %v6089
      %6605 = vmatmul.mubr.bf16.gmra.mrb[0].mxu0 %v6088
      %v6606 = vpop.f32.mrb[0].mxu0
      %v6607 = vpop.f32.mrb[0].mxu0
      %v6608 = vpop.f32.mrb[0].mxu0
      %v6609 = vpop.f32.mrb[0].mxu0
      %6610 = vdwg.mxu0
      %6611 = vmatprep.subr.bf16.mxu0 0
      %6612 = vmatpush1.bf16.msra.mxu0 %v6448
      %6613 = vmatprep.subr.bf16.mxu0 0
      %6614 = vmatpush1.bf16.msra.mxu0 %v6449
      %6615 = vmatprep.subr.bf16.mxu0 0
      %6616 = vmatpush1.bf16.msra.mxu0 %v6450
      %6617 = vmatprep.subr.bf16.mxu0 0
      %6618 = vmatpush1.bf16.msra.mxu0 %v6451
      %6619 = vmatprep.subr.bf16.mxu0 0
      %6620 = vmatpush1.bf16.msra.mxu0 %v6452
      %6621 = vmatprep.subr.bf16.mxu0 0
      %6622 = vmatpush1.bf16.msra.mxu0 %v6453
      %6623 = vmatprep.subr.bf16.mxu0 0
      %6624 = vmatpush1.bf16.msra.mxu0 %v6454
      %6625 = vmatprep.subr.bf16.mxu0 0
      %6626 = vmatpush1.bf16.msra.mxu0 %v6455
      %6627 = vmatprep.subr.bf16.mxu0 0
      %6628 = vmatpush1.bf16.msra.mxu0 %v6456
      %6629 = vmatprep.subr.bf16.mxu0 0
      %6630 = vmatpush1.bf16.msra.mxu0 %v6457
      %6631 = vmatprep.subr.bf16.mxu0 0
      %6632 = vmatpush1.bf16.msra.mxu0 %v6458
      %6633 = vmatprep.subr.bf16.mxu0 0
      %6634 = vmatpush1.bf16.msra.mxu0 %v6459
      %6635 = vmatprep.subr.bf16.mxu0 0
      %6636 = vmatpush1.bf16.msra.mxu0 %v6460
      %6637 = vmatprep.subr.bf16.mxu0 0
      %6638 = vmatpush1.bf16.msra.mxu0 %v6461
      %6639 = vmatprep.subr.bf16.mxu0 0
      %6640 = vmatpush1.bf16.msra.mxu0 %v6462
      %6641 = vmatprep.subr.bf16.mxu0 0
      %6642 = vmatpush1.bf16.msra.mxu0 %v6463
      %6643 = vmatprep.mubr.bf16.mxu0 %v6063
      %6644 = vmatmul.mubr.bf16.gmra.mrb[0].mxu0 %v6062
      %v6645 = vpop.f32.mrb[0].mxu0
      %v6646 = vadd.f32 %v6579, %v6645
      %v6647 = vpop.f32.mrb[0].mxu0
      %v6648 = vpop.f32.mrb[0].mxu0
      %v6649 = vpop.f32.mrb[0].mxu0
      %6650 = vmatprep.mubr.bf16.mxu0 %v6070
      %6651 = vmatmul.mubr.bf16.gmra.mrb[0].mxu0 %v6069
      %v6652 = vpop.f32.mrb[0].mxu0
      %v6653 = vadd.f32 %v6586, %v6652
      %v6654 = vpop.f32.mrb[0].mxu0
      %v6655 = vpop.f32.mrb[0].mxu0
      %v6656 = vpop.f32.mrb[0].mxu0
      %6657 = vmatprep.mubr.bf16.mxu0 %v6077
      %6658 = vmatmul.mubr.bf16.gmra.mrb[0].mxu0 %v6076
      %v6659 = vpop.f32.mrb[0].mxu0
      %v6660 = vadd.f32 %v6593, %v6659
      %v6661 = vpop.f32.mrb[0].mxu0
      %v6662 = vpop.f32.mrb[0].mxu0
      %v6663 = vpop.f32.mrb[0].mxu0
      %6664 = vmatprep.mubr.bf16.mxu0 %v6084
      %6665 = vmatmul.mubr.bf16.gmra.mrb[0].mxu0 %v6083
      %v6666 = vpop.f32.mrb[0].mxu0
      %v6667 = vadd.f32 %v6600, %v6666
      %v6668 = vpop.f32.mrb[0].mxu0
      %v6669 = vpop.f32.mrb[0].mxu0
      %v6670 = vpop.f32.mrb[0].mxu0
      %6671 = vmatprep.mubr.bf16.mxu0 %v6091
      %6672 = vmatmul.mubr.bf16.gmra.mrb[0].mxu0 %v6090
      %v6673 = vpop.f32.mrb[0].mxu0
      %v6674 = vpop.f32.mrb[0].mxu0
      %v6675 = vpop.f32.mrb[0].mxu0
      %v6676 = vpop.f32.mrb[0].mxu0
      %6677 = vdwg.mxu0
      %6678 = vmatprep.subr.bf16.mxu0 0
      %6679 = vmatpush1.bf16.msra.mxu0 %v6464
      %6680 = vmatprep.subr.bf16.mxu0 0
      %6681 = vmatpush1.bf16.msra.mxu0 %v6465
      %6682 = vmatprep.subr.bf16.mxu0 0
      %6683 = vmatpush1.bf16.msra.mxu0 %v6466
      %6684 = vmatprep.subr.bf16.mxu0 0
      %6685 = vmatpush1.bf16.msra.mxu0 %v6467
      %6686 = vmatprep.subr.bf16.mxu0 0
      %6687 = vmatpush1.bf16.msra.mxu0 %v6468
      %6688 = vmatprep.subr.bf16.mxu0 0
      %6689 = vmatpush1.bf16.msra.mxu0 %v6469
      %6690 = vmatprep.subr.bf16.mxu0 0
      %6691 = vmatpush1.bf16.msra.mxu0 %v6470
      %6692 = vmatprep.subr.bf16.mxu0 0
      %6693 = vmatpush1.bf16.msra.mxu0 %v6471
      %6694 = vmatprep.subr.bf16.mxu0 0
      %6695 = vmatpush1.bf16.msra.mxu0 %v6472
      %6696 = vmatprep.subr.bf16.mxu0 0
      %6697 = vmatpush1.bf16.msra.mxu0 %v6473
      %6698 = vmatprep.subr.bf16.mxu0 0
      %6699 = vmatpush1.bf16.msra.mxu0 %v6474
      %6700 = vmatprep.subr.bf16.mxu0 0
      %6701 = vmatpush1.bf16.msra.mxu0 %v6475
      %6702 = vmatprep.subr.bf16.mxu0 0
      %6703 = vmatpush1.bf16.msra.mxu0 %v6476
      %6704 = vmatprep.subr.bf16.mxu0 0
      %6705 = vmatpush1.bf16.msra.mxu0 %v6477
      %6706 = vmatprep.subr.bf16.mxu0 0
      %6707 = vmatpush1.bf16.msra.mxu0 %v6478
      %6708 = vmatprep.subr.bf16.mxu0 0
      %6709 = vmatpush1.bf16.msra.mxu0 %v6479
      %6710 = vmatprep.mubr.bf16.mxu0 %v6065
      %6711 = vmatmul.mubr.bf16.gmra.mrb[0].mxu0 %v6064
      %v6712 = vpop.f32.mrb[0].mxu0
      %v6713 = vadd.f32 %v6646, %v6712
      %v6714 = vpop.f32.mrb[0].mxu0
      %v6715 = vpop.f32.mrb[0].mxu0
      %v6716 = vpop.f32.mrb[0].mxu0
      %6717 = vmatprep.mubr.bf16.mxu0 %v6072
      %6718 = vmatmul.mubr.bf16.gmra.mrb[0].mxu0 %v6071
      %v6719 = vpop.f32.mrb[0].mxu0
      %v6720 = vadd.f32 %v6653, %v6719
      %v6721 = vpop.f32.mrb[0].mxu0
      %v6722 = vpop.f32.mrb[0].mxu0
      %v6723 = vpop.f32.mrb[0].mxu0
      %6724 = vmatprep.mubr.bf16.mxu0 %v6079
      %6725 = vmatmul.mubr.bf16.gmra.mrb[0].mxu0 %v6078
      %v6726 = vpop.f32.mrb[0].mxu0
      %v6727 = vadd.f32 %v6660, %v6726
      %v6728 = vpop.f32.mrb[0].mxu0
      %v6729 = vpop.f32.mrb[0].mxu0
      %v6730 = vpop.f32.mrb[0].mxu0
      %6731 = vmatprep.mubr.bf16.mxu0 %v6086
      %6732 = vmatmul.mubr.bf16.gmra.mrb[0].mxu0 %v6085
      %v6733 = vpop.f32.mrb[0].mxu0
      %v6734 = vadd.f32 %v6667, %v6733
      %v6735 = vpop.f32.mrb[0].mxu0
      %v6736 = vpop.f32.mrb[0].mxu0
      %v6737 = vpop.f32.mrb[0].mxu0
      %6738 = vmatprep.mubr.bf16.mxu0 %v6093
      %6739 = vmatmul.mubr.bf16.gmra.mrb[0].mxu0 %v6092
      %v6740 = vpop.f32.mrb[0].mxu0
      %v6741 = vpop.f32.mrb[0].mxu0
      %v6742 = vpop.f32.mrb[0].mxu0
      %v6743 = vpop.f32.mrb[0].mxu0
      %6744 = vdwg.mxu0
      %6745 = vmatprep.subr.bf16.mxu0 0
      %6746 = vmatpush1.bf16.msra.mxu0 %v6480
      %6747 = vmatprep.subr.bf16.mxu0 0
      %6748 = vmatpush1.bf16.msra.mxu0 %v6481
      %6749 = vmatprep.subr.bf16.mxu0 0
      %6750 = vmatpush1.bf16.msra.mxu0 %v6482
      %6751 = vmatprep.subr.bf16.mxu0 0
      %6752 = vmatpush1.bf16.msra.mxu0 %v6483
      %6753 = vmatprep.subr.bf16.mxu0 0
      %6754 = vmatpush1.bf16.msra.mxu0 %v6484
      %6755 = vmatprep.subr.bf16.mxu0 0
      %6756 = vmatpush1.bf16.msra.mxu0 %v6485
      %6757 = vmatprep.subr.bf16.mxu0 0
      %6758 = vmatpush1.bf16.msra.mxu0 %v6486
      %6759 = vmatprep.subr.bf16.mxu0 0
      %6760 = vmatpush1.bf16.msra.mxu0 %v6487
      %6761 = vmatprep.subr.bf16.mxu0 0
      %6762 = vmatpush1.bf16.msra.mxu0 0
      %6763 = vmatprep.subr.bf16.mxu0 0
      %6764 = vmatpush1.bf16.msra.mxu0 0
      %6765 = vmatprep.subr.bf16.mxu0 0
      %6766 = vmatpush1.bf16.msra.mxu0 0
      %6767 = vmatprep.subr.bf16.mxu0 0
      %6768 = vmatpush1.bf16.msra.mxu0 0
      %6769 = vmatprep.subr.bf16.mxu0 0
      %6770 = vmatpush1.bf16.msra.mxu0 0
      %6771 = vmatprep.subr.bf16.mxu0 0
      %6772 = vmatpush1.bf16.msra.mxu0 0
      %6773 = vmatprep.subr.bf16.mxu0 0
      %6774 = vmatpush1.bf16.msra.mxu0 0
      %6775 = vmatprep.subr.bf16.mxu0 0
      %6776 = vmatpush1.bf16.msra.mxu0 0
      %6777 = vmatprep.mubr.bf16.mxu0 0
      %6778 = vmatmul.mubr.bf16.gmra.mrb[0].mxu0 %v6066
      %v6779 = vpop.f32.mrb[0].mxu0
      %v6780 = vadd.f32 %v6713, %v6779
      %v6781 = vpop.f32.mrb[0].mxu0
      %v6782 = vpop.f32.mrb[0].mxu0
      %v6783 = vpop.f32.mrb[0].mxu0
      %6784 = vmatprep.mubr.bf16.mxu0 0
      %6785 = vmatmul.mubr.bf16.gmra.mrb[0].mxu0 %v6073
      %v6786 = vpop.f32.mrb[0].mxu0
      %v6787 = vadd.f32 %v6720, %v6786
      %v6788 = vpop.f32.mrb[0].mxu0
      %v6789 = vpop.f32.mrb[0].mxu0
      %v6790 = vpop.f32.mrb[0].mxu0
      %6791 = vmatprep.mubr.bf16.mxu0 0
      %6792 = vmatmul.mubr.bf16.gmra.mrb[0].mxu0 %v6080
      %v6793 = vpop.f32.mrb[0].mxu0
      %v6794 = vadd.f32 %v6727, %v6793
      %v6795 = vpop.f32.mrb[0].mxu0
      %v6796 = vpop.f32.mrb[0].mxu0
      %v6797 = vpop.f32.mrb[0].mxu0
      %6798 = vmatprep.mubr.bf16.mxu0 0
      %6799 = vmatmul.mubr.bf16.gmra.mrb[0].mxu0 %v6087
      %v6800 = vpop.f32.mrb[0].mxu0
      %v6801 = vadd.f32 %v6734, %v6800
      %v6802 = vpop.f32.mrb[0].mxu0
      %v6803 = vpop.f32.mrb[0].mxu0
      %v6804 = vpop.f32.mrb[0].mxu0
      %6805 = vmatprep.mubr.bf16.mxu0 0
      %6806 = vmatmul.mubr.bf16.gmra.mrb[0].mxu0 %v6094
      %v6807 = vpop.f32.mrb[0].mxu0
      %v6808 = vpop.f32.mrb[0].mxu0
      %v6809 = vpop.f32.mrb[0].mxu0
      %v6810 = vpop.f32.mrb[0].mxu0
      %6811 = vdwg.mxu0
      %v6812 = vadd.f32 %v6056, %v6780
      %v6813 = vadd.f32 %v6057, %v6787
      %v6814 = vadd.f32 %v6058, %v6794
      %v6815 = vadd.f32 %v6059, %v6801
      %v6816 = vld [vmem:[#allocation3 + $0x150] sm:$0xff]
      %v6817 = vld [vmem:[#allocation3 + $0x158] sm:$0xff]
      %v6818 = vld [vmem:[#allocation3 + $0x160] sm:$0xff]
      %v6819 = vld [vmem:[#allocation3 + $0x168] sm:$0xff]
      %v6820 = vld [vmem:[#allocation3 + $0x170] sm:$0xff]
      %v6821 = vld [vmem:[#allocation3 + $0x178] sm:$0xff]
      %v6822 = vld [vmem:[#allocation3 + $0x180] sm:$0xff]
      %v6823 = vld [vmem:[#allocation3 + $0x188] sm:$0xff]
      %v6824 = vld [vmem:[#allocation3 + $0x190] sm:$0xff]
      %v6825 = vld [vmem:[#allocation3 + $0x198] sm:$0xff]
      %v6826 = vld [vmem:[#allocation3 + $0x1a0] sm:$0xff]
      %v6827 = vld [vmem:[#allocation3 + $0x1a8] sm:$0xff]
      %v6828 = vld [vmem:[#allocation3 + $0x1b0] sm:$0xff]
      %v6829 = vld [vmem:[#allocation3 + $0x1b8] sm:$0xff]
      %v6830 = vld [vmem:[#allocation3 + $0x1c0] sm:$0xff]
      %v6831 = vld [vmem:[#allocation3 + $0x1c8] sm:$0xff]
      %v6832 = vld [vmem:[#allocation3 + $0x1d0] sm:$0xff]
      %v6833 = vld [vmem:[#allocation3 + $0x1d8] sm:$0xff]
      %v6834 = vld [vmem:[#allocation3 + $0x1e0] sm:$0xff]
      %v6835 = vld [vmem:[#allocation3 + $0x1e8] sm:$0xff]
      %v6836 = vld [vmem:[#allocation3 + $0x1f0] sm:$0xff]
      %v6837 = vld [vmem:[#allocation3 + $0x1f8] sm:$0xff]
      %v6838 = vld [vmem:[#allocation3 + $0x200] sm:$0xff]
      %v6839 = vld [vmem:[#allocation3 + $0x208] sm:$0xff]
      %v6840 = vld [vmem:[#allocation3 + $0x210] sm:$0xff]
      %v6841 = vld [vmem:[#allocation3 + $0x218] sm:$0xff]
      %v6842 = vld [vmem:[#allocation3 + $0x220] sm:$0xff]
      %v6843 = vld [vmem:[#allocation3 + $0x228] sm:$0xff]
      %v6844 = vld [vmem:[#allocation3 + $0x230] sm:$0xff]
      %v6845 = vld [vmem:[#allocation3 + $0x238] sm:$0xff]
      %v6846 = vld [vmem:[#allocation3 + $0x240] sm:$0xff]
      %v6847 = vld [vmem:[#allocation3 + $0x248] sm:$0xff]
      %v6848 = vld [vmem:[#allocation3 + $0x250] sm:$0xff]
      %v6849 = vld [vmem:[#allocation3 + $0x258] sm:$0xff]
      %v6850 = vld [vmem:[#allocation3 + $0x260] sm:$0xff]
      %s6851 = scalar_lea.vmem %s3, 2688
      %v6852 = vld [vmem:[%s6851] sm:$0xf]
      %v6853 = vld [vmem:[%s6851 + $0x4] sm:$0xf]
      %v6854 = vld [vmem:[%s6851 + $0x8] sm:$0xf]
      %v6855 = vld [vmem:[%s6851 + $0xc] sm:$0xf]
      %v6856 = vld [vmem:[%s6851 + $0x10] sm:$0xf]
      %v6857 = vld [vmem:[%s6851 + $0x14] sm:$0xf]
      %v6858 = vld [vmem:[%s6851 + $0x18] sm:$0xf]
      %v6859 = vld [vmem:[%s6851 + $0x1c] sm:$0xf]
      %v6860 = vld [vmem:[%s6851 + $0x20] sm:$0xf]
      %v6861 = vld [vmem:[%s6851 + $0x24] sm:$0xf]
      %v6862 = vld [vmem:[%s6851 + $0x28] sm:$0xf]
      %v6863 = vld [vmem:[%s6851 + $0x2c] sm:$0xf]
      %v6864 = vld [vmem:[%s6851 + $0x30] sm:$0xf]
      %v6865 = vld [vmem:[%s6851 + $0x34] sm:$0xf]
      %v6866 = vld [vmem:[%s6851 + $0x38] sm:$0xf]
      %v6867 = vld [vmem:[%s6851 + $0x3c] sm:$0xf]
      %v6868 = vld [vmem:[%s6851 + $0x40] sm:$0xf]
      %v6869 = vld [vmem:[%s6851 + $0x44] sm:$0xf]
      %v6870 = vld [vmem:[%s6851 + $0x48] sm:$0xf]
      %v6871 = vld [vmem:[%s6851 + $0x4c] sm:$0xf]
      %v6872 = vld [vmem:[%s6851 + $0x50] sm:$0xf]
      %v6873 = vld [vmem:[%s6851 + $0x54] sm:$0xf]
      %v6874 = vld [vmem:[%s6851 + $0x58] sm:$0xf]
      %v6875 = vld [vmem:[%s6851 + $0x5c] sm:$0xf]
      %v6876 = vld [vmem:[%s6851 + $0x60] sm:$0xf]
      %v6877 = vld [vmem:[%s6851 + $0x64] sm:$0xf]
      %v6878 = vld [vmem:[%s6851 + $0x68] sm:$0xf]
      %v6879 = vld [vmem:[%s6851 + $0x6c] sm:$0xf]
      %v6880 = vld [vmem:[%s6851 + $0x70] sm:$0xf]
      %v6881 = vld [vmem:[%s6851 + $0x74] sm:$0xf]
      %v6882 = vld [vmem:[%s6851 + $0x78] sm:$0xf]
      %v6883 = vld [vmem:[%s6851 + $0x7c] sm:$0xf]
      %v6884 = vld [vmem:[%s6851 + $0x80] sm:$0xf]
      %v6885 = vld [vmem:[%s6851 + $0x84] sm:$0xf]
      %v6886 = vld [vmem:[%s6851 + $0x88] sm:$0xf]
      %v6887 = vld [vmem:[%s6851 + $0x8c] sm:$0xf]
      %v6888 = vld [vmem:[%s6851 + $0x90] sm:$0xf]
      %v6889 = vld [vmem:[%s6851 + $0x94] sm:$0xf]
      %v6890 = vld [vmem:[%s6851 + $0x98] sm:$0xf]
      %v6891 = vld [vmem:[%s6851 + $0x9c] sm:$0xf]
      %v6892 = vld [vmem:[%s6851 + $0xa0] sm:$0xf]
      %v6893 = vld [vmem:[%s6851 + $0xa4] sm:$0xf]
      %v6894 = vld [vmem:[%s6851 + $0xa8] sm:$0xf]
      %v6895 = vld [vmem:[%s6851 + $0xac] sm:$0xf]
      %v6896 = vld [vmem:[%s6851 + $0xb0] sm:$0xf]
      %v6897 = vld [vmem:[%s6851 + $0xb4] sm:$0xf]
      %v6898 = vld [vmem:[%s6851 + $0xb8] sm:$0xf]
      %v6899 = vld [vmem:[%s6851 + $0xbc] sm:$0xf]
      %v6900 = vld [vmem:[%s6851 + $0xc0] sm:$0xf]
      %v6901 = vld [vmem:[%s6851 + $0xc4] sm:$0xf]
      %v6902 = vld [vmem:[%s6851 + $0xc8] sm:$0xf]
      %v6903 = vld [vmem:[%s6851 + $0xcc] sm:$0xf]
      %v6904 = vld [vmem:[%s6851 + $0xd0] sm:$0xf]
      %v6905 = vld [vmem:[%s6851 + $0xd4] sm:$0xf]
      %v6906 = vld [vmem:[%s6851 + $0xd8] sm:$0xf]
      %v6907 = vld [vmem:[%s6851 + $0xdc] sm:$0xf]
      %v6908 = vld [vmem:[%s6851 + $0xe0] sm:$0xf]
      %v6909 = vld [vmem:[%s6851 + $0xe4] sm:$0xf]
      %v6910 = vld [vmem:[%s6851 + $0xe8] sm:$0xf]
      %v6911 = vld [vmem:[%s6851 + $0xec] sm:$0xf]
      %v6912 = vld [vmem:[%s6851 + $0xf0] sm:$0xf]
      %v6913 = vld [vmem:[%s6851 + $0xf4] sm:$0xf]
      %v6914 = vld [vmem:[%s6851 + $0xf8] sm:$0xf]
      %v6915 = vld [vmem:[%s6851 + $0xfc] sm:$0xf]
      %v6916 = vld [vmem:[%s6851 + $0x100] sm:$0xf]
      %v6917 = vld [vmem:[%s6851 + $0x104] sm:$0xf]
      %v6918 = vld [vmem:[%s6851 + $0x108] sm:$0xf]
      %v6919 = vld [vmem:[%s6851 + $0x10c] sm:$0xf]
      %v6920 = vld [vmem:[%s6851 + $0x110] sm:$0xf]
      %v6921 = vld [vmem:[%s6851 + $0x114] sm:$0xf]
      %v6922 = vld [vmem:[%s6851 + $0x118] sm:$0xf]
      %v6923 = vld [vmem:[%s6851 + $0x11c] sm:$0xf]
      %v6924 = vld [vmem:[%s6851 + $0x120] sm:$0xf]
      %v6925 = vld [vmem:[%s6851 + $0x124] sm:$0xf]
      %v6926 = vld [vmem:[%s6851 + $0x128] sm:$0xf]
      %v6927 = vld [vmem:[%s6851 + $0x12c] sm:$0xf]
      %v6928 = vld [vmem:[%s6851 + $0x130] sm:$0xf]
      %v6929 = vld [vmem:[%s6851 + $0x134] sm:$0xf]
      %v6930 = vld [vmem:[%s6851 + $0x138] sm:$0xf]
      %v6931 = vld [vmem:[%s6851 + $0x13c] sm:$0xf]
      %v6932 = vld [vmem:[%s6851 + $0x140] sm:$0xf]
      %v6933 = vld [vmem:[%s6851 + $0x144] sm:$0xf]
      %v6934 = vld [vmem:[%s6851 + $0x148] sm:$0xf]
      %v6935 = vld [vmem:[%s6851 + $0x14c] sm:$0xf]
      %v6936 = vld [vmem:[%s6851 + $0x150] sm:$0xf]
      %v6937 = vld [vmem:[%s6851 + $0x154] sm:$0xf]
      %v6938 = vld [vmem:[%s6851 + $0x158] sm:$0xf]
      %v6939 = vld [vmem:[%s6851 + $0x15c] sm:$0xf]
      %v6940 = vld [vmem:[%s6851 + $0x160] sm:$0xf]
      %v6941 = vld [vmem:[%s6851 + $0x164] sm:$0xf]
      %v6942 = vld [vmem:[%s6851 + $0x168] sm:$0xf]
      %v6943 = vld [vmem:[%s6851 + $0x16c] sm:$0xf]
      %v6944 = vld [vmem:[%s6851 + $0x170] sm:$0xf]
      %v6945 = vld [vmem:[%s6851 + $0x174] sm:$0xf]
      %v6946 = vld [vmem:[%s6851 + $0x178] sm:$0xf]
      %v6947 = vld [vmem:[%s6851 + $0x17c] sm:$0xf]
      %v6948 = vld [vmem:[%s6851 + $0x180] sm:$0xf]
      %v6949 = vld [vmem:[%s6851 + $0x184] sm:$0xf]
      %v6950 = vld [vmem:[%s6851 + $0x188] sm:$0xf]
      %v6951 = vld [vmem:[%s6851 + $0x18c] sm:$0xf]
      %v6952 = vld [vmem:[%s6851 + $0x190] sm:$0xf]
      %v6953 = vld [vmem:[%s6851 + $0x194] sm:$0xf]
      %v6954 = vld [vmem:[%s6851 + $0x198] sm:$0xf]
      %v6955 = vld [vmem:[%s6851 + $0x19c] sm:$0xf]
      %v6956 = vld [vmem:[%s6851 + $0x1a0] sm:$0xf]
      %v6957 = vld [vmem:[%s6851 + $0x1a4] sm:$0xf]
      %v6958 = vld [vmem:[%s6851 + $0x1a8] sm:$0xf]
      %v6959 = vld [vmem:[%s6851 + $0x1ac] sm:$0xf]
      %v6960 = vld [vmem:[%s6851 + $0x1b0] sm:$0xf]
      %v6961 = vld [vmem:[%s6851 + $0x1b4] sm:$0xf]
      %v6962 = vld [vmem:[%s6851 + $0x1b8] sm:$0xf]
      %v6963 = vld [vmem:[%s6851 + $0x1bc] sm:$0xf]
      %v7076 = vunpack.c.l.b16 %v6852
      %v7077 = vunpack.c.l.b16 %v6853
      %v7078 = vunpack.c.l.b16 %v6854
      %v7079 = vunpack.c.l.b16 %v6855
      %v7080 = vunpack.c.l.b16 %v6856
      %v7081 = vunpack.c.l.b16 %v6857
      %v7082 = vunpack.c.l.b16 %v6858
      %v7083 = vunpack.c.l.b16 %v6859
      %v7084 = vunpack.c.l.b16 %v6860
      %v7085 = vunpack.c.l.b16 %v6861
      %v7086 = vunpack.c.l.b16 %v6862
      %v7087 = vunpack.c.l.b16 %v6863
      %v7088 = vunpack.c.l.b16 %v6864
      %v7089 = vunpack.c.l.b16 %v6865
      %v7090 = vunpack.c.l.b16 %v6866
      %v7091 = vunpack.c.l.b16 %v6867
      %v7092 = vunpack.c.l.b16 %v6868
      %v7093 = vunpack.c.l.b16 %v6869
      %v7094 = vunpack.c.l.b16 %v6870
      %v7095 = vunpack.c.l.b16 %v6871
      %v7096 = vunpack.c.l.b16 %v6872
      %v7097 = vunpack.c.l.b16 %v6873
      %v7098 = vunpack.c.l.b16 %v6874
      %v7099 = vunpack.c.l.b16 %v6875
      %v7100 = vunpack.c.l.b16 %v6876
      %v7101 = vunpack.c.l.b16 %v6877
      %v7102 = vunpack.c.l.b16 %v6878
      %v7103 = vunpack.c.l.b16 %v6879
      %v7104 = vunpack.c.l.b16 %v6880
      %v7105 = vunpack.c.l.b16 %v6881
      %v7106 = vunpack.c.l.b16 %v6882
      %v7107 = vunpack.c.l.b16 %v6883
      %v7108 = vunpack.c.l.b16 %v6884
      %v7109 = vunpack.c.l.b16 %v6885
      %v7110 = vunpack.c.l.b16 %v6886
      %v7111 = vunpack.c.l.b16 %v6887
      %v7112 = vunpack.c.l.b16 %v6888
      %v7113 = vunpack.c.l.b16 %v6889
      %v7114 = vunpack.c.l.b16 %v6890
      %v7115 = vunpack.c.l.b16 %v6891
      %v7116 = vunpack.c.l.b16 %v6892
      %v7117 = vunpack.c.l.b16 %v6893
      %v7118 = vunpack.c.l.b16 %v6894
      %v7119 = vunpack.c.l.b16 %v6895
      %v7120 = vunpack.c.l.b16 %v6896
      %v7121 = vunpack.c.l.b16 %v6897
      %v7122 = vunpack.c.l.b16 %v6898
      %v7123 = vunpack.c.l.b16 %v6899
      %v7124 = vunpack.c.l.b16 %v6900
      %v7125 = vunpack.c.l.b16 %v6901
      %v7126 = vunpack.c.l.b16 %v6902
      %v7127 = vunpack.c.l.b16 %v6903
      %v7128 = vunpack.c.l.b16 %v6904
      %v7129 = vunpack.c.l.b16 %v6905
      %v7130 = vunpack.c.l.b16 %v6906
      %v7131 = vunpack.c.l.b16 %v6907
      %v7132 = vunpack.c.l.b16 %v6908
      %v7133 = vunpack.c.l.b16 %v6909
      %v7134 = vunpack.c.l.b16 %v6910
      %v7135 = vunpack.c.l.b16 %v6911
      %v7136 = vunpack.c.l.b16 %v6912
      %v7137 = vunpack.c.l.b16 %v6913
      %v7138 = vunpack.c.l.b16 %v6914
      %v7139 = vunpack.c.l.b16 %v6915
      %v7140 = vunpack.c.l.b16 %v6916
      %v7141 = vunpack.c.l.b16 %v6917
      %v7142 = vunpack.c.l.b16 %v6918
      %v7143 = vunpack.c.l.b16 %v6919
      %v7144 = vunpack.c.l.b16 %v6920
      %v7145 = vunpack.c.l.b16 %v6921
      %v7146 = vunpack.c.l.b16 %v6922
      %v7147 = vunpack.c.l.b16 %v6923
      %v7148 = vunpack.c.l.b16 %v6924
      %v7149 = vunpack.c.l.b16 %v6925
      %v7150 = vunpack.c.l.b16 %v6926
      %v7151 = vunpack.c.l.b16 %v6927
      %v7152 = vunpack.c.l.b16 %v6928
      %v7153 = vunpack.c.l.b16 %v6929
      %v7154 = vunpack.c.l.b16 %v6930
      %v7155 = vunpack.c.l.b16 %v6931
      %v7156 = vunpack.c.l.b16 %v6932
      %v7157 = vunpack.c.l.b16 %v6933
      %v7158 = vunpack.c.l.b16 %v6934
      %v7159 = vunpack.c.l.b16 %v6935
      %v7160 = vunpack.c.l.b16 %v6936
      %v7161 = vunpack.c.l.b16 %v6937
      %v7162 = vunpack.c.l.b16 %v6938
      %v7163 = vunpack.c.l.b16 %v6939
      %v7164 = vunpack.c.l.b16 %v6940
      %v7165 = vunpack.c.l.b16 %v6941
      %v7166 = vunpack.c.l.b16 %v6942
      %v7167 = vunpack.c.l.b16 %v6943
      %v7168 = vunpack.c.l.b16 %v6944
      %v7169 = vunpack.c.l.b16 %v6945
      %v7170 = vunpack.c.l.b16 %v6946
      %v7171 = vunpack.c.l.b16 %v6947
      %v7172 = vunpack.c.l.b16 %v6948
      %v7173 = vunpack.c.l.b16 %v6949
      %v7174 = vunpack.c.l.b16 %v6950
      %v7175 = vunpack.c.l.b16 %v6951
      %v7176 = vunpack.c.l.b16 %v6952
      %v7177 = vunpack.c.l.b16 %v6953
      %v7178 = vunpack.c.l.b16 %v6954
      %v7179 = vunpack.c.l.b16 %v6955
      %v7180 = vunpack.c.l.b16 %v6956
      %v7181 = vunpack.c.l.b16 %v6957
      %v7182 = vunpack.c.l.b16 %v6958
      %v7183 = vunpack.c.l.b16 %v6959
      %v7184 = vunpack.c.l.b16 %v6960
      %v7185 = vunpack.c.l.b16 %v6961
      %v7186 = vunpack.c.l.b16 %v6962
      %v7187 = vunpack.c.l.b16 %v6963
      %v7188 = vpack.c.b16 %v7077, %v7076
      %v7189 = vpack.c.b16 %v7079, %v7078
      %v7190 = vpack.c.b16 %v7081, %v7080
      %v7191 = vpack.c.b16 %v7083, %v7082
      %v7192 = vpack.c.b16 %v7085, %v7084
      %v7193 = vpack.c.b16 %v7087, %v7086
      %v7194 = vpack.c.b16 %v7089, %v7088
      %v7195 = vpack.c.b16 %v7091, %v7090
      %v7196 = vpack.c.b16 %v7093, %v7092
      %v7197 = vpack.c.b16 %v7095, %v7094
      %v7198 = vpack.c.b16 %v7097, %v7096
      %v7199 = vpack.c.b16 %v7099, %v7098
      %v7200 = vpack.c.b16 %v7101, %v7100
      %v7201 = vpack.c.b16 %v7103, %v7102
      %v7202 = vpack.c.b16 %v7105, %v7104
      %v7203 = vpack.c.b16 %v7107, %v7106
      %v7204 = vpack.c.b16 %v7109, %v7108
      %v7205 = vpack.c.b16 %v7111, %v7110
      %v7206 = vpack.c.b16 %v7113, %v7112
      %v7207 = vpack.c.b16 %v7115, %v7114
      %v7208 = vpack.c.b16 %v7117, %v7116
      %v7209 = vpack.c.b16 %v7119, %v7118
      %v7210 = vpack.c.b16 %v7121, %v7120
      %v7211 = vpack.c.b16 %v7123, %v7122
      %v7212 = vpack.c.b16 %v7125, %v7124
      %v7213 = vpack.c.b16 %v7127, %v7126
      %v7214 = vpack.c.b16 %v7129, %v7128
      %v7215 = vpack.c.b16 %v7131, %v7130
      %v7216 = vpack.c.b16 %v7133, %v7132
      %v7217 = vpack.c.b16 %v7135, %v7134
      %v7218 = vpack.c.b16 %v7137, %v7136
      %v7219 = vpack.c.b16 %v7139, %v7138
      %v7220 = vpack.c.b16 %v7141, %v7140
      %v7221 = vpack.c.b16 %v7143, %v7142
      %v7222 = vpack.c.b16 %v7145, %v7144
      %v7223 = vpack.c.b16 %v7147, %v7146
      %v7224 = vpack.c.b16 %v7149, %v7148
      %v7225 = vpack.c.b16 %v7151, %v7150
      %v7226 = vpack.c.b16 %v7153, %v7152
      %v7227 = vpack.c.b16 %v7155, %v7154
      %v7228 = vpack.c.b16 %v7157, %v7156
      %v7229 = vpack.c.b16 %v7159, %v7158
      %v7230 = vpack.c.b16 %v7161, %v7160
      %v7231 = vpack.c.b16 %v7163, %v7162
      %v7232 = vpack.c.b16 %v7165, %v7164
      %v7233 = vpack.c.b16 %v7167, %v7166
      %v7234 = vpack.c.b16 %v7169, %v7168
      %v7235 = vpack.c.b16 %v7171, %v7170
      %v7236 = vpack.c.b16 %v7173, %v7172
      %v7237 = vpack.c.b16 %v7175, %v7174
      %v7238 = vpack.c.b16 %v7177, %v7176
      %v7239 = vpack.c.b16 %v7179, %v7178
      %v7240 = vpack.c.b16 %v7181, %v7180
      %v7241 = vpack.c.b16 %v7183, %v7182
      %v7242 = vpack.c.b16 %v7185, %v7184
      %v7243 = vpack.c.b16 %v7187, %v7186
      %7300 = vmatprep.subr.bf16.mxu0 0
      %7301 = vmatpush1.bf16.msra.mxu0 %v7188
      %7302 = vmatprep.subr.bf16.mxu0 0
      %7303 = vmatpush1.bf16.msra.mxu0 %v7189
      %7304 = vmatprep.subr.bf16.mxu0 0
      %7305 = vmatpush1.bf16.msra.mxu0 %v7190
      %7306 = vmatprep.subr.bf16.mxu0 0
      %7307 = vmatpush1.bf16.msra.mxu0 %v7191
      %7308 = vmatprep.subr.bf16.mxu0 0
      %7309 = vmatpush1.bf16.msra.mxu0 %v7192
      %7310 = vmatprep.subr.bf16.mxu0 0
      %7311 = vmatpush1.bf16.msra.mxu0 %v7193
      %7312 = vmatprep.subr.bf16.mxu0 0
      %7313 = vmatpush1.bf16.msra.mxu0 %v7194
      %7314 = vmatprep.subr.bf16.mxu0 0
      %7315 = vmatpush1.bf16.msra.mxu0 %v7195
      %7316 = vmatprep.subr.bf16.mxu0 0
      %7317 = vmatpush1.bf16.msra.mxu0 %v7196
      %7318 = vmatprep.subr.bf16.mxu0 0
      %7319 = vmatpush1.bf16.msra.mxu0 %v7197
      %7320 = vmatprep.subr.bf16.mxu0 0
      %7321 = vmatpush1.bf16.msra.mxu0 %v7198
      %7322 = vmatprep.subr.bf16.mxu0 0
      %7323 = vmatpush1.bf16.msra.mxu0 %v7199
      %7324 = vmatprep.subr.bf16.mxu0 0
      %7325 = vmatpush1.bf16.msra.mxu0 %v7200
      %7326 = vmatprep.subr.bf16.mxu0 0
      %7327 = vmatpush1.bf16.msra.mxu0 %v7201
      %7328 = vmatprep.subr.bf16.mxu0 0
      %7329 = vmatpush1.bf16.msra.mxu0 %v7202
      %7330 = vmatprep.subr.bf16.mxu0 0
      %7331 = vmatpush1.bf16.msra.mxu0 %v7203
      %7332 = vmatprep.mubr.bf16.mxu0 %v6817
      %7333 = vmatmul.mubr.bf16.gmra.mrb[0].mxu0 %v6816
      %v7334 = vpop.f32.mrb[0].mxu0
      %v7335 = vadd.f32 0.0, %v7334
      %v7336 = vpop.f32.mrb[0].mxu0
      %v7337 = vpop.f32.mrb[0].mxu0
      %v7338 = vpop.f32.mrb[0].mxu0
      %7339 = vmatprep.mubr.bf16.mxu0 %v6824
      %7340 = vmatmul.mubr.bf16.gmra.mrb[0].mxu0 %v6823
      %v7341 = vpop.f32.mrb[0].mxu0
      %v7342 = vadd.f32 0.0, %v7341
      %v7343 = vpop.f32.mrb[0].mxu0
      %v7344 = vpop.f32.mrb[0].mxu0
      %v7345 = vpop.f32.mrb[0].mxu0
      %7346 = vmatprep.mubr.bf16.mxu0 %v6831
      %7347 = vmatmul.mubr.bf16.gmra.mrb[0].mxu0 %v6830
      %v7348 = vpop.f32.mrb[0].mxu0
      %v7349 = vadd.f32 0.0, %v7348
      %v7350 = vpop.f32.mrb[0].mxu0
      %v7351 = vpop.f32.mrb[0].mxu0
      %v7352 = vpop.f32.mrb[0].mxu0
      %7353 = vmatprep.mubr.bf16.mxu0 %v6838
      %7354 = vmatmul.mubr.bf16.gmra.mrb[0].mxu0 %v6837
      %v7355 = vpop.f32.mrb[0].mxu0
      %v7356 = vadd.f32 0.0, %v7355
      %v7357 = vpop.f32.mrb[0].mxu0
      %v7358 = vpop.f32.mrb[0].mxu0
      %v7359 = vpop.f32.mrb[0].mxu0
      %7360 = vmatprep.mubr.bf16.mxu0 %v6845
      %7361 = vmatmul.mubr.bf16.gmra.mrb[0].mxu0 %v6844
      %v7362 = vpop.f32.mrb[0].mxu0
      %v7363 = vpop.f32.mrb[0].mxu0
      %v7364 = vpop.f32.mrb[0].mxu0
      %v7365 = vpop.f32.mrb[0].mxu0
      %7366 = vdwg.mxu0
      %7367 = vmatprep.subr.bf16.mxu0 0
      %7368 = vmatpush1.bf16.msra.mxu0 %v7204
      %7369 = vmatprep.subr.bf16.mxu0 0
      %7370 = vmatpush1.bf16.msra.mxu0 %v7205
      %7371 = vmatprep.subr.bf16.mxu0 0
      %7372 = vmatpush1.bf16.msra.mxu0 %v7206
      %7373 = vmatprep.subr.bf16.mxu0 0
      %7374 = vmatpush1.bf16.msra.mxu0 %v7207
      %7375 = vmatprep.subr.bf16.mxu0 0
      %7376 = vmatpush1.bf16.msra.mxu0 %v7208
      %7377 = vmatprep.subr.bf16.mxu0 0
      %7378 = vmatpush1.bf16.msra.mxu0 %v7209
      %7379 = vmatprep.subr.bf16.mxu0 0
      %7380 = vmatpush1.bf16.msra.mxu0 %v7210
      %7381 = vmatprep.subr.bf16.mxu0 0
      %7382 = vmatpush1.bf16.msra.mxu0 %v7211
      %7383 = vmatprep.subr.bf16.mxu0 0
      %7384 = vmatpush1.bf16.msra.mxu0 %v7212
      %7385 = vmatprep.subr.bf16.mxu0 0
      %7386 = vmatpush1.bf16.msra.mxu0 %v7213
      %7387 = vmatprep.subr.bf16.mxu0 0
      %7388 = vmatpush1.bf16.msra.mxu0 %v7214
      %7389 = vmatprep.subr.bf16.mxu0 0
      %7390 = vmatpush1.bf16.msra.mxu0 %v7215
      %7391 = vmatprep.subr.bf16.mxu0 0
      %7392 = vmatpush1.bf16.msra.mxu0 %v7216
      %7393 = vmatprep.subr.bf16.mxu0 0
      %7394 = vmatpush1.bf16.msra.mxu0 %v7217
      %7395 = vmatprep.subr.bf16.mxu0 0
      %7396 = vmatpush1.bf16.msra.mxu0 %v7218
      %7397 = vmatprep.subr.bf16.mxu0 0
      %7398 = vmatpush1.bf16.msra.mxu0 %v7219
      %7399 = vmatprep.mubr.bf16.mxu0 %v6819
      %7400 = vmatmul.mubr.bf16.gmra.mrb[0].mxu0 %v6818
      %v7401 = vpop.f32.mrb[0].mxu0
      %v7402 = vadd.f32 %v7335, %v7401
      %v7403 = vpop.f32.mrb[0].mxu0
      %v7404 = vpop.f32.mrb[0].mxu0
      %v7405 = vpop.f32.mrb[0].mxu0
      %7406 = vmatprep.mubr.bf16.mxu0 %v6826
      %7407 = vmatmul.mubr.bf16.gmra.mrb[0].mxu0 %v6825
      %v7408 = vpop.f32.mrb[0].mxu0
      %v7409 = vadd.f32 %v7342, %v7408
      %v7410 = vpop.f32.mrb[0].mxu0
      %v7411 = vpop.f32.mrb[0].mxu0
      %v7412 = vpop.f32.mrb[0].mxu0
      %7413 = vmatprep.mubr.bf16.mxu0 %v6833
      %7414 = vmatmul.mubr.bf16.gmra.mrb[0].mxu0 %v6832
      %v7415 = vpop.f32.mrb[0].mxu0
      %v7416 = vadd.f32 %v7349, %v7415
      %v7417 = vpop.f32.mrb[0].mxu0
      %v7418 = vpop.f32.mrb[0].mxu0
      %v7419 = vpop.f32.mrb[0].mxu0
      %7420 = vmatprep.mubr.bf16.mxu0 %v6840
      %7421 = vmatmul.mubr.bf16.gmra.mrb[0].mxu0 %v6839
      %v7422 = vpop.f32.mrb[0].mxu0
      %v7423 = vadd.f32 %v7356, %v7422
      %v7424 = vpop.f32.mrb[0].mxu0
      %v7425 = vpop.f32.mrb[0].mxu0
      %v7426 = vpop.f32.mrb[0].mxu0
      %7427 = vmatprep.mubr.bf16.mxu0 %v6847
      %7428 = vmatmul.mubr.bf16.gmra.mrb[0].mxu0 %v6846
      %v7429 = vpop.f32.mrb[0].mxu0
      %v7430 = vpop.f32.mrb[0].mxu0
      %v7431 = vpop.f32.mrb[0].mxu0
      %v7432 = vpop.f32.mrb[0].mxu0
      %7433 = vdwg.mxu0
      %7434 = vmatprep.subr.bf16.mxu0 0
      %7435 = vmatpush1.bf16.msra.mxu0 %v7220
      %7436 = vmatprep.subr.bf16.mxu0 0
      %7437 = vmatpush1.bf16.msra.mxu0 %v7221
      %7438 = vmatprep.subr.bf16.mxu0 0
      %7439 = vmatpush1.bf16.msra.mxu0 %v7222
      %7440 = vmatprep.subr.bf16.mxu0 0
      %7441 = vmatpush1.bf16.msra.mxu0 %v7223
      %7442 = vmatprep.subr.bf16.mxu0 0
      %7443 = vmatpush1.bf16.msra.mxu0 %v7224
      %7444 = vmatprep.subr.bf16.mxu0 0
      %7445 = vmatpush1.bf16.msra.mxu0 %v7225
      %7446 = vmatprep.subr.bf16.mxu0 0
      %7447 = vmatpush1.bf16.msra.mxu0 %v7226
      %7448 = vmatprep.subr.bf16.mxu0 0
      %7449 = vmatpush1.bf16.msra.mxu0 %v7227
      %7450 = vmatprep.subr.bf16.mxu0 0
      %7451 = vmatpush1.bf16.msra.mxu0 %v7228
      %7452 = vmatprep.subr.bf16.mxu0 0
      %7453 = vmatpush1.bf16.msra.mxu0 %v7229
      %7454 = vmatprep.subr.bf16.mxu0 0
      %7455 = vmatpush1.bf16.msra.mxu0 %v7230
      %7456 = vmatprep.subr.bf16.mxu0 0
      %7457 = vmatpush1.bf16.msra.mxu0 %v7231
      %7458 = vmatprep.subr.bf16.mxu0 0
      %7459 = vmatpush1.bf16.msra.mxu0 %v7232
      %7460 = vmatprep.subr.bf16.mxu0 0
      %7461 = vmatpush1.bf16.msra.mxu0 %v7233
      %7462 = vmatprep.subr.bf16.mxu0 0
      %7463 = vmatpush1.bf16.msra.mxu0 %v7234
      %7464 = vmatprep.subr.bf16.mxu0 0
      %7465 = vmatpush1.bf16.msra.mxu0 %v7235
      %7466 = vmatprep.mubr.bf16.mxu0 %v6821
      %7467 = vmatmul.mubr.bf16.gmra.mrb[0].mxu0 %v6820
      %v7468 = vpop.f32.mrb[0].mxu0
      %v7469 = vadd.f32 %v7402, %v7468
      %v7470 = vpop.f32.mrb[0].mxu0
      %v7471 = vpop.f32.mrb[0].mxu0
      %v7472 = vpop.f32.mrb[0].mxu0
      %7473 = vmatprep.mubr.bf16.mxu0 %v6828
      %7474 = vmatmul.mubr.bf16.gmra.mrb[0].mxu0 %v6827
      %v7475 = vpop.f32.mrb[0].mxu0
      %v7476 = vadd.f32 %v7409, %v7475
      %v7477 = vpop.f32.mrb[0].mxu0
      %v7478 = vpop.f32.mrb[0].mxu0
      %v7479 = vpop.f32.mrb[0].mxu0
      %7480 = vmatprep.mubr.bf16.mxu0 %v6835
      %7481 = vmatmul.mubr.bf16.gmra.mrb[0].mxu0 %v6834
      %v7482 = vpop.f32.mrb[0].mxu0
      %v7483 = vadd.f32 %v7416, %v7482
      %v7484 = vpop.f32.mrb[0].mxu0
      %v7485 = vpop.f32.mrb[0].mxu0
      %v7486 = vpop.f32.mrb[0].mxu0
      %7487 = vmatprep.mubr.bf16.mxu0 %v6842
      %7488 = vmatmul.mubr.bf16.gmra.mrb[0].mxu0 %v6841
      %v7489 = vpop.f32.mrb[0].mxu0
      %v7490 = vadd.f32 %v7423, %v7489
      %v7491 = vpop.f32.mrb[0].mxu0
      %v7492 = vpop.f32.mrb[0].mxu0
      %v7493 = vpop.f32.mrb[0].mxu0
      %7494 = vmatprep.mubr.bf16.mxu0 %v6849
      %7495 = vmatmul.mubr.bf16.gmra.mrb[0].mxu0 %v6848
      %v7496 = vpop.f32.mrb[0].mxu0
      %v7497 = vpop.f32.mrb[0].mxu0
      %v7498 = vpop.f32.mrb[0].mxu0
      %v7499 = vpop.f32.mrb[0].mxu0
      %7500 = vdwg.mxu0
      %7501 = vmatprep.subr.bf16.mxu0 0
      %7502 = vmatpush1.bf16.msra.mxu0 %v7236
      %7503 = vmatprep.subr.bf16.mxu0 0
      %7504 = vmatpush1.bf16.msra.mxu0 %v7237
      %7505 = vmatprep.subr.bf16.mxu0 0
      %7506 = vmatpush1.bf16.msra.mxu0 %v7238
      %7507 = vmatprep.subr.bf16.mxu0 0
      %7508 = vmatpush1.bf16.msra.mxu0 %v7239
      %7509 = vmatprep.subr.bf16.mxu0 0
      %7510 = vmatpush1.bf16.msra.mxu0 %v7240
      %7511 = vmatprep.subr.bf16.mxu0 0
      %7512 = vmatpush1.bf16.msra.mxu0 %v7241
      %7513 = vmatprep.subr.bf16.mxu0 0
      %7514 = vmatpush1.bf16.msra.mxu0 %v7242
      %7515 = vmatprep.subr.bf16.mxu0 0
      %7516 = vmatpush1.bf16.msra.mxu0 %v7243
      %7517 = vmatprep.subr.bf16.mxu0 0
      %7518 = vmatpush1.bf16.msra.mxu0 0
      %7519 = vmatprep.subr.bf16.mxu0 0
      %7520 = vmatpush1.bf16.msra.mxu0 0
      %7521 = vmatprep.subr.bf16.mxu0 0
      %7522 = vmatpush1.bf16.msra.mxu0 0
      %7523 = vmatprep.subr.bf16.mxu0 0
      %7524 = vmatpush1.bf16.msra.mxu0 0
      %7525 = vmatprep.subr.bf16.mxu0 0
      %7526 = vmatpush1.bf16.msra.mxu0 0
      %7527 = vmatprep.subr.bf16.mxu0 0
      %7528 = vmatpush1.bf16.msra.mxu0 0
      %7529 = vmatprep.subr.bf16.mxu0 0
      %7530 = vmatpush1.bf16.msra.mxu0 0
      %7531 = vmatprep.subr.bf16.mxu0 0
      %7532 = vmatpush1.bf16.msra.mxu0 0
      %7533 = vmatprep.mubr.bf16.mxu0 0
      %7534 = vmatmul.mubr.bf16.gmra.mrb[0].mxu0 %v6822
      %v7535 = vpop.f32.mrb[0].mxu0
      %v7536 = vadd.f32 %v7469, %v7535
      %v7537 = vpop.f32.mrb[0].mxu0
      %v7538 = vpop.f32.mrb[0].mxu0
      %v7539 = vpop.f32.mrb[0].mxu0
      %7540 = vmatprep.mubr.bf16.mxu0 0
      %7541 = vmatmul.mubr.bf16.gmra.mrb[0].mxu0 %v6829
      %v7542 = vpop.f32.mrb[0].mxu0
      %v7543 = vadd.f32 %v7476, %v7542
      %v7544 = vpop.f32.mrb[0].mxu0
      %v7545 = vpop.f32.mrb[0].mxu0
      %v7546 = vpop.f32.mrb[0].mxu0
      %7547 = vmatprep.mubr.bf16.mxu0 0
      %7548 = vmatmul.mubr.bf16.gmra.mrb[0].mxu0 %v6836
      %v7549 = vpop.f32.mrb[0].mxu0
      %v7550 = vadd.f32 %v7483, %v7549
      %v7551 = vpop.f32.mrb[0].mxu0
      %v7552 = vpop.f32.mrb[0].mxu0
      %v7553 = vpop.f32.mrb[0].mxu0
      %7554 = vmatprep.mubr.bf16.mxu0 0
      %7555 = vmatmul.mubr.bf16.gmra.mrb[0].mxu0 %v6843
      %v7556 = vpop.f32.mrb[0].mxu0
      %v7557 = vadd.f32 %v7490, %v7556
      %v7558 = vpop.f32.mrb[0].mxu0
      %v7559 = vpop.f32.mrb[0].mxu0
      %v7560 = vpop.f32.mrb[0].mxu0
      %7561 = vmatprep.mubr.bf16.mxu0 0
      %7562 = vmatmul.mubr.bf16.gmra.mrb[0].mxu0 %v6850
      %v7563 = vpop.f32.mrb[0].mxu0
      %v7564 = vpop.f32.mrb[0].mxu0
      %v7565 = vpop.f32.mrb[0].mxu0
      %v7566 = vpop.f32.mrb[0].mxu0
      %7567 = vdwg.mxu0
      %v7568 = vadd.f32 %v6812, %v7536
      %v7569 = vadd.f32 %v6813, %v7543
      %v7570 = vadd.f32 %v6814, %v7550
      %v7571 = vadd.f32 %v6815, %v7557
      %v7572 = vld [vmem:[%s4] sm:$0x1]
      %v7574 = vlaneseq
      %v7575 = vshrl.u32 %v7574, 7
      %v7576 = vsub.s32 0, %v7575
      %v7577 = vrot.slane %v7572, %v7576
      %v7579 = vadd.f32 %v7568, %v7577
      %v7580 = vadd.f32 %v7569, %v7577
      %v7581 = vadd.f32 %v7570, %v7577
      %v7582 = vadd.f32 %v7571, %v7577
      %v7583 = vmul.f32 %v7579, 0.5
      %v7584 = vmul.f32 %v7580, 0.5
      %v7585 = vmul.f32 %v7581, 0.5
      %v7586 = vmul.f32 %v7582, 0.5
      %v7587 = vmul.f32 %v7579, %v742
      %v7588 = vmul.f32 %v7580, %v742
      %v7589 = vmul.f32 %v7581, %v742
      %v7590 = vmul.f32 %v7582, %v742
      %v7591 = verf.f32.pop %v7587
      %v7592 = verf.f32.pop %v7588
      %v7593 = verf.f32.pop %v7589
      %v7594 = verf.f32.pop %v7590
      %v7595 = vadd.f32 %v7591, 1.0
      %v7596 = vadd.f32 %v7592, 1.0
      %v7597 = vadd.f32 %v7593, 1.0
      %v7598 = vadd.f32 %v7594, 1.0
      %v7599 = vmul.f32 %v7583, %v7595
      %v7600 = vmul.f32 %v7584, %v7596
      %v7601 = vmul.f32 %v7585, %v7597
      %v7602 = vmul.f32 %v7586, %v7598
      %v7603 = vld [vmem:[%s6] sm:$0x3]
      %v7605 = vrot.slane %v7599, 1
      %v7607 = vmax.f32 %v7599, %v7605
      %v7609 = vrot.slane %v7600, 1
      %v7611 = vmax.f32 %v7600, %v7609
      %v7612 = vmax.f32 %v7607, %v7611
      %v7613 = vld [vmem:[%s5] sm:$0xff]
      %v7614 = vld [vmem:[%s5 + $0x8] sm:$0xff]
      %v7615 = vld [vmem:[%s5 + $0x10] sm:$0xff]
      %v7616 = vld [vmem:[%s5 + $0x18] sm:$0xff]
      %v7617 = vld [vmem:[%s5 + $0x20] sm:$0xff]
      %v7618 = vld [vmem:[%s5 + $0x28] sm:$0xff]
      %v7619 = vld [vmem:[%s5 + $0x30] sm:$0xff]
      %v7620 = vld [vmem:[%s5 + $0x38] sm:$0xff]
      %v7621 = vld [vmem:[%s5 + $0x40] sm:$0xff]
      %v7622 = vld [vmem:[%s5 + $0x48] sm:$0xff]
      %v7623 = vld [vmem:[%s5 + $0x50] sm:$0xff]
      %v7624 = vld [vmem:[%s5 + $0x58] sm:$0xff]
      %v7625 = vld [vmem:[%s5 + $0x60] sm:$0xff]
      %v7626 = vld [vmem:[%s5 + $0x68] sm:$0xff]
      %v7627 = vld [vmem:[%s5 + $0x70] sm:$0xff]
      %v7628 = vld [vmem:[%s5 + $0x78] sm:$0xff]
      %v7629 = vld [vmem:[%s5 + $0x80] sm:$0xff]
      %v7630 = vld [vmem:[%s5 + $0x88] sm:$0xff]
      %v7631 = vld [vmem:[%s5 + $0x90] sm:$0xff]
      %v7632 = vld [vmem:[%s5 + $0x98] sm:$0xff]
      %v7633 = vld [vmem:[%s5 + $0xa0] sm:$0xff]
      %v7634 = vld [vmem:[%s5 + $0xa8] sm:$0xff]
      %v7635 = vld [vmem:[%s5 + $0xb0] sm:$0xff]
      %v7636 = vld [vmem:[%s5 + $0xb8] sm:$0xff]
      %v7637 = vld [vmem:[%s5 + $0xc0] sm:$0xff]
      %v7638 = vld [vmem:[%s5 + $0xc8] sm:$0xff]
      %v7639 = vld [vmem:[%s5 + $0xd0] sm:$0xff]
      %v7640 = vld [vmem:[%s5 + $0xd8] sm:$0xff]
      %v7641 = vld [vmem:[%s5 + $0xe0] sm:$0xff]
      %v7642 = vld [vmem:[%s5 + $0xe8] sm:$0xff]
      %v7643 = vld [vmem:[%s5 + $0xf0] sm:$0xff]
      %v7644 = vld [vmem:[%s5 + $0xf8] sm:$0xff]
      %7645 = vmatprep.subr.mxu0 %v7614
      %7646 = vmatpush1.msra.mxu0 %v7613
      %7647 = vmatprep.subr.mxu0 %v7616
      %7648 = vmatpush1.msra.mxu0 %v7615
      %7649 = vmatprep.subr.mxu0 %v7618
      %7650 = vmatpush1.msra.mxu0 %v7617
      %7651 = vmatprep.subr.mxu0 %v7620
      %7652 = vmatpush1.msra.mxu0 %v7619
      %7653 = vmatprep.subr.mxu0 %v7622
      %7654 = vmatpush1.msra.mxu0 %v7621
      %7655 = vmatprep.subr.mxu0 %v7624
      %7656 = vmatpush1.msra.mxu0 %v7623
      %7657 = vmatprep.subr.mxu0 %v7626
      %7658 = vmatpush1.msra.mxu0 %v7625
      %7659 = vmatprep.subr.mxu0 %v7628
      %7660 = vmatpush1.msra.mxu0 %v7627
      %7661 = vmatprep.subr.mxu0 %v7630
      %7662 = vmatpush1.msra.mxu0 %v7629
      %7663 = vmatprep.subr.mxu0 %v7632
      %7664 = vmatpush1.msra.mxu0 %v7631
      %7665 = vmatprep.subr.mxu0 %v7634
      %7666 = vmatpush1.msra.mxu0 %v7633
      %7667 = vmatprep.subr.mxu0 %v7636
      %7668 = vmatpush1.msra.mxu0 %v7635
      %7669 = vmatprep.subr.mxu0 %v7638
      %7670 = vmatpush1.msra.mxu0 %v7637
      %7671 = vmatprep.subr.mxu0 %v7640
      %7672 = vmatpush1.msra.mxu0 %v7639
      %7673 = vmatprep.subr.mxu0 %v7642
      %7674 = vmatpush1.msra.mxu0 %v7641
      %7675 = vmatprep.subr.mxu0 %v7644
      %7676 = vmatpush1.msra.mxu0 %v7643
      %7677 = vmatprep.subr.mxu0 0.0
      %7678 = vmatpush1.msra.mxu0 0.0
      %7679 = vmatprep.subr.mxu0 0.0
      %7680 = vmatpush1.msra.mxu0 0.0
      %7681 = vmatprep.subr.mxu0 0.0
      %7682 = vmatpush1.msra.mxu0 0.0
      %7683 = vmatprep.subr.mxu0 0.0
      %7684 = vmatpush1.msra.mxu0 0.0
      %7685 = vmatprep.subr.mxu0 0.0
      %7686 = vmatpush1.msra.mxu0 0.0
      %7687 = vmatprep.subr.mxu0 0.0
      %7688 = vmatpush1.msra.mxu0 0.0
      %7689 = vmatprep.subr.mxu0 0.0
      %7690 = vmatpush1.msra.mxu0 0.0
      %7691 = vmatprep.subr.mxu0 0.0
      %7692 = vmatpush1.msra.mxu0 0.0
      %7693 = vmatprep.subr.mxu0 0.0
      %7694 = vmatpush1.msra.mxu0 0.0
      %7695 = vmatprep.subr.mxu0 0.0
      %7696 = vmatpush1.msra.mxu0 0.0
      %7697 = vmatprep.subr.mxu0 0.0
      %7698 = vmatpush1.msra.mxu0 0.0
      %7699 = vmatprep.subr.mxu0 0.0
      %7700 = vmatpush1.msra.mxu0 0.0
      %7701 = vmatprep.subr.mxu0 0.0
      %7702 = vmatpush1.msra.mxu0 0.0
      %7703 = vmatprep.subr.mxu0 0.0
      %7704 = vmatpush1.msra.mxu0 0.0
      %7705 = vmatprep.subr.mxu0 0.0
      %7706 = vmatpush1.msra.mxu0 0.0
      %7707 = vmatprep.subr.mxu0 0.0
      %7708 = vmatpush1.msra.mxu0 0.0
      %7709 = vmatprep.mubr.f32.mxu0 0.0
      %7710 = vmatmul.mubr.f32.gmra.mrb[0].mxu0 %v7612
      %v7711 = vpop.f32.mrb[0].mxu0
      %v7712 = vadd.f32 0.0, %v7711
      %v7713 = vpop.f32.mrb[0].mxu0
      %v7714 = vadd.f32 0.0, %v7713
      %7715 = vdwg.mxu0
      %v7718 = vcombine.low %v7712, %v7714
      %v7720 = vunpack.c.l.s4 1966171168
      %v7721 = vunpack.c.0.s8 %v7720
      %v7722 = vlaneseq
      %v7723 = vshrl.u32 %v7722, 7
      %v7724 = vsub.s32 %v7721, %v7723
      %v7725 = vrot.slane %v7718, %v7724
      %v7727 = vunpack.c.l.s4 1966171168
      %v7728 = vunpack.c.0.s8 %v7727
      %v7729 = vlaneseq
      %v7730 = vshrl.u32 %v7729, 7
      %v7731 = vsub.s32 %v7728, %v7730
      %v7732 = vrot.slane %v7725, %v7731
      %v7734 = vadd.f32 %v7603, %v7732
      %s7735 = scalar_lea.vmem %s5, 256
      %v7736 = vld [vmem:[%s7735] sm:$0xff]
      %v7737 = vld [vmem:[%s7735 + $0x8] sm:$0xff]
      %v7738 = vld [vmem:[%s7735 + $0x10] sm:$0xff]
      %v7739 = vld [vmem:[%s7735 + $0x18] sm:$0xff]
      %v7740 = vld [vmem:[%s7735 + $0x20] sm:$0xff]
      %v7741 = vld [vmem:[%s7735 + $0x28] sm:$0xff]
      %v7742 = vld [vmem:[%s7735 + $0x30] sm:$0xff]
      %v7743 = vld [vmem:[%s7735 + $0x38] sm:$0xff]
      %v7744 = vld [vmem:[%s7735 + $0x40] sm:$0xff]
      %v7745 = vld [vmem:[%s7735 + $0x48] sm:$0xff]
      %v7746 = vld [vmem:[%s7735 + $0x50] sm:$0xff]
      %v7747 = vld [vmem:[%s7735 + $0x58] sm:$0xff]
      %v7748 = vld [vmem:[%s7735 + $0x60] sm:$0xff]
      %v7749 = vld [vmem:[%s7735 + $0x68] sm:$0xff]
      %v7750 = vld [vmem:[%s7735 + $0x70] sm:$0xff]
      %v7751 = vld [vmem:[%s7735 + $0x78] sm:$0xff]
      %v7752 = vld [vmem:[%s7735 + $0x80] sm:$0xff]
      %v7753 = vld [vmem:[%s7735 + $0x88] sm:$0xff]
      %v7754 = vld [vmem:[%s7735 + $0x90] sm:$0xff]
      %v7755 = vld [vmem:[%s7735 + $0x98] sm:$0xff]
      %v7756 = vld [vmem:[%s7735 + $0xa0] sm:$0xff]
      %v7757 = vld [vmem:[%s7735 + $0xa8] sm:$0xff]
      %v7758 = vld [vmem:[%s7735 + $0xb0] sm:$0xff]
      %v7759 = vld [vmem:[%s7735 + $0xb8] sm:$0xff]
      %v7760 = vld [vmem:[%s7735 + $0xc0] sm:$0xff]
      %v7761 = vld [vmem:[%s7735 + $0xc8] sm:$0xff]
      %v7762 = vld [vmem:[%s7735 + $0xd0] sm:$0xff]
      %v7763 = vld [vmem:[%s7735 + $0xd8] sm:$0xff]
      %v7764 = vld [vmem:[%s7735 + $0xe0] sm:$0xff]
      %v7765 = vld [vmem:[%s7735 + $0xe8] sm:$0xff]
      %v7766 = vld [vmem:[%s7735 + $0xf0] sm:$0xff]
      %v7767 = vld [vmem:[%s7735 + $0xf8] sm:$0xff]
      %v7769 = vrot.slane %v7612, 2
      %7771 = vmatprep.subr.mxu0 %v7737
      %7772 = vmatpush1.msra.mxu0 %v7736
      %7773 = vmatprep.subr.mxu0 %v7739
      %7774 = vmatpush1.msra.mxu0 %v7738
      %7775 = vmatprep.subr.mxu0 %v7741
      %7776 = vmatpush1.msra.mxu0 %v7740
      %7777 = vmatprep.subr.mxu0 %v7743
      %7778 = vmatpush1.msra.mxu0 %v7742
      %7779 = vmatprep.subr.mxu0 %v7745
      %7780 = vmatpush1.msra.mxu0 %v7744
      %7781 = vmatprep.subr.mxu0 %v7747
      %7782 = vmatpush1.msra.mxu0 %v7746
      %7783 = vmatprep.subr.mxu0 %v7749
      %7784 = vmatpush1.msra.mxu0 %v7748
      %7785 = vmatprep.subr.mxu0 %v7751
      %7786 = vmatpush1.msra.mxu0 %v7750
      %7787 = vmatprep.subr.mxu0 %v7753
      %7788 = vmatpush1.msra.mxu0 %v7752
      %7789 = vmatprep.subr.mxu0 %v7755
      %7790 = vmatpush1.msra.mxu0 %v7754
      %7791 = vmatprep.subr.mxu0 %v7757
      %7792 = vmatpush1.msra.mxu0 %v7756
      %7793 = vmatprep.subr.mxu0 %v7759
      %7794 = vmatpush1.msra.mxu0 %v7758
      %7795 = vmatprep.subr.mxu0 %v7761
      %7796 = vmatpush1.msra.mxu0 %v7760
      %7797 = vmatprep.subr.mxu0 %v7763
      %7798 = vmatpush1.msra.mxu0 %v7762
      %7799 = vmatprep.subr.mxu0 %v7765
      %7800 = vmatpush1.msra.mxu0 %v7764
      %7801 = vmatprep.subr.mxu0 %v7767
      %7802 = vmatpush1.msra.mxu0 %v7766
      %7803 = vmatprep.subr.mxu0 0.0
      %7804 = vmatpush1.msra.mxu0 0.0
      %7805 = vmatprep.subr.mxu0 0.0
      %7806 = vmatpush1.msra.mxu0 0.0
      %7807 = vmatprep.subr.mxu0 0.0
      %7808 = vmatpush1.msra.mxu0 0.0
      %7809 = vmatprep.subr.mxu0 0.0
      %7810 = vmatpush1.msra.mxu0 0.0
      %7811 = vmatprep.subr.mxu0 0.0
      %7812 = vmatpush1.msra.mxu0 0.0
      %7813 = vmatprep.subr.mxu0 0.0
      %7814 = vmatpush1.msra.mxu0 0.0
      %7815 = vmatprep.subr.mxu0 0.0
      %7816 = vmatpush1.msra.mxu0 0.0
      %7817 = vmatprep.subr.mxu0 0.0
      %7818 = vmatpush1.msra.mxu0 0.0
      %7819 = vmatprep.subr.mxu0 0.0
      %7820 = vmatpush1.msra.mxu0 0.0
      %7821 = vmatprep.subr.mxu0 0.0
      %7822 = vmatpush1.msra.mxu0 0.0
      %7823 = vmatprep.subr.mxu0 0.0
      %7824 = vmatpush1.msra.mxu0 0.0
      %7825 = vmatprep.subr.mxu0 0.0
      %7826 = vmatpush1.msra.mxu0 0.0
      %7827 = vmatprep.subr.mxu0 0.0
      %7828 = vmatpush1.msra.mxu0 0.0
      %7829 = vmatprep.subr.mxu0 0.0
      %7830 = vmatpush1.msra.mxu0 0.0
      %7831 = vmatprep.subr.mxu0 0.0
      %7832 = vmatpush1.msra.mxu0 0.0
      %7833 = vmatprep.subr.mxu0 0.0
      %7834 = vmatpush1.msra.mxu0 0.0
      %7835 = vmatprep.mubr.f32.mxu0 0.0
      %7836 = vmatmul.mubr.f32.gmra.mrb[0].mxu0 %v7769
      %v7837 = vpop.f32.mrb[0].mxu0
      %v7838 = vadd.f32 0.0, %v7837
      %v7839 = vpop.f32.mrb[0].mxu0
      %v7840 = vadd.f32 0.0, %v7839
      %7841 = vdwg.mxu0
      %v7844 = vcombine.low %v7838, %v7840
      %v7846 = vunpack.c.l.s4 1966171168
      %v7847 = vunpack.c.0.s8 %v7846
      %v7848 = vlaneseq
      %v7849 = vshrl.u32 %v7848, 7
      %v7850 = vsub.s32 %v7847, %v7849
      %v7851 = vrot.slane %v7844, %v7850
      %v7853 = vunpack.c.l.s4 1966171168
      %v7854 = vunpack.c.0.s8 %v7853
      %v7855 = vlaneseq
      %v7856 = vshrl.u32 %v7855, 7
      %v7857 = vsub.s32 %v7854, %v7856
      %v7858 = vrot.slane %v7851, %v7857
      %v7860 = vadd.f32 %v7734, %v7858
      %v7862 = vrot.slane %v7601, 1
      %v7864 = vmax.f32 %v7601, %v7862
      %v7866 = vrot.slane %v7602, 1
      %v7868 = vmax.f32 %v7602, %v7866
      %v7869 = vmax.f32 %v7864, %v7868
      %s7870 = scalar_lea.vmem %s5, 512
      %v7871 = vld [vmem:[%s7870] sm:$0xff]
      %v7872 = vld [vmem:[%s7870 + $0x8] sm:$0xff]
      %v7873 = vld [vmem:[%s7870 + $0x10] sm:$0xff]
      %v7874 = vld [vmem:[%s7870 + $0x18] sm:$0xff]
      %v7875 = vld [vmem:[%s7870 + $0x20] sm:$0xff]
      %v7876 = vld [vmem:[%s7870 + $0x28] sm:$0xff]
      %v7877 = vld [vmem:[%s7870 + $0x30] sm:$0xff]
      %v7878 = vld [vmem:[%s7870 + $0x38] sm:$0xff]
      %v7879 = vld [vmem:[%s7870 + $0x40] sm:$0xff]
      %v7880 = vld [vmem:[%s7870 + $0x48] sm:$0xff]
      %v7881 = vld [vmem:[%s7870 + $0x50] sm:$0xff]
      %v7882 = vld [vmem:[%s7870 + $0x58] sm:$0xff]
      %v7883 = vld [vmem:[%s7870 + $0x60] sm:$0xff]
      %v7884 = vld [vmem:[%s7870 + $0x68] sm:$0xff]
      %v7885 = vld [vmem:[%s7870 + $0x70] sm:$0xff]
      %v7886 = vld [vmem:[%s7870 + $0x78] sm:$0xff]
      %v7887 = vld [vmem:[%s7870 + $0x80] sm:$0xff]
      %v7888 = vld [vmem:[%s7870 + $0x88] sm:$0xff]
      %v7889 = vld [vmem:[%s7870 + $0x90] sm:$0xff]
      %v7890 = vld [vmem:[%s7870 + $0x98] sm:$0xff]
      %v7891 = vld [vmem:[%s7870 + $0xa0] sm:$0xff]
      %v7892 = vld [vmem:[%s7870 + $0xa8] sm:$0xff]
      %v7893 = vld [vmem:[%s7870 + $0xb0] sm:$0xff]
      %v7894 = vld [vmem:[%s7870 + $0xb8] sm:$0xff]
      %v7895 = vld [vmem:[%s7870 + $0xc0] sm:$0xff]
      %v7896 = vld [vmem:[%s7870 + $0xc8] sm:$0xff]
      %v7897 = vld [vmem:[%s7870 + $0xd0] sm:$0xff]
      %v7898 = vld [vmem:[%s7870 + $0xd8] sm:$0xff]
      %v7899 = vld [vmem:[%s7870 + $0xe0] sm:$0xff]
      %v7900 = vld [vmem:[%s7870 + $0xe8] sm:$0xff]
      %v7901 = vld [vmem:[%s7870 + $0xf0] sm:$0xff]
      %v7902 = vld [vmem:[%s7870 + $0xf8] sm:$0xff]
      %7903 = vmatprep.subr.mxu0 %v7872
      %7904 = vmatpush1.msra.mxu0 %v7871
      %7905 = vmatprep.subr.mxu0 %v7874
      %7906 = vmatpush1.msra.mxu0 %v7873
      %7907 = vmatprep.subr.mxu0 %v7876
      %7908 = vmatpush1.msra.mxu0 %v7875
      %7909 = vmatprep.subr.mxu0 %v7878
      %7910 = vmatpush1.msra.mxu0 %v7877
      %7911 = vmatprep.subr.mxu0 %v7880
      %7912 = vmatpush1.msra.mxu0 %v7879
      %7913 = vmatprep.subr.mxu0 %v7882
      %7914 = vmatpush1.msra.mxu0 %v7881
      %7915 = vmatprep.subr.mxu0 %v7884
      %7916 = vmatpush1.msra.mxu0 %v7883
      %7917 = vmatprep.subr.mxu0 %v7886
      %7918 = vmatpush1.msra.mxu0 %v7885
      %7919 = vmatprep.subr.mxu0 %v7888
      %7920 = vmatpush1.msra.mxu0 %v7887
      %7921 = vmatprep.subr.mxu0 %v7890
      %7922 = vmatpush1.msra.mxu0 %v7889
      %7923 = vmatprep.subr.mxu0 %v7892
      %7924 = vmatpush1.msra.mxu0 %v7891
      %7925 = vmatprep.subr.mxu0 %v7894
      %7926 = vmatpush1.msra.mxu0 %v7893
      %7927 = vmatprep.subr.mxu0 %v7896
      %7928 = vmatpush1.msra.mxu0 %v7895
      %7929 = vmatprep.subr.mxu0 %v7898
      %7930 = vmatpush1.msra.mxu0 %v7897
      %7931 = vmatprep.subr.mxu0 %v7900
      %7932 = vmatpush1.msra.mxu0 %v7899
      %7933 = vmatprep.subr.mxu0 %v7902
      %7934 = vmatpush1.msra.mxu0 %v7901
      %7935 = vmatprep.subr.mxu0 0.0
      %7936 = vmatpush1.msra.mxu0 0.0
      %7937 = vmatprep.subr.mxu0 0.0
      %7938 = vmatpush1.msra.mxu0 0.0
      %7939 = vmatprep.subr.mxu0 0.0
      %7940 = vmatpush1.msra.mxu0 0.0
      %7941 = vmatprep.subr.mxu0 0.0
      %7942 = vmatpush1.msra.mxu0 0.0
      %7943 = vmatprep.subr.mxu0 0.0
      %7944 = vmatpush1.msra.mxu0 0.0
      %7945 = vmatprep.subr.mxu0 0.0
      %7946 = vmatpush1.msra.mxu0 0.0
      %7947 = vmatprep.subr.mxu0 0.0
      %7948 = vmatpush1.msra.mxu0 0.0
      %7949 = vmatprep.subr.mxu0 0.0
      %7950 = vmatpush1.msra.mxu0 0.0
      %7951 = vmatprep.subr.mxu0 0.0
      %7952 = vmatpush1.msra.mxu0 0.0
      %7953 = vmatprep.subr.mxu0 0.0
      %7954 = vmatpush1.msra.mxu0 0.0
      %7955 = vmatprep.subr.mxu0 0.0
      %7956 = vmatpush1.msra.mxu0 0.0
      %7957 = vmatprep.subr.mxu0 0.0
      %7958 = vmatpush1.msra.mxu0 0.0
      %7959 = vmatprep.subr.mxu0 0.0
      %7960 = vmatpush1.msra.mxu0 0.0
      %7961 = vmatprep.subr.mxu0 0.0
      %7962 = vmatpush1.msra.mxu0 0.0
      %7963 = vmatprep.subr.mxu0 0.0
      %7964 = vmatpush1.msra.mxu0 0.0
      %7965 = vmatprep.subr.mxu0 0.0
      %7966 = vmatpush1.msra.mxu0 0.0
      %7967 = vmatprep.mubr.f32.mxu0 0.0
      %7968 = vmatmul.mubr.f32.gmra.mrb[0].mxu0 %v7869
      %v7969 = vpop.f32.mrb[0].mxu0
      %v7970 = vadd.f32 0.0, %v7969
      %v7971 = vpop.f32.mrb[0].mxu0
      %v7972 = vadd.f32 0.0, %v7971
      %7973 = vdwg.mxu0
      %v7976 = vcombine.low %v7970, %v7972
      %v7978 = vunpack.c.l.s4 1966171168
      %v7979 = vunpack.c.0.s8 %v7978
      %v7980 = vlaneseq
      %v7981 = vshrl.u32 %v7980, 7
      %v7982 = vsub.s32 %v7979, %v7981
      %v7983 = vrot.slane %v7976, %v7982
      %v7985 = vunpack.c.l.s4 1966171168
      %v7986 = vunpack.c.0.s8 %v7985
      %v7987 = vlaneseq
      %v7988 = vshrl.u32 %v7987, 7
      %v7989 = vsub.s32 %v7986, %v7988
      %v7990 = vrot.slane %v7983, %v7989
      %v7992 = vadd.f32 %v7860, %v7990
      %s7993 = scalar_lea.vmem %s5, 768
      %v7994 = vld [vmem:[%s7993] sm:$0xff]
      %v7995 = vld [vmem:[%s7993 + $0x8] sm:$0xff]
      %v7996 = vld [vmem:[%s7993 + $0x10] sm:$0xff]
      %v7997 = vld [vmem:[%s7993 + $0x18] sm:$0xff]
      %v7998 = vld [vmem:[%s7993 + $0x20] sm:$0xff]
      %v7999 = vld [vmem:[%s7993 + $0x28] sm:$0xff]
      %v8000 = vld [vmem:[%s7993 + $0x30] sm:$0xff]
      %v8001 = vld [vmem:[%s7993 + $0x38] sm:$0xff]
      %v8002 = vld [vmem:[%s7993 + $0x40] sm:$0xff]
      %v8003 = vld [vmem:[%s7993 + $0x48] sm:$0xff]
      %v8004 = vld [vmem:[%s7993 + $0x50] sm:$0xff]
      %v8005 = vld [vmem:[%s7993 + $0x58] sm:$0xff]
      %v8006 = vld [vmem:[%s7993 + $0x60] sm:$0xff]
      %v8007 = vld [vmem:[%s7993 + $0x68] sm:$0xff]
      %v8008 = vld [vmem:[%s7993 + $0x70] sm:$0xff]
      %v8009 = vld [vmem:[%s7993 + $0x78] sm:$0xff]
      %v8010 = vld [vmem:[%s7993 + $0x80] sm:$0xff]
      %v8011 = vld [vmem:[%s7993 + $0x88] sm:$0xff]
      %v8012 = vld [vmem:[%s7993 + $0x90] sm:$0xff]
      %v8013 = vld [vmem:[%s7993 + $0x98] sm:$0xff]
      %v8014 = vld [vmem:[%s7993 + $0xa0] sm:$0xff]
      %v8015 = vld [vmem:[%s7993 + $0xa8] sm:$0xff]
      %v8016 = vld [vmem:[%s7993 + $0xb0] sm:$0xff]
      %v8017 = vld [vmem:[%s7993 + $0xb8] sm:$0xff]
      %v8018 = vld [vmem:[%s7993 + $0xc0] sm:$0xff]
      %v8019 = vld [vmem:[%s7993 + $0xc8] sm:$0xff]
      %v8020 = vld [vmem:[%s7993 + $0xd0] sm:$0xff]
      %v8021 = vld [vmem:[%s7993 + $0xd8] sm:$0xff]
      %v8022 = vld [vmem:[%s7993 + $0xe0] sm:$0xff]
      %v8023 = vld [vmem:[%s7993 + $0xe8] sm:$0xff]
      %v8024 = vld [vmem:[%s7993 + $0xf0] sm:$0xff]
      %v8025 = vld [vmem:[%s7993 + $0xf8] sm:$0xff]
      %v8027 = vrot.slane %v7869, 2
      %8029 = vmatprep.subr.mxu0 %v7995
      %8030 = vmatpush1.msra.mxu0 %v7994
      %8031 = vmatprep.subr.mxu0 %v7997
      %8032 = vmatpush1.msra.mxu0 %v7996
      %8033 = vmatprep.subr.mxu0 %v7999
      %8034 = vmatpush1.msra.mxu0 %v7998
      %8035 = vmatprep.subr.mxu0 %v8001
      %8036 = vmatpush1.msra.mxu0 %v8000
      %8037 = vmatprep.subr.mxu0 %v8003
      %8038 = vmatpush1.msra.mxu0 %v8002
      %8039 = vmatprep.subr.mxu0 %v8005
      %8040 = vmatpush1.msra.mxu0 %v8004
      %8041 = vmatprep.subr.mxu0 %v8007
      %8042 = vmatpush1.msra.mxu0 %v8006
      %8043 = vmatprep.subr.mxu0 %v8009
      %8044 = vmatpush1.msra.mxu0 %v8008
      %8045 = vmatprep.subr.mxu0 %v8011
      %8046 = vmatpush1.msra.mxu0 %v8010
      %8047 = vmatprep.subr.mxu0 %v8013
      %8048 = vmatpush1.msra.mxu0 %v8012
      %8049 = vmatprep.subr.mxu0 %v8015
      %8050 = vmatpush1.msra.mxu0 %v8014
      %8051 = vmatprep.subr.mxu0 %v8017
      %8052 = vmatpush1.msra.mxu0 %v8016
      %8053 = vmatprep.subr.mxu0 %v8019
      %8054 = vmatpush1.msra.mxu0 %v8018
      %8055 = vmatprep.subr.mxu0 %v8021
      %8056 = vmatpush1.msra.mxu0 %v8020
      %8057 = vmatprep.subr.mxu0 %v8023
      %8058 = vmatpush1.msra.mxu0 %v8022
      %8059 = vmatprep.subr.mxu0 %v8025
      %8060 = vmatpush1.msra.mxu0 %v8024
      %8061 = vmatprep.subr.mxu0 0.0
      %8062 = vmatpush1.msra.mxu0 0.0
      %8063 = vmatprep.subr.mxu0 0.0
      %8064 = vmatpush1.msra.mxu0 0.0
      %8065 = vmatprep.subr.mxu0 0.0
      %8066 = vmatpush1.msra.mxu0 0.0
      %8067 = vmatprep.subr.mxu0 0.0
      %8068 = vmatpush1.msra.mxu0 0.0
      %8069 = vmatprep.subr.mxu0 0.0
      %8070 = vmatpush1.msra.mxu0 0.0
      %8071 = vmatprep.subr.mxu0 0.0
      %8072 = vmatpush1.msra.mxu0 0.0
      %8073 = vmatprep.subr.mxu0 0.0
      %8074 = vmatpush1.msra.mxu0 0.0
      %8075 = vmatprep.subr.mxu0 0.0
      %8076 = vmatpush1.msra.mxu0 0.0
      %8077 = vmatprep.subr.mxu0 0.0
      %8078 = vmatpush1.msra.mxu0 0.0
      %8079 = vmatprep.subr.mxu0 0.0
      %8080 = vmatpush1.msra.mxu0 0.0
      %8081 = vmatprep.subr.mxu0 0.0
      %8082 = vmatpush1.msra.mxu0 0.0
      %8083 = vmatprep.subr.mxu0 0.0
      %8084 = vmatpush1.msra.mxu0 0.0
      %8085 = vmatprep.subr.mxu0 0.0
      %8086 = vmatpush1.msra.mxu0 0.0
      %8087 = vmatprep.subr.mxu0 0.0
      %8088 = vmatpush1.msra.mxu0 0.0
      %8089 = vmatprep.subr.mxu0 0.0
      %8090 = vmatpush1.msra.mxu0 0.0
      %8091 = vmatprep.subr.mxu0 0.0
      %8092 = vmatpush1.msra.mxu0 0.0
      %8093 = vmatprep.mubr.f32.mxu0 0.0
      %8094 = vmatmul.mubr.f32.gmra.mrb[0].mxu0 %v8027
      %v8095 = vpop.f32.mrb[0].mxu0
      %v8096 = vadd.f32 0.0, %v8095
      %v8097 = vpop.f32.mrb[0].mxu0
      %v8098 = vadd.f32 0.0, %v8097
      %8099 = vdwg.mxu0
      %v8102 = vcombine.low %v8096, %v8098
      %v8104 = vunpack.c.l.s4 1966171168
      %v8105 = vunpack.c.0.s8 %v8104
      %v8106 = vlaneseq
      %v8107 = vshrl.u32 %v8106, 7
      %v8108 = vsub.s32 %v8105, %v8107
      %v8109 = vrot.slane %v8102, %v8108
      %v8111 = vunpack.c.l.s4 1966171168
      %v8112 = vunpack.c.0.s8 %v8111
      %v8113 = vlaneseq
      %v8114 = vshrl.u32 %v8113, 7
      %v8115 = vsub.s32 %v8112, %v8114
      %v8116 = vrot.slane %v8109, %v8115
      %v8118 = vadd.f32 %v7992, %v8116
      %v8119 = vmul.f32 %v8118, 0.5
      %v8120 = vmul.f32 %v8118, %v742
      %v8121 = verf.f32.pop %v8120
      %v8122 = vadd.f32 %v8121, 1.0
      %v8123 = vmul.f32 %v8119, %v8122
      %v8124 = vld [vmem:[%s7] sm:$0xff]
      %v8125 = vld [vmem:[%s7 + $0x8] sm:$0xff]
      %v8126 = vld [vmem:[%s7 + $0x10] sm:$0xff]
      %v8127 = vld [vmem:[%s7 + $0x18] sm:$0xff]
      %v8128 = vld [vmem:[%s7 + $0x20] sm:$0xff]
      %v8129 = vld [vmem:[%s7 + $0x28] sm:$0xff]
      %v8130 = vld [vmem:[%s7 + $0x30] sm:$0xff]
      %v8131 = vld [vmem:[%s7 + $0x38] sm:$0xff]
      %v8132 = vld [vmem:[%s7 + $0x40] sm:$0xff]
      %v8133 = vld [vmem:[%s7 + $0x48] sm:$0xff]
      %v8134 = vld [vmem:[%s7 + $0x50] sm:$0xff]
      %v8135 = vld [vmem:[%s7 + $0x58] sm:$0xff]
      %v8136 = vld [vmem:[%s7 + $0x60] sm:$0xff]
      %v8137 = vld [vmem:[%s7 + $0x68] sm:$0xff]
      %v8138 = vld [vmem:[%s7 + $0x70] sm:$0xff]
      %v8139 = vld [vmem:[%s7 + $0x78] sm:$0xff]
      %v8140 = vld [vmem:[%s7 + $0x80] sm:$0xff]
      %v8141 = vld [vmem:[%s7 + $0x88] sm:$0xff]
      %v8142 = vld [vmem:[%s7 + $0x90] sm:$0xff]
      %v8143 = vld [vmem:[%s7 + $0x98] sm:$0xff]
      %v8144 = vld [vmem:[%s7 + $0xa0] sm:$0xff]
      %v8145 = vld [vmem:[%s7 + $0xa8] sm:$0xff]
      %v8146 = vld [vmem:[%s7 + $0xb0] sm:$0xff]
      %v8147 = vld [vmem:[%s7 + $0xb8] sm:$0xff]
      %v8148 = vld [vmem:[%s7 + $0xc0] sm:$0xff]
      %v8149 = vld [vmem:[%s7 + $0xc8] sm:$0xff]
      %v8150 = vld [vmem:[%s7 + $0xd0] sm:$0xff]
      %v8151 = vld [vmem:[%s7 + $0xd8] sm:$0xff]
      %v8152 = vld [vmem:[%s7 + $0xe0] sm:$0xff]
      %v8153 = vld [vmem:[%s7 + $0xe8] sm:$0xff]
      %v8154 = vld [vmem:[%s7 + $0xf0] sm:$0xff]
      %v8155 = vld [vmem:[%s7 + $0xf8] sm:$0xff]
      %v8156 = vld [vmem:[%s8] sm:$0x1]
      %v8158 = vlaneseq
      %v8159 = vshrl.u32 %v8158, 7
      %v8160 = vsub.s32 0, %v8159
      %v8161 = vrot.slane %v8123, %v8160
      %v8162 = vlaneseq
      %v8163 = vshrl.u32 %v8162, 7
      %v8164 = vsub.s32 1, %v8163
      %v8165 = vrot.slane %v8123, %v8164
      %8168 = vmatprep.subr.mxu0 0.0
      %8169 = vmatpush1.msra.mxu0 %v8124
      %8170 = vmatprep.subr.mxu0 0.0
      %8171 = vmatpush1.msra.mxu0 %v8125
      %8172 = vmatprep.subr.mxu0 0.0
      %8173 = vmatpush1.msra.mxu0 %v8126
      %8174 = vmatprep.subr.mxu0 0.0
      %8175 = vmatpush1.msra.mxu0 %v8127
      %8176 = vmatprep.subr.mxu0 0.0
      %8177 = vmatpush1.msra.mxu0 %v8128
      %8178 = vmatprep.subr.mxu0 0.0
      %8179 = vmatpush1.msra.mxu0 %v8129
      %8180 = vmatprep.subr.mxu0 0.0
      %8181 = vmatpush1.msra.mxu0 %v8130
      %8182 = vmatprep.subr.mxu0 0.0
      %8183 = vmatpush1.msra.mxu0 %v8131
      %8184 = vmatprep.subr.mxu0 0.0
      %8185 = vmatpush1.msra.mxu0 %v8132
      %8186 = vmatprep.subr.mxu0 0.0
      %8187 = vmatpush1.msra.mxu0 %v8133
      %8188 = vmatprep.subr.mxu0 0.0
      %8189 = vmatpush1.msra.mxu0 %v8134
      %8190 = vmatprep.subr.mxu0 0.0
      %8191 = vmatpush1.msra.mxu0 %v8135
      %8192 = vmatprep.subr.mxu0 0.0
      %8193 = vmatpush1.msra.mxu0 %v8136
      %8194 = vmatprep.subr.mxu0 0.0
      %8195 = vmatpush1.msra.mxu0 %v8137
      %8196 = vmatprep.subr.mxu0 0.0
      %8197 = vmatpush1.msra.mxu0 %v8138
      %8198 = vmatprep.subr.mxu0 0.0
      %8199 = vmatpush1.msra.mxu0 %v8139
      %8200 = vmatprep.subr.mxu0 0.0
      %8201 = vmatpush1.msra.mxu0 %v8140
      %8202 = vmatprep.subr.mxu0 0.0
      %8203 = vmatpush1.msra.mxu0 %v8141
      %8204 = vmatprep.subr.mxu0 0.0
      %8205 = vmatpush1.msra.mxu0 %v8142
      %8206 = vmatprep.subr.mxu0 0.0
      %8207 = vmatpush1.msra.mxu0 %v8143
      %8208 = vmatprep.subr.mxu0 0.0
      %8209 = vmatpush1.msra.mxu0 %v8144
      %8210 = vmatprep.subr.mxu0 0.0
      %8211 = vmatpush1.msra.mxu0 %v8145
      %8212 = vmatprep.subr.mxu0 0.0
      %8213 = vmatpush1.msra.mxu0 %v8146
      %8214 = vmatprep.subr.mxu0 0.0
      %8215 = vmatpush1.msra.mxu0 %v8147
      %8216 = vmatprep.subr.mxu0 0.0
      %8217 = vmatpush1.msra.mxu0 %v8148
      %8218 = vmatprep.subr.mxu0 0.0
      %8219 = vmatpush1.msra.mxu0 %v8149
      %8220 = vmatprep.subr.mxu0 0.0
      %8221 = vmatpush1.msra.mxu0 %v8150
      %8222 = vmatprep.subr.mxu0 0.0
      %8223 = vmatpush1.msra.mxu0 %v8151
      %8224 = vmatprep.subr.mxu0 0.0
      %8225 = vmatpush1.msra.mxu0 %v8152
      %8226 = vmatprep.subr.mxu0 0.0
      %8227 = vmatpush1.msra.mxu0 %v8153
      %8228 = vmatprep.subr.mxu0 0.0
      %8229 = vmatpush1.msra.mxu0 %v8154
      %8230 = vmatprep.subr.mxu0 0.0
      %8231 = vmatpush1.msra.mxu0 %v8155
      %8232 = vmatprep.mubr.f32.mxu0 %v8165
      %8233 = vmatmul.mubr.f32.gmra.mrb[0].mxu0 %v8161
      %v8234 = vpop.f32.mrb[0].mxu0
      %v8235 = vadd.f32 %v8156, %v8234
      %v8236 = vpop.f32.mrb[0].mxu0
      %8237 = vdwg.mxu0
      %v8238 = vlaneseq
      %v8239 = vshrl.u32 %v8238, 7
      %v8240 = vsub.s32 0, %v8239
      %v8241 = vrot.slane %v8235, %v8240
      %8242 = vst [vmem:[%s330] sm:$0xff] %v8241
      %p8243 = scmp.lt.s32.totalorder %s20, 1
      %s8244 = scalar_select %p8243, %s20, 1
      %s8245 = smul.addr %s8244, 8
      %s8246 = scalar_lea.vmem %s9, %s8245
      // Predicated region
      $region57: #{poolnet_forward.1} parent=55 // pred_check
        %p8247 = pneg %p232
      $region58: #{poolnet_forward.1} parent=55 // pred_check_branch
        %8249 = sbr.rel (%p8247) target = $region60
      $region59: #{poolnet_forward.1} parent=55 // pred_region
        _
      $region60: #{poolnet_forward.1} parent=55 // pred_fallthru
        _
    $region56: #{poolnet_forward.1} parent=5 // pred_fallthru
      _
    %p8250 = scmp.le.s32.totalorder 2, %s15
    // Predicated region
    $region61: #{poolnet_forward.1} parent=5 // pred_check
      %p8251 = pneg %p8250
    $region62: #{poolnet_forward.1} parent=5 // pred_check_branch
      %8253 = sbr.rel (%p8251) target = $region64
    $region63: #{poolnet_forward.1} parent=5 // pred_region
      %s8254 = ssub.s32 %s15, 2
      // Predicated region
      $region65: #{poolnet_forward.1} parent=63 // pred_check
        %p8255 = pneg %p238
      $region66: #{poolnet_forward.1} parent=63 // pred_check_branch
        %8257 = sbr.rel (%p8255) target = $region68
      $region67: #{poolnet_forward.1} parent=63 // pred_region
        %p8258 = scmp.lt.s32.totalorder %s21, 1
        %s8259 = scalar_select %p8258, %s21, 1
        %s8260 = smul.addr %s8259, 8
        %s8261 = scalar_lea.vmem %s9, %s8260
      $region68: #{poolnet_forward.1} parent=63 // pred_fallthru
        _
    $region64: #{poolnet_forward.1} parent=5 // pred_fallthru
      _
  $region6: #{poolnet_forward.1} parent=0 // loop_footer
    %s19 = sadd.s32 1, %s15
  $region7: #{poolnet_forward.1} parent=0 // loop_footer_branch
    %14 = sbr.rel target = $region3
  $region8: #{poolnet_forward.1} parent=0 // loop_exit
    _

</llo_original>
